<compile_context>
chip_gen: v7x
topology: tpu7x:2x2x1
jax: 0.10.0
libtpu: 0.0.40
codegen_flags: <defaults>
</compile_context>

<pallas_src>
import numpy as np
import jax
import jax.numpy as jnp
from jax.experimental import pallas as pl
from jax.experimental.pallas import tpu as pltpu

C = 768                       # backbone hidden size
HW = 16                       # spatial grid after reshape(B, 16, 16, 768)
POOL1_K, POOL1_OUT = 4, 8     # FractionalMaxPool2d(4, output_size=8)
CONV_K, CONV_S = 4, 4         # depthwise Conv2d(k=4, s=4, groups=768)
N_CSTART = HW - POOL1_K + 1   # 13 valid sliding-window column starts
LN_EPS = 1e-5                 # nn.LayerNorm default eps
MAX_BT = 16                   # batch-tile cap: keeps the bf16 x block (double
                              # buffered) + f32 temporaries inside v7x's 64 MiB
VMEM_LIMIT = 48 * 1024 * 1024  # raise scoped VMEM (v5e default is only 16 MiB)


# ---- exact GELU (erf form, like nn.GELU default) -----------------------------
# erf via Abramowitz & Stegun 7.1.26 (max abs err ~1.5e-7). The inner divide is
# routed through the EUP approx reciprocal (err ~2^-12), below the bf16
# weight-quantization noise already accepted, and frees the VALU slot.
def _erf(x):
    a1, a2, a3, a4, a5 = (0.254829592, -0.284496736, 1.421413741,
                          -1.453152027, 1.061405429)
    p = 0.3275911
    ax = jnp.abs(x)
    t = pl.reciprocal(1.0 + p * ax, approx=True)
    poly = t * (a1 + t * (a2 + t * (a3 + t * (a4 + t * a5))))
    e = 1.0 - poly * jnp.exp(-ax * ax)
    return jnp.where(x >= 0, e, -e)


def _gelu(x):
    return 0.5 * x * (1.0 + _erf(x * 0.7071067811865476))


def _layer_norm(y):
    # nn.LayerNorm(..., elementwise_affine=False): no gamma/beta, biased var
    mu = jnp.mean(y, axis=-1, keepdims=True)
    c = y - mu
    var = jnp.mean(c * c, axis=-1, keepdims=True)
    return c * jax.lax.rsqrt(var + LN_EPS)


# ---- FractionalMaxPool2d region starts ----------------------------------------
# Same interval generation as PyTorch's fractional_max_pool2d.
# TODO(synk): PyTorch draws fresh _random_samples per forward; fixed
# deterministic samples (0.31 / 0.67) are used here.
def _fractional_starts(input_size, output_size, pool_size, sample):
    if output_size == 1:
        return [input_size - pool_size]
    alpha = (input_size - pool_size) / (output_size - 1)
    starts = [int((i + sample) * alpha) - int(sample * alpha)
              for i in range(output_size - 1)]
    starts.append(input_size - pool_size)
    return starts


_ROW_STARTS = _fractional_starts(HW, POOL1_OUT, POOL1_K, 0.31)
_COL_STARTS = _fractional_starts(HW, POOL1_OUT, POOL1_K, 0.67)

# Per conv-output column owc, the 4 pooled-column starts it reads form a narrow
# contiguous band of the 13 sliding-window starts.  The kernel slices only that
# band (span=6 here) instead of multiplying a 13-row, ~70%-zero select tensor.
_OWC_STARTS = [[_COL_STARTS[owc * CONV_S + kw] for kw in range(CONV_K)]
               for owc in range(2)]
_OWC_SPAN = max(max(s) - min(s) + 1 for s in _OWC_STARTS)
_OWC_BASE = [min(min(s), N_CSTART - _OWC_SPAN) for s in _OWC_STARTS]

# Selection tensor: scatter each conv-weight row onto its local band position,
# so each (owc, kh) contribution is one (bt, span, 768) multiply + one
# cross-sublane reduction (XLU) instead of 16 per-tap FMAs.
_sel = np.zeros((2, CONV_K, _OWC_SPAN, CONV_K * CONV_K), np.float32)
for _owc in range(2):
    for _kh in range(CONV_K):
        for _kw in range(CONV_K):
            _l = _OWC_STARTS[_owc][_kw] - _OWC_BASE[_owc]
            _sel[_owc, _kh, _l, _kh * CONV_K + _kw] = 1.0
_WSEL_SEL = jnp.asarray(_sel)


def prepare_conv_wsel(conv_w):
    """conv_w: (16, 768); row kh*4+kw = PyTorch Conv2d weight[c, 0, kh, kw]."""
    return jnp.einsum("oklr,rc->oklc", _WSEL_SEL, conv_w)   # (2, 4, span, 768)


# ---- single fused kernel: pool_ln + (folded) SEL + Regressor_head -------------
def bar_fused_kernel(x_ref, sex_ref, wsel_ref, convb_ref,
                     w1p_ref, v1_ref, b1_ref, w2_ref, b2_ref,
                     w3_ref, b3_ref, w4_ref, b4_ref, o_ref):
    bt = x_ref.shape[0]
    wsel = wsel_ref[...]                                   # (2, 4, span, 768) f32
    conv_b = convb_ref[...]                                # (1, 768) f32

    # --- pool_ln: FractionalMaxPool2d(4, 8) -> depthwise Conv2d(4, s=4) -> GELU
    #              -> FractionalMaxPool2d(2, 1) -> Flatten ----------------------
    # Processed one pooled row (oh) at a time so only small temporaries are
    # live (no full f32 copy of x).  Row/column max pooling runs in the input
    # dtype (bf16-safe: max is exact); the f32 cast is deferred to the per-row
    # (bt, 16, 768) result so the proven f32 sublane-offset-slice path is used
    # for the sliding column max.
    conv_out = []
    for ohc in range(2):
        acc = [jnp.zeros((bt, C), jnp.float32) for _ in range(2)]
        for kh in range(CONV_K):
            oh = ohc * CONV_S + kh
            rs = _ROW_STARTS[oh]
            win = x_ref[:, rs:rs + POOL1_K, :, :]              # (bt, 4, 16, 768)
            rm = jnp.max(win, axis=1).astype(jnp.float32)      # (bt, 16, 768)
            # sliding 4-wide column max via two shifted maxes -> all 13 starts
            m2 = jnp.maximum(rm[:, 0:HW - 1, :], rm[:, 1:HW, :])
            m4 = jnp.maximum(m2[:, 0:N_CSTART, :],
                             m2[:, 2:N_CSTART + 2, :])         # (bt, 13, 768)
            for owc in range(2):
                b0 = _OWC_BASE[owc]
                band = m4[:, b0:b0 + _OWC_SPAN, :]             # (bt, span, 768)
                acc[owc] = acc[owc] + jnp.sum(band * wsel[owc, kh], axis=1)
        for owc in range(2):
            conv_out.append(_gelu(acc[owc] + conv_b))          # (bt, 768)

    # FractionalMaxPool2d(2, output_size=1) over the 2x2 conv map + Flatten
    feat = jnp.maximum(jnp.maximum(conv_out[0], conv_out[1]),
                       jnp.maximum(conv_out[2], conv_out[3]))  # (bt, 768)

    # --- Regressor_head.  SEL (Linear(1,32)) and the sex columns of W1 are
    #     pre-folded: y1 = feat @ w1_pool + sex * v1 + b1'  (exactly equivalent
    #     since both ops are affine and Dropout is identity at inference) ------
    sex = sex_ref[...].reshape(bt, 1)
    wdt = w1p_ref.dtype                                        # bfloat16

    def _block(y):
        return _layer_norm(_gelu(y))

    y1 = (jnp.dot(feat.astype(wdt), w1p_ref[...],
                  preferred_element_type=jnp.float32)
          + sex * v1_ref[...] + b1_ref[...])
    h1 = _block(y1)                                            # (bt, 800)
    # nn.Dropout(0.2): identity at inference
    h2 = _block(jnp.dot(h1.astype(wdt), w2_ref[...],
                        preferred_element_type=jnp.float32) + b2_ref[...])
    h3 = _block(jnp.dot(h2.astype(wdt), w3_ref[...],
                        preferred_element_type=jnp.float32) + b3_ref[...])
    out = jnp.sum(h3 * w4_ref[...], axis=-1, keepdims=True) + b4_ref[...]
    o_ref[...] = out.reshape(bt, 1, 1)                         # (bt, 1, 1)


# ---- parameter init (deterministic, PyTorch-default-style uniform) ------------
def init_params(key):
    def linear(k, fan_in, fan_out, wdtype=jnp.float32):
        kw, kb = jax.random.split(k)
        bound = 1.0 / (fan_in ** 0.5)
        w = jax.random.uniform(kw, (fan_in, fan_out), jnp.float32, -bound, bound)
        b = jax.random.uniform(kb, (1, fan_out), jnp.float32, -bound, bound)
        return w.astype(wdtype), b

    keys = jax.random.split(key, 6)
    p = {}

    # SEL = nn.Linear(1, 32): generated, then folded into the first head layer.
    sel_w, sel_b = linear(keys[0], 1, 32)

    # depthwise Conv2d(768,768,k=4,s=4,groups=768); row kh*4+kw = weight[c,0,kh,kw]
    kcw, kcb = jax.random.split(keys[1])
    cbound = 1.0 / (CONV_K * CONV_K) ** 0.5
    conv_w = jax.random.uniform(kcw, (CONV_K * CONV_K, C), jnp.float32,
                                -cbound, cbound)
    p['conv_b'] = jax.random.uniform(kcb, (1, C), jnp.float32, -cbound, cbound)
    p['conv_wsel'] = prepare_conv_wsel(conv_w)          # (2, 4, span, 768) f32

    # head Linear(800, 800): PyTorch mapping w1_sex = W1[:, :32].T,
    # w1_pool = W1[:, 32:].T.  w1_pool stored bf16 (halves weight DMA);
    # accumulation stays f32.
    b800 = 1.0 / (800.0 ** 0.5)
    k1s, k1p, k1b = jax.random.split(keys[2], 3)
    w1_sex = jax.random.uniform(k1s, (32, 800), jnp.float32, -b800, b800)
    p['w1_pool'] = jax.random.uniform(k1p, (C, 800), jnp.float32,
                                      -b800, b800).astype(jnp.bfloat16)
    b1 = jax.random.uniform(k1b, (1, 800), jnp.float32, -b800, b800)

    # SEL fold: sex_emb @ w1_sex = sex * (sel_w @ w1_sex) + sel_b @ w1_sex
    p['v1'] = sel_w @ w1_sex                            # (1, 800) f32
    p['b1f'] = b1 + sel_b @ w1_sex                      # (1, 800) f32

    p['w2'], p['b2'] = linear(keys[3], 800, 256, jnp.bfloat16)
    p['w3'], p['b3'] = linear(keys[4], 256, 32, jnp.bfloat16)

    # final Linear(32,1): stored as a (1,32) lane row + (1,1) bias, f32
    k4w, k4b = jax.random.split(keys[5])
    b32 = 1.0 / (32.0 ** 0.5)
    p['w4'] = jax.random.uniform(k4w, (1, 32), jnp.float32, -b32, b32)
    p['b4'] = jax.random.uniform(k4b, (1, 1), jnp.float32, -b32, b32)
    return p


def _batch_tile(batch):
    # Largest batch tile <= MAX_BT that divides B: bt is every matmul's M dim
    # and it amortizes the ~0.35 us per-grid-step overhead; MAX_BT=16 keeps the
    # double-buffered x block + f32 temporaries inside v7x's 64 MiB VMEM
    # (comfortable on v5e/v6e with vmem_limit_bytes raised below).
    # TODO(synk): on v7x with B == MAX_BT, two steps of MAX_BT//2 would let
    # dimension_semantics=("parallel",) feed both TensorCores.
    for bt in (16, 8, 4, 2, 1):
        if bt <= batch and batch % bt == 0:
            return bt
    return 1


# ---- forward -------------------------------------------------------------------
@jax.jit
def bar_model_forward(params, x_tokens, sex):
    """x_tokens: [B, 256, 768] backbone last_hidden_state; sex: [B] float."""
    B = x_tokens.shape[0]
    bt = _batch_tile(B)
    # PyTorch: reshape(B,16,16,768).permute(0,3,1,2) -> NCHW; we stay NHWC.
    # No dtype cast here: the kernel consumes the backbone's output dtype
    # directly (an explicit wrapper-side cast would add a full HBM pass).
    x_nhwc = x_tokens.reshape(B, HW, HW, C)
    sex3 = sex.reshape(B, 1, 1).astype(jnp.float32)

    bcast2 = lambda b: (0, 0)
    out3 = pl.pallas_call(
        bar_fused_kernel,
        out_shape=jax.ShapeDtypeStruct((B, 1, 1), jnp.float32),
        grid=(B // bt,),
        in_specs=[
            pl.BlockSpec((bt, HW, HW, C), lambda b: (b, 0, 0, 0)),           # x
            pl.BlockSpec((bt, 1, 1), lambda b: (b, 0, 0)),                   # sex
            pl.BlockSpec((2, CONV_K, _OWC_SPAN, C), lambda b: (0, 0, 0, 0)),  # wsel
            pl.BlockSpec((1, C), bcast2),       # conv_b
            pl.BlockSpec((C, 800), bcast2),     # w1_pool
            pl.BlockSpec((1, 800), bcast2),     # v1 (folded SEL @ w1_sex)
            pl.BlockSpec((1, 800), bcast2),     # b1' (folded bias)
            pl.BlockSpec((800, 256), bcast2),   # w2
            pl.BlockSpec((1, 256), bcast2),     # b2
            pl.BlockSpec((256, 32), bcast2),    # w3
            pl.BlockSpec((1, 32), bcast2),      # b3
            pl.BlockSpec((1, 32), bcast2),      # w4
            pl.BlockSpec((1, 1), bcast2),       # b4
        ],
        out_specs=pl.BlockSpec((bt, 1, 1), lambda b: (b, 0, 0)),
        compiler_params=pltpu.CompilerParams(
            dimension_semantics=("parallel",),
            vmem_limit_bytes=VMEM_LIMIT),
    )(x_nhwc, sex3, params['conv_wsel'], params['conv_b'],
      params['w1_pool'], params['v1'], params['b1f'],
      params['w2'], params['b2'], params['w3'], params['b3'],
      params['w4'], params['b4'])
    return out3.reshape(B, 1)                                  # (B, 1)


if __name__ == "__main__":
    key = jax.random.PRNGKey(0)
    kp, kx = jax.random.split(key)
    params = init_params(kp)

    B = 2
    # Stand-in for backbone(x).last_hidden_state (SwinV2-tiny, image_size=500),
    # emitted in bf16 by the backbone's final op so the fused kernel reads bf16
    # directly (no extra HBM cast pass inside the forward).
    x_tokens = jax.random.normal(kx, (B, HW * HW, C),
                                 jnp.float32).astype(jnp.bfloat16)
    sex = jnp.array([0.0, 1.0], jnp.float32)                   # 0: female, 1: male

    out = bar_model_forward(params, x_tokens, sex)
    jax.block_until_ready(out)
    assert out.shape == (B, 1) and out.dtype == jnp.float32
    assert bool(jnp.all(jnp.isfinite(out)))
    print("KERNEL_OK")
</pallas_src>

<mosaic_0001>
module attributes {stable_mosaic.version = 11 : i64} {
  func.func @bar_fused_kernel(%arg0: i32, %arg1: memref<2x16x16x768xbf16, #tpu.memory_space<vmem>>, %arg2: memref<2x1x1xf32, #tpu.memory_space<vmem>>, %arg3: memref<2x4x6x768xf32, #tpu.memory_space<vmem>>, %arg4: memref<1x768xf32, #tpu.memory_space<vmem>>, %arg5: memref<768x800xbf16, #tpu.memory_space<vmem>>, %arg6: memref<1x800xf32, #tpu.memory_space<vmem>>, %arg7: memref<1x800xf32, #tpu.memory_space<vmem>>, %arg8: memref<800x256xbf16, #tpu.memory_space<vmem>>, %arg9: memref<1x256xf32, #tpu.memory_space<vmem>>, %arg10: memref<256x32xbf16, #tpu.memory_space<vmem>>, %arg11: memref<1x32xf32, #tpu.memory_space<vmem>>, %arg12: memref<1x32xf32, #tpu.memory_space<vmem>>, %arg13: memref<1x1xf32, #tpu.memory_space<vmem>>, %arg14: memref<2x1x1xf32, #tpu.memory_space<vmem>>) attributes {dimension_semantics = [#tpu.dimension_semantics<parallel>], iteration_bounds = array<i64: 1>, scalar_prefetch = 0 : i64, scratch_operands = 0 : i64, tpu.core_type = #tpu.core_type<tc>, window_params = [{transform_indices = @transform_0, window_bounds = array<i64: 2, 16, 16, 768>}, {transform_indices = @transform_1, window_bounds = array<i64: 2, 1, 1>}, {pipeline_mode = #tpu.pipeline_mode<synchronous>, transform_indices = @transform_2, window_bounds = array<i64: 2, 4, 6, 768>}, {pipeline_mode = #tpu.pipeline_mode<synchronous>, transform_indices = @transform_3, window_bounds = array<i64: 1, 768>}, {pipeline_mode = #tpu.pipeline_mode<synchronous>, transform_indices = @transform_4, window_bounds = array<i64: 768, 800>}, {pipeline_mode = #tpu.pipeline_mode<synchronous>, transform_indices = @transform_5, window_bounds = array<i64: 1, 800>}, {pipeline_mode = #tpu.pipeline_mode<synchronous>, transform_indices = @transform_6, window_bounds = array<i64: 1, 800>}, {pipeline_mode = #tpu.pipeline_mode<synchronous>, transform_indices = @transform_7, window_bounds = array<i64: 800, 256>}, {pipeline_mode = #tpu.pipeline_mode<synchronous>, transform_indices = @transform_8, window_bounds = array<i64: 1, 256>}, {pipeline_mode = #tpu.pipeline_mode<synchronous>, transform_indices = @transform_9, window_bounds = array<i64: 256, 32>}, {pipeline_mode = #tpu.pipeline_mode<synchronous>, transform_indices = @transform_10, window_bounds = array<i64: 1, 32>}, {pipeline_mode = #tpu.pipeline_mode<synchronous>, transform_indices = @transform_11, window_bounds = array<i64: 1, 32>}, {pipeline_mode = #tpu.pipeline_mode<synchronous>, transform_indices = @transform_12, window_bounds = array<i64: 1, 1>}, {transform_indices = @transform_13, window_bounds = array<i64: 2, 1, 1>}]} {
    %c0 = arith.constant 0 : index
    %c0_0 = arith.constant 0 : index
    %c0_1 = arith.constant 0 : index
    %c0_2 = arith.constant 0 : index
    %0 = vector.load %arg3[%c0, %c0_0, %c0_1, %c0_2] : memref<2x4x6x768xf32, #tpu.memory_space<vmem>>, vector<2x4x6x768xf32>
    %c0_3 = arith.constant 0 : index
    %c0_4 = arith.constant 0 : index
    %1 = vector.load %arg4[%c0_3, %c0_4] : memref<1x768xf32, #tpu.memory_space<vmem>>, vector<1x768xf32>
    %cst = arith.constant 0.000000e+00 : f32
    %2 = vector.broadcast %cst : f32 to vector<2x768xf32>
    %cst_5 = arith.constant 0.000000e+00 : f32
    %3 = vector.broadcast %cst_5 : f32 to vector<2x768xf32>
    %c0_6 = arith.constant 0 : index
    %c0_7 = arith.constant 0 : index
    %c0_8 = arith.constant 0 : index
    %c0_9 = arith.constant 0 : index
    %4 = vector.load %arg1[%c0_6, %c0_7, %c0_8, %c0_9] : memref<2x16x16x768xbf16, #tpu.memory_space<vmem>>, vector<2x4x16x768xbf16>
    %cst_10 = arith.constant dense<0xFF80> : vector<2x16x768xbf16>
    %5 = vector.multi_reduction <maximumf>, %4, %cst_10 [1] : vector<2x4x16x768xbf16> to vector<2x16x768xbf16>
    %6 = arith.extf %5 : vector<2x16x768xbf16> to vector<2x16x768xf32>
    %7 = vector.extract_strided_slice %6 {offsets = [0, 0, 0], sizes = [2, 15, 768], strides = [1, 1, 1]} : vector<2x16x768xf32> to vector<2x15x768xf32>
    %8 = vector.extract_strided_slice %6 {offsets = [0, 1, 0], sizes = [2, 15, 768], strides = [1, 1, 1]} : vector<2x16x768xf32> to vector<2x15x768xf32>
    %9 = arith.maximumf %7, %8 : vector<2x15x768xf32>
    %10 = vector.extract_strided_slice %9 {offsets = [0, 0, 0], sizes = [2, 13, 768], strides = [1, 1, 1]} : vector<2x15x768xf32> to vector<2x13x768xf32>
    %11 = vector.extract_strided_slice %9 {offsets = [0, 2, 0], sizes = [2, 13, 768], strides = [1, 1, 1]} : vector<2x15x768xf32> to vector<2x13x768xf32>
    %12 = arith.maximumf %10, %11 : vector<2x13x768xf32>
    %13 = vector.extract_strided_slice %12 {offsets = [0, 0, 0], sizes = [2, 6, 768], strides = [1, 1, 1]} : vector<2x13x768xf32> to vector<2x6x768xf32>
    %14 = vector.extract_strided_slice %0 {offsets = [0, 0, 0, 0], sizes = [1, 1, 6, 768], strides = [1, 1, 1, 1]} : vector<2x4x6x768xf32> to vector<1x1x6x768xf32>
    %15 = vector.shape_cast %14 : vector<1x1x6x768xf32> to vector<6x768xf32>
    %16 = vector.shape_cast %15 : vector<6x768xf32> to vector<1x6x768xf32>
    %17 = vector.broadcast %16 : vector<1x6x768xf32> to vector<2x6x768xf32>
    %18 = arith.mulf %13, %17 : vector<2x6x768xf32>
    %cst_11 = arith.constant dense<0.000000e+00> : vector<2x768xf32>
    %19 = vector.multi_reduction <add>, %18, %cst_11 [1] : vector<2x6x768xf32> to vector<2x768xf32>
    %20 = arith.addf %2, %19 : vector<2x768xf32>
    %21 = vector.extract_strided_slice %12 {offsets = [0, 7, 0], sizes = [2, 6, 768], strides = [1, 1, 1]} : vector<2x13x768xf32> to vector<2x6x768xf32>
    %22 = vector.extract_strided_slice %0 {offsets = [1, 0, 0, 0], sizes = [1, 1, 6, 768], strides = [1, 1, 1, 1]} : vector<2x4x6x768xf32> to vector<1x1x6x768xf32>
    %23 = vector.shape_cast %22 : vector<1x1x6x768xf32> to vector<6x768xf32>
    %24 = vector.shape_cast %23 : vector<6x768xf32> to vector<1x6x768xf32>
    %25 = vector.broadcast %24 : vector<1x6x768xf32> to vector<2x6x768xf32>
    %26 = arith.mulf %21, %25 : vector<2x6x768xf32>
    %cst_12 = arith.constant dense<0.000000e+00> : vector<2x768xf32>
    %27 = vector.multi_reduction <add>, %26, %cst_12 [1] : vector<2x6x768xf32> to vector<2x768xf32>
    %28 = arith.addf %3, %27 : vector<2x768xf32>
    %c0_13 = arith.constant 0 : index
    %c2 = arith.constant 2 : index
    %c0_14 = arith.constant 0 : index
    %c0_15 = arith.constant 0 : index
    %29 = vector.load %arg1[%c0_13, %c2, %c0_14, %c0_15] : memref<2x16x16x768xbf16, #tpu.memory_space<vmem>>, vector<2x4x16x768xbf16>
    %cst_16 = arith.constant dense<0xFF80> : vector<2x16x768xbf16>
    %30 = vector.multi_reduction <maximumf>, %29, %cst_16 [1] : vector<2x4x16x768xbf16> to vector<2x16x768xbf16>
    %31 = arith.extf %30 : vector<2x16x768xbf16> to vector<2x16x768xf32>
    %32 = vector.extract_strided_slice %31 {offsets = [0, 0, 0], sizes = [2, 15, 768], strides = [1, 1, 1]} : vector<2x16x768xf32> to vector<2x15x768xf32>
    %33 = vector.extract_strided_slice %31 {offsets = [0, 1, 0], sizes = [2, 15, 768], strides = [1, 1, 1]} : vector<2x16x768xf32> to vector<2x15x768xf32>
    %34 = arith.maximumf %32, %33 : vector<2x15x768xf32>
    %35 = vector.extract_strided_slice %34 {offsets = [0, 0, 0], sizes = [2, 13, 768], strides = [1, 1, 1]} : vector<2x15x768xf32> to vector<2x13x768xf32>
    %36 = vector.extract_strided_slice %34 {offsets = [0, 2, 0], sizes = [2, 13, 768], strides = [1, 1, 1]} : vector<2x15x768xf32> to vector<2x13x768xf32>
    %37 = arith.maximumf %35, %36 : vector<2x13x768xf32>
    %38 = vector.extract_strided_slice %37 {offsets = [0, 0, 0], sizes = [2, 6, 768], strides = [1, 1, 1]} : vector<2x13x768xf32> to vector<2x6x768xf32>
    %39 = vector.extract_strided_slice %0 {offsets = [0, 1, 0, 0], sizes = [1, 1, 6, 768], strides = [1, 1, 1, 1]} : vector<2x4x6x768xf32> to vector<1x1x6x768xf32>
    %40 = vector.shape_cast %39 : vector<1x1x6x768xf32> to vector<6x768xf32>
    %41 = vector.shape_cast %40 : vector<6x768xf32> to vector<1x6x768xf32>
    %42 = vector.broadcast %41 : vector<1x6x768xf32> to vector<2x6x768xf32>
    %43 = arith.mulf %38, %42 : vector<2x6x768xf32>
    %cst_17 = arith.constant dense<0.000000e+00> : vector<2x768xf32>
    %44 = vector.multi_reduction <add>, %43, %cst_17 [1] : vector<2x6x768xf32> to vector<2x768xf32>
    %45 = arith.addf %20, %44 : vector<2x768xf32>
    %46 = vector.extract_strided_slice %37 {offsets = [0, 7, 0], sizes = [2, 6, 768], strides = [1, 1, 1]} : vector<2x13x768xf32> to vector<2x6x768xf32>
    %47 = vector.extract_strided_slice %0 {offsets = [1, 1, 0, 0], sizes = [1, 1, 6, 768], strides = [1, 1, 1, 1]} : vector<2x4x6x768xf32> to vector<1x1x6x768xf32>
    %48 = vector.shape_cast %47 : vector<1x1x6x768xf32> to vector<6x768xf32>
    %49 = vector.shape_cast %48 : vector<6x768xf32> to vector<1x6x768xf32>
    %50 = vector.broadcast %49 : vector<1x6x768xf32> to vector<2x6x768xf32>
    %51 = arith.mulf %46, %50 : vector<2x6x768xf32>
    %cst_18 = arith.constant dense<0.000000e+00> : vector<2x768xf32>
    %52 = vector.multi_reduction <add>, %51, %cst_18 [1] : vector<2x6x768xf32> to vector<2x768xf32>
    %53 = arith.addf %28, %52 : vector<2x768xf32>
    %c0_19 = arith.constant 0 : index
    %c3 = arith.constant 3 : index
    %c0_20 = arith.constant 0 : index
    %c0_21 = arith.constant 0 : index
    %54 = vector.load %arg1[%c0_19, %c3, %c0_20, %c0_21] : memref<2x16x16x768xbf16, #tpu.memory_space<vmem>>, vector<2x4x16x768xbf16>
    %cst_22 = arith.constant dense<0xFF80> : vector<2x16x768xbf16>
    %55 = vector.multi_reduction <maximumf>, %54, %cst_22 [1] : vector<2x4x16x768xbf16> to vector<2x16x768xbf16>
    %56 = arith.extf %55 : vector<2x16x768xbf16> to vector<2x16x768xf32>
    %57 = vector.extract_strided_slice %56 {offsets = [0, 0, 0], sizes = [2, 15, 768], strides = [1, 1, 1]} : vector<2x16x768xf32> to vector<2x15x768xf32>
    %58 = vector.extract_strided_slice %56 {offsets = [0, 1, 0], sizes = [2, 15, 768], strides = [1, 1, 1]} : vector<2x16x768xf32> to vector<2x15x768xf32>
    %59 = arith.maximumf %57, %58 : vector<2x15x768xf32>
    %60 = vector.extract_strided_slice %59 {offsets = [0, 0, 0], sizes = [2, 13, 768], strides = [1, 1, 1]} : vector<2x15x768xf32> to vector<2x13x768xf32>
    %61 = vector.extract_strided_slice %59 {offsets = [0, 2, 0], sizes = [2, 13, 768], strides = [1, 1, 1]} : vector<2x15x768xf32> to vector<2x13x768xf32>
    %62 = arith.maximumf %60, %61 : vector<2x13x768xf32>
    %63 = vector.extract_strided_slice %62 {offsets = [0, 0, 0], sizes = [2, 6, 768], strides = [1, 1, 1]} : vector<2x13x768xf32> to vector<2x6x768xf32>
    %64 = vector.extract_strided_slice %0 {offsets = [0, 2, 0, 0], sizes = [1, 1, 6, 768], strides = [1, 1, 1, 1]} : vector<2x4x6x768xf32> to vector<1x1x6x768xf32>
    %65 = vector.shape_cast %64 : vector<1x1x6x768xf32> to vector<6x768xf32>
    %66 = vector.shape_cast %65 : vector<6x768xf32> to vector<1x6x768xf32>
    %67 = vector.broadcast %66 : vector<1x6x768xf32> to vector<2x6x768xf32>
    %68 = arith.mulf %63, %67 : vector<2x6x768xf32>
    %cst_23 = arith.constant dense<0.000000e+00> : vector<2x768xf32>
    %69 = vector.multi_reduction <add>, %68, %cst_23 [1] : vector<2x6x768xf32> to vector<2x768xf32>
    %70 = arith.addf %45, %69 : vector<2x768xf32>
    %71 = vector.extract_strided_slice %62 {offsets = [0, 7, 0], sizes = [2, 6, 768], strides = [1, 1, 1]} : vector<2x13x768xf32> to vector<2x6x768xf32>
    %72 = vector.extract_strided_slice %0 {offsets = [1, 2, 0, 0], sizes = [1, 1, 6, 768], strides = [1, 1, 1, 1]} : vector<2x4x6x768xf32> to vector<1x1x6x768xf32>
    %73 = vector.shape_cast %72 : vector<1x1x6x768xf32> to vector<6x768xf32>
    %74 = vector.shape_cast %73 : vector<6x768xf32> to vector<1x6x768xf32>
    %75 = vector.broadcast %74 : vector<1x6x768xf32> to vector<2x6x768xf32>
    %76 = arith.mulf %71, %75 : vector<2x6x768xf32>
    %cst_24 = arith.constant dense<0.000000e+00> : vector<2x768xf32>
    %77 = vector.multi_reduction <add>, %76, %cst_24 [1] : vector<2x6x768xf32> to vector<2x768xf32>
    %78 = arith.addf %53, %77 : vector<2x768xf32>
    %c0_25 = arith.constant 0 : index
    %c5 = arith.constant 5 : index
    %c0_26 = arith.constant 0 : index
    %c0_27 = arith.constant 0 : index
    %79 = vector.load %arg1[%c0_25, %c5, %c0_26, %c0_27] : memref<2x16x16x768xbf16, #tpu.memory_space<vmem>>, vector<2x4x16x768xbf16>
    %cst_28 = arith.constant dense<0xFF80> : vector<2x16x768xbf16>
    %80 = vector.multi_reduction <maximumf>, %79, %cst_28 [1] : vector<2x4x16x768xbf16> to vector<2x16x768xbf16>
    %81 = arith.extf %80 : vector<2x16x768xbf16> to vector<2x16x768xf32>
    %82 = vector.extract_strided_slice %81 {offsets = [0, 0, 0], sizes = [2, 15, 768], strides = [1, 1, 1]} : vector<2x16x768xf32> to vector<2x15x768xf32>
    %83 = vector.extract_strided_slice %81 {offsets = [0, 1, 0], sizes = [2, 15, 768], strides = [1, 1, 1]} : vector<2x16x768xf32> to vector<2x15x768xf32>
    %84 = arith.maximumf %82, %83 : vector<2x15x768xf32>
    %85 = vector.extract_strided_slice %84 {offsets = [0, 0, 0], sizes = [2, 13, 768], strides = [1, 1, 1]} : vector<2x15x768xf32> to vector<2x13x768xf32>
    %86 = vector.extract_strided_slice %84 {offsets = [0, 2, 0], sizes = [2, 13, 768], strides = [1, 1, 1]} : vector<2x15x768xf32> to vector<2x13x768xf32>
    %87 = arith.maximumf %85, %86 : vector<2x13x768xf32>
    %88 = vector.extract_strided_slice %87 {offsets = [0, 0, 0], sizes = [2, 6, 768], strides = [1, 1, 1]} : vector<2x13x768xf32> to vector<2x6x768xf32>
    %89 = vector.extract_strided_slice %0 {offsets = [0, 3, 0, 0], sizes = [1, 1, 6, 768], strides = [1, 1, 1, 1]} : vector<2x4x6x768xf32> to vector<1x1x6x768xf32>
    %90 = vector.shape_cast %89 : vector<1x1x6x768xf32> to vector<6x768xf32>
    %91 = vector.shape_cast %90 : vector<6x768xf32> to vector<1x6x768xf32>
    %92 = vector.broadcast %91 : vector<1x6x768xf32> to vector<2x6x768xf32>
    %93 = arith.mulf %88, %92 : vector<2x6x768xf32>
    %cst_29 = arith.constant dense<0.000000e+00> : vector<2x768xf32>
    %94 = vector.multi_reduction <add>, %93, %cst_29 [1] : vector<2x6x768xf32> to vector<2x768xf32>
    %95 = arith.addf %70, %94 : vector<2x768xf32>
    %96 = vector.extract_strided_slice %87 {offsets = [0, 7, 0], sizes = [2, 6, 768], strides = [1, 1, 1]} : vector<2x13x768xf32> to vector<2x6x768xf32>
    %97 = vector.extract_strided_slice %0 {offsets = [1, 3, 0, 0], sizes = [1, 1, 6, 768], strides = [1, 1, 1, 1]} : vector<2x4x6x768xf32> to vector<1x1x6x768xf32>
    %98 = vector.shape_cast %97 : vector<1x1x6x768xf32> to vector<6x768xf32>
    %99 = vector.shape_cast %98 : vector<6x768xf32> to vector<1x6x768xf32>
    %100 = vector.broadcast %99 : vector<1x6x768xf32> to vector<2x6x768xf32>
    %101 = arith.mulf %96, %100 : vector<2x6x768xf32>
    %cst_30 = arith.constant dense<0.000000e+00> : vector<2x768xf32>
    %102 = vector.multi_reduction <add>, %101, %cst_30 [1] : vector<2x6x768xf32> to vector<2x768xf32>
    %103 = arith.addf %78, %102 : vector<2x768xf32>
    %104 = vector.broadcast %1 : vector<1x768xf32> to vector<2x768xf32>
    %105 = arith.addf %95, %104 : vector<2x768xf32>
    %cst_31 = arith.constant 5.000000e-01 : f32
    %106 = vector.broadcast %cst_31 : f32 to vector<2x768xf32>
    %107 = arith.mulf %106, %105 : vector<2x768xf32>
    %cst_32 = arith.constant 0.707106769 : f32
    %108 = vector.broadcast %cst_32 : f32 to vector<2x768xf32>
    %109 = arith.mulf %105, %108 : vector<2x768xf32>
    %110 = math.absf %109 : vector<2x768xf32>
    %cst_33 = arith.constant 0.327591091 : f32
    %111 = vector.broadcast %cst_33 : f32 to vector<2x768xf32>
    %112 = arith.mulf %111, %110 : vector<2x768xf32>
    %cst_34 = arith.constant 1.000000e+00 : f32
    %113 = vector.broadcast %cst_34 : f32 to vector<2x768xf32>
    %114 = arith.addf %113, %112 : vector<2x768xf32>
    %115 = tpu.reciprocal %114 {approx = true} : vector<2x768xf32> -> vector<2x768xf32>
    %cst_35 = arith.constant 1.06140542 : f32
    %116 = vector.broadcast %cst_35 : f32 to vector<2x768xf32>
    %117 = arith.mulf %115, %116 : vector<2x768xf32>
    %cst_36 = arith.constant -1.45315206 : f32
    %118 = vector.broadcast %cst_36 : f32 to vector<2x768xf32>
    %119 = arith.addf %118, %117 : vector<2x768xf32>
    %120 = arith.mulf %115, %119 : vector<2x768xf32>
    %cst_37 = arith.constant 1.42141378 : f32
    %121 = vector.broadcast %cst_37 : f32 to vector<2x768xf32>
    %122 = arith.addf %121, %120 : vector<2x768xf32>
    %123 = arith.mulf %115, %122 : vector<2x768xf32>
    %cst_38 = arith.constant -0.284496725 : f32
    %124 = vector.broadcast %cst_38 : f32 to vector<2x768xf32>
    %125 = arith.addf %124, %123 : vector<2x768xf32>
    %126 = arith.mulf %115, %125 : vector<2x768xf32>
    %cst_39 = arith.constant 0.254829586 : f32
    %127 = vector.broadcast %cst_39 : f32 to vector<2x768xf32>
    %128 = arith.addf %127, %126 : vector<2x768xf32>
    %129 = arith.mulf %115, %128 : vector<2x768xf32>
    %cst_40 = arith.constant 0.000000e+00 : f32
    %130 = vector.broadcast %cst_40 : f32 to vector<2x768xf32>
    %131 = arith.subf %130, %110 : vector<2x768xf32>
    %132 = arith.mulf %131, %110 : vector<2x768xf32>
    %133 = math.exp %132 : vector<2x768xf32>
    %134 = arith.mulf %129, %133 : vector<2x768xf32>
    %cst_41 = arith.constant 1.000000e+00 : f32
    %135 = vector.broadcast %cst_41 : f32 to vector<2x768xf32>
    %136 = arith.subf %135, %134 : vector<2x768xf32>
    %cst_42 = arith.constant 0.000000e+00 : f32
    %137 = vector.broadcast %cst_42 : f32 to vector<2x768xf32>
    %138 = arith.cmpf oge, %109, %137 : vector<2x768xf32>
    %cst_43 = arith.constant 0.000000e+00 : f32
    %139 = vector.broadcast %cst_43 : f32 to vector<2x768xf32>
    %140 = arith.subf %139, %136 : vector<2x768xf32>
    %141 = arith.select %138, %136, %140 : vector<2x768xi1>, vector<2x768xf32>
    %cst_44 = arith.constant 1.000000e+00 : f32
    %142 = vector.broadcast %cst_44 : f32 to vector<2x768xf32>
    %143 = arith.addf %142, %141 : vector<2x768xf32>
    %144 = arith.mulf %107, %143 : vector<2x768xf32>
    %145 = vector.broadcast %1 : vector<1x768xf32> to vector<2x768xf32>
    %146 = arith.addf %103, %145 : vector<2x768xf32>
    %cst_45 = arith.constant 5.000000e-01 : f32
    %147 = vector.broadcast %cst_45 : f32 to vector<2x768xf32>
    %148 = arith.mulf %147, %146 : vector<2x768xf32>
    %cst_46 = arith.constant 0.707106769 : f32
    %149 = vector.broadcast %cst_46 : f32 to vector<2x768xf32>
    %150 = arith.mulf %146, %149 : vector<2x768xf32>
    %151 = math.absf %150 : vector<2x768xf32>
    %cst_47 = arith.constant 0.327591091 : f32
    %152 = vector.broadcast %cst_47 : f32 to vector<2x768xf32>
    %153 = arith.mulf %152, %151 : vector<2x768xf32>
    %cst_48 = arith.constant 1.000000e+00 : f32
    %154 = vector.broadcast %cst_48 : f32 to vector<2x768xf32>
    %155 = arith.addf %154, %153 : vector<2x768xf32>
    %156 = tpu.reciprocal %155 {approx = true} : vector<2x768xf32> -> vector<2x768xf32>
    %cst_49 = arith.constant 1.06140542 : f32
    %157 = vector.broadcast %cst_49 : f32 to vector<2x768xf32>
    %158 = arith.mulf %156, %157 : vector<2x768xf32>
    %cst_50 = arith.constant -1.45315206 : f32
    %159 = vector.broadcast %cst_50 : f32 to vector<2x768xf32>
    %160 = arith.addf %159, %158 : vector<2x768xf32>
    %161 = arith.mulf %156, %160 : vector<2x768xf32>
    %cst_51 = arith.constant 1.42141378 : f32
    %162 = vector.broadcast %cst_51 : f32 to vector<2x768xf32>
    %163 = arith.addf %162, %161 : vector<2x768xf32>
    %164 = arith.mulf %156, %163 : vector<2x768xf32>
    %cst_52 = arith.constant -0.284496725 : f32
    %165 = vector.broadcast %cst_52 : f32 to vector<2x768xf32>
    %166 = arith.addf %165, %164 : vector<2x768xf32>
    %167 = arith.mulf %156, %166 : vector<2x768xf32>
    %cst_53 = arith.constant 0.254829586 : f32
    %168 = vector.broadcast %cst_53 : f32 to vector<2x768xf32>
    %169 = arith.addf %168, %167 : vector<2x768xf32>
    %170 = arith.mulf %156, %169 : vector<2x768xf32>
    %cst_54 = arith.constant 0.000000e+00 : f32
    %171 = vector.broadcast %cst_54 : f32 to vector<2x768xf32>
    %172 = arith.subf %171, %151 : vector<2x768xf32>
    %173 = arith.mulf %172, %151 : vector<2x768xf32>
    %174 = math.exp %173 : vector<2x768xf32>
    %175 = arith.mulf %170, %174 : vector<2x768xf32>
    %cst_55 = arith.constant 1.000000e+00 : f32
    %176 = vector.broadcast %cst_55 : f32 to vector<2x768xf32>
    %177 = arith.subf %176, %175 : vector<2x768xf32>
    %cst_56 = arith.constant 0.000000e+00 : f32
    %178 = vector.broadcast %cst_56 : f32 to vector<2x768xf32>
    %179 = arith.cmpf oge, %150, %178 : vector<2x768xf32>
    %cst_57 = arith.constant 0.000000e+00 : f32
    %180 = vector.broadcast %cst_57 : f32 to vector<2x768xf32>
    %181 = arith.subf %180, %177 : vector<2x768xf32>
    %182 = arith.select %179, %177, %181 : vector<2x768xi1>, vector<2x768xf32>
    %cst_58 = arith.constant 1.000000e+00 : f32
    %183 = vector.broadcast %cst_58 : f32 to vector<2x768xf32>
    %184 = arith.addf %183, %182 : vector<2x768xf32>
    %185 = arith.mulf %148, %184 : vector<2x768xf32>
    %cst_59 = arith.constant 0.000000e+00 : f32
    %186 = vector.broadcast %cst_59 : f32 to vector<2x768xf32>
    %cst_60 = arith.constant 0.000000e+00 : f32
    %187 = vector.broadcast %cst_60 : f32 to vector<2x768xf32>
    %c0_61 = arith.constant 0 : index
    %c7 = arith.constant 7 : index
    %c0_62 = arith.constant 0 : index
    %c0_63 = arith.constant 0 : index
    %188 = vector.load %arg1[%c0_61, %c7, %c0_62, %c0_63] : memref<2x16x16x768xbf16, #tpu.memory_space<vmem>>, vector<2x4x16x768xbf16>
    %cst_64 = arith.constant dense<0xFF80> : vector<2x16x768xbf16>
    %189 = vector.multi_reduction <maximumf>, %188, %cst_64 [1] : vector<2x4x16x768xbf16> to vector<2x16x768xbf16>
    %190 = arith.extf %189 : vector<2x16x768xbf16> to vector<2x16x768xf32>
    %191 = vector.extract_strided_slice %190 {offsets = [0, 0, 0], sizes = [2, 15, 768], strides = [1, 1, 1]} : vector<2x16x768xf32> to vector<2x15x768xf32>
    %192 = vector.extract_strided_slice %190 {offsets = [0, 1, 0], sizes = [2, 15, 768], strides = [1, 1, 1]} : vector<2x16x768xf32> to vector<2x15x768xf32>
    %193 = arith.maximumf %191, %192 : vector<2x15x768xf32>
    %194 = vector.extract_strided_slice %193 {offsets = [0, 0, 0], sizes = [2, 13, 768], strides = [1, 1, 1]} : vector<2x15x768xf32> to vector<2x13x768xf32>
    %195 = vector.extract_strided_slice %193 {offsets = [0, 2, 0], sizes = [2, 13, 768], strides = [1, 1, 1]} : vector<2x15x768xf32> to vector<2x13x768xf32>
    %196 = arith.maximumf %194, %195 : vector<2x13x768xf32>
    %197 = vector.extract_strided_slice %196 {offsets = [0, 0, 0], sizes = [2, 6, 768], strides = [1, 1, 1]} : vector<2x13x768xf32> to vector<2x6x768xf32>
    %198 = vector.extract_strided_slice %0 {offsets = [0, 0, 0, 0], sizes = [1, 1, 6, 768], strides = [1, 1, 1, 1]} : vector<2x4x6x768xf32> to vector<1x1x6x768xf32>
    %199 = vector.shape_cast %198 : vector<1x1x6x768xf32> to vector<6x768xf32>
    %200 = vector.shape_cast %199 : vector<6x768xf32> to vector<1x6x768xf32>
    %201 = vector.broadcast %200 : vector<1x6x768xf32> to vector<2x6x768xf32>
    %202 = arith.mulf %197, %201 : vector<2x6x768xf32>
    %cst_65 = arith.constant dense<0.000000e+00> : vector<2x768xf32>
    %203 = vector.multi_reduction <add>, %202, %cst_65 [1] : vector<2x6x768xf32> to vector<2x768xf32>
    %204 = arith.addf %186, %203 : vector<2x768xf32>
    %205 = vector.extract_strided_slice %196 {offsets = [0, 7, 0], sizes = [2, 6, 768], strides = [1, 1, 1]} : vector<2x13x768xf32> to vector<2x6x768xf32>
    %206 = vector.extract_strided_slice %0 {offsets = [1, 0, 0, 0], sizes = [1, 1, 6, 768], strides = [1, 1, 1, 1]} : vector<2x4x6x768xf32> to vector<1x1x6x768xf32>
    %207 = vector.shape_cast %206 : vector<1x1x6x768xf32> to vector<6x768xf32>
    %208 = vector.shape_cast %207 : vector<6x768xf32> to vector<1x6x768xf32>
    %209 = vector.broadcast %208 : vector<1x6x768xf32> to vector<2x6x768xf32>
    %210 = arith.mulf %205, %209 : vector<2x6x768xf32>
    %cst_66 = arith.constant dense<0.000000e+00> : vector<2x768xf32>
    %211 = vector.multi_reduction <add>, %210, %cst_66 [1] : vector<2x6x768xf32> to vector<2x768xf32>
    %212 = arith.addf %187, %211 : vector<2x768xf32>
    %c0_67 = arith.constant 0 : index
    %c9 = arith.constant 9 : index
    %c0_68 = arith.constant 0 : index
    %c0_69 = arith.constant 0 : index
    %213 = vector.load %arg1[%c0_67, %c9, %c0_68, %c0_69] : memref<2x16x16x768xbf16, #tpu.memory_space<vmem>>, vector<2x4x16x768xbf16>
    %cst_70 = arith.constant dense<0xFF80> : vector<2x16x768xbf16>
    %214 = vector.multi_reduction <maximumf>, %213, %cst_70 [1] : vector<2x4x16x768xbf16> to vector<2x16x768xbf16>
    %215 = arith.extf %214 : vector<2x16x768xbf16> to vector<2x16x768xf32>
    %216 = vector.extract_strided_slice %215 {offsets = [0, 0, 0], sizes = [2, 15, 768], strides = [1, 1, 1]} : vector<2x16x768xf32> to vector<2x15x768xf32>
    %217 = vector.extract_strided_slice %215 {offsets = [0, 1, 0], sizes = [2, 15, 768], strides = [1, 1, 1]} : vector<2x16x768xf32> to vector<2x15x768xf32>
    %218 = arith.maximumf %216, %217 : vector<2x15x768xf32>
    %219 = vector.extract_strided_slice %218 {offsets = [0, 0, 0], sizes = [2, 13, 768], strides = [1, 1, 1]} : vector<2x15x768xf32> to vector<2x13x768xf32>
    %220 = vector.extract_strided_slice %218 {offsets = [0, 2, 0], sizes = [2, 13, 768], strides = [1, 1, 1]} : vector<2x15x768xf32> to vector<2x13x768xf32>
    %221 = arith.maximumf %219, %220 : vector<2x13x768xf32>
    %222 = vector.extract_strided_slice %221 {offsets = [0, 0, 0], sizes = [2, 6, 768], strides = [1, 1, 1]} : vector<2x13x768xf32> to vector<2x6x768xf32>
    %223 = vector.extract_strided_slice %0 {offsets = [0, 1, 0, 0], sizes = [1, 1, 6, 768], strides = [1, 1, 1, 1]} : vector<2x4x6x768xf32> to vector<1x1x6x768xf32>
    %224 = vector.shape_cast %223 : vector<1x1x6x768xf32> to vector<6x768xf32>
    %225 = vector.shape_cast %224 : vector<6x768xf32> to vector<1x6x768xf32>
    %226 = vector.broadcast %225 : vector<1x6x768xf32> to vector<2x6x768xf32>
    %227 = arith.mulf %222, %226 : vector<2x6x768xf32>
    %cst_71 = arith.constant dense<0.000000e+00> : vector<2x768xf32>
    %228 = vector.multi_reduction <add>, %227, %cst_71 [1] : vector<2x6x768xf32> to vector<2x768xf32>
    %229 = arith.addf %204, %228 : vector<2x768xf32>
    %230 = vector.extract_strided_slice %221 {offsets = [0, 7, 0], sizes = [2, 6, 768], strides = [1, 1, 1]} : vector<2x13x768xf32> to vector<2x6x768xf32>
    %231 = vector.extract_strided_slice %0 {offsets = [1, 1, 0, 0], sizes = [1, 1, 6, 768], strides = [1, 1, 1, 1]} : vector<2x4x6x768xf32> to vector<1x1x6x768xf32>
    %232 = vector.shape_cast %231 : vector<1x1x6x768xf32> to vector<6x768xf32>
    %233 = vector.shape_cast %232 : vector<6x768xf32> to vector<1x6x768xf32>
    %234 = vector.broadcast %233 : vector<1x6x768xf32> to vector<2x6x768xf32>
    %235 = arith.mulf %230, %234 : vector<2x6x768xf32>
    %cst_72 = arith.constant dense<0.000000e+00> : vector<2x768xf32>
    %236 = vector.multi_reduction <add>, %235, %cst_72 [1] : vector<2x6x768xf32> to vector<2x768xf32>
    %237 = arith.addf %212, %236 : vector<2x768xf32>
    %c0_73 = arith.constant 0 : index
    %c10 = arith.constant 10 : index
    %c0_74 = arith.constant 0 : index
    %c0_75 = arith.constant 0 : index
    %238 = vector.load %arg1[%c0_73, %c10, %c0_74, %c0_75] : memref<2x16x16x768xbf16, #tpu.memory_space<vmem>>, vector<2x4x16x768xbf16>
    %cst_76 = arith.constant dense<0xFF80> : vector<2x16x768xbf16>
    %239 = vector.multi_reduction <maximumf>, %238, %cst_76 [1] : vector<2x4x16x768xbf16> to vector<2x16x768xbf16>
    %240 = arith.extf %239 : vector<2x16x768xbf16> to vector<2x16x768xf32>
    %241 = vector.extract_strided_slice %240 {offsets = [0, 0, 0], sizes = [2, 15, 768], strides = [1, 1, 1]} : vector<2x16x768xf32> to vector<2x15x768xf32>
    %242 = vector.extract_strided_slice %240 {offsets = [0, 1, 0], sizes = [2, 15, 768], strides = [1, 1, 1]} : vector<2x16x768xf32> to vector<2x15x768xf32>
    %243 = arith.maximumf %241, %242 : vector<2x15x768xf32>
    %244 = vector.extract_strided_slice %243 {offsets = [0, 0, 0], sizes = [2, 13, 768], strides = [1, 1, 1]} : vector<2x15x768xf32> to vector<2x13x768xf32>
    %245 = vector.extract_strided_slice %243 {offsets = [0, 2, 0], sizes = [2, 13, 768], strides = [1, 1, 1]} : vector<2x15x768xf32> to vector<2x13x768xf32>
    %246 = arith.maximumf %244, %245 : vector<2x13x768xf32>
    %247 = vector.extract_strided_slice %246 {offsets = [0, 0, 0], sizes = [2, 6, 768], strides = [1, 1, 1]} : vector<2x13x768xf32> to vector<2x6x768xf32>
    %248 = vector.extract_strided_slice %0 {offsets = [0, 2, 0, 0], sizes = [1, 1, 6, 768], strides = [1, 1, 1, 1]} : vector<2x4x6x768xf32> to vector<1x1x6x768xf32>
    %249 = vector.shape_cast %248 : vector<1x1x6x768xf32> to vector<6x768xf32>
    %250 = vector.shape_cast %249 : vector<6x768xf32> to vector<1x6x768xf32>
    %251 = vector.broadcast %250 : vector<1x6x768xf32> to vector<2x6x768xf32>
    %252 = arith.mulf %247, %251 : vector<2x6x768xf32>
    %cst_77 = arith.constant dense<0.000000e+00> : vector<2x768xf32>
    %253 = vector.multi_reduction <add>, %252, %cst_77 [1] : vector<2x6x768xf32> to vector<2x768xf32>
    %254 = arith.addf %229, %253 : vector<2x768xf32>
    %255 = vector.extract_strided_slice %246 {offsets = [0, 7, 0], sizes = [2, 6, 768], strides = [1, 1, 1]} : vector<2x13x768xf32> to vector<2x6x768xf32>
    %256 = vector.extract_strided_slice %0 {offsets = [1, 2, 0, 0], sizes = [1, 1, 6, 768], strides = [1, 1, 1, 1]} : vector<2x4x6x768xf32> to vector<1x1x6x768xf32>
    %257 = vector.shape_cast %256 : vector<1x1x6x768xf32> to vector<6x768xf32>
    %258 = vector.shape_cast %257 : vector<6x768xf32> to vector<1x6x768xf32>
    %259 = vector.broadcast %258 : vector<1x6x768xf32> to vector<2x6x768xf32>
    %260 = arith.mulf %255, %259 : vector<2x6x768xf32>
    %cst_78 = arith.constant dense<0.000000e+00> : vector<2x768xf32>
    %261 = vector.multi_reduction <add>, %260, %cst_78 [1] : vector<2x6x768xf32> to vector<2x768xf32>
    %262 = arith.addf %237, %261 : vector<2x768xf32>
    %c0_79 = arith.constant 0 : index
    %c12 = arith.constant 12 : index
    %c0_80 = arith.constant 0 : index
    %c0_81 = arith.constant 0 : index
    %263 = vector.load %arg1[%c0_79, %c12, %c0_80, %c0_81] : memref<2x16x16x768xbf16, #tpu.memory_space<vmem>>, vector<2x4x16x768xbf16>
    %cst_82 = arith.constant dense<0xFF80> : vector<2x16x768xbf16>
    %264 = vector.multi_reduction <maximumf>, %263, %cst_82 [1] : vector<2x4x16x768xbf16> to vector<2x16x768xbf16>
    %265 = arith.extf %264 : vector<2x16x768xbf16> to vector<2x16x768xf32>
    %266 = vector.extract_strided_slice %265 {offsets = [0, 0, 0], sizes = [2, 15, 768], strides = [1, 1, 1]} : vector<2x16x768xf32> to vector<2x15x768xf32>
    %267 = vector.extract_strided_slice %265 {offsets = [0, 1, 0], sizes = [2, 15, 768], strides = [1, 1, 1]} : vector<2x16x768xf32> to vector<2x15x768xf32>
    %268 = arith.maximumf %266, %267 : vector<2x15x768xf32>
    %269 = vector.extract_strided_slice %268 {offsets = [0, 0, 0], sizes = [2, 13, 768], strides = [1, 1, 1]} : vector<2x15x768xf32> to vector<2x13x768xf32>
    %270 = vector.extract_strided_slice %268 {offsets = [0, 2, 0], sizes = [2, 13, 768], strides = [1, 1, 1]} : vector<2x15x768xf32> to vector<2x13x768xf32>
    %271 = arith.maximumf %269, %270 : vector<2x13x768xf32>
    %272 = vector.extract_strided_slice %271 {offsets = [0, 0, 0], sizes = [2, 6, 768], strides = [1, 1, 1]} : vector<2x13x768xf32> to vector<2x6x768xf32>
    %273 = vector.extract_strided_slice %0 {offsets = [0, 3, 0, 0], sizes = [1, 1, 6, 768], strides = [1, 1, 1, 1]} : vector<2x4x6x768xf32> to vector<1x1x6x768xf32>
    %274 = vector.shape_cast %273 : vector<1x1x6x768xf32> to vector<6x768xf32>
    %275 = vector.shape_cast %274 : vector<6x768xf32> to vector<1x6x768xf32>
    %276 = vector.broadcast %275 : vector<1x6x768xf32> to vector<2x6x768xf32>
    %277 = arith.mulf %272, %276 : vector<2x6x768xf32>
    %cst_83 = arith.constant dense<0.000000e+00> : vector<2x768xf32>
    %278 = vector.multi_reduction <add>, %277, %cst_83 [1] : vector<2x6x768xf32> to vector<2x768xf32>
    %279 = arith.addf %254, %278 : vector<2x768xf32>
    %280 = vector.extract_strided_slice %271 {offsets = [0, 7, 0], sizes = [2, 6, 768], strides = [1, 1, 1]} : vector<2x13x768xf32> to vector<2x6x768xf32>
    %281 = vector.extract_strided_slice %0 {offsets = [1, 3, 0, 0], sizes = [1, 1, 6, 768], strides = [1, 1, 1, 1]} : vector<2x4x6x768xf32> to vector<1x1x6x768xf32>
    %282 = vector.shape_cast %281 : vector<1x1x6x768xf32> to vector<6x768xf32>
    %283 = vector.shape_cast %282 : vector<6x768xf32> to vector<1x6x768xf32>
    %284 = vector.broadcast %283 : vector<1x6x768xf32> to vector<2x6x768xf32>
    %285 = arith.mulf %280, %284 : vector<2x6x768xf32>
    %cst_84 = arith.constant dense<0.000000e+00> : vector<2x768xf32>
    %286 = vector.multi_reduction <add>, %285, %cst_84 [1] : vector<2x6x768xf32> to vector<2x768xf32>
    %287 = arith.addf %262, %286 : vector<2x768xf32>
    %288 = vector.broadcast %1 : vector<1x768xf32> to vector<2x768xf32>
    %289 = arith.addf %279, %288 : vector<2x768xf32>
    %cst_85 = arith.constant 5.000000e-01 : f32
    %290 = vector.broadcast %cst_85 : f32 to vector<2x768xf32>
    %291 = arith.mulf %290, %289 : vector<2x768xf32>
    %cst_86 = arith.constant 0.707106769 : f32
    %292 = vector.broadcast %cst_86 : f32 to vector<2x768xf32>
    %293 = arith.mulf %289, %292 : vector<2x768xf32>
    %294 = math.absf %293 : vector<2x768xf32>
    %cst_87 = arith.constant 0.327591091 : f32
    %295 = vector.broadcast %cst_87 : f32 to vector<2x768xf32>
    %296 = arith.mulf %295, %294 : vector<2x768xf32>
    %cst_88 = arith.constant 1.000000e+00 : f32
    %297 = vector.broadcast %cst_88 : f32 to vector<2x768xf32>
    %298 = arith.addf %297, %296 : vector<2x768xf32>
    %299 = tpu.reciprocal %298 {approx = true} : vector<2x768xf32> -> vector<2x768xf32>
    %cst_89 = arith.constant 1.06140542 : f32
    %300 = vector.broadcast %cst_89 : f32 to vector<2x768xf32>
    %301 = arith.mulf %299, %300 : vector<2x768xf32>
    %cst_90 = arith.constant -1.45315206 : f32
    %302 = vector.broadcast %cst_90 : f32 to vector<2x768xf32>
    %303 = arith.addf %302, %301 : vector<2x768xf32>
    %304 = arith.mulf %299, %303 : vector<2x768xf32>
    %cst_91 = arith.constant 1.42141378 : f32
    %305 = vector.broadcast %cst_91 : f32 to vector<2x768xf32>
    %306 = arith.addf %305, %304 : vector<2x768xf32>
    %307 = arith.mulf %299, %306 : vector<2x768xf32>
    %cst_92 = arith.constant -0.284496725 : f32
    %308 = vector.broadcast %cst_92 : f32 to vector<2x768xf32>
    %309 = arith.addf %308, %307 : vector<2x768xf32>
    %310 = arith.mulf %299, %309 : vector<2x768xf32>
    %cst_93 = arith.constant 0.254829586 : f32
    %311 = vector.broadcast %cst_93 : f32 to vector<2x768xf32>
    %312 = arith.addf %311, %310 : vector<2x768xf32>
    %313 = arith.mulf %299, %312 : vector<2x768xf32>
    %cst_94 = arith.constant 0.000000e+00 : f32
    %314 = vector.broadcast %cst_94 : f32 to vector<2x768xf32>
    %315 = arith.subf %314, %294 : vector<2x768xf32>
    %316 = arith.mulf %315, %294 : vector<2x768xf32>
    %317 = math.exp %316 : vector<2x768xf32>
    %318 = arith.mulf %313, %317 : vector<2x768xf32>
    %cst_95 = arith.constant 1.000000e+00 : f32
    %319 = vector.broadcast %cst_95 : f32 to vector<2x768xf32>
    %320 = arith.subf %319, %318 : vector<2x768xf32>
    %cst_96 = arith.constant 0.000000e+00 : f32
    %321 = vector.broadcast %cst_96 : f32 to vector<2x768xf32>
    %322 = arith.cmpf oge, %293, %321 : vector<2x768xf32>
    %cst_97 = arith.constant 0.000000e+00 : f32
    %323 = vector.broadcast %cst_97 : f32 to vector<2x768xf32>
    %324 = arith.subf %323, %320 : vector<2x768xf32>
    %325 = arith.select %322, %320, %324 : vector<2x768xi1>, vector<2x768xf32>
    %cst_98 = arith.constant 1.000000e+00 : f32
    %326 = vector.broadcast %cst_98 : f32 to vector<2x768xf32>
    %327 = arith.addf %326, %325 : vector<2x768xf32>
    %328 = arith.mulf %291, %327 : vector<2x768xf32>
    %329 = vector.broadcast %1 : vector<1x768xf32> to vector<2x768xf32>
    %330 = arith.addf %287, %329 : vector<2x768xf32>
    %cst_99 = arith.constant 5.000000e-01 : f32
    %331 = vector.broadcast %cst_99 : f32 to vector<2x768xf32>
    %332 = arith.mulf %331, %330 : vector<2x768xf32>
    %cst_100 = arith.constant 0.707106769 : f32
    %333 = vector.broadcast %cst_100 : f32 to vector<2x768xf32>
    %334 = arith.mulf %330, %333 : vector<2x768xf32>
    %335 = math.absf %334 : vector<2x768xf32>
    %cst_101 = arith.constant 0.327591091 : f32
    %336 = vector.broadcast %cst_101 : f32 to vector<2x768xf32>
    %337 = arith.mulf %336, %335 : vector<2x768xf32>
    %cst_102 = arith.constant 1.000000e+00 : f32
    %338 = vector.broadcast %cst_102 : f32 to vector<2x768xf32>
    %339 = arith.addf %338, %337 : vector<2x768xf32>
    %340 = tpu.reciprocal %339 {approx = true} : vector<2x768xf32> -> vector<2x768xf32>
    %cst_103 = arith.constant 1.06140542 : f32
    %341 = vector.broadcast %cst_103 : f32 to vector<2x768xf32>
    %342 = arith.mulf %340, %341 : vector<2x768xf32>
    %cst_104 = arith.constant -1.45315206 : f32
    %343 = vector.broadcast %cst_104 : f32 to vector<2x768xf32>
    %344 = arith.addf %343, %342 : vector<2x768xf32>
    %345 = arith.mulf %340, %344 : vector<2x768xf32>
    %cst_105 = arith.constant 1.42141378 : f32
    %346 = vector.broadcast %cst_105 : f32 to vector<2x768xf32>
    %347 = arith.addf %346, %345 : vector<2x768xf32>
    %348 = arith.mulf %340, %347 : vector<2x768xf32>
    %cst_106 = arith.constant -0.284496725 : f32
    %349 = vector.broadcast %cst_106 : f32 to vector<2x768xf32>
    %350 = arith.addf %349, %348 : vector<2x768xf32>
    %351 = arith.mulf %340, %350 : vector<2x768xf32>
    %cst_107 = arith.constant 0.254829586 : f32
    %352 = vector.broadcast %cst_107 : f32 to vector<2x768xf32>
    %353 = arith.addf %352, %351 : vector<2x768xf32>
    %354 = arith.mulf %340, %353 : vector<2x768xf32>
    %cst_108 = arith.constant 0.000000e+00 : f32
    %355 = vector.broadcast %cst_108 : f32 to vector<2x768xf32>
    %356 = arith.subf %355, %335 : vector<2x768xf32>
    %357 = arith.mulf %356, %335 : vector<2x768xf32>
    %358 = math.exp %357 : vector<2x768xf32>
    %359 = arith.mulf %354, %358 : vector<2x768xf32>
    %cst_109 = arith.constant 1.000000e+00 : f32
    %360 = vector.broadcast %cst_109 : f32 to vector<2x768xf32>
    %361 = arith.subf %360, %359 : vector<2x768xf32>
    %cst_110 = arith.constant 0.000000e+00 : f32
    %362 = vector.broadcast %cst_110 : f32 to vector<2x768xf32>
    %363 = arith.cmpf oge, %334, %362 : vector<2x768xf32>
    %cst_111 = arith.constant 0.000000e+00 : f32
    %364 = vector.broadcast %cst_111 : f32 to vector<2x768xf32>
    %365 = arith.subf %364, %361 : vector<2x768xf32>
    %366 = arith.select %363, %361, %365 : vector<2x768xi1>, vector<2x768xf32>
    %cst_112 = arith.constant 1.000000e+00 : f32
    %367 = vector.broadcast %cst_112 : f32 to vector<2x768xf32>
    %368 = arith.addf %367, %366 : vector<2x768xf32>
    %369 = arith.mulf %332, %368 : vector<2x768xf32>
    %370 = arith.maximumf %144, %185 : vector<2x768xf32>
    %371 = arith.maximumf %328, %369 : vector<2x768xf32>
    %372 = arith.maximumf %370, %371 : vector<2x768xf32>
    %c0_113 = arith.constant 0 : index
    %c0_114 = arith.constant 0 : index
    %c0_115 = arith.constant 0 : index
    %373 = vector.load %arg2[%c0_113, %c0_114, %c0_115] : memref<2x1x1xf32, #tpu.memory_space<vmem>>, vector<2x1x1xf32>
    %374 = vector.shape_cast %373 : vector<2x1x1xf32> to vector<2x1xf32>
    %375 = arith.truncf %372 : vector<2x768xf32> to vector<2x768xbf16>
    %c0_116 = arith.constant 0 : index
    %c0_117 = arith.constant 0 : index
    %376 = vector.load %arg5[%c0_116, %c0_117] : memref<768x800xbf16, #tpu.memory_space<vmem>>, vector<768x800xbf16>
    %cst_118 = arith.constant dense<0.000000e+00> : vector<2x800xf32>
    %377 = tpu.matmul %375, %376, %cst_118 {dimension_numbers = #tpu.dot_dimension_numbers<[1], [0], [0], [1], [0, 0, 1, 1], [], []>} : vector<2x768xbf16>, vector<768x800xbf16>, vector<2x800xf32> -> vector<2x800xf32>
    %c0_119 = arith.constant 0 : index
    %c0_120 = arith.constant 0 : index
    %378 = vector.load %arg6[%c0_119, %c0_120] : memref<1x800xf32, #tpu.memory_space<vmem>>, vector<1x800xf32>
    %379 = vector.broadcast %374 : vector<2x1xf32> to vector<2x800xf32>
    %380 = vector.broadcast %378 : vector<1x800xf32> to vector<2x800xf32>
    %381 = arith.mulf %379, %380 : vector<2x800xf32>
    %382 = arith.addf %377, %381 : vector<2x800xf32>
    %c0_121 = arith.constant 0 : index
    %c0_122 = arith.constant 0 : index
    %383 = vector.load %arg7[%c0_121, %c0_122] : memref<1x800xf32, #tpu.memory_space<vmem>>, vector<1x800xf32>
    %384 = vector.broadcast %383 : vector<1x800xf32> to vector<2x800xf32>
    %385 = arith.addf %382, %384 : vector<2x800xf32>
    %cst_123 = arith.constant 5.000000e-01 : f32
    %386 = vector.broadcast %cst_123 : f32 to vector<2x800xf32>
    %387 = arith.mulf %386, %385 : vector<2x800xf32>
    %cst_124 = arith.constant 0.707106769 : f32
    %388 = vector.broadcast %cst_124 : f32 to vector<2x800xf32>
    %389 = arith.mulf %385, %388 : vector<2x800xf32>
    %390 = math.absf %389 : vector<2x800xf32>
    %cst_125 = arith.constant 0.327591091 : f32
    %391 = vector.broadcast %cst_125 : f32 to vector<2x800xf32>
    %392 = arith.mulf %391, %390 : vector<2x800xf32>
    %cst_126 = arith.constant 1.000000e+00 : f32
    %393 = vector.broadcast %cst_126 : f32 to vector<2x800xf32>
    %394 = arith.addf %393, %392 : vector<2x800xf32>
    %395 = tpu.reciprocal %394 {approx = true} : vector<2x800xf32> -> vector<2x800xf32>
    %cst_127 = arith.constant 1.06140542 : f32
    %396 = vector.broadcast %cst_127 : f32 to vector<2x800xf32>
    %397 = arith.mulf %395, %396 : vector<2x800xf32>
    %cst_128 = arith.constant -1.45315206 : f32
    %398 = vector.broadcast %cst_128 : f32 to vector<2x800xf32>
    %399 = arith.addf %398, %397 : vector<2x800xf32>
    %400 = arith.mulf %395, %399 : vector<2x800xf32>
    %cst_129 = arith.constant 1.42141378 : f32
    %401 = vector.broadcast %cst_129 : f32 to vector<2x800xf32>
    %402 = arith.addf %401, %400 : vector<2x800xf32>
    %403 = arith.mulf %395, %402 : vector<2x800xf32>
    %cst_130 = arith.constant -0.284496725 : f32
    %404 = vector.broadcast %cst_130 : f32 to vector<2x800xf32>
    %405 = arith.addf %404, %403 : vector<2x800xf32>
    %406 = arith.mulf %395, %405 : vector<2x800xf32>
    %cst_131 = arith.constant 0.254829586 : f32
    %407 = vector.broadcast %cst_131 : f32 to vector<2x800xf32>
    %408 = arith.addf %407, %406 : vector<2x800xf32>
    %409 = arith.mulf %395, %408 : vector<2x800xf32>
    %cst_132 = arith.constant 0.000000e+00 : f32
    %410 = vector.broadcast %cst_132 : f32 to vector<2x800xf32>
    %411 = arith.subf %410, %390 : vector<2x800xf32>
    %412 = arith.mulf %411, %390 : vector<2x800xf32>
    %413 = math.exp %412 : vector<2x800xf32>
    %414 = arith.mulf %409, %413 : vector<2x800xf32>
    %cst_133 = arith.constant 1.000000e+00 : f32
    %415 = vector.broadcast %cst_133 : f32 to vector<2x800xf32>
    %416 = arith.subf %415, %414 : vector<2x800xf32>
    %cst_134 = arith.constant 0.000000e+00 : f32
    %417 = vector.broadcast %cst_134 : f32 to vector<2x800xf32>
    %418 = arith.cmpf oge, %389, %417 : vector<2x800xf32>
    %cst_135 = arith.constant 0.000000e+00 : f32
    %419 = vector.broadcast %cst_135 : f32 to vector<2x800xf32>
    %420 = arith.subf %419, %416 : vector<2x800xf32>
    %421 = arith.select %418, %416, %420 : vector<2x800xi1>, vector<2x800xf32>
    %cst_136 = arith.constant 1.000000e+00 : f32
    %422 = vector.broadcast %cst_136 : f32 to vector<2x800xf32>
    %423 = arith.addf %422, %421 : vector<2x800xf32>
    %424 = arith.mulf %387, %423 : vector<2x800xf32>
    %cst_137 = arith.constant dense<0.000000e+00> : vector<2xf32>
    %425 = vector.multi_reduction <add>, %424, %cst_137 [1] : vector<2x800xf32> to vector<2xf32>
    %426 = vector.shape_cast %425 : vector<2xf32> to vector<2x1xf32>
    %cst_138 = arith.constant 8.000000e+02 : f32
    %427 = vector.broadcast %cst_138 : f32 to vector<2x1xf32>
    %428 = arith.divf %426, %427 : vector<2x1xf32>
    %429 = vector.broadcast %428 : vector<2x1xf32> to vector<2x800xf32>
    %430 = arith.subf %424, %429 : vector<2x800xf32>
    %431 = arith.mulf %430, %430 : vector<2x800xf32>
    %cst_139 = arith.constant dense<0.000000e+00> : vector<2xf32>
    %432 = vector.multi_reduction <add>, %431, %cst_139 [1] : vector<2x800xf32> to vector<2xf32>
    %433 = vector.shape_cast %432 : vector<2xf32> to vector<2x1xf32>
    %cst_140 = arith.constant 8.000000e+02 : f32
    %434 = vector.broadcast %cst_140 : f32 to vector<2x1xf32>
    %435 = arith.divf %433, %434 : vector<2x1xf32>
    %cst_141 = arith.constant 9.99999974E-6 : f32
    %436 = vector.broadcast %cst_141 : f32 to vector<2x1xf32>
    %437 = arith.addf %435, %436 : vector<2x1xf32>
    %438 = math.rsqrt %437 : vector<2x1xf32>
    %439 = vector.broadcast %438 : vector<2x1xf32> to vector<2x800xf32>
    %440 = arith.mulf %430, %439 : vector<2x800xf32>
    %441 = arith.truncf %440 : vector<2x800xf32> to vector<2x800xbf16>
    %c0_142 = arith.constant 0 : index
    %c0_143 = arith.constant 0 : index
    %442 = vector.load %arg8[%c0_142, %c0_143] : memref<800x256xbf16, #tpu.memory_space<vmem>>, vector<800x256xbf16>
    %cst_144 = arith.constant dense<0.000000e+00> : vector<2x256xf32>
    %443 = tpu.matmul %441, %442, %cst_144 {dimension_numbers = #tpu.dot_dimension_numbers<[1], [0], [0], [1], [0, 0, 1, 1], [], []>} : vector<2x800xbf16>, vector<800x256xbf16>, vector<2x256xf32> -> vector<2x256xf32>
    %c0_145 = arith.constant 0 : index
    %c0_146 = arith.constant 0 : index
    %444 = vector.load %arg9[%c0_145, %c0_146] : memref<1x256xf32, #tpu.memory_space<vmem>>, vector<1x256xf32>
    %445 = vector.broadcast %444 : vector<1x256xf32> to vector<2x256xf32>
    %446 = arith.addf %443, %445 : vector<2x256xf32>
    %cst_147 = arith.constant 5.000000e-01 : f32
    %447 = vector.broadcast %cst_147 : f32 to vector<2x256xf32>
    %448 = arith.mulf %447, %446 : vector<2x256xf32>
    %cst_148 = arith.constant 0.707106769 : f32
    %449 = vector.broadcast %cst_148 : f32 to vector<2x256xf32>
    %450 = arith.mulf %446, %449 : vector<2x256xf32>
    %451 = math.absf %450 : vector<2x256xf32>
    %cst_149 = arith.constant 0.327591091 : f32
    %452 = vector.broadcast %cst_149 : f32 to vector<2x256xf32>
    %453 = arith.mulf %452, %451 : vector<2x256xf32>
    %cst_150 = arith.constant 1.000000e+00 : f32
    %454 = vector.broadcast %cst_150 : f32 to vector<2x256xf32>
    %455 = arith.addf %454, %453 : vector<2x256xf32>
    %456 = tpu.reciprocal %455 {approx = true} : vector<2x256xf32> -> vector<2x256xf32>
    %cst_151 = arith.constant 1.06140542 : f32
    %457 = vector.broadcast %cst_151 : f32 to vector<2x256xf32>
    %458 = arith.mulf %456, %457 : vector<2x256xf32>
    %cst_152 = arith.constant -1.45315206 : f32
    %459 = vector.broadcast %cst_152 : f32 to vector<2x256xf32>
    %460 = arith.addf %459, %458 : vector<2x256xf32>
    %461 = arith.mulf %456, %460 : vector<2x256xf32>
    %cst_153 = arith.constant 1.42141378 : f32
    %462 = vector.broadcast %cst_153 : f32 to vector<2x256xf32>
    %463 = arith.addf %462, %461 : vector<2x256xf32>
    %464 = arith.mulf %456, %463 : vector<2x256xf32>
    %cst_154 = arith.constant -0.284496725 : f32
    %465 = vector.broadcast %cst_154 : f32 to vector<2x256xf32>
    %466 = arith.addf %465, %464 : vector<2x256xf32>
    %467 = arith.mulf %456, %466 : vector<2x256xf32>
    %cst_155 = arith.constant 0.254829586 : f32
    %468 = vector.broadcast %cst_155 : f32 to vector<2x256xf32>
    %469 = arith.addf %468, %467 : vector<2x256xf32>
    %470 = arith.mulf %456, %469 : vector<2x256xf32>
    %cst_156 = arith.constant 0.000000e+00 : f32
    %471 = vector.broadcast %cst_156 : f32 to vector<2x256xf32>
    %472 = arith.subf %471, %451 : vector<2x256xf32>
    %473 = arith.mulf %472, %451 : vector<2x256xf32>
    %474 = math.exp %473 : vector<2x256xf32>
    %475 = arith.mulf %470, %474 : vector<2x256xf32>
    %cst_157 = arith.constant 1.000000e+00 : f32
    %476 = vector.broadcast %cst_157 : f32 to vector<2x256xf32>
    %477 = arith.subf %476, %475 : vector<2x256xf32>
    %cst_158 = arith.constant 0.000000e+00 : f32
    %478 = vector.broadcast %cst_158 : f32 to vector<2x256xf32>
    %479 = arith.cmpf oge, %450, %478 : vector<2x256xf32>
    %cst_159 = arith.constant 0.000000e+00 : f32
    %480 = vector.broadcast %cst_159 : f32 to vector<2x256xf32>
    %481 = arith.subf %480, %477 : vector<2x256xf32>
    %482 = arith.select %479, %477, %481 : vector<2x256xi1>, vector<2x256xf32>
    %cst_160 = arith.constant 1.000000e+00 : f32
    %483 = vector.broadcast %cst_160 : f32 to vector<2x256xf32>
    %484 = arith.addf %483, %482 : vector<2x256xf32>
    %485 = arith.mulf %448, %484 : vector<2x256xf32>
    %cst_161 = arith.constant dense<0.000000e+00> : vector<2xf32>
    %486 = vector.multi_reduction <add>, %485, %cst_161 [1] : vector<2x256xf32> to vector<2xf32>
    %487 = vector.shape_cast %486 : vector<2xf32> to vector<2x1xf32>
    %cst_162 = arith.constant 2.560000e+02 : f32
    %488 = vector.broadcast %cst_162 : f32 to vector<2x1xf32>
    %489 = arith.divf %487, %488 : vector<2x1xf32>
    %490 = vector.broadcast %489 : vector<2x1xf32> to vector<2x256xf32>
    %491 = arith.subf %485, %490 : vector<2x256xf32>
    %492 = arith.mulf %491, %491 : vector<2x256xf32>
    %cst_163 = arith.constant dense<0.000000e+00> : vector<2xf32>
    %493 = vector.multi_reduction <add>, %492, %cst_163 [1] : vector<2x256xf32> to vector<2xf32>
    %494 = vector.shape_cast %493 : vector<2xf32> to vector<2x1xf32>
    %cst_164 = arith.constant 2.560000e+02 : f32
    %495 = vector.broadcast %cst_164 : f32 to vector<2x1xf32>
    %496 = arith.divf %494, %495 : vector<2x1xf32>
    %cst_165 = arith.constant 9.99999974E-6 : f32
    %497 = vector.broadcast %cst_165 : f32 to vector<2x1xf32>
    %498 = arith.addf %496, %497 : vector<2x1xf32>
    %499 = math.rsqrt %498 : vector<2x1xf32>
    %500 = vector.broadcast %499 : vector<2x1xf32> to vector<2x256xf32>
    %501 = arith.mulf %491, %500 : vector<2x256xf32>
    %502 = arith.truncf %501 : vector<2x256xf32> to vector<2x256xbf16>
    %c0_166 = arith.constant 0 : index
    %c0_167 = arith.constant 0 : index
    %503 = vector.load %arg10[%c0_166, %c0_167] : memref<256x32xbf16, #tpu.memory_space<vmem>>, vector<256x32xbf16>
    %cst_168 = arith.constant dense<0.000000e+00> : vector<2x32xf32>
    %504 = tpu.matmul %502, %503, %cst_168 {dimension_numbers = #tpu.dot_dimension_numbers<[1], [0], [0], [1], [0, 0, 1, 1], [], []>} : vector<2x256xbf16>, vector<256x32xbf16>, vector<2x32xf32> -> vector<2x32xf32>
    %c0_169 = arith.constant 0 : index
    %c0_170 = arith.constant 0 : index
    %505 = vector.load %arg11[%c0_169, %c0_170] : memref<1x32xf32, #tpu.memory_space<vmem>>, vector<1x32xf32>
    %506 = vector.broadcast %505 : vector<1x32xf32> to vector<2x32xf32>
    %507 = arith.addf %504, %506 : vector<2x32xf32>
    %cst_171 = arith.constant 5.000000e-01 : f32
    %508 = vector.broadcast %cst_171 : f32 to vector<2x32xf32>
    %509 = arith.mulf %508, %507 : vector<2x32xf32>
    %cst_172 = arith.constant 0.707106769 : f32
    %510 = vector.broadcast %cst_172 : f32 to vector<2x32xf32>
    %511 = arith.mulf %507, %510 : vector<2x32xf32>
    %512 = math.absf %511 : vector<2x32xf32>
    %cst_173 = arith.constant 0.327591091 : f32
    %513 = vector.broadcast %cst_173 : f32 to vector<2x32xf32>
    %514 = arith.mulf %513, %512 : vector<2x32xf32>
    %cst_174 = arith.constant 1.000000e+00 : f32
    %515 = vector.broadcast %cst_174 : f32 to vector<2x32xf32>
    %516 = arith.addf %515, %514 : vector<2x32xf32>
    %517 = tpu.reciprocal %516 {approx = true} : vector<2x32xf32> -> vector<2x32xf32>
    %cst_175 = arith.constant 1.06140542 : f32
    %518 = vector.broadcast %cst_175 : f32 to vector<2x32xf32>
    %519 = arith.mulf %517, %518 : vector<2x32xf32>
    %cst_176 = arith.constant -1.45315206 : f32
    %520 = vector.broadcast %cst_176 : f32 to vector<2x32xf32>
    %521 = arith.addf %520, %519 : vector<2x32xf32>
    %522 = arith.mulf %517, %521 : vector<2x32xf32>
    %cst_177 = arith.constant 1.42141378 : f32
    %523 = vector.broadcast %cst_177 : f32 to vector<2x32xf32>
    %524 = arith.addf %523, %522 : vector<2x32xf32>
    %525 = arith.mulf %517, %524 : vector<2x32xf32>
    %cst_178 = arith.constant -0.284496725 : f32
    %526 = vector.broadcast %cst_178 : f32 to vector<2x32xf32>
    %527 = arith.addf %526, %525 : vector<2x32xf32>
    %528 = arith.mulf %517, %527 : vector<2x32xf32>
    %cst_179 = arith.constant 0.254829586 : f32
    %529 = vector.broadcast %cst_179 : f32 to vector<2x32xf32>
    %530 = arith.addf %529, %528 : vector<2x32xf32>
    %531 = arith.mulf %517, %530 : vector<2x32xf32>
    %cst_180 = arith.constant 0.000000e+00 : f32
    %532 = vector.broadcast %cst_180 : f32 to vector<2x32xf32>
    %533 = arith.subf %532, %512 : vector<2x32xf32>
    %534 = arith.mulf %533, %512 : vector<2x32xf32>
    %535 = math.exp %534 : vector<2x32xf32>
    %536 = arith.mulf %531, %535 : vector<2x32xf32>
    %cst_181 = arith.constant 1.000000e+00 : f32
    %537 = vector.broadcast %cst_181 : f32 to vector<2x32xf32>
    %538 = arith.subf %537, %536 : vector<2x32xf32>
    %cst_182 = arith.constant 0.000000e+00 : f32
    %539 = vector.broadcast %cst_182 : f32 to vector<2x32xf32>
    %540 = arith.cmpf oge, %511, %539 : vector<2x32xf32>
    %cst_183 = arith.constant 0.000000e+00 : f32
    %541 = vector.broadcast %cst_183 : f32 to vector<2x32xf32>
    %542 = arith.subf %541, %538 : vector<2x32xf32>
    %543 = arith.select %540, %538, %542 : vector<2x32xi1>, vector<2x32xf32>
    %cst_184 = arith.constant 1.000000e+00 : f32
    %544 = vector.broadcast %cst_184 : f32 to vector<2x32xf32>
    %545 = arith.addf %544, %543 : vector<2x32xf32>
    %546 = arith.mulf %509, %545 : vector<2x32xf32>
    %cst_185 = arith.constant dense<0.000000e+00> : vector<2xf32>
    %547 = vector.multi_reduction <add>, %546, %cst_185 [1] : vector<2x32xf32> to vector<2xf32>
    %548 = vector.shape_cast %547 : vector<2xf32> to vector<2x1xf32>
    %cst_186 = arith.constant 3.200000e+01 : f32
    %549 = vector.broadcast %cst_186 : f32 to vector<2x1xf32>
    %550 = arith.divf %548, %549 : vector<2x1xf32>
    %551 = vector.broadcast %550 : vector<2x1xf32> to vector<2x32xf32>
    %552 = arith.subf %546, %551 : vector<2x32xf32>
    %553 = arith.mulf %552, %552 : vector<2x32xf32>
    %cst_187 = arith.constant dense<0.000000e+00> : vector<2xf32>
    %554 = vector.multi_reduction <add>, %553, %cst_187 [1] : vector<2x32xf32> to vector<2xf32>
    %555 = vector.shape_cast %554 : vector<2xf32> to vector<2x1xf32>
    %cst_188 = arith.constant 3.200000e+01 : f32
    %556 = vector.broadcast %cst_188 : f32 to vector<2x1xf32>
    %557 = arith.divf %555, %556 : vector<2x1xf32>
    %cst_189 = arith.constant 9.99999974E-6 : f32
    %558 = vector.broadcast %cst_189 : f32 to vector<2x1xf32>
    %559 = arith.addf %557, %558 : vector<2x1xf32>
    %560 = math.rsqrt %559 : vector<2x1xf32>
    %561 = vector.broadcast %560 : vector<2x1xf32> to vector<2x32xf32>
    %562 = arith.mulf %552, %561 : vector<2x32xf32>
    %c0_190 = arith.constant 0 : index
    %c0_191 = arith.constant 0 : index
    %563 = vector.load %arg12[%c0_190, %c0_191] : memref<1x32xf32, #tpu.memory_space<vmem>>, vector<1x32xf32>
    %564 = vector.broadcast %563 : vector<1x32xf32> to vector<2x32xf32>
    %565 = arith.mulf %562, %564 : vector<2x32xf32>
    %cst_192 = arith.constant dense<0.000000e+00> : vector<2xf32>
    %566 = vector.multi_reduction <add>, %565, %cst_192 [1] : vector<2x32xf32> to vector<2xf32>
    %567 = vector.shape_cast %566 : vector<2xf32> to vector<2x1xf32>
    %c0_193 = arith.constant 0 : index
    %c0_194 = arith.constant 0 : index
    %568 = vector.load %arg13[%c0_193, %c0_194] : memref<1x1xf32, #tpu.memory_space<vmem>>, vector<1x1xf32>
    %569 = vector.broadcast %568 : vector<1x1xf32> to vector<2x1xf32>
    %570 = arith.addf %567, %569 : vector<2x1xf32>
    %571 = vector.shape_cast %570 : vector<2x1xf32> to vector<2x1x1xf32>
    %c0_195 = arith.constant 0 : index
    %c0_196 = arith.constant 0 : index
    %c0_197 = arith.constant 0 : index
    %572 = vector.load %arg14[%c0_195, %c0_196, %c0_197] : memref<2x1x1xf32, #tpu.memory_space<vmem>>, vector<2x1x1xf32>
    tpu.vector_store %arg14[%c0_195, %c0_196, %c0_197], %571 {strides = array<i32>} : memref<2x1x1xf32, #tpu.memory_space<vmem>>, vector<2x1x1xf32>,
    return
  }
  func.func @transform_0(%arg0: i32) -> (i32, i32, i32, i32) {
    %c0_i32 = arith.constant 0 : i32
    %c0_i32_0 = arith.constant 0 : i32
    %c0_i32_1 = arith.constant 0 : i32
    %c0_i32_2 = arith.constant 0 : i32
    return %arg0, %c0_i32, %c0_i32_0, %c0_i32_1 : i32, i32, i32, i32
  }
  func.func @transform_1(%arg0: i32) -> (i32, i32, i32) {
    %c0_i32 = arith.constant 0 : i32
    %c0_i32_0 = arith.constant 0 : i32
    %c0_i32_1 = arith.constant 0 : i32
    return %arg0, %c0_i32, %c0_i32_0 : i32, i32, i32
  }
  func.func @transform_2(%arg0: i32) -> (i32, i32, i32, i32) {
    %c0_i32 = arith.constant 0 : i32
    %c0_i32_0 = arith.constant 0 : i32
    %c0_i32_1 = arith.constant 0 : i32
    %c0_i32_2 = arith.constant 0 : i32
    %c0_i32_3 = arith.constant 0 : i32
    return %c0_i32, %c0_i32_0, %c0_i32_1, %c0_i32_2 : i32, i32, i32, i32
  }
  func.func @transform_3(%arg0: i32) -> (i32, i32) {
    %c0_i32 = arith.constant 0 : i32
    %c0_i32_0 = arith.constant 0 : i32
    %c0_i32_1 = arith.constant 0 : i32
    return %c0_i32, %c0_i32_0 : i32, i32
  }
  func.func @transform_4(%arg0: i32) -> (i32, i32) {
    %c0_i32 = arith.constant 0 : i32
    %c0_i32_0 = arith.constant 0 : i32
    %c0_i32_1 = arith.constant 0 : i32
    return %c0_i32, %c0_i32_0 : i32, i32
  }
  func.func @transform_5(%arg0: i32) -> (i32, i32) {
    %c0_i32 = arith.constant 0 : i32
    %c0_i32_0 = arith.constant 0 : i32
    %c0_i32_1 = arith.constant 0 : i32
    return %c0_i32, %c0_i32_0 : i32, i32
  }
  func.func @transform_6(%arg0: i32) -> (i32, i32) {
    %c0_i32 = arith.constant 0 : i32
    %c0_i32_0 = arith.constant 0 : i32
    %c0_i32_1 = arith.constant 0 : i32
    return %c0_i32, %c0_i32_0 : i32, i32
  }
  func.func @transform_7(%arg0: i32) -> (i32, i32) {
    %c0_i32 = arith.constant 0 : i32
    %c0_i32_0 = arith.constant 0 : i32
    %c0_i32_1 = arith.constant 0 : i32
    return %c0_i32, %c0_i32_0 : i32, i32
  }
  func.func @transform_8(%arg0: i32) -> (i32, i32) {
    %c0_i32 = arith.constant 0 : i32
    %c0_i32_0 = arith.constant 0 : i32
    %c0_i32_1 = arith.constant 0 : i32
    return %c0_i32, %c0_i32_0 : i32, i32
  }
  func.func @transform_9(%arg0: i32) -> (i32, i32) {
    %c0_i32 = arith.constant 0 : i32
    %c0_i32_0 = arith.constant 0 : i32
    %c0_i32_1 = arith.constant 0 : i32
    return %c0_i32, %c0_i32_0 : i32, i32
  }
  func.func @transform_10(%arg0: i32) -> (i32, i32) {
    %c0_i32 = arith.constant 0 : i32
    %c0_i32_0 = arith.constant 0 : i32
    %c0_i32_1 = arith.constant 0 : i32
    return %c0_i32, %c0_i32_0 : i32, i32
  }
  func.func @transform_11(%arg0: i32) -> (i32, i32) {
    %c0_i32 = arith.constant 0 : i32
    %c0_i32_0 = arith.constant 0 : i32
    %c0_i32_1 = arith.constant 0 : i32
    return %c0_i32, %c0_i32_0 : i32, i32
  }
  func.func @transform_12(%arg0: i32) -> (i32, i32) {
    %c0_i32 = arith.constant 0 : i32
    %c0_i32_0 = arith.constant 0 : i32
    %c0_i32_1 = arith.constant 0 : i32
    return %c0_i32, %c0_i32_0 : i32, i32
  }
  func.func @transform_13(%arg0: i32) -> (i32, i32, i32) {
    %c0_i32 = arith.constant 0 : i32
    %c0_i32_0 = arith.constant 0 : i32
    %c0_i32_1 = arith.constant 0 : i32
    return %arg0, %c0_i32, %c0_i32_0 : i32, i32, i32
  }
}

</mosaic_0001>

<llo_original>
// kernel: bar_model_forward.1
$region0: #{bar_model_forward.1}
  #allocation0 [shape = 'u32[]', space=smem, size = 0x4, offset = 0x4, fixed_abs, tag = 'smem constant byte address 0x4 - core index']
  #allocation1 [shape = 'u32[144,128]{1,0:T(1,128)}', space=vmem, size = 0x12000, scoped, tag = 'internal scratch']
  #allocation2 [shape = 'f32[1,1]{1,0:T(1,128)S(1)}', space=vmem, size = 0x200, scoped, tag = 'scoped memory for bar_model_forward.1']
  %s0 = inlined_call_operand.vmem [shape: bf16[2,16,16,768], index: 0, kind: input, shape index: {}]
  %s1 = inlined_call_operand.vmem [shape: f32[2,1,1], index: 1, kind: input, shape index: {}]
  %s2 = inlined_call_operand.vmem [shape: f32[2,4,6,768], index: 2, kind: input, shape index: {}]
  %s3 = inlined_call_operand.vmem [shape: f32[1,768], index: 3, kind: input, shape index: {}]
  %s4 = inlined_call_operand.vmem [shape: bf16[768,800], index: 4, kind: input, shape index: {}]
  %s5 = inlined_call_operand.vmem [shape: f32[1,800], index: 5, kind: input, shape index: {}]
  %s6 = inlined_call_operand.vmem [shape: f32[1,800], index: 6, kind: input, shape index: {}]
  %s7 = inlined_call_operand.vmem [shape: bf16[800,256], index: 7, kind: input, shape index: {}]
  %s8 = inlined_call_operand.vmem [shape: f32[1,256], index: 8, kind: input, shape index: {}]
  %s9 = inlined_call_operand.vmem [shape: bf16[256,32], index: 9, kind: input, shape index: {}]
  %s10 = inlined_call_operand.vmem [shape: f32[1,32], index: 10, kind: input, shape index: {}]
  %s11 = inlined_call_operand.vmem [shape: f32[1,32], index: 11, kind: input, shape index: {}]
  %s12 = inlined_call_operand.<no memory space> [shape: f32[1,1], index: 12, kind: input, shape index: {}]
  %s13 = inlined_call_operand.vmem [shape: f32[2,1,1], index: 13, kind: output, shape index: {}]
  %s14 = sld [smem:[#allocation0]]
  $region62: #{bar_model_forward.1} parent=0
    _
  %s16 = ssub.s32 1, %s14
  %s17 = scalar_select 0, %s16, %s14
  %v18 = vstv %s12
  %19 = vst [vmem:[#allocation2] sm:$0x1] %v18
  // Predicated region
  $region2: #{bar_model_forward.1} parent=0 // pred_check
    _
  $region3: #{bar_model_forward.1} parent=0 // pred_check_branch
    %21 = sbr.rel (0) target = $region5
  $region4: #{bar_model_forward.1} parent=0 // pred_region
    _
  $region5: #{bar_model_forward.1} parent=0 // pred_fallthru
    _
  // Predicated region
  $region6: #{bar_model_forward.1} parent=0 // pred_check
    _
  $region7: #{bar_model_forward.1} parent=0 // pred_check_branch
    %23 = sbr.rel (0) target = $region9
  $region8: #{bar_model_forward.1} parent=0 // pred_region
    _
  $region9: #{bar_model_forward.1} parent=0 // pred_fallthru
    _
  // Predicated region
  $region10: #{bar_model_forward.1} parent=0 // pred_check
    _
  $region11: #{bar_model_forward.1} parent=0 // pred_check_branch
    %25 = sbr.rel (0) target = $region13
  $region12: #{bar_model_forward.1} parent=0 // pred_region
    _
  $region13: #{bar_model_forward.1} parent=0 // pred_fallthru
    _
  // Predicated region
  $region14: #{bar_model_forward.1} parent=0 // pred_check
    _
  $region15: #{bar_model_forward.1} parent=0 // pred_check_branch
    %27 = sbr.rel (0) target = $region17
  $region16: #{bar_model_forward.1} parent=0 // pred_region
    _
  $region17: #{bar_model_forward.1} parent=0 // pred_fallthru
    _
  // Predicated region
  $region18: #{bar_model_forward.1} parent=0 // pred_check
    _
  $region19: #{bar_model_forward.1} parent=0 // pred_check_branch
    %29 = sbr.rel (0) target = $region21
  $region20: #{bar_model_forward.1} parent=0 // pred_region
    _
  $region21: #{bar_model_forward.1} parent=0 // pred_fallthru
    _
  // Predicated region
  $region22: #{bar_model_forward.1} parent=0 // pred_check
    _
  $region23: #{bar_model_forward.1} parent=0 // pred_check_branch
    %31 = sbr.rel (0) target = $region25
  $region24: #{bar_model_forward.1} parent=0 // pred_region
    _
  $region25: #{bar_model_forward.1} parent=0 // pred_fallthru
    _
  // Predicated region
  $region26: #{bar_model_forward.1} parent=0 // pred_check
    _
  $region27: #{bar_model_forward.1} parent=0 // pred_check_branch
    %33 = sbr.rel (0) target = $region29
  $region28: #{bar_model_forward.1} parent=0 // pred_region
    _
  $region29: #{bar_model_forward.1} parent=0 // pred_fallthru
    _
  // Predicated region
  $region30: #{bar_model_forward.1} parent=0 // pred_check
    _
  $region31: #{bar_model_forward.1} parent=0 // pred_check_branch
    %35 = sbr.rel (0) target = $region33
  $region32: #{bar_model_forward.1} parent=0 // pred_region
    _
  $region33: #{bar_model_forward.1} parent=0 // pred_fallthru
    _
  // Predicated region
  $region34: #{bar_model_forward.1} parent=0 // pred_check
    _
  $region35: #{bar_model_forward.1} parent=0 // pred_check_branch
    %37 = sbr.rel (0) target = $region37
  $region36: #{bar_model_forward.1} parent=0 // pred_region
    _
  $region37: #{bar_model_forward.1} parent=0 // pred_fallthru
    _
  // Predicated region
  $region38: #{bar_model_forward.1} parent=0 // pred_check
    _
  $region39: #{bar_model_forward.1} parent=0 // pred_check_branch
    %39 = sbr.rel (0) target = $region41
  $region40: #{bar_model_forward.1} parent=0 // pred_region
    _
  $region41: #{bar_model_forward.1} parent=0 // pred_fallthru
    _
  // Predicated region
  $region42: #{bar_model_forward.1} parent=0 // pred_check
    _
  $region43: #{bar_model_forward.1} parent=0 // pred_check_branch
    %41 = sbr.rel (0) target = $region45
  $region44: #{bar_model_forward.1} parent=0 // pred_region
    _
  $region45: #{bar_model_forward.1} parent=0 // pred_fallthru
    _
  // Predicated region
  $region46: #{bar_model_forward.1} parent=0 // pred_check
    _
  $region47: #{bar_model_forward.1} parent=0 // pred_check_branch
    %43 = sbr.rel (0) target = $region49
  $region48: #{bar_model_forward.1} parent=0 // pred_region
    _
  $region49: #{bar_model_forward.1} parent=0 // pred_fallthru
    _
  // Predicated region
  $region50: #{bar_model_forward.1} parent=0 // pred_check
    _
  $region51: #{bar_model_forward.1} parent=0 // pred_check_branch
    %45 = sbr.rel (0) target = $region53
  $region52: #{bar_model_forward.1} parent=0 // pred_region
    _
  $region53: #{bar_model_forward.1} parent=0 // pred_fallthru
    _
  %v47 = vld [vmem:[%s2] sm:$0x3f]
  %v48 = vld [vmem:[%s2 + $0x8] sm:$0x3f]
  %v49 = vld [vmem:[%s2 + $0x10] sm:$0x3f]
  %v50 = vld [vmem:[%s2 + $0x18] sm:$0x3f]
  %v51 = vld [vmem:[%s2 + $0x20] sm:$0x3f]
  %v52 = vld [vmem:[%s2 + $0x28] sm:$0x3f]
  %v53 = vld [vmem:[%s2 + $0x30] sm:$0x3f]
  %v54 = vld [vmem:[%s2 + $0x38] sm:$0x3f]
  %v55 = vld [vmem:[%s2 + $0x40] sm:$0x3f]
  %v56 = vld [vmem:[%s2 + $0x48] sm:$0x3f]
  %v57 = vld [vmem:[%s2 + $0x50] sm:$0x3f]
  %v58 = vld [vmem:[%s2 + $0x58] sm:$0x3f]
  %v59 = vld [vmem:[%s2 + $0x60] sm:$0x3f]
  %v60 = vld [vmem:[%s2 + $0x68] sm:$0x3f]
  %v61 = vld [vmem:[%s2 + $0x70] sm:$0x3f]
  %v62 = vld [vmem:[%s2 + $0x78] sm:$0x3f]
  %v63 = vld [vmem:[%s2 + $0x80] sm:$0x3f]
  %v64 = vld [vmem:[%s2 + $0x88] sm:$0x3f]
  %v65 = vld [vmem:[%s2 + $0x90] sm:$0x3f]
  %v66 = vld [vmem:[%s2 + $0x98] sm:$0x3f]
  %v67 = vld [vmem:[%s2 + $0xa0] sm:$0x3f]
  %v68 = vld [vmem:[%s2 + $0xa8] sm:$0x3f]
  %v69 = vld [vmem:[%s2 + $0xb0] sm:$0x3f]
  %v70 = vld [vmem:[%s2 + $0xb8] sm:$0x3f]
  %v71 = vld [vmem:[%s2 + $0xc0] sm:$0x3f]
  %v72 = vld [vmem:[%s2 + $0xc8] sm:$0x3f]
  %v73 = vld [vmem:[%s2 + $0xd0] sm:$0x3f]
  %v74 = vld [vmem:[%s2 + $0xd8] sm:$0x3f]
  %v75 = vld [vmem:[%s2 + $0xe0] sm:$0x3f]
  %v76 = vld [vmem:[%s2 + $0xe8] sm:$0x3f]
  %v77 = vld [vmem:[%s2 + $0xf0] sm:$0x3f]
  %v78 = vld [vmem:[%s2 + $0xf8] sm:$0x3f]
  %v79 = vld [vmem:[%s2 + $0x100] sm:$0x3f]
  %v80 = vld [vmem:[%s2 + $0x108] sm:$0x3f]
  %v81 = vld [vmem:[%s2 + $0x110] sm:$0x3f]
  %v82 = vld [vmem:[%s2 + $0x118] sm:$0x3f]
  %v83 = vld [vmem:[%s2 + $0x120] sm:$0x3f]
  %v84 = vld [vmem:[%s2 + $0x128] sm:$0x3f]
  %v85 = vld [vmem:[%s2 + $0x130] sm:$0x3f]
  %v86 = vld [vmem:[%s2 + $0x138] sm:$0x3f]
  %v87 = vld [vmem:[%s2 + $0x140] sm:$0x3f]
  %v88 = vld [vmem:[%s2 + $0x148] sm:$0x3f]
  %v89 = vld [vmem:[%s2 + $0x150] sm:$0x3f]
  %v90 = vld [vmem:[%s2 + $0x158] sm:$0x3f]
  %v91 = vld [vmem:[%s2 + $0x160] sm:$0x3f]
  %v92 = vld [vmem:[%s2 + $0x168] sm:$0x3f]
  %v93 = vld [vmem:[%s2 + $0x170] sm:$0x3f]
  %v94 = vld [vmem:[%s2 + $0x178] sm:$0x3f]
  %v95 = vld [vmem:[%s3] sm:$0x3f]
  %v96 = vld [vmem:[%s0] sm:$0xff]
  %v97 = vld [vmem:[%s0 + $0x8] sm:$0xff]
  %v98 = vld [vmem:[%s0 + $0x10] sm:$0xff]
  %v99 = vld [vmem:[%s0 + $0x18] sm:$0xff]
  %v100 = vld [vmem:[%s0 + $0x20] sm:$0xff]
  %v101 = vld [vmem:[%s0 + $0x28] sm:$0xff]
  %v102 = vld [vmem:[%s0 + $0x30] sm:$0xff]
  %v103 = vld [vmem:[%s0 + $0x38] sm:$0xff]
  %v104 = vld [vmem:[%s0 + $0x40] sm:$0xff]
  %v105 = vld [vmem:[%s0 + $0x48] sm:$0xff]
  %v106 = vld [vmem:[%s0 + $0x50] sm:$0xff]
  %v107 = vld [vmem:[%s0 + $0x58] sm:$0xff]
  %v108 = vld [vmem:[%s0 + $0x60] sm:$0xff]
  %v109 = vld [vmem:[%s0 + $0x68] sm:$0xff]
  %v110 = vld [vmem:[%s0 + $0x70] sm:$0xff]
  %v111 = vld [vmem:[%s0 + $0x78] sm:$0xff]
  %v112 = vld [vmem:[%s0 + $0x80] sm:$0xff]
  %v113 = vld [vmem:[%s0 + $0x88] sm:$0xff]
  %v114 = vld [vmem:[%s0 + $0x90] sm:$0xff]
  %v115 = vld [vmem:[%s0 + $0x98] sm:$0xff]
  %v116 = vld [vmem:[%s0 + $0xa0] sm:$0xff]
  %v117 = vld [vmem:[%s0 + $0xa8] sm:$0xff]
  %v118 = vld [vmem:[%s0 + $0xb0] sm:$0xff]
  %v119 = vld [vmem:[%s0 + $0xb8] sm:$0xff]
  %v120 = vld [vmem:[%s0 + $0x300] sm:$0xff]
  %v121 = vld [vmem:[%s0 + $0x308] sm:$0xff]
  %v122 = vld [vmem:[%s0 + $0x310] sm:$0xff]
  %v123 = vld [vmem:[%s0 + $0x318] sm:$0xff]
  %v124 = vld [vmem:[%s0 + $0x320] sm:$0xff]
  %v125 = vld [vmem:[%s0 + $0x328] sm:$0xff]
  %v126 = vld [vmem:[%s0 + $0x330] sm:$0xff]
  %v127 = vld [vmem:[%s0 + $0x338] sm:$0xff]
  %v128 = vld [vmem:[%s0 + $0x340] sm:$0xff]
  %v129 = vld [vmem:[%s0 + $0x348] sm:$0xff]
  %v130 = vld [vmem:[%s0 + $0x350] sm:$0xff]
  %v131 = vld [vmem:[%s0 + $0x358] sm:$0xff]
  %v132 = vld [vmem:[%s0 + $0x360] sm:$0xff]
  %v133 = vld [vmem:[%s0 + $0x368] sm:$0xff]
  %v134 = vld [vmem:[%s0 + $0x370] sm:$0xff]
  %v135 = vld [vmem:[%s0 + $0x378] sm:$0xff]
  %v136 = vld [vmem:[%s0 + $0x380] sm:$0xff]
  %v137 = vld [vmem:[%s0 + $0x388] sm:$0xff]
  %v138 = vld [vmem:[%s0 + $0x390] sm:$0xff]
  %v139 = vld [vmem:[%s0 + $0x398] sm:$0xff]
  %v140 = vld [vmem:[%s0 + $0x3a0] sm:$0xff]
  %v141 = vld [vmem:[%s0 + $0x3a8] sm:$0xff]
  %v142 = vld [vmem:[%s0 + $0x3b0] sm:$0xff]
  %v143 = vld [vmem:[%s0 + $0x3b8] sm:$0xff]
  %v144 = vmax.bf16 %v96, %v102
  %v145 = vmax.bf16 %v144, %v108
  %v146 = vmax.bf16 %v145, %v114
  %v147 = vmax.bf16 %v97, %v103
  %v148 = vmax.bf16 %v147, %v109
  %v149 = vmax.bf16 %v148, %v115
  %v150 = vmax.bf16 %v98, %v104
  %v151 = vmax.bf16 %v150, %v110
  %v152 = vmax.bf16 %v151, %v116
  %v153 = vmax.bf16 %v99, %v105
  %v154 = vmax.bf16 %v153, %v111
  %v155 = vmax.bf16 %v154, %v117
  %v156 = vmax.bf16 %v100, %v106
  %v157 = vmax.bf16 %v156, %v112
  %v158 = vmax.bf16 %v157, %v118
  %v159 = vmax.bf16 %v101, %v107
  %v160 = vmax.bf16 %v159, %v113
  %v161 = vmax.bf16 %v160, %v119
  %v162 = vmax.bf16 %v120, %v126
  %v163 = vmax.bf16 %v162, %v132
  %v164 = vmax.bf16 %v163, %v138
  %v165 = vmax.bf16 %v121, %v127
  %v166 = vmax.bf16 %v165, %v133
  %v167 = vmax.bf16 %v166, %v139
  %v168 = vmax.bf16 %v122, %v128
  %v169 = vmax.bf16 %v168, %v134
  %v170 = vmax.bf16 %v169, %v140
  %v171 = vmax.bf16 %v123, %v129
  %v172 = vmax.bf16 %v171, %v135
  %v173 = vmax.bf16 %v172, %v141
  %v174 = vmax.bf16 %v124, %v130
  %v175 = vmax.bf16 %v174, %v136
  %v176 = vmax.bf16 %v175, %v142
  %v177 = vmax.bf16 %v125, %v131
  %v178 = vmax.bf16 %v177, %v137
  %v179 = vmax.bf16 %v178, %v143
  %v180 = vunpack.c.l.bf16 %v146
  %v181 = vunpack.c.h.bf16 %v146
  %v182 = vunpack.c.l.bf16 %v149
  %v183 = vunpack.c.h.bf16 %v149
  %v184 = vunpack.c.l.bf16 %v152
  %v185 = vunpack.c.h.bf16 %v152
  %v186 = vunpack.c.l.bf16 %v155
  %v187 = vunpack.c.h.bf16 %v155
  %v188 = vunpack.c.l.bf16 %v158
  %v189 = vunpack.c.h.bf16 %v158
  %v190 = vunpack.c.l.bf16 %v161
  %v191 = vunpack.c.h.bf16 %v161
  %v192 = vunpack.c.l.bf16 %v164
  %v193 = vunpack.c.h.bf16 %v164
  %v194 = vunpack.c.l.bf16 %v167
  %v195 = vunpack.c.h.bf16 %v167
  %v196 = vunpack.c.l.bf16 %v170
  %v197 = vunpack.c.h.bf16 %v170
  %v198 = vunpack.c.l.bf16 %v173
  %v199 = vunpack.c.h.bf16 %v173
  %v200 = vunpack.c.l.bf16 %v176
  %v201 = vunpack.c.h.bf16 %v176
  %v202 = vunpack.c.l.bf16 %v179
  %v203 = vunpack.c.h.bf16 %v179
  %vm228 = vcmask 1046528
  %v229 = vrot.slane %v180, 1
  %v230 = vrot.slane %v186, 1
  %v231 = vsel %vm228, %v229, %v230
  %v232 = vrot.slane %v181, 1
  %v233 = vrot.slane %v187, 1
  %v234 = vsel %vm228, %v232, %v233
  %v235 = vrot.slane %v182, 1
  %v236 = vrot.slane %v188, 1
  %v237 = vsel %vm228, %v235, %v236
  %v238 = vrot.slane %v183, 1
  %v239 = vrot.slane %v189, 1
  %v240 = vsel %vm228, %v238, %v239
  %v241 = vrot.slane %v184, 1
  %v242 = vrot.slane %v190, 1
  %v243 = vsel %vm228, %v241, %v242
  %v244 = vrot.slane %v185, 1
  %v245 = vrot.slane %v191, 1
  %v246 = vsel %vm228, %v244, %v245
  %v247 = vrot.slane %v192, 1
  %v248 = vrot.slane %v198, 1
  %v249 = vsel %vm228, %v247, %v248
  %v250 = vrot.slane %v193, 1
  %v251 = vrot.slane %v199, 1
  %v252 = vsel %vm228, %v250, %v251
  %v253 = vrot.slane %v194, 1
  %v254 = vrot.slane %v200, 1
  %v255 = vsel %vm228, %v253, %v254
  %v256 = vrot.slane %v195, 1
  %v257 = vrot.slane %v201, 1
  %v258 = vsel %vm228, %v256, %v257
  %v259 = vrot.slane %v196, 1
  %v260 = vrot.slane %v202, 1
  %v261 = vsel %vm228, %v259, %v260
  %v262 = vrot.slane %v197, 1
  %v263 = vrot.slane %v203, 1
  %v264 = vsel %vm228, %v262, %v263
  %v289 = vmax.f32 %v180, %v231
  %v290 = vmax.f32 %v181, %v234
  %v291 = vmax.f32 %v182, %v237
  %v292 = vmax.f32 %v183, %v240
  %v293 = vmax.f32 %v184, %v243
  %v294 = vmax.f32 %v185, %v246
  %v295 = vmax.f32 %v186, %v230
  %v296 = vmax.f32 %v187, %v233
  %v297 = vmax.f32 %v188, %v236
  %v298 = vmax.f32 %v189, %v239
  %v299 = vmax.f32 %v190, %v242
  %v300 = vmax.f32 %v191, %v245
  %v301 = vmax.f32 %v192, %v249
  %v302 = vmax.f32 %v193, %v252
  %v303 = vmax.f32 %v194, %v255
  %v304 = vmax.f32 %v195, %v258
  %v305 = vmax.f32 %v196, %v261
  %v306 = vmax.f32 %v197, %v264
  %v307 = vmax.f32 %v198, %v248
  %v308 = vmax.f32 %v199, %v251
  %v309 = vmax.f32 %v200, %v254
  %v310 = vmax.f32 %v201, %v257
  %v311 = vmax.f32 %v202, %v260
  %v312 = vmax.f32 %v203, %v263
  %vm337 = vcmask 1045504
  %v338 = vrot.slane %v289, 2
  %v339 = vrot.slane %v295, 2
  %v340 = vsel %vm337, %v338, %v339
  %v341 = vrot.slane %v290, 2
  %v342 = vrot.slane %v296, 2
  %v343 = vsel %vm337, %v341, %v342
  %v344 = vrot.slane %v291, 2
  %v345 = vrot.slane %v297, 2
  %v346 = vsel %vm337, %v344, %v345
  %v347 = vrot.slane %v292, 2
  %v348 = vrot.slane %v298, 2
  %v349 = vsel %vm337, %v347, %v348
  %v350 = vrot.slane %v293, 2
  %v351 = vrot.slane %v299, 2
  %v352 = vsel %vm337, %v350, %v351
  %v353 = vrot.slane %v294, 2
  %v354 = vrot.slane %v300, 2
  %v355 = vsel %vm337, %v353, %v354
  %v356 = vrot.slane %v301, 2
  %v357 = vrot.slane %v307, 2
  %v358 = vsel %vm337, %v356, %v357
  %v359 = vrot.slane %v302, 2
  %v360 = vrot.slane %v308, 2
  %v361 = vsel %vm337, %v359, %v360
  %v362 = vrot.slane %v303, 2
  %v363 = vrot.slane %v309, 2
  %v364 = vsel %vm337, %v362, %v363
  %v365 = vrot.slane %v304, 2
  %v366 = vrot.slane %v310, 2
  %v367 = vsel %vm337, %v365, %v366
  %v368 = vrot.slane %v305, 2
  %v369 = vrot.slane %v311, 2
  %v370 = vsel %vm337, %v368, %v369
  %v371 = vrot.slane %v306, 2
  %v372 = vrot.slane %v312, 2
  %v373 = vsel %vm337, %v371, %v372
  %v398 = vmax.f32 %v289, %v340
  %v399 = vmax.f32 %v290, %v343
  %v400 = vmax.f32 %v291, %v346
  %v401 = vmax.f32 %v292, %v349
  %v402 = vmax.f32 %v293, %v352
  %v403 = vmax.f32 %v294, %v355
  %v404 = vmax.f32 %v295, %v339
  %v405 = vmax.f32 %v296, %v342
  %v406 = vmax.f32 %v297, %v345
  %v407 = vmax.f32 %v298, %v348
  %v408 = vmax.f32 %v299, %v351
  %v409 = vmax.f32 %v300, %v354
  %v410 = vmax.f32 %v301, %v358
  %v411 = vmax.f32 %v302, %v361
  %v412 = vmax.f32 %v303, %v364
  %v413 = vmax.f32 %v304, %v367
  %v414 = vmax.f32 %v305, %v370
  %v415 = vmax.f32 %v306, %v373
  %v416 = vmax.f32 %v307, %v357
  %v417 = vmax.f32 %v308, %v360
  %v418 = vmax.f32 %v309, %v363
  %v419 = vmax.f32 %v310, %v366
  %v420 = vmax.f32 %v311, %v369
  %v421 = vmax.f32 %v312, %v372
  %v422 = vmul.f32 %v398, %v47
  %v423 = vmul.f32 %v399, %v48
  %v424 = vmul.f32 %v400, %v49
  %v425 = vmul.f32 %v401, %v50
  %v426 = vmul.f32 %v402, %v51
  %v427 = vmul.f32 %v403, %v52
  %v428 = vmul.f32 %v410, %v47
  %v429 = vmul.f32 %v411, %v48
  %v430 = vmul.f32 %v412, %v49
  %v431 = vmul.f32 %v413, %v50
  %v432 = vmul.f32 %v414, %v51
  %v433 = vmul.f32 %v415, %v52
  %v434 = vsel %vm337, %v422, 0.0
  %v435 = vrot.slane %v434, 4
  %v436 = vadd.f32 %v434, %v435
  %v437 = vrot.slane %v436, 2
  %v438 = vadd.f32 %v436, %v437
  %v439 = vrot.slane %v438, 1
  %v440 = vadd.f32 %v438, %v439
  %v441 = vsel %vm337, %v423, 0.0
  %v442 = vrot.slane %v441, 4
  %v443 = vadd.f32 %v441, %v442
  %v444 = vrot.slane %v443, 2
  %v445 = vadd.f32 %v443, %v444
  %v446 = vrot.slane %v445, 1
  %v447 = vadd.f32 %v445, %v446
  %v448 = vsel %vm337, %v424, 0.0
  %v449 = vrot.slane %v448, 4
  %v450 = vadd.f32 %v448, %v449
  %v451 = vrot.slane %v450, 2
  %v452 = vadd.f32 %v450, %v451
  %v453 = vrot.slane %v452, 1
  %v454 = vadd.f32 %v452, %v453
  %v455 = vsel %vm337, %v425, 0.0
  %v456 = vrot.slane %v455, 4
  %v457 = vadd.f32 %v455, %v456
  %v458 = vrot.slane %v457, 2
  %v459 = vadd.f32 %v457, %v458
  %v460 = vrot.slane %v459, 1
  %v461 = vadd.f32 %v459, %v460
  %v462 = vsel %vm337, %v426, 0.0
  %v463 = vrot.slane %v462, 4
  %v464 = vadd.f32 %v462, %v463
  %v465 = vrot.slane %v464, 2
  %v466 = vadd.f32 %v464, %v465
  %v467 = vrot.slane %v466, 1
  %v468 = vadd.f32 %v466, %v467
  %v469 = vsel %vm337, %v427, 0.0
  %v470 = vrot.slane %v469, 4
  %v471 = vadd.f32 %v469, %v470
  %v472 = vrot.slane %v471, 2
  %v473 = vadd.f32 %v471, %v472
  %v474 = vrot.slane %v473, 1
  %v475 = vadd.f32 %v473, %v474
  %v476 = vsel %vm337, %v428, 0.0
  %v477 = vrot.slane %v476, 4
  %v478 = vadd.f32 %v476, %v477
  %v479 = vrot.slane %v478, 2
  %v480 = vadd.f32 %v478, %v479
  %v481 = vrot.slane %v480, 1
  %v482 = vadd.f32 %v480, %v481
  %v483 = vsel %vm337, %v429, 0.0
  %v484 = vrot.slane %v483, 4
  %v485 = vadd.f32 %v483, %v484
  %v486 = vrot.slane %v485, 2
  %v487 = vadd.f32 %v485, %v486
  %v488 = vrot.slane %v487, 1
  %v489 = vadd.f32 %v487, %v488
  %v490 = vsel %vm337, %v430, 0.0
  %v491 = vrot.slane %v490, 4
  %v492 = vadd.f32 %v490, %v491
  %v493 = vrot.slane %v492, 2
  %v494 = vadd.f32 %v492, %v493
  %v495 = vrot.slane %v494, 1
  %v496 = vadd.f32 %v494, %v495
  %v497 = vsel %vm337, %v431, 0.0
  %v498 = vrot.slane %v497, 4
  %v499 = vadd.f32 %v497, %v498
  %v500 = vrot.slane %v499, 2
  %v501 = vadd.f32 %v499, %v500
  %v502 = vrot.slane %v501, 1
  %v503 = vadd.f32 %v501, %v502
  %v504 = vsel %vm337, %v432, 0.0
  %v505 = vrot.slane %v504, 4
  %v506 = vadd.f32 %v504, %v505
  %v507 = vrot.slane %v506, 2
  %v508 = vadd.f32 %v506, %v507
  %v509 = vrot.slane %v508, 1
  %v510 = vadd.f32 %v508, %v509
  %v511 = vsel %vm337, %v433, 0.0
  %v512 = vrot.slane %v511, 4
  %v513 = vadd.f32 %v511, %v512
  %v514 = vrot.slane %v513, 2
  %v515 = vadd.f32 %v513, %v514
  %v516 = vrot.slane %v515, 1
  %v517 = vadd.f32 %v515, %v516
  %v518 = vadd.f32 %v440, 0.0
  %v519 = vadd.f32 %v447, 0.0
  %v520 = vadd.f32 %v454, 0.0
  %v521 = vadd.f32 %v461, 0.0
  %v522 = vadd.f32 %v468, 0.0
  %v523 = vadd.f32 %v475, 0.0
  %v524 = vadd.f32 %v482, 0.0
  %v525 = vadd.f32 %v489, 0.0
  %v526 = vadd.f32 %v496, 0.0
  %v527 = vadd.f32 %v503, 0.0
  %v528 = vadd.f32 %v510, 0.0
  %v529 = vadd.f32 %v517, 0.0
  %v536 = vrot.slane %v71, 1
  %v537 = vrot.slane %v72, 1
  %v538 = vrot.slane %v73, 1
  %v539 = vrot.slane %v74, 1
  %v540 = vrot.slane %v75, 1
  %v541 = vrot.slane %v76, 1
  %v548 = vmul.f32 %v398, %v536
  %v549 = vmul.f32 %v399, %v537
  %v550 = vmul.f32 %v400, %v538
  %v551 = vmul.f32 %v401, %v539
  %v552 = vmul.f32 %v402, %v540
  %v553 = vmul.f32 %v403, %v541
  %v554 = vmul.f32 %v404, %v536
  %v555 = vmul.f32 %v405, %v537
  %v556 = vmul.f32 %v406, %v538
  %v557 = vmul.f32 %v407, %v539
  %v558 = vmul.f32 %v408, %v540
  %v559 = vmul.f32 %v409, %v541
  %v560 = vmul.f32 %v410, %v536
  %v561 = vmul.f32 %v411, %v537
  %v562 = vmul.f32 %v412, %v538
  %v563 = vmul.f32 %v413, %v539
  %v564 = vmul.f32 %v414, %v540
  %v565 = vmul.f32 %v415, %v541
  %v566 = vmul.f32 %v416, %v536
  %v567 = vmul.f32 %v417, %v537
  %v568 = vmul.f32 %v418, %v538
  %v569 = vmul.f32 %v419, %v539
  %v570 = vmul.f32 %v420, %v540
  %v571 = vmul.f32 %v421, %v541
  %vm596 = vcmask 1040384
  %v597 = vrot.slane %v548, 7
  %v598 = vrot.slane %v554, 7
  %v599 = vsel %vm596, %v597, %v598
  %v600 = vrot.slane %v549, 7
  %v601 = vrot.slane %v555, 7
  %v602 = vsel %vm596, %v600, %v601
  %v603 = vrot.slane %v550, 7
  %v604 = vrot.slane %v556, 7
  %v605 = vsel %vm596, %v603, %v604
  %v606 = vrot.slane %v551, 7
  %v607 = vrot.slane %v557, 7
  %v608 = vsel %vm596, %v606, %v607
  %v609 = vrot.slane %v552, 7
  %v610 = vrot.slane %v558, 7
  %v611 = vsel %vm596, %v609, %v610
  %v612 = vrot.slane %v553, 7
  %v613 = vrot.slane %v559, 7
  %v614 = vsel %vm596, %v612, %v613
  %v615 = vrot.slane %v560, 7
  %v616 = vrot.slane %v566, 7
  %v617 = vsel %vm596, %v615, %v616
  %v618 = vrot.slane %v561, 7
  %v619 = vrot.slane %v567, 7
  %v620 = vsel %vm596, %v618, %v619
  %v621 = vrot.slane %v562, 7
  %v622 = vrot.slane %v568, 7
  %v623 = vsel %vm596, %v621, %v622
  %v624 = vrot.slane %v563, 7
  %v625 = vrot.slane %v569, 7
  %v626 = vsel %vm596, %v624, %v625
  %v627 = vrot.slane %v564, 7
  %v628 = vrot.slane %v570, 7
  %v629 = vsel %vm596, %v627, %v628
  %v630 = vrot.slane %v565, 7
  %v631 = vrot.slane %v571, 7
  %v632 = vsel %vm596, %v630, %v631
  %v645 = vsel %vm337, %v599, 0.0
  %v646 = vrot.slane %v645, 4
  %v647 = vadd.f32 %v645, %v646
  %v648 = vrot.slane %v647, 2
  %v649 = vadd.f32 %v647, %v648
  %v650 = vrot.slane %v649, 1
  %v651 = vadd.f32 %v649, %v650
  %v652 = vsel %vm337, %v602, 0.0
  %v653 = vrot.slane %v652, 4
  %v654 = vadd.f32 %v652, %v653
  %v655 = vrot.slane %v654, 2
  %v656 = vadd.f32 %v654, %v655
  %v657 = vrot.slane %v656, 1
  %v658 = vadd.f32 %v656, %v657
  %v659 = vsel %vm337, %v605, 0.0
  %v660 = vrot.slane %v659, 4
  %v661 = vadd.f32 %v659, %v660
  %v662 = vrot.slane %v661, 2
  %v663 = vadd.f32 %v661, %v662
  %v664 = vrot.slane %v663, 1
  %v665 = vadd.f32 %v663, %v664
  %v666 = vsel %vm337, %v608, 0.0
  %v667 = vrot.slane %v666, 4
  %v668 = vadd.f32 %v666, %v667
  %v669 = vrot.slane %v668, 2
  %v670 = vadd.f32 %v668, %v669
  %v671 = vrot.slane %v670, 1
  %v672 = vadd.f32 %v670, %v671
  %v673 = vsel %vm337, %v611, 0.0
  %v674 = vrot.slane %v673, 4
  %v675 = vadd.f32 %v673, %v674
  %v676 = vrot.slane %v675, 2
  %v677 = vadd.f32 %v675, %v676
  %v678 = vrot.slane %v677, 1
  %v679 = vadd.f32 %v677, %v678
  %v680 = vsel %vm337, %v614, 0.0
  %v681 = vrot.slane %v680, 4
  %v682 = vadd.f32 %v680, %v681
  %v683 = vrot.slane %v682, 2
  %v684 = vadd.f32 %v682, %v683
  %v685 = vrot.slane %v684, 1
  %v686 = vadd.f32 %v684, %v685
  %v687 = vsel %vm337, %v617, 0.0
  %v688 = vrot.slane %v687, 4
  %v689 = vadd.f32 %v687, %v688
  %v690 = vrot.slane %v689, 2
  %v691 = vadd.f32 %v689, %v690
  %v692 = vrot.slane %v691, 1
  %v693 = vadd.f32 %v691, %v692
  %v694 = vsel %vm337, %v620, 0.0
  %v695 = vrot.slane %v694, 4
  %v696 = vadd.f32 %v694, %v695
  %v697 = vrot.slane %v696, 2
  %v698 = vadd.f32 %v696, %v697
  %v699 = vrot.slane %v698, 1
  %v700 = vadd.f32 %v698, %v699
  %v701 = vsel %vm337, %v623, 0.0
  %v702 = vrot.slane %v701, 4
  %v703 = vadd.f32 %v701, %v702
  %v704 = vrot.slane %v703, 2
  %v705 = vadd.f32 %v703, %v704
  %v706 = vrot.slane %v705, 1
  %v707 = vadd.f32 %v705, %v706
  %v708 = vsel %vm337, %v626, 0.0
  %v709 = vrot.slane %v708, 4
  %v710 = vadd.f32 %v708, %v709
  %v711 = vrot.slane %v710, 2
  %v712 = vadd.f32 %v710, %v711
  %v713 = vrot.slane %v712, 1
  %v714 = vadd.f32 %v712, %v713
  %v715 = vsel %vm337, %v629, 0.0
  %v716 = vrot.slane %v715, 4
  %v717 = vadd.f32 %v715, %v716
  %v718 = vrot.slane %v717, 2
  %v719 = vadd.f32 %v717, %v718
  %v720 = vrot.slane %v719, 1
  %v721 = vadd.f32 %v719, %v720
  %v722 = vsel %vm337, %v632, 0.0
  %v723 = vrot.slane %v722, 4
  %v724 = vadd.f32 %v722, %v723
  %v725 = vrot.slane %v724, 2
  %v726 = vadd.f32 %v724, %v725
  %v727 = vrot.slane %v726, 1
  %v728 = vadd.f32 %v726, %v727
  %v729 = vadd.f32 %v651, 0.0
  %v730 = vadd.f32 %v658, 0.0
  %v731 = vadd.f32 %v665, 0.0
  %v732 = vadd.f32 %v672, 0.0
  %v733 = vadd.f32 %v679, 0.0
  %v734 = vadd.f32 %v686, 0.0
  %v735 = vadd.f32 %v693, 0.0
  %v736 = vadd.f32 %v700, 0.0
  %v737 = vadd.f32 %v707, 0.0
  %v738 = vadd.f32 %v714, 0.0
  %v739 = vadd.f32 %v721, 0.0
  %v740 = vadd.f32 %v728, 0.0
  %s741 = scalar_lea.vmem %s0, 96
  %v742 = vld [vmem:[%s741] sm:$0xff]
  %v743 = vld [vmem:[%s741 + $0x8] sm:$0xff]
  %v744 = vld [vmem:[%s741 + $0x10] sm:$0xff]
  %v745 = vld [vmem:[%s741 + $0x18] sm:$0xff]
  %v746 = vld [vmem:[%s741 + $0x20] sm:$0xff]
  %v747 = vld [vmem:[%s741 + $0x28] sm:$0xff]
  %v748 = vld [vmem:[%s741 + $0x30] sm:$0xff]
  %v749 = vld [vmem:[%s741 + $0x38] sm:$0xff]
  %v750 = vld [vmem:[%s741 + $0x40] sm:$0xff]
  %v751 = vld [vmem:[%s741 + $0x48] sm:$0xff]
  %v752 = vld [vmem:[%s741 + $0x50] sm:$0xff]
  %v753 = vld [vmem:[%s741 + $0x58] sm:$0xff]
  %v754 = vld [vmem:[%s741 + $0x60] sm:$0xff]
  %v755 = vld [vmem:[%s741 + $0x68] sm:$0xff]
  %v756 = vld [vmem:[%s741 + $0x70] sm:$0xff]
  %v757 = vld [vmem:[%s741 + $0x78] sm:$0xff]
  %v758 = vld [vmem:[%s741 + $0x80] sm:$0xff]
  %v759 = vld [vmem:[%s741 + $0x88] sm:$0xff]
  %v760 = vld [vmem:[%s741 + $0x90] sm:$0xff]
  %v761 = vld [vmem:[%s741 + $0x98] sm:$0xff]
  %v762 = vld [vmem:[%s741 + $0xa0] sm:$0xff]
  %v763 = vld [vmem:[%s741 + $0xa8] sm:$0xff]
  %v764 = vld [vmem:[%s741 + $0xb0] sm:$0xff]
  %v765 = vld [vmem:[%s741 + $0xb8] sm:$0xff]
  %v766 = vld [vmem:[%s741 + $0x300] sm:$0xff]
  %v767 = vld [vmem:[%s741 + $0x308] sm:$0xff]
  %v768 = vld [vmem:[%s741 + $0x310] sm:$0xff]
  %v769 = vld [vmem:[%s741 + $0x318] sm:$0xff]
  %v770 = vld [vmem:[%s741 + $0x320] sm:$0xff]
  %v771 = vld [vmem:[%s741 + $0x328] sm:$0xff]
  %v772 = vld [vmem:[%s741 + $0x330] sm:$0xff]
  %v773 = vld [vmem:[%s741 + $0x338] sm:$0xff]
  %v774 = vld [vmem:[%s741 + $0x340] sm:$0xff]
  %v775 = vld [vmem:[%s741 + $0x348] sm:$0xff]
  %v776 = vld [vmem:[%s741 + $0x350] sm:$0xff]
  %v777 = vld [vmem:[%s741 + $0x358] sm:$0xff]
  %v778 = vld [vmem:[%s741 + $0x360] sm:$0xff]
  %v779 = vld [vmem:[%s741 + $0x368] sm:$0xff]
  %v780 = vld [vmem:[%s741 + $0x370] sm:$0xff]
  %v781 = vld [vmem:[%s741 + $0x378] sm:$0xff]
  %v782 = vld [vmem:[%s741 + $0x380] sm:$0xff]
  %v783 = vld [vmem:[%s741 + $0x388] sm:$0xff]
  %v784 = vld [vmem:[%s741 + $0x390] sm:$0xff]
  %v785 = vld [vmem:[%s741 + $0x398] sm:$0xff]
  %v786 = vld [vmem:[%s741 + $0x3a0] sm:$0xff]
  %v787 = vld [vmem:[%s741 + $0x3a8] sm:$0xff]
  %v788 = vld [vmem:[%s741 + $0x3b0] sm:$0xff]
  %v789 = vld [vmem:[%s741 + $0x3b8] sm:$0xff]
  %v790 = vmax.bf16 %v742, %v748
  %v791 = vmax.bf16 %v790, %v754
  %v792 = vmax.bf16 %v791, %v760
  %v793 = vmax.bf16 %v743, %v749
  %v794 = vmax.bf16 %v793, %v755
  %v795 = vmax.bf16 %v794, %v761
  %v796 = vmax.bf16 %v744, %v750
  %v797 = vmax.bf16 %v796, %v756
  %v798 = vmax.bf16 %v797, %v762
  %v799 = vmax.bf16 %v745, %v751
  %v800 = vmax.bf16 %v799, %v757
  %v801 = vmax.bf16 %v800, %v763
  %v802 = vmax.bf16 %v746, %v752
  %v803 = vmax.bf16 %v802, %v758
  %v804 = vmax.bf16 %v803, %v764
  %v805 = vmax.bf16 %v747, %v753
  %v806 = vmax.bf16 %v805, %v759
  %v807 = vmax.bf16 %v806, %v765
  %v808 = vmax.bf16 %v766, %v772
  %v809 = vmax.bf16 %v808, %v778
  %v810 = vmax.bf16 %v809, %v784
  %v811 = vmax.bf16 %v767, %v773
  %v812 = vmax.bf16 %v811, %v779
  %v813 = vmax.bf16 %v812, %v785
  %v814 = vmax.bf16 %v768, %v774
  %v815 = vmax.bf16 %v814, %v780
  %v816 = vmax.bf16 %v815, %v786
  %v817 = vmax.bf16 %v769, %v775
  %v818 = vmax.bf16 %v817, %v781
  %v819 = vmax.bf16 %v818, %v787
  %v820 = vmax.bf16 %v770, %v776
  %v821 = vmax.bf16 %v820, %v782
  %v822 = vmax.bf16 %v821, %v788
  %v823 = vmax.bf16 %v771, %v777
  %v824 = vmax.bf16 %v823, %v783
  %v825 = vmax.bf16 %v824, %v789
  %v826 = vunpack.c.l.bf16 %v792
  %v827 = vunpack.c.h.bf16 %v792
  %v828 = vunpack.c.l.bf16 %v795
  %v829 = vunpack.c.h.bf16 %v795
  %v830 = vunpack.c.l.bf16 %v798
  %v831 = vunpack.c.h.bf16 %v798
  %v832 = vunpack.c.l.bf16 %v801
  %v833 = vunpack.c.h.bf16 %v801
  %v834 = vunpack.c.l.bf16 %v804
  %v835 = vunpack.c.h.bf16 %v804
  %v836 = vunpack.c.l.bf16 %v807
  %v837 = vunpack.c.h.bf16 %v807
  %v838 = vunpack.c.l.bf16 %v810
  %v839 = vunpack.c.h.bf16 %v810
  %v840 = vunpack.c.l.bf16 %v813
  %v841 = vunpack.c.h.bf16 %v813
  %v842 = vunpack.c.l.bf16 %v816
  %v843 = vunpack.c.h.bf16 %v816
  %v844 = vunpack.c.l.bf16 %v819
  %v845 = vunpack.c.h.bf16 %v819
  %v846 = vunpack.c.l.bf16 %v822
  %v847 = vunpack.c.h.bf16 %v822
  %v848 = vunpack.c.l.bf16 %v825
  %v849 = vunpack.c.h.bf16 %v825
  %v874 = vrot.slane %v826, 1
  %v875 = vrot.slane %v832, 1
  %v876 = vsel %vm228, %v874, %v875
  %v877 = vrot.slane %v827, 1
  %v878 = vrot.slane %v833, 1
  %v879 = vsel %vm228, %v877, %v878
  %v880 = vrot.slane %v828, 1
  %v881 = vrot.slane %v834, 1
  %v882 = vsel %vm228, %v880, %v881
  %v883 = vrot.slane %v829, 1
  %v884 = vrot.slane %v835, 1
  %v885 = vsel %vm228, %v883, %v884
  %v886 = vrot.slane %v830, 1
  %v887 = vrot.slane %v836, 1
  %v888 = vsel %vm228, %v886, %v887
  %v889 = vrot.slane %v831, 1
  %v890 = vrot.slane %v837, 1
  %v891 = vsel %vm228, %v889, %v890
  %v892 = vrot.slane %v838, 1
  %v893 = vrot.slane %v844, 1
  %v894 = vsel %vm228, %v892, %v893
  %v895 = vrot.slane %v839, 1
  %v896 = vrot.slane %v845, 1
  %v897 = vsel %vm228, %v895, %v896
  %v898 = vrot.slane %v840, 1
  %v899 = vrot.slane %v846, 1
  %v900 = vsel %vm228, %v898, %v899
  %v901 = vrot.slane %v841, 1
  %v902 = vrot.slane %v847, 1
  %v903 = vsel %vm228, %v901, %v902
  %v904 = vrot.slane %v842, 1
  %v905 = vrot.slane %v848, 1
  %v906 = vsel %vm228, %v904, %v905
  %v907 = vrot.slane %v843, 1
  %v908 = vrot.slane %v849, 1
  %v909 = vsel %vm228, %v907, %v908
  %v934 = vmax.f32 %v826, %v876
  %v935 = vmax.f32 %v827, %v879
  %v936 = vmax.f32 %v828, %v882
  %v937 = vmax.f32 %v829, %v885
  %v938 = vmax.f32 %v830, %v888
  %v939 = vmax.f32 %v831, %v891
  %v940 = vmax.f32 %v832, %v875
  %v941 = vmax.f32 %v833, %v878
  %v942 = vmax.f32 %v834, %v881
  %v943 = vmax.f32 %v835, %v884
  %v944 = vmax.f32 %v836, %v887
  %v945 = vmax.f32 %v837, %v890
  %v946 = vmax.f32 %v838, %v894
  %v947 = vmax.f32 %v839, %v897
  %v948 = vmax.f32 %v840, %v900
  %v949 = vmax.f32 %v841, %v903
  %v950 = vmax.f32 %v842, %v906
  %v951 = vmax.f32 %v843, %v909
  %v952 = vmax.f32 %v844, %v893
  %v953 = vmax.f32 %v845, %v896
  %v954 = vmax.f32 %v846, %v899
  %v955 = vmax.f32 %v847, %v902
  %v956 = vmax.f32 %v848, %v905
  %v957 = vmax.f32 %v849, %v908
  %v982 = vrot.slane %v934, 2
  %v983 = vrot.slane %v940, 2
  %v984 = vsel %vm337, %v982, %v983
  %v985 = vrot.slane %v935, 2
  %v986 = vrot.slane %v941, 2
  %v987 = vsel %vm337, %v985, %v986
  %v988 = vrot.slane %v936, 2
  %v989 = vrot.slane %v942, 2
  %v990 = vsel %vm337, %v988, %v989
  %v991 = vrot.slane %v937, 2
  %v992 = vrot.slane %v943, 2
  %v993 = vsel %vm337, %v991, %v992
  %v994 = vrot.slane %v938, 2
  %v995 = vrot.slane %v944, 2
  %v996 = vsel %vm337, %v994, %v995
  %v997 = vrot.slane %v939, 2
  %v998 = vrot.slane %v945, 2
  %v999 = vsel %vm337, %v997, %v998
  %v1000 = vrot.slane %v946, 2
  %v1001 = vrot.slane %v952, 2
  %v1002 = vsel %vm337, %v1000, %v1001
  %v1003 = vrot.slane %v947, 2
  %v1004 = vrot.slane %v953, 2
  %v1005 = vsel %vm337, %v1003, %v1004
  %v1006 = vrot.slane %v948, 2
  %v1007 = vrot.slane %v954, 2
  %v1008 = vsel %vm337, %v1006, %v1007
  %v1009 = vrot.slane %v949, 2
  %v1010 = vrot.slane %v955, 2
  %v1011 = vsel %vm337, %v1009, %v1010
  %v1012 = vrot.slane %v950, 2
  %v1013 = vrot.slane %v956, 2
  %v1014 = vsel %vm337, %v1012, %v1013
  %v1015 = vrot.slane %v951, 2
  %v1016 = vrot.slane %v957, 2
  %v1017 = vsel %vm337, %v1015, %v1016
  %v1042 = vmax.f32 %v934, %v984
  %v1043 = vmax.f32 %v935, %v987
  %v1044 = vmax.f32 %v936, %v990
  %v1045 = vmax.f32 %v937, %v993
  %v1046 = vmax.f32 %v938, %v996
  %v1047 = vmax.f32 %v939, %v999
  %v1048 = vmax.f32 %v940, %v983
  %v1049 = vmax.f32 %v941, %v986
  %v1050 = vmax.f32 %v942, %v989
  %v1051 = vmax.f32 %v943, %v992
  %v1052 = vmax.f32 %v944, %v995
  %v1053 = vmax.f32 %v945, %v998
  %v1054 = vmax.f32 %v946, %v1002
  %v1055 = vmax.f32 %v947, %v1005
  %v1056 = vmax.f32 %v948, %v1008
  %v1057 = vmax.f32 %v949, %v1011
  %v1058 = vmax.f32 %v950, %v1014
  %v1059 = vmax.f32 %v951, %v1017
  %v1060 = vmax.f32 %v952, %v1001
  %v1061 = vmax.f32 %v953, %v1004
  %v1062 = vmax.f32 %v954, %v1007
  %v1063 = vmax.f32 %v955, %v1010
  %v1064 = vmax.f32 %v956, %v1013
  %v1065 = vmax.f32 %v957, %v1016
  %v1066 = vmul.f32 %v1042, %v53
  %v1067 = vmul.f32 %v1043, %v54
  %v1068 = vmul.f32 %v1044, %v55
  %v1069 = vmul.f32 %v1045, %v56
  %v1070 = vmul.f32 %v1046, %v57
  %v1071 = vmul.f32 %v1047, %v58
  %v1072 = vmul.f32 %v1054, %v53
  %v1073 = vmul.f32 %v1055, %v54
  %v1074 = vmul.f32 %v1056, %v55
  %v1075 = vmul.f32 %v1057, %v56
  %v1076 = vmul.f32 %v1058, %v57
  %v1077 = vmul.f32 %v1059, %v58
  %v1078 = vsel %vm337, %v1066, 0.0
  %v1079 = vrot.slane %v1078, 4
  %v1080 = vadd.f32 %v1078, %v1079
  %v1081 = vrot.slane %v1080, 2
  %v1082 = vadd.f32 %v1080, %v1081
  %v1083 = vrot.slane %v1082, 1
  %v1084 = vadd.f32 %v1082, %v1083
  %v1085 = vsel %vm337, %v1067, 0.0
  %v1086 = vrot.slane %v1085, 4
  %v1087 = vadd.f32 %v1085, %v1086
  %v1088 = vrot.slane %v1087, 2
  %v1089 = vadd.f32 %v1087, %v1088
  %v1090 = vrot.slane %v1089, 1
  %v1091 = vadd.f32 %v1089, %v1090
  %v1092 = vsel %vm337, %v1068, 0.0
  %v1093 = vrot.slane %v1092, 4
  %v1094 = vadd.f32 %v1092, %v1093
  %v1095 = vrot.slane %v1094, 2
  %v1096 = vadd.f32 %v1094, %v1095
  %v1097 = vrot.slane %v1096, 1
  %v1098 = vadd.f32 %v1096, %v1097
  %v1099 = vsel %vm337, %v1069, 0.0
  %v1100 = vrot.slane %v1099, 4
  %v1101 = vadd.f32 %v1099, %v1100
  %v1102 = vrot.slane %v1101, 2
  %v1103 = vadd.f32 %v1101, %v1102
  %v1104 = vrot.slane %v1103, 1
  %v1105 = vadd.f32 %v1103, %v1104
  %v1106 = vsel %vm337, %v1070, 0.0
  %v1107 = vrot.slane %v1106, 4
  %v1108 = vadd.f32 %v1106, %v1107
  %v1109 = vrot.slane %v1108, 2
  %v1110 = vadd.f32 %v1108, %v1109
  %v1111 = vrot.slane %v1110, 1
  %v1112 = vadd.f32 %v1110, %v1111
  %v1113 = vsel %vm337, %v1071, 0.0
  %v1114 = vrot.slane %v1113, 4
  %v1115 = vadd.f32 %v1113, %v1114
  %v1116 = vrot.slane %v1115, 2
  %v1117 = vadd.f32 %v1115, %v1116
  %v1118 = vrot.slane %v1117, 1
  %v1119 = vadd.f32 %v1117, %v1118
  %v1120 = vsel %vm337, %v1072, 0.0
  %v1121 = vrot.slane %v1120, 4
  %v1122 = vadd.f32 %v1120, %v1121
  %v1123 = vrot.slane %v1122, 2
  %v1124 = vadd.f32 %v1122, %v1123
  %v1125 = vrot.slane %v1124, 1
  %v1126 = vadd.f32 %v1124, %v1125
  %v1127 = vsel %vm337, %v1073, 0.0
  %v1128 = vrot.slane %v1127, 4
  %v1129 = vadd.f32 %v1127, %v1128
  %v1130 = vrot.slane %v1129, 2
  %v1131 = vadd.f32 %v1129, %v1130
  %v1132 = vrot.slane %v1131, 1
  %v1133 = vadd.f32 %v1131, %v1132
  %v1134 = vsel %vm337, %v1074, 0.0
  %v1135 = vrot.slane %v1134, 4
  %v1136 = vadd.f32 %v1134, %v1135
  %v1137 = vrot.slane %v1136, 2
  %v1138 = vadd.f32 %v1136, %v1137
  %v1139 = vrot.slane %v1138, 1
  %v1140 = vadd.f32 %v1138, %v1139
  %v1141 = vsel %vm337, %v1075, 0.0
  %v1142 = vrot.slane %v1141, 4
  %v1143 = vadd.f32 %v1141, %v1142
  %v1144 = vrot.slane %v1143, 2
  %v1145 = vadd.f32 %v1143, %v1144
  %v1146 = vrot.slane %v1145, 1
  %v1147 = vadd.f32 %v1145, %v1146
  %v1148 = vsel %vm337, %v1076, 0.0
  %v1149 = vrot.slane %v1148, 4
  %v1150 = vadd.f32 %v1148, %v1149
  %v1151 = vrot.slane %v1150, 2
  %v1152 = vadd.f32 %v1150, %v1151
  %v1153 = vrot.slane %v1152, 1
  %v1154 = vadd.f32 %v1152, %v1153
  %v1155 = vsel %vm337, %v1077, 0.0
  %v1156 = vrot.slane %v1155, 4
  %v1157 = vadd.f32 %v1155, %v1156
  %v1158 = vrot.slane %v1157, 2
  %v1159 = vadd.f32 %v1157, %v1158
  %v1160 = vrot.slane %v1159, 1
  %v1161 = vadd.f32 %v1159, %v1160
  %v1162 = vadd.f32 %v518, %v1084
  %v1163 = vadd.f32 %v519, %v1091
  %v1164 = vadd.f32 %v520, %v1098
  %v1165 = vadd.f32 %v521, %v1105
  %v1166 = vadd.f32 %v522, %v1112
  %v1167 = vadd.f32 %v523, %v1119
  %v1168 = vadd.f32 %v524, %v1126
  %v1169 = vadd.f32 %v525, %v1133
  %v1170 = vadd.f32 %v526, %v1140
  %v1171 = vadd.f32 %v527, %v1147
  %v1172 = vadd.f32 %v528, %v1154
  %v1173 = vadd.f32 %v529, %v1161
  %v1180 = vrot.slane %v77, 1
  %v1181 = vrot.slane %v78, 1
  %v1182 = vrot.slane %v79, 1
  %v1183 = vrot.slane %v80, 1
  %v1184 = vrot.slane %v81, 1
  %v1185 = vrot.slane %v82, 1
  %v1192 = vmul.f32 %v1042, %v1180
  %v1193 = vmul.f32 %v1043, %v1181
  %v1194 = vmul.f32 %v1044, %v1182
  %v1195 = vmul.f32 %v1045, %v1183
  %v1196 = vmul.f32 %v1046, %v1184
  %v1197 = vmul.f32 %v1047, %v1185
  %v1198 = vmul.f32 %v1048, %v1180
  %v1199 = vmul.f32 %v1049, %v1181
  %v1200 = vmul.f32 %v1050, %v1182
  %v1201 = vmul.f32 %v1051, %v1183
  %v1202 = vmul.f32 %v1052, %v1184
  %v1203 = vmul.f32 %v1053, %v1185
  %v1204 = vmul.f32 %v1054, %v1180
  %v1205 = vmul.f32 %v1055, %v1181
  %v1206 = vmul.f32 %v1056, %v1182
  %v1207 = vmul.f32 %v1057, %v1183
  %v1208 = vmul.f32 %v1058, %v1184
  %v1209 = vmul.f32 %v1059, %v1185
  %v1210 = vmul.f32 %v1060, %v1180
  %v1211 = vmul.f32 %v1061, %v1181
  %v1212 = vmul.f32 %v1062, %v1182
  %v1213 = vmul.f32 %v1063, %v1183
  %v1214 = vmul.f32 %v1064, %v1184
  %v1215 = vmul.f32 %v1065, %v1185
  %v1240 = vrot.slane %v1192, 7
  %v1241 = vrot.slane %v1198, 7
  %v1242 = vsel %vm596, %v1240, %v1241
  %v1243 = vrot.slane %v1193, 7
  %v1244 = vrot.slane %v1199, 7
  %v1245 = vsel %vm596, %v1243, %v1244
  %v1246 = vrot.slane %v1194, 7
  %v1247 = vrot.slane %v1200, 7
  %v1248 = vsel %vm596, %v1246, %v1247
  %v1249 = vrot.slane %v1195, 7
  %v1250 = vrot.slane %v1201, 7
  %v1251 = vsel %vm596, %v1249, %v1250
  %v1252 = vrot.slane %v1196, 7
  %v1253 = vrot.slane %v1202, 7
  %v1254 = vsel %vm596, %v1252, %v1253
  %v1255 = vrot.slane %v1197, 7
  %v1256 = vrot.slane %v1203, 7
  %v1257 = vsel %vm596, %v1255, %v1256
  %v1258 = vrot.slane %v1204, 7
  %v1259 = vrot.slane %v1210, 7
  %v1260 = vsel %vm596, %v1258, %v1259
  %v1261 = vrot.slane %v1205, 7
  %v1262 = vrot.slane %v1211, 7
  %v1263 = vsel %vm596, %v1261, %v1262
  %v1264 = vrot.slane %v1206, 7
  %v1265 = vrot.slane %v1212, 7
  %v1266 = vsel %vm596, %v1264, %v1265
  %v1267 = vrot.slane %v1207, 7
  %v1268 = vrot.slane %v1213, 7
  %v1269 = vsel %vm596, %v1267, %v1268
  %v1270 = vrot.slane %v1208, 7
  %v1271 = vrot.slane %v1214, 7
  %v1272 = vsel %vm596, %v1270, %v1271
  %v1273 = vrot.slane %v1209, 7
  %v1274 = vrot.slane %v1215, 7
  %v1275 = vsel %vm596, %v1273, %v1274
  %v1288 = vsel %vm337, %v1242, 0.0
  %v1289 = vrot.slane %v1288, 4
  %v1290 = vadd.f32 %v1288, %v1289
  %v1291 = vrot.slane %v1290, 2
  %v1292 = vadd.f32 %v1290, %v1291
  %v1293 = vrot.slane %v1292, 1
  %v1294 = vadd.f32 %v1292, %v1293
  %v1295 = vsel %vm337, %v1245, 0.0
  %v1296 = vrot.slane %v1295, 4
  %v1297 = vadd.f32 %v1295, %v1296
  %v1298 = vrot.slane %v1297, 2
  %v1299 = vadd.f32 %v1297, %v1298
  %v1300 = vrot.slane %v1299, 1
  %v1301 = vadd.f32 %v1299, %v1300
  %v1302 = vsel %vm337, %v1248, 0.0
  %v1303 = vrot.slane %v1302, 4
  %v1304 = vadd.f32 %v1302, %v1303
  %v1305 = vrot.slane %v1304, 2
  %v1306 = vadd.f32 %v1304, %v1305
  %v1307 = vrot.slane %v1306, 1
  %v1308 = vadd.f32 %v1306, %v1307
  %v1309 = vsel %vm337, %v1251, 0.0
  %v1310 = vrot.slane %v1309, 4
  %v1311 = vadd.f32 %v1309, %v1310
  %v1312 = vrot.slane %v1311, 2
  %v1313 = vadd.f32 %v1311, %v1312
  %v1314 = vrot.slane %v1313, 1
  %v1315 = vadd.f32 %v1313, %v1314
  %v1316 = vsel %vm337, %v1254, 0.0
  %v1317 = vrot.slane %v1316, 4
  %v1318 = vadd.f32 %v1316, %v1317
  %v1319 = vrot.slane %v1318, 2
  %v1320 = vadd.f32 %v1318, %v1319
  %v1321 = vrot.slane %v1320, 1
  %v1322 = vadd.f32 %v1320, %v1321
  %v1323 = vsel %vm337, %v1257, 0.0
  %v1324 = vrot.slane %v1323, 4
  %v1325 = vadd.f32 %v1323, %v1324
  %v1326 = vrot.slane %v1325, 2
  %v1327 = vadd.f32 %v1325, %v1326
  %v1328 = vrot.slane %v1327, 1
  %v1329 = vadd.f32 %v1327, %v1328
  %v1330 = vsel %vm337, %v1260, 0.0
  %v1331 = vrot.slane %v1330, 4
  %v1332 = vadd.f32 %v1330, %v1331
  %v1333 = vrot.slane %v1332, 2
  %v1334 = vadd.f32 %v1332, %v1333
  %v1335 = vrot.slane %v1334, 1
  %v1336 = vadd.f32 %v1334, %v1335
  %v1337 = vsel %vm337, %v1263, 0.0
  %v1338 = vrot.slane %v1337, 4
  %v1339 = vadd.f32 %v1337, %v1338
  %v1340 = vrot.slane %v1339, 2
  %v1341 = vadd.f32 %v1339, %v1340
  %v1342 = vrot.slane %v1341, 1
  %v1343 = vadd.f32 %v1341, %v1342
  %v1344 = vsel %vm337, %v1266, 0.0
  %v1345 = vrot.slane %v1344, 4
  %v1346 = vadd.f32 %v1344, %v1345
  %v1347 = vrot.slane %v1346, 2
  %v1348 = vadd.f32 %v1346, %v1347
  %v1349 = vrot.slane %v1348, 1
  %v1350 = vadd.f32 %v1348, %v1349
  %v1351 = vsel %vm337, %v1269, 0.0
  %v1352 = vrot.slane %v1351, 4
  %v1353 = vadd.f32 %v1351, %v1352
  %v1354 = vrot.slane %v1353, 2
  %v1355 = vadd.f32 %v1353, %v1354
  %v1356 = vrot.slane %v1355, 1
  %v1357 = vadd.f32 %v1355, %v1356
  %v1358 = vsel %vm337, %v1272, 0.0
  %v1359 = vrot.slane %v1358, 4
  %v1360 = vadd.f32 %v1358, %v1359
  %v1361 = vrot.slane %v1360, 2
  %v1362 = vadd.f32 %v1360, %v1361
  %v1363 = vrot.slane %v1362, 1
  %v1364 = vadd.f32 %v1362, %v1363
  %v1365 = vsel %vm337, %v1275, 0.0
  %v1366 = vrot.slane %v1365, 4
  %v1367 = vadd.f32 %v1365, %v1366
  %v1368 = vrot.slane %v1367, 2
  %v1369 = vadd.f32 %v1367, %v1368
  %v1370 = vrot.slane %v1369, 1
  %v1371 = vadd.f32 %v1369, %v1370
  %v1372 = vadd.f32 %v729, %v1294
  %v1373 = vadd.f32 %v730, %v1301
  %v1374 = vadd.f32 %v731, %v1308
  %v1375 = vadd.f32 %v732, %v1315
  %v1376 = vadd.f32 %v733, %v1322
  %v1377 = vadd.f32 %v734, %v1329
  %v1378 = vadd.f32 %v735, %v1336
  %v1379 = vadd.f32 %v736, %v1343
  %v1380 = vadd.f32 %v737, %v1350
  %v1381 = vadd.f32 %v738, %v1357
  %v1382 = vadd.f32 %v739, %v1364
  %v1383 = vadd.f32 %v740, %v1371
  %s1384 = scalar_lea.vmem %s0, 144
  %v1385 = vld [vmem:[%s1384] sm:$0xff]
  %v1386 = vld [vmem:[%s1384 + $0x8] sm:$0xff]
  %v1387 = vld [vmem:[%s1384 + $0x10] sm:$0xff]
  %v1388 = vld [vmem:[%s1384 + $0x18] sm:$0xff]
  %v1389 = vld [vmem:[%s1384 + $0x20] sm:$0xff]
  %v1390 = vld [vmem:[%s1384 + $0x28] sm:$0xff]
  %v1391 = vld [vmem:[%s1384 + $0x30] sm:$0xff]
  %v1392 = vld [vmem:[%s1384 + $0x38] sm:$0xff]
  %v1393 = vld [vmem:[%s1384 + $0x40] sm:$0xff]
  %v1394 = vld [vmem:[%s1384 + $0x48] sm:$0xff]
  %v1395 = vld [vmem:[%s1384 + $0x50] sm:$0xff]
  %v1396 = vld [vmem:[%s1384 + $0x58] sm:$0xff]
  %v1397 = vld [vmem:[%s1384 + $0x60] sm:$0xff]
  %v1398 = vld [vmem:[%s1384 + $0x68] sm:$0xff]
  %v1399 = vld [vmem:[%s1384 + $0x70] sm:$0xff]
  %v1400 = vld [vmem:[%s1384 + $0x78] sm:$0xff]
  %v1401 = vld [vmem:[%s1384 + $0x80] sm:$0xff]
  %v1402 = vld [vmem:[%s1384 + $0x88] sm:$0xff]
  %v1403 = vld [vmem:[%s1384 + $0x90] sm:$0xff]
  %v1404 = vld [vmem:[%s1384 + $0x98] sm:$0xff]
  %v1405 = vld [vmem:[%s1384 + $0xa0] sm:$0xff]
  %v1406 = vld [vmem:[%s1384 + $0xa8] sm:$0xff]
  %v1407 = vld [vmem:[%s1384 + $0xb0] sm:$0xff]
  %v1408 = vld [vmem:[%s1384 + $0xb8] sm:$0xff]
  %v1409 = vld [vmem:[%s1384 + $0x300] sm:$0xff]
  %v1410 = vld [vmem:[%s1384 + $0x308] sm:$0xff]
  %v1411 = vld [vmem:[%s1384 + $0x310] sm:$0xff]
  %v1412 = vld [vmem:[%s1384 + $0x318] sm:$0xff]
  %v1413 = vld [vmem:[%s1384 + $0x320] sm:$0xff]
  %v1414 = vld [vmem:[%s1384 + $0x328] sm:$0xff]
  %v1415 = vld [vmem:[%s1384 + $0x330] sm:$0xff]
  %v1416 = vld [vmem:[%s1384 + $0x338] sm:$0xff]
  %v1417 = vld [vmem:[%s1384 + $0x340] sm:$0xff]
  %v1418 = vld [vmem:[%s1384 + $0x348] sm:$0xff]
  %v1419 = vld [vmem:[%s1384 + $0x350] sm:$0xff]
  %v1420 = vld [vmem:[%s1384 + $0x358] sm:$0xff]
  %v1421 = vld [vmem:[%s1384 + $0x360] sm:$0xff]
  %v1422 = vld [vmem:[%s1384 + $0x368] sm:$0xff]
  %v1423 = vld [vmem:[%s1384 + $0x370] sm:$0xff]
  %v1424 = vld [vmem:[%s1384 + $0x378] sm:$0xff]
  %v1425 = vld [vmem:[%s1384 + $0x380] sm:$0xff]
  %v1426 = vld [vmem:[%s1384 + $0x388] sm:$0xff]
  %v1427 = vld [vmem:[%s1384 + $0x390] sm:$0xff]
  %v1428 = vld [vmem:[%s1384 + $0x398] sm:$0xff]
  %v1429 = vld [vmem:[%s1384 + $0x3a0] sm:$0xff]
  %v1430 = vld [vmem:[%s1384 + $0x3a8] sm:$0xff]
  %v1431 = vld [vmem:[%s1384 + $0x3b0] sm:$0xff]
  %v1432 = vld [vmem:[%s1384 + $0x3b8] sm:$0xff]
  %v1433 = vmax.bf16 %v1385, %v1391
  %v1434 = vmax.bf16 %v1433, %v1397
  %v1435 = vmax.bf16 %v1434, %v1403
  %v1436 = vmax.bf16 %v1386, %v1392
  %v1437 = vmax.bf16 %v1436, %v1398
  %v1438 = vmax.bf16 %v1437, %v1404
  %v1439 = vmax.bf16 %v1387, %v1393
  %v1440 = vmax.bf16 %v1439, %v1399
  %v1441 = vmax.bf16 %v1440, %v1405
  %v1442 = vmax.bf16 %v1388, %v1394
  %v1443 = vmax.bf16 %v1442, %v1400
  %v1444 = vmax.bf16 %v1443, %v1406
  %v1445 = vmax.bf16 %v1389, %v1395
  %v1446 = vmax.bf16 %v1445, %v1401
  %v1447 = vmax.bf16 %v1446, %v1407
  %v1448 = vmax.bf16 %v1390, %v1396
  %v1449 = vmax.bf16 %v1448, %v1402
  %v1450 = vmax.bf16 %v1449, %v1408
  %v1451 = vmax.bf16 %v1409, %v1415
  %v1452 = vmax.bf16 %v1451, %v1421
  %v1453 = vmax.bf16 %v1452, %v1427
  %v1454 = vmax.bf16 %v1410, %v1416
  %v1455 = vmax.bf16 %v1454, %v1422
  %v1456 = vmax.bf16 %v1455, %v1428
  %v1457 = vmax.bf16 %v1411, %v1417
  %v1458 = vmax.bf16 %v1457, %v1423
  %v1459 = vmax.bf16 %v1458, %v1429
  %v1460 = vmax.bf16 %v1412, %v1418
  %v1461 = vmax.bf16 %v1460, %v1424
  %v1462 = vmax.bf16 %v1461, %v1430
  %v1463 = vmax.bf16 %v1413, %v1419
  %v1464 = vmax.bf16 %v1463, %v1425
  %v1465 = vmax.bf16 %v1464, %v1431
  %v1466 = vmax.bf16 %v1414, %v1420
  %v1467 = vmax.bf16 %v1466, %v1426
  %v1468 = vmax.bf16 %v1467, %v1432
  %v1469 = vunpack.c.l.bf16 %v1435
  %v1470 = vunpack.c.h.bf16 %v1435
  %v1471 = vunpack.c.l.bf16 %v1438
  %v1472 = vunpack.c.h.bf16 %v1438
  %v1473 = vunpack.c.l.bf16 %v1441
  %v1474 = vunpack.c.h.bf16 %v1441
  %v1475 = vunpack.c.l.bf16 %v1444
  %v1476 = vunpack.c.h.bf16 %v1444
  %v1477 = vunpack.c.l.bf16 %v1447
  %v1478 = vunpack.c.h.bf16 %v1447
  %v1479 = vunpack.c.l.bf16 %v1450
  %v1480 = vunpack.c.h.bf16 %v1450
  %v1481 = vunpack.c.l.bf16 %v1453
  %v1482 = vunpack.c.h.bf16 %v1453
  %v1483 = vunpack.c.l.bf16 %v1456
  %v1484 = vunpack.c.h.bf16 %v1456
  %v1485 = vunpack.c.l.bf16 %v1459
  %v1486 = vunpack.c.h.bf16 %v1459
  %v1487 = vunpack.c.l.bf16 %v1462
  %v1488 = vunpack.c.h.bf16 %v1462
  %v1489 = vunpack.c.l.bf16 %v1465
  %v1490 = vunpack.c.h.bf16 %v1465
  %v1491 = vunpack.c.l.bf16 %v1468
  %v1492 = vunpack.c.h.bf16 %v1468
  %v1517 = vrot.slane %v1469, 1
  %v1518 = vrot.slane %v1475, 1
  %v1519 = vsel %vm228, %v1517, %v1518
  %v1520 = vrot.slane %v1470, 1
  %v1521 = vrot.slane %v1476, 1
  %v1522 = vsel %vm228, %v1520, %v1521
  %v1523 = vrot.slane %v1471, 1
  %v1524 = vrot.slane %v1477, 1
  %v1525 = vsel %vm228, %v1523, %v1524
  %v1526 = vrot.slane %v1472, 1
  %v1527 = vrot.slane %v1478, 1
  %v1528 = vsel %vm228, %v1526, %v1527
  %v1529 = vrot.slane %v1473, 1
  %v1530 = vrot.slane %v1479, 1
  %v1531 = vsel %vm228, %v1529, %v1530
  %v1532 = vrot.slane %v1474, 1
  %v1533 = vrot.slane %v1480, 1
  %v1534 = vsel %vm228, %v1532, %v1533
  %v1535 = vrot.slane %v1481, 1
  %v1536 = vrot.slane %v1487, 1
  %v1537 = vsel %vm228, %v1535, %v1536
  %v1538 = vrot.slane %v1482, 1
  %v1539 = vrot.slane %v1488, 1
  %v1540 = vsel %vm228, %v1538, %v1539
  %v1541 = vrot.slane %v1483, 1
  %v1542 = vrot.slane %v1489, 1
  %v1543 = vsel %vm228, %v1541, %v1542
  %v1544 = vrot.slane %v1484, 1
  %v1545 = vrot.slane %v1490, 1
  %v1546 = vsel %vm228, %v1544, %v1545
  %v1547 = vrot.slane %v1485, 1
  %v1548 = vrot.slane %v1491, 1
  %v1549 = vsel %vm228, %v1547, %v1548
  %v1550 = vrot.slane %v1486, 1
  %v1551 = vrot.slane %v1492, 1
  %v1552 = vsel %vm228, %v1550, %v1551
  %v1577 = vmax.f32 %v1469, %v1519
  %v1578 = vmax.f32 %v1470, %v1522
  %v1579 = vmax.f32 %v1471, %v1525
  %v1580 = vmax.f32 %v1472, %v1528
  %v1581 = vmax.f32 %v1473, %v1531
  %v1582 = vmax.f32 %v1474, %v1534
  %v1583 = vmax.f32 %v1475, %v1518
  %v1584 = vmax.f32 %v1476, %v1521
  %v1585 = vmax.f32 %v1477, %v1524
  %v1586 = vmax.f32 %v1478, %v1527
  %v1587 = vmax.f32 %v1479, %v1530
  %v1588 = vmax.f32 %v1480, %v1533
  %v1589 = vmax.f32 %v1481, %v1537
  %v1590 = vmax.f32 %v1482, %v1540
  %v1591 = vmax.f32 %v1483, %v1543
  %v1592 = vmax.f32 %v1484, %v1546
  %v1593 = vmax.f32 %v1485, %v1549
  %v1594 = vmax.f32 %v1486, %v1552
  %v1595 = vmax.f32 %v1487, %v1536
  %v1596 = vmax.f32 %v1488, %v1539
  %v1597 = vmax.f32 %v1489, %v1542
  %v1598 = vmax.f32 %v1490, %v1545
  %v1599 = vmax.f32 %v1491, %v1548
  %v1600 = vmax.f32 %v1492, %v1551
  %v1625 = vrot.slane %v1577, 2
  %v1626 = vrot.slane %v1583, 2
  %v1627 = vsel %vm337, %v1625, %v1626
  %v1628 = vrot.slane %v1578, 2
  %v1629 = vrot.slane %v1584, 2
  %v1630 = vsel %vm337, %v1628, %v1629
  %v1631 = vrot.slane %v1579, 2
  %v1632 = vrot.slane %v1585, 2
  %v1633 = vsel %vm337, %v1631, %v1632
  %v1634 = vrot.slane %v1580, 2
  %v1635 = vrot.slane %v1586, 2
  %v1636 = vsel %vm337, %v1634, %v1635
  %v1637 = vrot.slane %v1581, 2
  %v1638 = vrot.slane %v1587, 2
  %v1639 = vsel %vm337, %v1637, %v1638
  %v1640 = vrot.slane %v1582, 2
  %v1641 = vrot.slane %v1588, 2
  %v1642 = vsel %vm337, %v1640, %v1641
  %v1643 = vrot.slane %v1589, 2
  %v1644 = vrot.slane %v1595, 2
  %v1645 = vsel %vm337, %v1643, %v1644
  %v1646 = vrot.slane %v1590, 2
  %v1647 = vrot.slane %v1596, 2
  %v1648 = vsel %vm337, %v1646, %v1647
  %v1649 = vrot.slane %v1591, 2
  %v1650 = vrot.slane %v1597, 2
  %v1651 = vsel %vm337, %v1649, %v1650
  %v1652 = vrot.slane %v1592, 2
  %v1653 = vrot.slane %v1598, 2
  %v1654 = vsel %vm337, %v1652, %v1653
  %v1655 = vrot.slane %v1593, 2
  %v1656 = vrot.slane %v1599, 2
  %v1657 = vsel %vm337, %v1655, %v1656
  %v1658 = vrot.slane %v1594, 2
  %v1659 = vrot.slane %v1600, 2
  %v1660 = vsel %vm337, %v1658, %v1659
  %v1685 = vmax.f32 %v1577, %v1627
  %v1686 = vmax.f32 %v1578, %v1630
  %v1687 = vmax.f32 %v1579, %v1633
  %v1688 = vmax.f32 %v1580, %v1636
  %v1689 = vmax.f32 %v1581, %v1639
  %v1690 = vmax.f32 %v1582, %v1642
  %v1691 = vmax.f32 %v1583, %v1626
  %v1692 = vmax.f32 %v1584, %v1629
  %v1693 = vmax.f32 %v1585, %v1632
  %v1694 = vmax.f32 %v1586, %v1635
  %v1695 = vmax.f32 %v1587, %v1638
  %v1696 = vmax.f32 %v1588, %v1641
  %v1697 = vmax.f32 %v1589, %v1645
  %v1698 = vmax.f32 %v1590, %v1648
  %v1699 = vmax.f32 %v1591, %v1651
  %v1700 = vmax.f32 %v1592, %v1654
  %v1701 = vmax.f32 %v1593, %v1657
  %v1702 = vmax.f32 %v1594, %v1660
  %v1703 = vmax.f32 %v1595, %v1644
  %v1704 = vmax.f32 %v1596, %v1647
  %v1705 = vmax.f32 %v1597, %v1650
  %v1706 = vmax.f32 %v1598, %v1653
  %v1707 = vmax.f32 %v1599, %v1656
  %v1708 = vmax.f32 %v1600, %v1659
  %v1709 = vmul.f32 %v1685, %v59
  %v1710 = vmul.f32 %v1686, %v60
  %v1711 = vmul.f32 %v1687, %v61
  %v1712 = vmul.f32 %v1688, %v62
  %v1713 = vmul.f32 %v1689, %v63
  %v1714 = vmul.f32 %v1690, %v64
  %v1715 = vmul.f32 %v1697, %v59
  %v1716 = vmul.f32 %v1698, %v60
  %v1717 = vmul.f32 %v1699, %v61
  %v1718 = vmul.f32 %v1700, %v62
  %v1719 = vmul.f32 %v1701, %v63
  %v1720 = vmul.f32 %v1702, %v64
  %v1721 = vsel %vm337, %v1709, 0.0
  %v1722 = vrot.slane %v1721, 4
  %v1723 = vadd.f32 %v1721, %v1722
  %v1724 = vrot.slane %v1723, 2
  %v1725 = vadd.f32 %v1723, %v1724
  %v1726 = vrot.slane %v1725, 1
  %v1727 = vadd.f32 %v1725, %v1726
  %v1728 = vsel %vm337, %v1710, 0.0
  %v1729 = vrot.slane %v1728, 4
  %v1730 = vadd.f32 %v1728, %v1729
  %v1731 = vrot.slane %v1730, 2
  %v1732 = vadd.f32 %v1730, %v1731
  %v1733 = vrot.slane %v1732, 1
  %v1734 = vadd.f32 %v1732, %v1733
  %v1735 = vsel %vm337, %v1711, 0.0
  %v1736 = vrot.slane %v1735, 4
  %v1737 = vadd.f32 %v1735, %v1736
  %v1738 = vrot.slane %v1737, 2
  %v1739 = vadd.f32 %v1737, %v1738
  %v1740 = vrot.slane %v1739, 1
  %v1741 = vadd.f32 %v1739, %v1740
  %v1742 = vsel %vm337, %v1712, 0.0
  %v1743 = vrot.slane %v1742, 4
  %v1744 = vadd.f32 %v1742, %v1743
  %v1745 = vrot.slane %v1744, 2
  %v1746 = vadd.f32 %v1744, %v1745
  %v1747 = vrot.slane %v1746, 1
  %v1748 = vadd.f32 %v1746, %v1747
  %v1749 = vsel %vm337, %v1713, 0.0
  %v1750 = vrot.slane %v1749, 4
  %v1751 = vadd.f32 %v1749, %v1750
  %v1752 = vrot.slane %v1751, 2
  %v1753 = vadd.f32 %v1751, %v1752
  %v1754 = vrot.slane %v1753, 1
  %v1755 = vadd.f32 %v1753, %v1754
  %v1756 = vsel %vm337, %v1714, 0.0
  %v1757 = vrot.slane %v1756, 4
  %v1758 = vadd.f32 %v1756, %v1757
  %v1759 = vrot.slane %v1758, 2
  %v1760 = vadd.f32 %v1758, %v1759
  %v1761 = vrot.slane %v1760, 1
  %v1762 = vadd.f32 %v1760, %v1761
  %v1763 = vsel %vm337, %v1715, 0.0
  %v1764 = vrot.slane %v1763, 4
  %v1765 = vadd.f32 %v1763, %v1764
  %v1766 = vrot.slane %v1765, 2
  %v1767 = vadd.f32 %v1765, %v1766
  %v1768 = vrot.slane %v1767, 1
  %v1769 = vadd.f32 %v1767, %v1768
  %v1770 = vsel %vm337, %v1716, 0.0
  %v1771 = vrot.slane %v1770, 4
  %v1772 = vadd.f32 %v1770, %v1771
  %v1773 = vrot.slane %v1772, 2
  %v1774 = vadd.f32 %v1772, %v1773
  %v1775 = vrot.slane %v1774, 1
  %v1776 = vadd.f32 %v1774, %v1775
  %v1777 = vsel %vm337, %v1717, 0.0
  %v1778 = vrot.slane %v1777, 4
  %v1779 = vadd.f32 %v1777, %v1778
  %v1780 = vrot.slane %v1779, 2
  %v1781 = vadd.f32 %v1779, %v1780
  %v1782 = vrot.slane %v1781, 1
  %v1783 = vadd.f32 %v1781, %v1782
  %v1784 = vsel %vm337, %v1718, 0.0
  %v1785 = vrot.slane %v1784, 4
  %v1786 = vadd.f32 %v1784, %v1785
  %v1787 = vrot.slane %v1786, 2
  %v1788 = vadd.f32 %v1786, %v1787
  %v1789 = vrot.slane %v1788, 1
  %v1790 = vadd.f32 %v1788, %v1789
  %v1791 = vsel %vm337, %v1719, 0.0
  %v1792 = vrot.slane %v1791, 4
  %v1793 = vadd.f32 %v1791, %v1792
  %v1794 = vrot.slane %v1793, 2
  %v1795 = vadd.f32 %v1793, %v1794
  %v1796 = vrot.slane %v1795, 1
  %v1797 = vadd.f32 %v1795, %v1796
  %v1798 = vsel %vm337, %v1720, 0.0
  %v1799 = vrot.slane %v1798, 4
  %v1800 = vadd.f32 %v1798, %v1799
  %v1801 = vrot.slane %v1800, 2
  %v1802 = vadd.f32 %v1800, %v1801
  %v1803 = vrot.slane %v1802, 1
  %v1804 = vadd.f32 %v1802, %v1803
  %v1805 = vadd.f32 %v1162, %v1727
  %v1806 = vadd.f32 %v1163, %v1734
  %v1807 = vadd.f32 %v1164, %v1741
  %v1808 = vadd.f32 %v1165, %v1748
  %v1809 = vadd.f32 %v1166, %v1755
  %v1810 = vadd.f32 %v1167, %v1762
  %v1811 = vadd.f32 %v1168, %v1769
  %v1812 = vadd.f32 %v1169, %v1776
  %v1813 = vadd.f32 %v1170, %v1783
  %v1814 = vadd.f32 %v1171, %v1790
  %v1815 = vadd.f32 %v1172, %v1797
  %v1816 = vadd.f32 %v1173, %v1804
  %v1823 = vrot.slane %v83, 1
  %v1824 = vrot.slane %v84, 1
  %v1825 = vrot.slane %v85, 1
  %v1826 = vrot.slane %v86, 1
  %v1827 = vrot.slane %v87, 1
  %v1828 = vrot.slane %v88, 1
  %v1835 = vmul.f32 %v1685, %v1823
  %v1836 = vmul.f32 %v1686, %v1824
  %v1837 = vmul.f32 %v1687, %v1825
  %v1838 = vmul.f32 %v1688, %v1826
  %v1839 = vmul.f32 %v1689, %v1827
  %v1840 = vmul.f32 %v1690, %v1828
  %v1841 = vmul.f32 %v1691, %v1823
  %v1842 = vmul.f32 %v1692, %v1824
  %v1843 = vmul.f32 %v1693, %v1825
  %v1844 = vmul.f32 %v1694, %v1826
  %v1845 = vmul.f32 %v1695, %v1827
  %v1846 = vmul.f32 %v1696, %v1828
  %v1847 = vmul.f32 %v1697, %v1823
  %v1848 = vmul.f32 %v1698, %v1824
  %v1849 = vmul.f32 %v1699, %v1825
  %v1850 = vmul.f32 %v1700, %v1826
  %v1851 = vmul.f32 %v1701, %v1827
  %v1852 = vmul.f32 %v1702, %v1828
  %v1853 = vmul.f32 %v1703, %v1823
  %v1854 = vmul.f32 %v1704, %v1824
  %v1855 = vmul.f32 %v1705, %v1825
  %v1856 = vmul.f32 %v1706, %v1826
  %v1857 = vmul.f32 %v1707, %v1827
  %v1858 = vmul.f32 %v1708, %v1828
  %v1883 = vrot.slane %v1835, 7
  %v1884 = vrot.slane %v1841, 7
  %v1885 = vsel %vm596, %v1883, %v1884
  %v1886 = vrot.slane %v1836, 7
  %v1887 = vrot.slane %v1842, 7
  %v1888 = vsel %vm596, %v1886, %v1887
  %v1889 = vrot.slane %v1837, 7
  %v1890 = vrot.slane %v1843, 7
  %v1891 = vsel %vm596, %v1889, %v1890
  %v1892 = vrot.slane %v1838, 7
  %v1893 = vrot.slane %v1844, 7
  %v1894 = vsel %vm596, %v1892, %v1893
  %v1895 = vrot.slane %v1839, 7
  %v1896 = vrot.slane %v1845, 7
  %v1897 = vsel %vm596, %v1895, %v1896
  %v1898 = vrot.slane %v1840, 7
  %v1899 = vrot.slane %v1846, 7
  %v1900 = vsel %vm596, %v1898, %v1899
  %v1901 = vrot.slane %v1847, 7
  %v1902 = vrot.slane %v1853, 7
  %v1903 = vsel %vm596, %v1901, %v1902
  %v1904 = vrot.slane %v1848, 7
  %v1905 = vrot.slane %v1854, 7
  %v1906 = vsel %vm596, %v1904, %v1905
  %v1907 = vrot.slane %v1849, 7
  %v1908 = vrot.slane %v1855, 7
  %v1909 = vsel %vm596, %v1907, %v1908
  %v1910 = vrot.slane %v1850, 7
  %v1911 = vrot.slane %v1856, 7
  %v1912 = vsel %vm596, %v1910, %v1911
  %v1913 = vrot.slane %v1851, 7
  %v1914 = vrot.slane %v1857, 7
  %v1915 = vsel %vm596, %v1913, %v1914
  %v1916 = vrot.slane %v1852, 7
  %v1917 = vrot.slane %v1858, 7
  %v1918 = vsel %vm596, %v1916, %v1917
  %v1931 = vsel %vm337, %v1885, 0.0
  %v1932 = vrot.slane %v1931, 4
  %v1933 = vadd.f32 %v1931, %v1932
  %v1934 = vrot.slane %v1933, 2
  %v1935 = vadd.f32 %v1933, %v1934
  %v1936 = vrot.slane %v1935, 1
  %v1937 = vadd.f32 %v1935, %v1936
  %v1938 = vsel %vm337, %v1888, 0.0
  %v1939 = vrot.slane %v1938, 4
  %v1940 = vadd.f32 %v1938, %v1939
  %v1941 = vrot.slane %v1940, 2
  %v1942 = vadd.f32 %v1940, %v1941
  %v1943 = vrot.slane %v1942, 1
  %v1944 = vadd.f32 %v1942, %v1943
  %v1945 = vsel %vm337, %v1891, 0.0
  %v1946 = vrot.slane %v1945, 4
  %v1947 = vadd.f32 %v1945, %v1946
  %v1948 = vrot.slane %v1947, 2
  %v1949 = vadd.f32 %v1947, %v1948
  %v1950 = vrot.slane %v1949, 1
  %v1951 = vadd.f32 %v1949, %v1950
  %v1952 = vsel %vm337, %v1894, 0.0
  %v1953 = vrot.slane %v1952, 4
  %v1954 = vadd.f32 %v1952, %v1953
  %v1955 = vrot.slane %v1954, 2
  %v1956 = vadd.f32 %v1954, %v1955
  %v1957 = vrot.slane %v1956, 1
  %v1958 = vadd.f32 %v1956, %v1957
  %v1959 = vsel %vm337, %v1897, 0.0
  %v1960 = vrot.slane %v1959, 4
  %v1961 = vadd.f32 %v1959, %v1960
  %v1962 = vrot.slane %v1961, 2
  %v1963 = vadd.f32 %v1961, %v1962
  %v1964 = vrot.slane %v1963, 1
  %v1965 = vadd.f32 %v1963, %v1964
  %v1966 = vsel %vm337, %v1900, 0.0
  %v1967 = vrot.slane %v1966, 4
  %v1968 = vadd.f32 %v1966, %v1967
  %v1969 = vrot.slane %v1968, 2
  %v1970 = vadd.f32 %v1968, %v1969
  %v1971 = vrot.slane %v1970, 1
  %v1972 = vadd.f32 %v1970, %v1971
  %v1973 = vsel %vm337, %v1903, 0.0
  %v1974 = vrot.slane %v1973, 4
  %v1975 = vadd.f32 %v1973, %v1974
  %v1976 = vrot.slane %v1975, 2
  %v1977 = vadd.f32 %v1975, %v1976
  %v1978 = vrot.slane %v1977, 1
  %v1979 = vadd.f32 %v1977, %v1978
  %v1980 = vsel %vm337, %v1906, 0.0
  %v1981 = vrot.slane %v1980, 4
  %v1982 = vadd.f32 %v1980, %v1981
  %v1983 = vrot.slane %v1982, 2
  %v1984 = vadd.f32 %v1982, %v1983
  %v1985 = vrot.slane %v1984, 1
  %v1986 = vadd.f32 %v1984, %v1985
  %v1987 = vsel %vm337, %v1909, 0.0
  %v1988 = vrot.slane %v1987, 4
  %v1989 = vadd.f32 %v1987, %v1988
  %v1990 = vrot.slane %v1989, 2
  %v1991 = vadd.f32 %v1989, %v1990
  %v1992 = vrot.slane %v1991, 1
  %v1993 = vadd.f32 %v1991, %v1992
  %v1994 = vsel %vm337, %v1912, 0.0
  %v1995 = vrot.slane %v1994, 4
  %v1996 = vadd.f32 %v1994, %v1995
  %v1997 = vrot.slane %v1996, 2
  %v1998 = vadd.f32 %v1996, %v1997
  %v1999 = vrot.slane %v1998, 1
  %v2000 = vadd.f32 %v1998, %v1999
  %v2001 = vsel %vm337, %v1915, 0.0
  %v2002 = vrot.slane %v2001, 4
  %v2003 = vadd.f32 %v2001, %v2002
  %v2004 = vrot.slane %v2003, 2
  %v2005 = vadd.f32 %v2003, %v2004
  %v2006 = vrot.slane %v2005, 1
  %v2007 = vadd.f32 %v2005, %v2006
  %v2008 = vsel %vm337, %v1918, 0.0
  %v2009 = vrot.slane %v2008, 4
  %v2010 = vadd.f32 %v2008, %v2009
  %v2011 = vrot.slane %v2010, 2
  %v2012 = vadd.f32 %v2010, %v2011
  %v2013 = vrot.slane %v2012, 1
  %v2014 = vadd.f32 %v2012, %v2013
  %v2015 = vadd.f32 %v1372, %v1937
  %v2016 = vadd.f32 %v1373, %v1944
  %v2017 = vadd.f32 %v1374, %v1951
  %v2018 = vadd.f32 %v1375, %v1958
  %v2019 = vadd.f32 %v1376, %v1965
  %v2020 = vadd.f32 %v1377, %v1972
  %v2021 = vadd.f32 %v1378, %v1979
  %v2022 = vadd.f32 %v1379, %v1986
  %v2023 = vadd.f32 %v1380, %v1993
  %v2024 = vadd.f32 %v1381, %v2000
  %v2025 = vadd.f32 %v1382, %v2007
  %v2026 = vadd.f32 %v1383, %v2014
  %s2027 = scalar_lea.vmem %s0, 240
  %v2028 = vld [vmem:[%s2027] sm:$0xff]
  %v2029 = vld [vmem:[%s2027 + $0x8] sm:$0xff]
  %v2030 = vld [vmem:[%s2027 + $0x10] sm:$0xff]
  %v2031 = vld [vmem:[%s2027 + $0x18] sm:$0xff]
  %v2032 = vld [vmem:[%s2027 + $0x20] sm:$0xff]
  %v2033 = vld [vmem:[%s2027 + $0x28] sm:$0xff]
  %v2034 = vld [vmem:[%s2027 + $0x30] sm:$0xff]
  %v2035 = vld [vmem:[%s2027 + $0x38] sm:$0xff]
  %v2036 = vld [vmem:[%s2027 + $0x40] sm:$0xff]
  %v2037 = vld [vmem:[%s2027 + $0x48] sm:$0xff]
  %v2038 = vld [vmem:[%s2027 + $0x50] sm:$0xff]
  %v2039 = vld [vmem:[%s2027 + $0x58] sm:$0xff]
  %v2040 = vld [vmem:[%s2027 + $0x60] sm:$0xff]
  %v2041 = vld [vmem:[%s2027 + $0x68] sm:$0xff]
  %v2042 = vld [vmem:[%s2027 + $0x70] sm:$0xff]
  %v2043 = vld [vmem:[%s2027 + $0x78] sm:$0xff]
  %v2044 = vld [vmem:[%s2027 + $0x80] sm:$0xff]
  %v2045 = vld [vmem:[%s2027 + $0x88] sm:$0xff]
  %v2046 = vld [vmem:[%s2027 + $0x90] sm:$0xff]
  %v2047 = vld [vmem:[%s2027 + $0x98] sm:$0xff]
  %v2048 = vld [vmem:[%s2027 + $0xa0] sm:$0xff]
  %v2049 = vld [vmem:[%s2027 + $0xa8] sm:$0xff]
  %v2050 = vld [vmem:[%s2027 + $0xb0] sm:$0xff]
  %v2051 = vld [vmem:[%s2027 + $0xb8] sm:$0xff]
  %v2052 = vld [vmem:[%s2027 + $0x300] sm:$0xff]
  %v2053 = vld [vmem:[%s2027 + $0x308] sm:$0xff]
  %v2054 = vld [vmem:[%s2027 + $0x310] sm:$0xff]
  %v2055 = vld [vmem:[%s2027 + $0x318] sm:$0xff]
  %v2056 = vld [vmem:[%s2027 + $0x320] sm:$0xff]
  %v2057 = vld [vmem:[%s2027 + $0x328] sm:$0xff]
  %v2058 = vld [vmem:[%s2027 + $0x330] sm:$0xff]
  %v2059 = vld [vmem:[%s2027 + $0x338] sm:$0xff]
  %v2060 = vld [vmem:[%s2027 + $0x340] sm:$0xff]
  %v2061 = vld [vmem:[%s2027 + $0x348] sm:$0xff]
  %v2062 = vld [vmem:[%s2027 + $0x350] sm:$0xff]
  %v2063 = vld [vmem:[%s2027 + $0x358] sm:$0xff]
  %v2064 = vld [vmem:[%s2027 + $0x360] sm:$0xff]
  %v2065 = vld [vmem:[%s2027 + $0x368] sm:$0xff]
  %v2066 = vld [vmem:[%s2027 + $0x370] sm:$0xff]
  %v2067 = vld [vmem:[%s2027 + $0x378] sm:$0xff]
  %v2068 = vld [vmem:[%s2027 + $0x380] sm:$0xff]
  %v2069 = vld [vmem:[%s2027 + $0x388] sm:$0xff]
  %v2070 = vld [vmem:[%s2027 + $0x390] sm:$0xff]
  %v2071 = vld [vmem:[%s2027 + $0x398] sm:$0xff]
  %v2072 = vld [vmem:[%s2027 + $0x3a0] sm:$0xff]
  %v2073 = vld [vmem:[%s2027 + $0x3a8] sm:$0xff]
  %v2074 = vld [vmem:[%s2027 + $0x3b0] sm:$0xff]
  %v2075 = vld [vmem:[%s2027 + $0x3b8] sm:$0xff]
  %v2076 = vmax.bf16 %v2028, %v2034
  %v2077 = vmax.bf16 %v2076, %v2040
  %v2078 = vmax.bf16 %v2077, %v2046
  %v2079 = vmax.bf16 %v2029, %v2035
  %v2080 = vmax.bf16 %v2079, %v2041
  %v2081 = vmax.bf16 %v2080, %v2047
  %v2082 = vmax.bf16 %v2030, %v2036
  %v2083 = vmax.bf16 %v2082, %v2042
  %v2084 = vmax.bf16 %v2083, %v2048
  %v2085 = vmax.bf16 %v2031, %v2037
  %v2086 = vmax.bf16 %v2085, %v2043
  %v2087 = vmax.bf16 %v2086, %v2049
  %v2088 = vmax.bf16 %v2032, %v2038
  %v2089 = vmax.bf16 %v2088, %v2044
  %v2090 = vmax.bf16 %v2089, %v2050
  %v2091 = vmax.bf16 %v2033, %v2039
  %v2092 = vmax.bf16 %v2091, %v2045
  %v2093 = vmax.bf16 %v2092, %v2051
  %v2094 = vmax.bf16 %v2052, %v2058
  %v2095 = vmax.bf16 %v2094, %v2064
  %v2096 = vmax.bf16 %v2095, %v2070
  %v2097 = vmax.bf16 %v2053, %v2059
  %v2098 = vmax.bf16 %v2097, %v2065
  %v2099 = vmax.bf16 %v2098, %v2071
  %v2100 = vmax.bf16 %v2054, %v2060
  %v2101 = vmax.bf16 %v2100, %v2066
  %v2102 = vmax.bf16 %v2101, %v2072
  %v2103 = vmax.bf16 %v2055, %v2061
  %v2104 = vmax.bf16 %v2103, %v2067
  %v2105 = vmax.bf16 %v2104, %v2073
  %v2106 = vmax.bf16 %v2056, %v2062
  %v2107 = vmax.bf16 %v2106, %v2068
  %v2108 = vmax.bf16 %v2107, %v2074
  %v2109 = vmax.bf16 %v2057, %v2063
  %v2110 = vmax.bf16 %v2109, %v2069
  %v2111 = vmax.bf16 %v2110, %v2075
  %v2112 = vunpack.c.l.bf16 %v2078
  %v2113 = vunpack.c.h.bf16 %v2078
  %v2114 = vunpack.c.l.bf16 %v2081
  %v2115 = vunpack.c.h.bf16 %v2081
  %v2116 = vunpack.c.l.bf16 %v2084
  %v2117 = vunpack.c.h.bf16 %v2084
  %v2118 = vunpack.c.l.bf16 %v2087
  %v2119 = vunpack.c.h.bf16 %v2087
  %v2120 = vunpack.c.l.bf16 %v2090
  %v2121 = vunpack.c.h.bf16 %v2090
  %v2122 = vunpack.c.l.bf16 %v2093
  %v2123 = vunpack.c.h.bf16 %v2093
  %v2124 = vunpack.c.l.bf16 %v2096
  %v2125 = vunpack.c.h.bf16 %v2096
  %v2126 = vunpack.c.l.bf16 %v2099
  %v2127 = vunpack.c.h.bf16 %v2099
  %v2128 = vunpack.c.l.bf16 %v2102
  %v2129 = vunpack.c.h.bf16 %v2102
  %v2130 = vunpack.c.l.bf16 %v2105
  %v2131 = vunpack.c.h.bf16 %v2105
  %v2132 = vunpack.c.l.bf16 %v2108
  %v2133 = vunpack.c.h.bf16 %v2108
  %v2134 = vunpack.c.l.bf16 %v2111
  %v2135 = vunpack.c.h.bf16 %v2111
  %v2160 = vrot.slane %v2112, 1
  %v2161 = vrot.slane %v2118, 1
  %v2162 = vsel %vm228, %v2160, %v2161
  %v2163 = vrot.slane %v2113, 1
  %v2164 = vrot.slane %v2119, 1
  %v2165 = vsel %vm228, %v2163, %v2164
  %v2166 = vrot.slane %v2114, 1
  %v2167 = vrot.slane %v2120, 1
  %v2168 = vsel %vm228, %v2166, %v2167
  %v2169 = vrot.slane %v2115, 1
  %v2170 = vrot.slane %v2121, 1
  %v2171 = vsel %vm228, %v2169, %v2170
  %v2172 = vrot.slane %v2116, 1
  %v2173 = vrot.slane %v2122, 1
  %v2174 = vsel %vm228, %v2172, %v2173
  %v2175 = vrot.slane %v2117, 1
  %v2176 = vrot.slane %v2123, 1
  %v2177 = vsel %vm228, %v2175, %v2176
  %v2178 = vrot.slane %v2124, 1
  %v2179 = vrot.slane %v2130, 1
  %v2180 = vsel %vm228, %v2178, %v2179
  %v2181 = vrot.slane %v2125, 1
  %v2182 = vrot.slane %v2131, 1
  %v2183 = vsel %vm228, %v2181, %v2182
  %v2184 = vrot.slane %v2126, 1
  %v2185 = vrot.slane %v2132, 1
  %v2186 = vsel %vm228, %v2184, %v2185
  %v2187 = vrot.slane %v2127, 1
  %v2188 = vrot.slane %v2133, 1
  %v2189 = vsel %vm228, %v2187, %v2188
  %v2190 = vrot.slane %v2128, 1
  %v2191 = vrot.slane %v2134, 1
  %v2192 = vsel %vm228, %v2190, %v2191
  %v2193 = vrot.slane %v2129, 1
  %v2194 = vrot.slane %v2135, 1
  %v2195 = vsel %vm228, %v2193, %v2194
  %v2220 = vmax.f32 %v2112, %v2162
  %v2221 = vmax.f32 %v2113, %v2165
  %v2222 = vmax.f32 %v2114, %v2168
  %v2223 = vmax.f32 %v2115, %v2171
  %v2224 = vmax.f32 %v2116, %v2174
  %v2225 = vmax.f32 %v2117, %v2177
  %v2226 = vmax.f32 %v2118, %v2161
  %v2227 = vmax.f32 %v2119, %v2164
  %v2228 = vmax.f32 %v2120, %v2167
  %v2229 = vmax.f32 %v2121, %v2170
  %v2230 = vmax.f32 %v2122, %v2173
  %v2231 = vmax.f32 %v2123, %v2176
  %v2232 = vmax.f32 %v2124, %v2180
  %v2233 = vmax.f32 %v2125, %v2183
  %v2234 = vmax.f32 %v2126, %v2186
  %v2235 = vmax.f32 %v2127, %v2189
  %v2236 = vmax.f32 %v2128, %v2192
  %v2237 = vmax.f32 %v2129, %v2195
  %v2238 = vmax.f32 %v2130, %v2179
  %v2239 = vmax.f32 %v2131, %v2182
  %v2240 = vmax.f32 %v2132, %v2185
  %v2241 = vmax.f32 %v2133, %v2188
  %v2242 = vmax.f32 %v2134, %v2191
  %v2243 = vmax.f32 %v2135, %v2194
  %v2268 = vrot.slane %v2220, 2
  %v2269 = vrot.slane %v2226, 2
  %v2270 = vsel %vm337, %v2268, %v2269
  %v2271 = vrot.slane %v2221, 2
  %v2272 = vrot.slane %v2227, 2
  %v2273 = vsel %vm337, %v2271, %v2272
  %v2274 = vrot.slane %v2222, 2
  %v2275 = vrot.slane %v2228, 2
  %v2276 = vsel %vm337, %v2274, %v2275
  %v2277 = vrot.slane %v2223, 2
  %v2278 = vrot.slane %v2229, 2
  %v2279 = vsel %vm337, %v2277, %v2278
  %v2280 = vrot.slane %v2224, 2
  %v2281 = vrot.slane %v2230, 2
  %v2282 = vsel %vm337, %v2280, %v2281
  %v2283 = vrot.slane %v2225, 2
  %v2284 = vrot.slane %v2231, 2
  %v2285 = vsel %vm337, %v2283, %v2284
  %v2286 = vrot.slane %v2232, 2
  %v2287 = vrot.slane %v2238, 2
  %v2288 = vsel %vm337, %v2286, %v2287
  %v2289 = vrot.slane %v2233, 2
  %v2290 = vrot.slane %v2239, 2
  %v2291 = vsel %vm337, %v2289, %v2290
  %v2292 = vrot.slane %v2234, 2
  %v2293 = vrot.slane %v2240, 2
  %v2294 = vsel %vm337, %v2292, %v2293
  %v2295 = vrot.slane %v2235, 2
  %v2296 = vrot.slane %v2241, 2
  %v2297 = vsel %vm337, %v2295, %v2296
  %v2298 = vrot.slane %v2236, 2
  %v2299 = vrot.slane %v2242, 2
  %v2300 = vsel %vm337, %v2298, %v2299
  %v2301 = vrot.slane %v2237, 2
  %v2302 = vrot.slane %v2243, 2
  %v2303 = vsel %vm337, %v2301, %v2302
  %v2328 = vmax.f32 %v2220, %v2270
  %v2329 = vmax.f32 %v2221, %v2273
  %v2330 = vmax.f32 %v2222, %v2276
  %v2331 = vmax.f32 %v2223, %v2279
  %v2332 = vmax.f32 %v2224, %v2282
  %v2333 = vmax.f32 %v2225, %v2285
  %v2334 = vmax.f32 %v2226, %v2269
  %v2335 = vmax.f32 %v2227, %v2272
  %v2336 = vmax.f32 %v2228, %v2275
  %v2337 = vmax.f32 %v2229, %v2278
  %v2338 = vmax.f32 %v2230, %v2281
  %v2339 = vmax.f32 %v2231, %v2284
  %v2340 = vmax.f32 %v2232, %v2288
  %v2341 = vmax.f32 %v2233, %v2291
  %v2342 = vmax.f32 %v2234, %v2294
  %v2343 = vmax.f32 %v2235, %v2297
  %v2344 = vmax.f32 %v2236, %v2300
  %v2345 = vmax.f32 %v2237, %v2303
  %v2346 = vmax.f32 %v2238, %v2287
  %v2347 = vmax.f32 %v2239, %v2290
  %v2348 = vmax.f32 %v2240, %v2293
  %v2349 = vmax.f32 %v2241, %v2296
  %v2350 = vmax.f32 %v2242, %v2299
  %v2351 = vmax.f32 %v2243, %v2302
  %v2352 = vmul.f32 %v2328, %v65
  %v2353 = vmul.f32 %v2329, %v66
  %v2354 = vmul.f32 %v2330, %v67
  %v2355 = vmul.f32 %v2331, %v68
  %v2356 = vmul.f32 %v2332, %v69
  %v2357 = vmul.f32 %v2333, %v70
  %v2358 = vmul.f32 %v2340, %v65
  %v2359 = vmul.f32 %v2341, %v66
  %v2360 = vmul.f32 %v2342, %v67
  %v2361 = vmul.f32 %v2343, %v68
  %v2362 = vmul.f32 %v2344, %v69
  %v2363 = vmul.f32 %v2345, %v70
  %v2364 = vsel %vm337, %v2352, 0.0
  %v2365 = vrot.slane %v2364, 4
  %v2366 = vadd.f32 %v2364, %v2365
  %v2367 = vrot.slane %v2366, 2
  %v2368 = vadd.f32 %v2366, %v2367
  %v2369 = vrot.slane %v2368, 1
  %v2370 = vadd.f32 %v2368, %v2369
  %v2371 = vsel %vm337, %v2353, 0.0
  %v2372 = vrot.slane %v2371, 4
  %v2373 = vadd.f32 %v2371, %v2372
  %v2374 = vrot.slane %v2373, 2
  %v2375 = vadd.f32 %v2373, %v2374
  %v2376 = vrot.slane %v2375, 1
  %v2377 = vadd.f32 %v2375, %v2376
  %v2378 = vsel %vm337, %v2354, 0.0
  %v2379 = vrot.slane %v2378, 4
  %v2380 = vadd.f32 %v2378, %v2379
  %v2381 = vrot.slane %v2380, 2
  %v2382 = vadd.f32 %v2380, %v2381
  %v2383 = vrot.slane %v2382, 1
  %v2384 = vadd.f32 %v2382, %v2383
  %v2385 = vsel %vm337, %v2355, 0.0
  %v2386 = vrot.slane %v2385, 4
  %v2387 = vadd.f32 %v2385, %v2386
  %v2388 = vrot.slane %v2387, 2
  %v2389 = vadd.f32 %v2387, %v2388
  %v2390 = vrot.slane %v2389, 1
  %v2391 = vadd.f32 %v2389, %v2390
  %v2392 = vsel %vm337, %v2356, 0.0
  %v2393 = vrot.slane %v2392, 4
  %v2394 = vadd.f32 %v2392, %v2393
  %v2395 = vrot.slane %v2394, 2
  %v2396 = vadd.f32 %v2394, %v2395
  %v2397 = vrot.slane %v2396, 1
  %v2398 = vadd.f32 %v2396, %v2397
  %v2399 = vsel %vm337, %v2357, 0.0
  %v2400 = vrot.slane %v2399, 4
  %v2401 = vadd.f32 %v2399, %v2400
  %v2402 = vrot.slane %v2401, 2
  %v2403 = vadd.f32 %v2401, %v2402
  %v2404 = vrot.slane %v2403, 1
  %v2405 = vadd.f32 %v2403, %v2404
  %v2406 = vsel %vm337, %v2358, 0.0
  %v2407 = vrot.slane %v2406, 4
  %v2408 = vadd.f32 %v2406, %v2407
  %v2409 = vrot.slane %v2408, 2
  %v2410 = vadd.f32 %v2408, %v2409
  %v2411 = vrot.slane %v2410, 1
  %v2412 = vadd.f32 %v2410, %v2411
  %v2413 = vsel %vm337, %v2359, 0.0
  %v2414 = vrot.slane %v2413, 4
  %v2415 = vadd.f32 %v2413, %v2414
  %v2416 = vrot.slane %v2415, 2
  %v2417 = vadd.f32 %v2415, %v2416
  %v2418 = vrot.slane %v2417, 1
  %v2419 = vadd.f32 %v2417, %v2418
  %v2420 = vsel %vm337, %v2360, 0.0
  %v2421 = vrot.slane %v2420, 4
  %v2422 = vadd.f32 %v2420, %v2421
  %v2423 = vrot.slane %v2422, 2
  %v2424 = vadd.f32 %v2422, %v2423
  %v2425 = vrot.slane %v2424, 1
  %v2426 = vadd.f32 %v2424, %v2425
  %v2427 = vsel %vm337, %v2361, 0.0
  %v2428 = vrot.slane %v2427, 4
  %v2429 = vadd.f32 %v2427, %v2428
  %v2430 = vrot.slane %v2429, 2
  %v2431 = vadd.f32 %v2429, %v2430
  %v2432 = vrot.slane %v2431, 1
  %v2433 = vadd.f32 %v2431, %v2432
  %v2434 = vsel %vm337, %v2362, 0.0
  %v2435 = vrot.slane %v2434, 4
  %v2436 = vadd.f32 %v2434, %v2435
  %v2437 = vrot.slane %v2436, 2
  %v2438 = vadd.f32 %v2436, %v2437
  %v2439 = vrot.slane %v2438, 1
  %v2440 = vadd.f32 %v2438, %v2439
  %v2441 = vsel %vm337, %v2363, 0.0
  %v2442 = vrot.slane %v2441, 4
  %v2443 = vadd.f32 %v2441, %v2442
  %v2444 = vrot.slane %v2443, 2
  %v2445 = vadd.f32 %v2443, %v2444
  %v2446 = vrot.slane %v2445, 1
  %v2447 = vadd.f32 %v2445, %v2446
  %v2448 = vadd.f32 %v1805, %v2370
  %v2449 = vadd.f32 %v1806, %v2377
  %v2450 = vadd.f32 %v1807, %v2384
  %v2451 = vadd.f32 %v1808, %v2391
  %v2452 = vadd.f32 %v1809, %v2398
  %v2453 = vadd.f32 %v1810, %v2405
  %v2454 = vadd.f32 %v1811, %v2412
  %v2455 = vadd.f32 %v1812, %v2419
  %v2456 = vadd.f32 %v1813, %v2426
  %v2457 = vadd.f32 %v1814, %v2433
  %v2458 = vadd.f32 %v1815, %v2440
  %v2459 = vadd.f32 %v1816, %v2447
  %v2466 = vrot.slane %v89, 1
  %v2467 = vrot.slane %v90, 1
  %v2468 = vrot.slane %v91, 1
  %v2469 = vrot.slane %v92, 1
  %v2470 = vrot.slane %v93, 1
  %v2471 = vrot.slane %v94, 1
  %v2478 = vmul.f32 %v2328, %v2466
  %v2479 = vmul.f32 %v2329, %v2467
  %v2480 = vmul.f32 %v2330, %v2468
  %v2481 = vmul.f32 %v2331, %v2469
  %v2482 = vmul.f32 %v2332, %v2470
  %v2483 = vmul.f32 %v2333, %v2471
  %v2484 = vmul.f32 %v2334, %v2466
  %v2485 = vmul.f32 %v2335, %v2467
  %v2486 = vmul.f32 %v2336, %v2468
  %v2487 = vmul.f32 %v2337, %v2469
  %v2488 = vmul.f32 %v2338, %v2470
  %v2489 = vmul.f32 %v2339, %v2471
  %v2490 = vmul.f32 %v2340, %v2466
  %v2491 = vmul.f32 %v2341, %v2467
  %v2492 = vmul.f32 %v2342, %v2468
  %v2493 = vmul.f32 %v2343, %v2469
  %v2494 = vmul.f32 %v2344, %v2470
  %v2495 = vmul.f32 %v2345, %v2471
  %v2496 = vmul.f32 %v2346, %v2466
  %v2497 = vmul.f32 %v2347, %v2467
  %v2498 = vmul.f32 %v2348, %v2468
  %v2499 = vmul.f32 %v2349, %v2469
  %v2500 = vmul.f32 %v2350, %v2470
  %v2501 = vmul.f32 %v2351, %v2471
  %v2526 = vrot.slane %v2478, 7
  %v2527 = vrot.slane %v2484, 7
  %v2528 = vsel %vm596, %v2526, %v2527
  %v2529 = vrot.slane %v2479, 7
  %v2530 = vrot.slane %v2485, 7
  %v2531 = vsel %vm596, %v2529, %v2530
  %v2532 = vrot.slane %v2480, 7
  %v2533 = vrot.slane %v2486, 7
  %v2534 = vsel %vm596, %v2532, %v2533
  %v2535 = vrot.slane %v2481, 7
  %v2536 = vrot.slane %v2487, 7
  %v2537 = vsel %vm596, %v2535, %v2536
  %v2538 = vrot.slane %v2482, 7
  %v2539 = vrot.slane %v2488, 7
  %v2540 = vsel %vm596, %v2538, %v2539
  %v2541 = vrot.slane %v2483, 7
  %v2542 = vrot.slane %v2489, 7
  %v2543 = vsel %vm596, %v2541, %v2542
  %v2544 = vrot.slane %v2490, 7
  %v2545 = vrot.slane %v2496, 7
  %v2546 = vsel %vm596, %v2544, %v2545
  %v2547 = vrot.slane %v2491, 7
  %v2548 = vrot.slane %v2497, 7
  %v2549 = vsel %vm596, %v2547, %v2548
  %v2550 = vrot.slane %v2492, 7
  %v2551 = vrot.slane %v2498, 7
  %v2552 = vsel %vm596, %v2550, %v2551
  %v2553 = vrot.slane %v2493, 7
  %v2554 = vrot.slane %v2499, 7
  %v2555 = vsel %vm596, %v2553, %v2554
  %v2556 = vrot.slane %v2494, 7
  %v2557 = vrot.slane %v2500, 7
  %v2558 = vsel %vm596, %v2556, %v2557
  %v2559 = vrot.slane %v2495, 7
  %v2560 = vrot.slane %v2501, 7
  %v2561 = vsel %vm596, %v2559, %v2560
  %v2574 = vsel %vm337, %v2528, 0.0
  %v2575 = vrot.slane %v2574, 4
  %v2576 = vadd.f32 %v2574, %v2575
  %v2577 = vrot.slane %v2576, 2
  %v2578 = vadd.f32 %v2576, %v2577
  %v2579 = vrot.slane %v2578, 1
  %v2580 = vadd.f32 %v2578, %v2579
  %v2581 = vsel %vm337, %v2531, 0.0
  %v2582 = vrot.slane %v2581, 4
  %v2583 = vadd.f32 %v2581, %v2582
  %v2584 = vrot.slane %v2583, 2
  %v2585 = vadd.f32 %v2583, %v2584
  %v2586 = vrot.slane %v2585, 1
  %v2587 = vadd.f32 %v2585, %v2586
  %v2588 = vsel %vm337, %v2534, 0.0
  %v2589 = vrot.slane %v2588, 4
  %v2590 = vadd.f32 %v2588, %v2589
  %v2591 = vrot.slane %v2590, 2
  %v2592 = vadd.f32 %v2590, %v2591
  %v2593 = vrot.slane %v2592, 1
  %v2594 = vadd.f32 %v2592, %v2593
  %v2595 = vsel %vm337, %v2537, 0.0
  %v2596 = vrot.slane %v2595, 4
  %v2597 = vadd.f32 %v2595, %v2596
  %v2598 = vrot.slane %v2597, 2
  %v2599 = vadd.f32 %v2597, %v2598
  %v2600 = vrot.slane %v2599, 1
  %v2601 = vadd.f32 %v2599, %v2600
  %v2602 = vsel %vm337, %v2540, 0.0
  %v2603 = vrot.slane %v2602, 4
  %v2604 = vadd.f32 %v2602, %v2603
  %v2605 = vrot.slane %v2604, 2
  %v2606 = vadd.f32 %v2604, %v2605
  %v2607 = vrot.slane %v2606, 1
  %v2608 = vadd.f32 %v2606, %v2607
  %v2609 = vsel %vm337, %v2543, 0.0
  %v2610 = vrot.slane %v2609, 4
  %v2611 = vadd.f32 %v2609, %v2610
  %v2612 = vrot.slane %v2611, 2
  %v2613 = vadd.f32 %v2611, %v2612
  %v2614 = vrot.slane %v2613, 1
  %v2615 = vadd.f32 %v2613, %v2614
  %v2616 = vsel %vm337, %v2546, 0.0
  %v2617 = vrot.slane %v2616, 4
  %v2618 = vadd.f32 %v2616, %v2617
  %v2619 = vrot.slane %v2618, 2
  %v2620 = vadd.f32 %v2618, %v2619
  %v2621 = vrot.slane %v2620, 1
  %v2622 = vadd.f32 %v2620, %v2621
  %v2623 = vsel %vm337, %v2549, 0.0
  %v2624 = vrot.slane %v2623, 4
  %v2625 = vadd.f32 %v2623, %v2624
  %v2626 = vrot.slane %v2625, 2
  %v2627 = vadd.f32 %v2625, %v2626
  %v2628 = vrot.slane %v2627, 1
  %v2629 = vadd.f32 %v2627, %v2628
  %v2630 = vsel %vm337, %v2552, 0.0
  %v2631 = vrot.slane %v2630, 4
  %v2632 = vadd.f32 %v2630, %v2631
  %v2633 = vrot.slane %v2632, 2
  %v2634 = vadd.f32 %v2632, %v2633
  %v2635 = vrot.slane %v2634, 1
  %v2636 = vadd.f32 %v2634, %v2635
  %v2637 = vsel %vm337, %v2555, 0.0
  %v2638 = vrot.slane %v2637, 4
  %v2639 = vadd.f32 %v2637, %v2638
  %v2640 = vrot.slane %v2639, 2
  %v2641 = vadd.f32 %v2639, %v2640
  %v2642 = vrot.slane %v2641, 1
  %v2643 = vadd.f32 %v2641, %v2642
  %v2644 = vsel %vm337, %v2558, 0.0
  %v2645 = vrot.slane %v2644, 4
  %v2646 = vadd.f32 %v2644, %v2645
  %v2647 = vrot.slane %v2646, 2
  %v2648 = vadd.f32 %v2646, %v2647
  %v2649 = vrot.slane %v2648, 1
  %v2650 = vadd.f32 %v2648, %v2649
  %v2651 = vsel %vm337, %v2561, 0.0
  %v2652 = vrot.slane %v2651, 4
  %v2653 = vadd.f32 %v2651, %v2652
  %v2654 = vrot.slane %v2653, 2
  %v2655 = vadd.f32 %v2653, %v2654
  %v2656 = vrot.slane %v2655, 1
  %v2657 = vadd.f32 %v2655, %v2656
  %v2658 = vadd.f32 %v2015, %v2580
  %v2659 = vadd.f32 %v2016, %v2587
  %v2660 = vadd.f32 %v2017, %v2594
  %v2661 = vadd.f32 %v2018, %v2601
  %v2662 = vadd.f32 %v2019, %v2608
  %v2663 = vadd.f32 %v2020, %v2615
  %v2664 = vadd.f32 %v2021, %v2622
  %v2665 = vadd.f32 %v2022, %v2629
  %v2666 = vadd.f32 %v2023, %v2636
  %v2667 = vadd.f32 %v2024, %v2643
  %v2668 = vadd.f32 %v2025, %v2650
  %v2669 = vadd.f32 %v2026, %v2657
  %v2671 = vlaneseq
  %v2672 = vshrl.u32 %v2671, 7
  %v2673 = vsub.s32 0, %v2672
  %v2674 = vrot.slane %v95, %v2673
  %v2675 = vlaneseq
  %v2676 = vshrl.u32 %v2675, 7
  %v2677 = vsub.s32 1, %v2676
  %v2678 = vrot.slane %v95, %v2677
  %v2679 = vlaneseq
  %v2680 = vshrl.u32 %v2679, 7
  %v2681 = vsub.s32 2, %v2680
  %v2682 = vrot.slane %v95, %v2681
  %v2683 = vlaneseq
  %v2684 = vshrl.u32 %v2683, 7
  %v2685 = vsub.s32 3, %v2684
  %v2686 = vrot.slane %v95, %v2685
  %v2687 = vlaneseq
  %v2688 = vshrl.u32 %v2687, 7
  %v2689 = vsub.s32 4, %v2688
  %v2690 = vrot.slane %v95, %v2689
  %v2691 = vlaneseq
  %v2692 = vshrl.u32 %v2691, 7
  %v2693 = vsub.s32 5, %v2692
  %v2694 = vrot.slane %v95, %v2693
  %v2701 = vadd.f32 %v2448, %v2674
  %v2702 = vadd.f32 %v2449, %v2678
  %v2703 = vadd.f32 %v2450, %v2682
  %v2704 = vadd.f32 %v2451, %v2686
  %v2705 = vadd.f32 %v2452, %v2690
  %v2706 = vadd.f32 %v2453, %v2694
  %v2707 = vadd.f32 %v2454, %v2674
  %v2708 = vadd.f32 %v2455, %v2678
  %v2709 = vadd.f32 %v2456, %v2682
  %v2710 = vadd.f32 %v2457, %v2686
  %v2711 = vadd.f32 %v2458, %v2690
  %v2712 = vadd.f32 %v2459, %v2694
  %v2713 = vmul.f32 %v2701, 0.5
  %v2714 = vmul.f32 %v2702, 0.5
  %v2715 = vmul.f32 %v2703, 0.5
  %v2716 = vmul.f32 %v2704, 0.5
  %v2717 = vmul.f32 %v2705, 0.5
  %v2718 = vmul.f32 %v2706, 0.5
  %v2719 = vmul.f32 %v2707, 0.5
  %v2720 = vmul.f32 %v2708, 0.5
  %v2721 = vmul.f32 %v2709, 0.5
  %v2722 = vmul.f32 %v2710, 0.5
  %v2723 = vmul.f32 %v2711, 0.5
  %v2724 = vmul.f32 %v2712, 0.5
  %v2725 = vmul.f32 %v2701, 0.70710677
  %v2726 = vmul.f32 %v2702, 0.70710677
  %v2727 = vmul.f32 %v2703, 0.70710677
  %v2728 = vmul.f32 %v2704, 0.70710677
  %v2729 = vmul.f32 %v2705, 0.70710677
  %v2730 = vmul.f32 %v2706, 0.70710677
  %v2731 = vmul.f32 %v2707, 0.70710677
  %v2732 = vmul.f32 %v2708, 0.70710677
  %v2733 = vmul.f32 %v2709, 0.70710677
  %v2734 = vmul.f32 %v2710, 0.70710677
  %v2735 = vmul.f32 %v2711, 0.70710677
  %v2736 = vmul.f32 %v2712, 0.70710677
  %v2737 = vand.u32 2147483647, %v2725
  %v2738 = vand.u32 2147483647, %v2726
  %v2739 = vand.u32 2147483647, %v2727
  %v2740 = vand.u32 2147483647, %v2728
  %v2741 = vand.u32 2147483647, %v2729
  %v2742 = vand.u32 2147483647, %v2730
  %v2743 = vand.u32 2147483647, %v2731
  %v2744 = vand.u32 2147483647, %v2732
  %v2745 = vand.u32 2147483647, %v2733
  %v2746 = vand.u32 2147483647, %v2734
  %v2747 = vand.u32 2147483647, %v2735
  %v2748 = vand.u32 2147483647, %v2736
  %v2749 = vmul.f32 %v2737, 0.3275911
  %v2750 = vmul.f32 %v2738, 0.3275911
  %v2751 = vmul.f32 %v2739, 0.3275911
  %v2752 = vmul.f32 %v2740, 0.3275911
  %v2753 = vmul.f32 %v2741, 0.3275911
  %v2754 = vmul.f32 %v2742, 0.3275911
  %v2755 = vmul.f32 %v2743, 0.3275911
  %v2756 = vmul.f32 %v2744, 0.3275911
  %v2757 = vmul.f32 %v2745, 0.3275911
  %v2758 = vmul.f32 %v2746, 0.3275911
  %v2759 = vmul.f32 %v2747, 0.3275911
  %v2760 = vmul.f32 %v2748, 0.3275911
  %v2761 = vadd.f32 %v2749, 1.0
  %v2762 = vadd.f32 %v2750, 1.0
  %v2763 = vadd.f32 %v2751, 1.0
  %v2764 = vadd.f32 %v2752, 1.0
  %v2765 = vadd.f32 %v2753, 1.0
  %v2766 = vadd.f32 %v2754, 1.0
  %v2767 = vadd.f32 %v2755, 1.0
  %v2768 = vadd.f32 %v2756, 1.0
  %v2769 = vadd.f32 %v2757, 1.0
  %v2770 = vadd.f32 %v2758, 1.0
  %v2771 = vadd.f32 %v2759, 1.0
  %v2772 = vadd.f32 %v2760, 1.0
  %v2773 = vrcp.pop %v2761
  %v2774 = vrcp.pop %v2762
  %v2775 = vrcp.pop %v2763
  %v2776 = vrcp.pop %v2764
  %v2777 = vrcp.pop %v2765
  %v2778 = vrcp.pop %v2766
  %v2779 = vrcp.pop %v2767
  %v2780 = vrcp.pop %v2768
  %v2781 = vrcp.pop %v2769
  %v2782 = vrcp.pop %v2770
  %v2783 = vrcp.pop %v2771
  %v2784 = vrcp.pop %v2772
  %v2785 = vmul.f32 %v2773, 1.0614054
  %v2786 = vmul.f32 %v2774, 1.0614054
  %v2787 = vmul.f32 %v2775, 1.0614054
  %v2788 = vmul.f32 %v2776, 1.0614054
  %v2789 = vmul.f32 %v2777, 1.0614054
  %v2790 = vmul.f32 %v2778, 1.0614054
  %v2791 = vmul.f32 %v2779, 1.0614054
  %v2792 = vmul.f32 %v2780, 1.0614054
  %v2793 = vmul.f32 %v2781, 1.0614054
  %v2794 = vmul.f32 %v2782, 1.0614054
  %v2795 = vmul.f32 %v2783, 1.0614054
  %v2796 = vmul.f32 %v2784, 1.0614054
  %v2797 = vadd.f32 %v2785, -1.4531521
  %v2798 = vadd.f32 %v2786, -1.4531521
  %v2799 = vadd.f32 %v2787, -1.4531521
  %v2800 = vadd.f32 %v2788, -1.4531521
  %v2801 = vadd.f32 %v2789, -1.4531521
  %v2802 = vadd.f32 %v2790, -1.4531521
  %v2803 = vadd.f32 %v2791, -1.4531521
  %v2804 = vadd.f32 %v2792, -1.4531521
  %v2805 = vadd.f32 %v2793, -1.4531521
  %v2806 = vadd.f32 %v2794, -1.4531521
  %v2807 = vadd.f32 %v2795, -1.4531521
  %v2808 = vadd.f32 %v2796, -1.4531521
  %v2809 = vmul.f32 %v2773, %v2797
  %v2810 = vmul.f32 %v2774, %v2798
  %v2811 = vmul.f32 %v2775, %v2799
  %v2812 = vmul.f32 %v2776, %v2800
  %v2813 = vmul.f32 %v2777, %v2801
  %v2814 = vmul.f32 %v2778, %v2802
  %v2815 = vmul.f32 %v2779, %v2803
  %v2816 = vmul.f32 %v2780, %v2804
  %v2817 = vmul.f32 %v2781, %v2805
  %v2818 = vmul.f32 %v2782, %v2806
  %v2819 = vmul.f32 %v2783, %v2807
  %v2820 = vmul.f32 %v2784, %v2808
  %v2821 = vadd.f32 %v2809, 1.4214138
  %v2822 = vadd.f32 %v2810, 1.4214138
  %v2823 = vadd.f32 %v2811, 1.4214138
  %v2824 = vadd.f32 %v2812, 1.4214138
  %v2825 = vadd.f32 %v2813, 1.4214138
  %v2826 = vadd.f32 %v2814, 1.4214138
  %v2827 = vadd.f32 %v2815, 1.4214138
  %v2828 = vadd.f32 %v2816, 1.4214138
  %v2829 = vadd.f32 %v2817, 1.4214138
  %v2830 = vadd.f32 %v2818, 1.4214138
  %v2831 = vadd.f32 %v2819, 1.4214138
  %v2832 = vadd.f32 %v2820, 1.4214138
  %v2833 = vmul.f32 %v2773, %v2821
  %v2834 = vmul.f32 %v2774, %v2822
  %v2835 = vmul.f32 %v2775, %v2823
  %v2836 = vmul.f32 %v2776, %v2824
  %v2837 = vmul.f32 %v2777, %v2825
  %v2838 = vmul.f32 %v2778, %v2826
  %v2839 = vmul.f32 %v2779, %v2827
  %v2840 = vmul.f32 %v2780, %v2828
  %v2841 = vmul.f32 %v2781, %v2829
  %v2842 = vmul.f32 %v2782, %v2830
  %v2843 = vmul.f32 %v2783, %v2831
  %v2844 = vmul.f32 %v2784, %v2832
  %v2845 = vadd.f32 %v2833, -0.28449672
  %v2846 = vadd.f32 %v2834, -0.28449672
  %v2847 = vadd.f32 %v2835, -0.28449672
  %v2848 = vadd.f32 %v2836, -0.28449672
  %v2849 = vadd.f32 %v2837, -0.28449672
  %v2850 = vadd.f32 %v2838, -0.28449672
  %v2851 = vadd.f32 %v2839, -0.28449672
  %v2852 = vadd.f32 %v2840, -0.28449672
  %v2853 = vadd.f32 %v2841, -0.28449672
  %v2854 = vadd.f32 %v2842, -0.28449672
  %v2855 = vadd.f32 %v2843, -0.28449672
  %v2856 = vadd.f32 %v2844, -0.28449672
  %v2857 = vmul.f32 %v2773, %v2845
  %v2858 = vmul.f32 %v2774, %v2846
  %v2859 = vmul.f32 %v2775, %v2847
  %v2860 = vmul.f32 %v2776, %v2848
  %v2861 = vmul.f32 %v2777, %v2849
  %v2862 = vmul.f32 %v2778, %v2850
  %v2863 = vmul.f32 %v2779, %v2851
  %v2864 = vmul.f32 %v2780, %v2852
  %v2865 = vmul.f32 %v2781, %v2853
  %v2866 = vmul.f32 %v2782, %v2854
  %v2867 = vmul.f32 %v2783, %v2855
  %v2868 = vmul.f32 %v2784, %v2856
  %v2869 = vadd.f32 %v2857, 0.2548296
  %v2870 = vadd.f32 %v2858, 0.2548296
  %v2871 = vadd.f32 %v2859, 0.2548296
  %v2872 = vadd.f32 %v2860, 0.2548296
  %v2873 = vadd.f32 %v2861, 0.2548296
  %v2874 = vadd.f32 %v2862, 0.2548296
  %v2875 = vadd.f32 %v2863, 0.2548296
  %v2876 = vadd.f32 %v2864, 0.2548296
  %v2877 = vadd.f32 %v2865, 0.2548296
  %v2878 = vadd.f32 %v2866, 0.2548296
  %v2879 = vadd.f32 %v2867, 0.2548296
  %v2880 = vadd.f32 %v2868, 0.2548296
  %v2881 = vmul.f32 %v2773, %v2869
  %v2882 = vmul.f32 %v2774, %v2870
  %v2883 = vmul.f32 %v2775, %v2871
  %v2884 = vmul.f32 %v2776, %v2872
  %v2885 = vmul.f32 %v2777, %v2873
  %v2886 = vmul.f32 %v2778, %v2874
  %v2887 = vmul.f32 %v2779, %v2875
  %v2888 = vmul.f32 %v2780, %v2876
  %v2889 = vmul.f32 %v2781, %v2877
  %v2890 = vmul.f32 %v2782, %v2878
  %v2891 = vmul.f32 %v2783, %v2879
  %v2892 = vmul.f32 %v2784, %v2880
  %v2893 = vsub.f32 0.0, %v2737
  %v2894 = vsub.f32 0.0, %v2738
  %v2895 = vsub.f32 0.0, %v2739
  %v2896 = vsub.f32 0.0, %v2740
  %v2897 = vsub.f32 0.0, %v2741
  %v2898 = vsub.f32 0.0, %v2742
  %v2899 = vsub.f32 0.0, %v2743
  %v2900 = vsub.f32 0.0, %v2744
  %v2901 = vsub.f32 0.0, %v2745
  %v2902 = vsub.f32 0.0, %v2746
  %v2903 = vsub.f32 0.0, %v2747
  %v2904 = vsub.f32 0.0, %v2748
  %v2905 = vmul.f32 %v2893, %v2737
  %v2906 = vmul.f32 %v2894, %v2738
  %v2907 = vmul.f32 %v2895, %v2739
  %v2908 = vmul.f32 %v2896, %v2740
  %v2909 = vmul.f32 %v2897, %v2741
  %v2910 = vmul.f32 %v2898, %v2742
  %v2911 = vmul.f32 %v2899, %v2743
  %v2912 = vmul.f32 %v2900, %v2744
  %v2913 = vmul.f32 %v2901, %v2745
  %v2914 = vmul.f32 %v2902, %v2746
  %v2915 = vmul.f32 %v2903, %v2747
  %v2916 = vmul.f32 %v2904, %v2748
  %v2917 = vmul.f32 %v2905, 1.442695
  %v2918 = vpow.pop %v2917
  %v2919 = vmul.f32 %v2906, 1.442695
  %v2920 = vpow.pop %v2919
  %v2921 = vmul.f32 %v2907, 1.442695
  %v2922 = vpow.pop %v2921
  %v2923 = vmul.f32 %v2908, 1.442695
  %v2924 = vpow.pop %v2923
  %v2925 = vmul.f32 %v2909, 1.442695
  %v2926 = vpow.pop %v2925
  %v2927 = vmul.f32 %v2910, 1.442695
  %v2928 = vpow.pop %v2927
  %v2929 = vmul.f32 %v2911, 1.442695
  %v2930 = vpow.pop %v2929
  %v2931 = vmul.f32 %v2912, 1.442695
  %v2932 = vpow.pop %v2931
  %v2933 = vmul.f32 %v2913, 1.442695
  %v2934 = vpow.pop %v2933
  %v2935 = vmul.f32 %v2914, 1.442695
  %v2936 = vpow.pop %v2935
  %v2937 = vmul.f32 %v2915, 1.442695
  %v2938 = vpow.pop %v2937
  %v2939 = vmul.f32 %v2916, 1.442695
  %v2940 = vpow.pop %v2939
  %v2941 = vmul.f32 %v2881, %v2918
  %v2942 = vmul.f32 %v2882, %v2920
  %v2943 = vmul.f32 %v2883, %v2922
  %v2944 = vmul.f32 %v2884, %v2924
  %v2945 = vmul.f32 %v2885, %v2926
  %v2946 = vmul.f32 %v2886, %v2928
  %v2947 = vmul.f32 %v2887, %v2930
  %v2948 = vmul.f32 %v2888, %v2932
  %v2949 = vmul.f32 %v2889, %v2934
  %v2950 = vmul.f32 %v2890, %v2936
  %v2951 = vmul.f32 %v2891, %v2938
  %v2952 = vmul.f32 %v2892, %v2940
  %v2953 = vsub.f32 1.0, %v2941
  %v2954 = vsub.f32 1.0, %v2942
  %v2955 = vsub.f32 1.0, %v2943
  %v2956 = vsub.f32 1.0, %v2944
  %v2957 = vsub.f32 1.0, %v2945
  %v2958 = vsub.f32 1.0, %v2946
  %v2959 = vsub.f32 1.0, %v2947
  %v2960 = vsub.f32 1.0, %v2948
  %v2961 = vsub.f32 1.0, %v2949
  %v2962 = vsub.f32 1.0, %v2950
  %v2963 = vsub.f32 1.0, %v2951
  %v2964 = vsub.f32 1.0, %v2952
  %vm2965 = vcmp.ge.f32.partialorder %v2725, 0.0
  %vm2966 = vcmp.ge.f32.partialorder %v2726, 0.0
  %vm2967 = vcmp.ge.f32.partialorder %v2727, 0.0
  %vm2968 = vcmp.ge.f32.partialorder %v2728, 0.0
  %vm2969 = vcmp.ge.f32.partialorder %v2729, 0.0
  %vm2970 = vcmp.ge.f32.partialorder %v2730, 0.0
  %vm2971 = vcmp.ge.f32.partialorder %v2731, 0.0
  %vm2972 = vcmp.ge.f32.partialorder %v2732, 0.0
  %vm2973 = vcmp.ge.f32.partialorder %v2733, 0.0
  %vm2974 = vcmp.ge.f32.partialorder %v2734, 0.0
  %vm2975 = vcmp.ge.f32.partialorder %v2735, 0.0
  %vm2976 = vcmp.ge.f32.partialorder %v2736, 0.0
  %v2977 = vsub.f32 0.0, %v2953
  %v2978 = vsub.f32 0.0, %v2954
  %v2979 = vsub.f32 0.0, %v2955
  %v2980 = vsub.f32 0.0, %v2956
  %v2981 = vsub.f32 0.0, %v2957
  %v2982 = vsub.f32 0.0, %v2958
  %v2983 = vsub.f32 0.0, %v2959
  %v2984 = vsub.f32 0.0, %v2960
  %v2985 = vsub.f32 0.0, %v2961
  %v2986 = vsub.f32 0.0, %v2962
  %v2987 = vsub.f32 0.0, %v2963
  %v2988 = vsub.f32 0.0, %v2964
  %v2989 = vsel %vm2965, %v2953, %v2977
  %v2990 = vsel %vm2966, %v2954, %v2978
  %v2991 = vsel %vm2967, %v2955, %v2979
  %v2992 = vsel %vm2968, %v2956, %v2980
  %v2993 = vsel %vm2969, %v2957, %v2981
  %v2994 = vsel %vm2970, %v2958, %v2982
  %v2995 = vsel %vm2971, %v2959, %v2983
  %v2996 = vsel %vm2972, %v2960, %v2984
  %v2997 = vsel %vm2973, %v2961, %v2985
  %v2998 = vsel %vm2974, %v2962, %v2986
  %v2999 = vsel %vm2975, %v2963, %v2987
  %v3000 = vsel %vm2976, %v2964, %v2988
  %v3001 = vadd.f32 %v2989, 1.0
  %v3002 = vadd.f32 %v2990, 1.0
  %v3003 = vadd.f32 %v2991, 1.0
  %v3004 = vadd.f32 %v2992, 1.0
  %v3005 = vadd.f32 %v2993, 1.0
  %v3006 = vadd.f32 %v2994, 1.0
  %v3007 = vadd.f32 %v2995, 1.0
  %v3008 = vadd.f32 %v2996, 1.0
  %v3009 = vadd.f32 %v2997, 1.0
  %v3010 = vadd.f32 %v2998, 1.0
  %v3011 = vadd.f32 %v2999, 1.0
  %v3012 = vadd.f32 %v3000, 1.0
  %v3013 = vmul.f32 %v2713, %v3001
  %v3014 = vmul.f32 %v2714, %v3002
  %v3015 = vmul.f32 %v2715, %v3003
  %v3016 = vmul.f32 %v2716, %v3004
  %v3017 = vmul.f32 %v2717, %v3005
  %v3018 = vmul.f32 %v2718, %v3006
  %v3019 = vmul.f32 %v2719, %v3007
  %v3020 = vmul.f32 %v2720, %v3008
  %v3021 = vmul.f32 %v2721, %v3009
  %v3022 = vmul.f32 %v2722, %v3010
  %v3023 = vmul.f32 %v2723, %v3011
  %v3024 = vmul.f32 %v2724, %v3012
  %v3025 = vadd.f32 %v2658, %v2674
  %v3026 = vadd.f32 %v2659, %v2678
  %v3027 = vadd.f32 %v2660, %v2682
  %v3028 = vadd.f32 %v2661, %v2686
  %v3029 = vadd.f32 %v2662, %v2690
  %v3030 = vadd.f32 %v2663, %v2694
  %v3031 = vadd.f32 %v2664, %v2674
  %v3032 = vadd.f32 %v2665, %v2678
  %v3033 = vadd.f32 %v2666, %v2682
  %v3034 = vadd.f32 %v2667, %v2686
  %v3035 = vadd.f32 %v2668, %v2690
  %v3036 = vadd.f32 %v2669, %v2694
  %v3037 = vmul.f32 %v3025, 0.5
  %v3038 = vmul.f32 %v3026, 0.5
  %v3039 = vmul.f32 %v3027, 0.5
  %v3040 = vmul.f32 %v3028, 0.5
  %v3041 = vmul.f32 %v3029, 0.5
  %v3042 = vmul.f32 %v3030, 0.5
  %v3043 = vmul.f32 %v3031, 0.5
  %v3044 = vmul.f32 %v3032, 0.5
  %v3045 = vmul.f32 %v3033, 0.5
  %v3046 = vmul.f32 %v3034, 0.5
  %v3047 = vmul.f32 %v3035, 0.5
  %v3048 = vmul.f32 %v3036, 0.5
  %v3049 = vmul.f32 %v3025, 0.70710677
  %v3050 = vmul.f32 %v3026, 0.70710677
  %v3051 = vmul.f32 %v3027, 0.70710677
  %v3052 = vmul.f32 %v3028, 0.70710677
  %v3053 = vmul.f32 %v3029, 0.70710677
  %v3054 = vmul.f32 %v3030, 0.70710677
  %v3055 = vmul.f32 %v3031, 0.70710677
  %v3056 = vmul.f32 %v3032, 0.70710677
  %v3057 = vmul.f32 %v3033, 0.70710677
  %v3058 = vmul.f32 %v3034, 0.70710677
  %v3059 = vmul.f32 %v3035, 0.70710677
  %v3060 = vmul.f32 %v3036, 0.70710677
  %v3061 = vand.u32 2147483647, %v3049
  %v3062 = vand.u32 2147483647, %v3050
  %v3063 = vand.u32 2147483647, %v3051
  %v3064 = vand.u32 2147483647, %v3052
  %v3065 = vand.u32 2147483647, %v3053
  %v3066 = vand.u32 2147483647, %v3054
  %v3067 = vand.u32 2147483647, %v3055
  %v3068 = vand.u32 2147483647, %v3056
  %v3069 = vand.u32 2147483647, %v3057
  %v3070 = vand.u32 2147483647, %v3058
  %v3071 = vand.u32 2147483647, %v3059
  %v3072 = vand.u32 2147483647, %v3060
  %v3073 = vmul.f32 %v3061, 0.3275911
  %v3074 = vmul.f32 %v3062, 0.3275911
  %v3075 = vmul.f32 %v3063, 0.3275911
  %v3076 = vmul.f32 %v3064, 0.3275911
  %v3077 = vmul.f32 %v3065, 0.3275911
  %v3078 = vmul.f32 %v3066, 0.3275911
  %v3079 = vmul.f32 %v3067, 0.3275911
  %v3080 = vmul.f32 %v3068, 0.3275911
  %v3081 = vmul.f32 %v3069, 0.3275911
  %v3082 = vmul.f32 %v3070, 0.3275911
  %v3083 = vmul.f32 %v3071, 0.3275911
  %v3084 = vmul.f32 %v3072, 0.3275911
  %v3085 = vadd.f32 %v3073, 1.0
  %v3086 = vadd.f32 %v3074, 1.0
  %v3087 = vadd.f32 %v3075, 1.0
  %v3088 = vadd.f32 %v3076, 1.0
  %v3089 = vadd.f32 %v3077, 1.0
  %v3090 = vadd.f32 %v3078, 1.0
  %v3091 = vadd.f32 %v3079, 1.0
  %v3092 = vadd.f32 %v3080, 1.0
  %v3093 = vadd.f32 %v3081, 1.0
  %v3094 = vadd.f32 %v3082, 1.0
  %v3095 = vadd.f32 %v3083, 1.0
  %v3096 = vadd.f32 %v3084, 1.0
  %v3097 = vrcp.pop %v3085
  %v3098 = vrcp.pop %v3086
  %v3099 = vrcp.pop %v3087
  %v3100 = vrcp.pop %v3088
  %v3101 = vrcp.pop %v3089
  %v3102 = vrcp.pop %v3090
  %v3103 = vrcp.pop %v3091
  %v3104 = vrcp.pop %v3092
  %v3105 = vrcp.pop %v3093
  %v3106 = vrcp.pop %v3094
  %v3107 = vrcp.pop %v3095
  %v3108 = vrcp.pop %v3096
  %v3109 = vmul.f32 %v3097, 1.0614054
  %v3110 = vmul.f32 %v3098, 1.0614054
  %v3111 = vmul.f32 %v3099, 1.0614054
  %v3112 = vmul.f32 %v3100, 1.0614054
  %v3113 = vmul.f32 %v3101, 1.0614054
  %v3114 = vmul.f32 %v3102, 1.0614054
  %v3115 = vmul.f32 %v3103, 1.0614054
  %v3116 = vmul.f32 %v3104, 1.0614054
  %v3117 = vmul.f32 %v3105, 1.0614054
  %v3118 = vmul.f32 %v3106, 1.0614054
  %v3119 = vmul.f32 %v3107, 1.0614054
  %v3120 = vmul.f32 %v3108, 1.0614054
  %v3121 = vadd.f32 %v3109, -1.4531521
  %v3122 = vadd.f32 %v3110, -1.4531521
  %v3123 = vadd.f32 %v3111, -1.4531521
  %v3124 = vadd.f32 %v3112, -1.4531521
  %v3125 = vadd.f32 %v3113, -1.4531521
  %v3126 = vadd.f32 %v3114, -1.4531521
  %v3127 = vadd.f32 %v3115, -1.4531521
  %v3128 = vadd.f32 %v3116, -1.4531521
  %v3129 = vadd.f32 %v3117, -1.4531521
  %v3130 = vadd.f32 %v3118, -1.4531521
  %v3131 = vadd.f32 %v3119, -1.4531521
  %v3132 = vadd.f32 %v3120, -1.4531521
  %v3133 = vmul.f32 %v3097, %v3121
  %v3134 = vmul.f32 %v3098, %v3122
  %v3135 = vmul.f32 %v3099, %v3123
  %v3136 = vmul.f32 %v3100, %v3124
  %v3137 = vmul.f32 %v3101, %v3125
  %v3138 = vmul.f32 %v3102, %v3126
  %v3139 = vmul.f32 %v3103, %v3127
  %v3140 = vmul.f32 %v3104, %v3128
  %v3141 = vmul.f32 %v3105, %v3129
  %v3142 = vmul.f32 %v3106, %v3130
  %v3143 = vmul.f32 %v3107, %v3131
  %v3144 = vmul.f32 %v3108, %v3132
  %v3145 = vadd.f32 %v3133, 1.4214138
  %v3146 = vadd.f32 %v3134, 1.4214138
  %v3147 = vadd.f32 %v3135, 1.4214138
  %v3148 = vadd.f32 %v3136, 1.4214138
  %v3149 = vadd.f32 %v3137, 1.4214138
  %v3150 = vadd.f32 %v3138, 1.4214138
  %v3151 = vadd.f32 %v3139, 1.4214138
  %v3152 = vadd.f32 %v3140, 1.4214138
  %v3153 = vadd.f32 %v3141, 1.4214138
  %v3154 = vadd.f32 %v3142, 1.4214138
  %v3155 = vadd.f32 %v3143, 1.4214138
  %v3156 = vadd.f32 %v3144, 1.4214138
  %v3157 = vmul.f32 %v3097, %v3145
  %v3158 = vmul.f32 %v3098, %v3146
  %v3159 = vmul.f32 %v3099, %v3147
  %v3160 = vmul.f32 %v3100, %v3148
  %v3161 = vmul.f32 %v3101, %v3149
  %v3162 = vmul.f32 %v3102, %v3150
  %v3163 = vmul.f32 %v3103, %v3151
  %v3164 = vmul.f32 %v3104, %v3152
  %v3165 = vmul.f32 %v3105, %v3153
  %v3166 = vmul.f32 %v3106, %v3154
  %v3167 = vmul.f32 %v3107, %v3155
  %v3168 = vmul.f32 %v3108, %v3156
  %v3169 = vadd.f32 %v3157, -0.28449672
  %v3170 = vadd.f32 %v3158, -0.28449672
  %v3171 = vadd.f32 %v3159, -0.28449672
  %v3172 = vadd.f32 %v3160, -0.28449672
  %v3173 = vadd.f32 %v3161, -0.28449672
  %v3174 = vadd.f32 %v3162, -0.28449672
  %v3175 = vadd.f32 %v3163, -0.28449672
  %v3176 = vadd.f32 %v3164, -0.28449672
  %v3177 = vadd.f32 %v3165, -0.28449672
  %v3178 = vadd.f32 %v3166, -0.28449672
  %v3179 = vadd.f32 %v3167, -0.28449672
  %v3180 = vadd.f32 %v3168, -0.28449672
  %v3181 = vmul.f32 %v3097, %v3169
  %v3182 = vmul.f32 %v3098, %v3170
  %v3183 = vmul.f32 %v3099, %v3171
  %v3184 = vmul.f32 %v3100, %v3172
  %v3185 = vmul.f32 %v3101, %v3173
  %v3186 = vmul.f32 %v3102, %v3174
  %v3187 = vmul.f32 %v3103, %v3175
  %v3188 = vmul.f32 %v3104, %v3176
  %v3189 = vmul.f32 %v3105, %v3177
  %v3190 = vmul.f32 %v3106, %v3178
  %v3191 = vmul.f32 %v3107, %v3179
  %v3192 = vmul.f32 %v3108, %v3180
  %v3193 = vadd.f32 %v3181, 0.2548296
  %v3194 = vadd.f32 %v3182, 0.2548296
  %v3195 = vadd.f32 %v3183, 0.2548296
  %v3196 = vadd.f32 %v3184, 0.2548296
  %v3197 = vadd.f32 %v3185, 0.2548296
  %v3198 = vadd.f32 %v3186, 0.2548296
  %v3199 = vadd.f32 %v3187, 0.2548296
  %v3200 = vadd.f32 %v3188, 0.2548296
  %v3201 = vadd.f32 %v3189, 0.2548296
  %v3202 = vadd.f32 %v3190, 0.2548296
  %v3203 = vadd.f32 %v3191, 0.2548296
  %v3204 = vadd.f32 %v3192, 0.2548296
  %v3205 = vmul.f32 %v3097, %v3193
  %v3206 = vmul.f32 %v3098, %v3194
  %v3207 = vmul.f32 %v3099, %v3195
  %v3208 = vmul.f32 %v3100, %v3196
  %v3209 = vmul.f32 %v3101, %v3197
  %v3210 = vmul.f32 %v3102, %v3198
  %v3211 = vmul.f32 %v3103, %v3199
  %v3212 = vmul.f32 %v3104, %v3200
  %v3213 = vmul.f32 %v3105, %v3201
  %v3214 = vmul.f32 %v3106, %v3202
  %v3215 = vmul.f32 %v3107, %v3203
  %v3216 = vmul.f32 %v3108, %v3204
  %v3217 = vsub.f32 0.0, %v3061
  %v3218 = vsub.f32 0.0, %v3062
  %v3219 = vsub.f32 0.0, %v3063
  %v3220 = vsub.f32 0.0, %v3064
  %v3221 = vsub.f32 0.0, %v3065
  %v3222 = vsub.f32 0.0, %v3066
  %v3223 = vsub.f32 0.0, %v3067
  %v3224 = vsub.f32 0.0, %v3068
  %v3225 = vsub.f32 0.0, %v3069
  %v3226 = vsub.f32 0.0, %v3070
  %v3227 = vsub.f32 0.0, %v3071
  %v3228 = vsub.f32 0.0, %v3072
  %v3229 = vmul.f32 %v3217, %v3061
  %v3230 = vmul.f32 %v3218, %v3062
  %v3231 = vmul.f32 %v3219, %v3063
  %v3232 = vmul.f32 %v3220, %v3064
  %v3233 = vmul.f32 %v3221, %v3065
  %v3234 = vmul.f32 %v3222, %v3066
  %v3235 = vmul.f32 %v3223, %v3067
  %v3236 = vmul.f32 %v3224, %v3068
  %v3237 = vmul.f32 %v3225, %v3069
  %v3238 = vmul.f32 %v3226, %v3070
  %v3239 = vmul.f32 %v3227, %v3071
  %v3240 = vmul.f32 %v3228, %v3072
  %v3241 = vmul.f32 %v3229, 1.442695
  %v3242 = vpow.pop %v3241
  %v3243 = vmul.f32 %v3230, 1.442695
  %v3244 = vpow.pop %v3243
  %v3245 = vmul.f32 %v3231, 1.442695
  %v3246 = vpow.pop %v3245
  %v3247 = vmul.f32 %v3232, 1.442695
  %v3248 = vpow.pop %v3247
  %v3249 = vmul.f32 %v3233, 1.442695
  %v3250 = vpow.pop %v3249
  %v3251 = vmul.f32 %v3234, 1.442695
  %v3252 = vpow.pop %v3251
  %v3253 = vmul.f32 %v3235, 1.442695
  %v3254 = vpow.pop %v3253
  %v3255 = vmul.f32 %v3236, 1.442695
  %v3256 = vpow.pop %v3255
  %v3257 = vmul.f32 %v3237, 1.442695
  %v3258 = vpow.pop %v3257
  %v3259 = vmul.f32 %v3238, 1.442695
  %v3260 = vpow.pop %v3259
  %v3261 = vmul.f32 %v3239, 1.442695
  %v3262 = vpow.pop %v3261
  %v3263 = vmul.f32 %v3240, 1.442695
  %v3264 = vpow.pop %v3263
  %v3265 = vmul.f32 %v3205, %v3242
  %v3266 = vmul.f32 %v3206, %v3244
  %v3267 = vmul.f32 %v3207, %v3246
  %v3268 = vmul.f32 %v3208, %v3248
  %v3269 = vmul.f32 %v3209, %v3250
  %v3270 = vmul.f32 %v3210, %v3252
  %v3271 = vmul.f32 %v3211, %v3254
  %v3272 = vmul.f32 %v3212, %v3256
  %v3273 = vmul.f32 %v3213, %v3258
  %v3274 = vmul.f32 %v3214, %v3260
  %v3275 = vmul.f32 %v3215, %v3262
  %v3276 = vmul.f32 %v3216, %v3264
  %v3277 = vsub.f32 1.0, %v3265
  %v3278 = vsub.f32 1.0, %v3266
  %v3279 = vsub.f32 1.0, %v3267
  %v3280 = vsub.f32 1.0, %v3268
  %v3281 = vsub.f32 1.0, %v3269
  %v3282 = vsub.f32 1.0, %v3270
  %v3283 = vsub.f32 1.0, %v3271
  %v3284 = vsub.f32 1.0, %v3272
  %v3285 = vsub.f32 1.0, %v3273
  %v3286 = vsub.f32 1.0, %v3274
  %v3287 = vsub.f32 1.0, %v3275
  %v3288 = vsub.f32 1.0, %v3276
  %vm3289 = vcmp.ge.f32.partialorder %v3049, 0.0
  %vm3290 = vcmp.ge.f32.partialorder %v3050, 0.0
  %vm3291 = vcmp.ge.f32.partialorder %v3051, 0.0
  %vm3292 = vcmp.ge.f32.partialorder %v3052, 0.0
  %vm3293 = vcmp.ge.f32.partialorder %v3053, 0.0
  %vm3294 = vcmp.ge.f32.partialorder %v3054, 0.0
  %vm3295 = vcmp.ge.f32.partialorder %v3055, 0.0
  %vm3296 = vcmp.ge.f32.partialorder %v3056, 0.0
  %vm3297 = vcmp.ge.f32.partialorder %v3057, 0.0
  %vm3298 = vcmp.ge.f32.partialorder %v3058, 0.0
  %vm3299 = vcmp.ge.f32.partialorder %v3059, 0.0
  %vm3300 = vcmp.ge.f32.partialorder %v3060, 0.0
  %v3301 = vsub.f32 0.0, %v3277
  %v3302 = vsub.f32 0.0, %v3278
  %v3303 = vsub.f32 0.0, %v3279
  %v3304 = vsub.f32 0.0, %v3280
  %v3305 = vsub.f32 0.0, %v3281
  %v3306 = vsub.f32 0.0, %v3282
  %v3307 = vsub.f32 0.0, %v3283
  %v3308 = vsub.f32 0.0, %v3284
  %v3309 = vsub.f32 0.0, %v3285
  %v3310 = vsub.f32 0.0, %v3286
  %v3311 = vsub.f32 0.0, %v3287
  %v3312 = vsub.f32 0.0, %v3288
  %v3313 = vsel %vm3289, %v3277, %v3301
  %v3314 = vsel %vm3290, %v3278, %v3302
  %v3315 = vsel %vm3291, %v3279, %v3303
  %v3316 = vsel %vm3292, %v3280, %v3304
  %v3317 = vsel %vm3293, %v3281, %v3305
  %v3318 = vsel %vm3294, %v3282, %v3306
  %v3319 = vsel %vm3295, %v3283, %v3307
  %v3320 = vsel %vm3296, %v3284, %v3308
  %v3321 = vsel %vm3297, %v3285, %v3309
  %v3322 = vsel %vm3298, %v3286, %v3310
  %v3323 = vsel %vm3299, %v3287, %v3311
  %v3324 = vsel %vm3300, %v3288, %v3312
  %v3325 = vadd.f32 %v3313, 1.0
  %v3326 = vadd.f32 %v3314, 1.0
  %v3327 = vadd.f32 %v3315, 1.0
  %v3328 = vadd.f32 %v3316, 1.0
  %v3329 = vadd.f32 %v3317, 1.0
  %v3330 = vadd.f32 %v3318, 1.0
  %v3331 = vadd.f32 %v3319, 1.0
  %v3332 = vadd.f32 %v3320, 1.0
  %v3333 = vadd.f32 %v3321, 1.0
  %v3334 = vadd.f32 %v3322, 1.0
  %v3335 = vadd.f32 %v3323, 1.0
  %v3336 = vadd.f32 %v3324, 1.0
  %v3337 = vmul.f32 %v3037, %v3325
  %v3338 = vmul.f32 %v3038, %v3326
  %v3339 = vmul.f32 %v3039, %v3327
  %v3340 = vmul.f32 %v3040, %v3328
  %v3341 = vmul.f32 %v3041, %v3329
  %v3342 = vmul.f32 %v3042, %v3330
  %v3343 = vmul.f32 %v3043, %v3331
  %v3344 = vmul.f32 %v3044, %v3332
  %v3345 = vmul.f32 %v3045, %v3333
  %v3346 = vmul.f32 %v3046, %v3334
  %v3347 = vmul.f32 %v3047, %v3335
  %v3348 = vmul.f32 %v3048, %v3336
  %s3349 = scalar_lea.vmem %s0, 336
  %v3350 = vld [vmem:[%s3349] sm:$0xff]
  %v3351 = vld [vmem:[%s3349 + $0x8] sm:$0xff]
  %v3352 = vld [vmem:[%s3349 + $0x10] sm:$0xff]
  %v3353 = vld [vmem:[%s3349 + $0x18] sm:$0xff]
  %v3354 = vld [vmem:[%s3349 + $0x20] sm:$0xff]
  %v3355 = vld [vmem:[%s3349 + $0x28] sm:$0xff]
  %v3356 = vld [vmem:[%s3349 + $0x30] sm:$0xff]
  %v3357 = vld [vmem:[%s3349 + $0x38] sm:$0xff]
  %v3358 = vld [vmem:[%s3349 + $0x40] sm:$0xff]
  %v3359 = vld [vmem:[%s3349 + $0x48] sm:$0xff]
  %v3360 = vld [vmem:[%s3349 + $0x50] sm:$0xff]
  %v3361 = vld [vmem:[%s3349 + $0x58] sm:$0xff]
  %v3362 = vld [vmem:[%s3349 + $0x60] sm:$0xff]
  %v3363 = vld [vmem:[%s3349 + $0x68] sm:$0xff]
  %v3364 = vld [vmem:[%s3349 + $0x70] sm:$0xff]
  %v3365 = vld [vmem:[%s3349 + $0x78] sm:$0xff]
  %v3366 = vld [vmem:[%s3349 + $0x80] sm:$0xff]
  %v3367 = vld [vmem:[%s3349 + $0x88] sm:$0xff]
  %v3368 = vld [vmem:[%s3349 + $0x90] sm:$0xff]
  %v3369 = vld [vmem:[%s3349 + $0x98] sm:$0xff]
  %v3370 = vld [vmem:[%s3349 + $0xa0] sm:$0xff]
  %v3371 = vld [vmem:[%s3349 + $0xa8] sm:$0xff]
  %v3372 = vld [vmem:[%s3349 + $0xb0] sm:$0xff]
  %v3373 = vld [vmem:[%s3349 + $0xb8] sm:$0xff]
  %v3374 = vld [vmem:[%s3349 + $0x300] sm:$0xff]
  %v3375 = vld [vmem:[%s3349 + $0x308] sm:$0xff]
  %v3376 = vld [vmem:[%s3349 + $0x310] sm:$0xff]
  %v3377 = vld [vmem:[%s3349 + $0x318] sm:$0xff]
  %v3378 = vld [vmem:[%s3349 + $0x320] sm:$0xff]
  %v3379 = vld [vmem:[%s3349 + $0x328] sm:$0xff]
  %v3380 = vld [vmem:[%s3349 + $0x330] sm:$0xff]
  %v3381 = vld [vmem:[%s3349 + $0x338] sm:$0xff]
  %v3382 = vld [vmem:[%s3349 + $0x340] sm:$0xff]
  %v3383 = vld [vmem:[%s3349 + $0x348] sm:$0xff]
  %v3384 = vld [vmem:[%s3349 + $0x350] sm:$0xff]
  %v3385 = vld [vmem:[%s3349 + $0x358] sm:$0xff]
  %v3386 = vld [vmem:[%s3349 + $0x360] sm:$0xff]
  %v3387 = vld [vmem:[%s3349 + $0x368] sm:$0xff]
  %v3388 = vld [vmem:[%s3349 + $0x370] sm:$0xff]
  %v3389 = vld [vmem:[%s3349 + $0x378] sm:$0xff]
  %v3390 = vld [vmem:[%s3349 + $0x380] sm:$0xff]
  %v3391 = vld [vmem:[%s3349 + $0x388] sm:$0xff]
  %v3392 = vld [vmem:[%s3349 + $0x390] sm:$0xff]
  %v3393 = vld [vmem:[%s3349 + $0x398] sm:$0xff]
  %v3394 = vld [vmem:[%s3349 + $0x3a0] sm:$0xff]
  %v3395 = vld [vmem:[%s3349 + $0x3a8] sm:$0xff]
  %v3396 = vld [vmem:[%s3349 + $0x3b0] sm:$0xff]
  %v3397 = vld [vmem:[%s3349 + $0x3b8] sm:$0xff]
  %v3398 = vmax.bf16 %v3350, %v3356
  %v3399 = vmax.bf16 %v3398, %v3362
  %v3400 = vmax.bf16 %v3399, %v3368
  %v3401 = vmax.bf16 %v3351, %v3357
  %v3402 = vmax.bf16 %v3401, %v3363
  %v3403 = vmax.bf16 %v3402, %v3369
  %v3404 = vmax.bf16 %v3352, %v3358
  %v3405 = vmax.bf16 %v3404, %v3364
  %v3406 = vmax.bf16 %v3405, %v3370
  %v3407 = vmax.bf16 %v3353, %v3359
  %v3408 = vmax.bf16 %v3407, %v3365
  %v3409 = vmax.bf16 %v3408, %v3371
  %v3410 = vmax.bf16 %v3354, %v3360
  %v3411 = vmax.bf16 %v3410, %v3366
  %v3412 = vmax.bf16 %v3411, %v3372
  %v3413 = vmax.bf16 %v3355, %v3361
  %v3414 = vmax.bf16 %v3413, %v3367
  %v3415 = vmax.bf16 %v3414, %v3373
  %v3416 = vmax.bf16 %v3374, %v3380
  %v3417 = vmax.bf16 %v3416, %v3386
  %v3418 = vmax.bf16 %v3417, %v3392
  %v3419 = vmax.bf16 %v3375, %v3381
  %v3420 = vmax.bf16 %v3419, %v3387
  %v3421 = vmax.bf16 %v3420, %v3393
  %v3422 = vmax.bf16 %v3376, %v3382
  %v3423 = vmax.bf16 %v3422, %v3388
  %v3424 = vmax.bf16 %v3423, %v3394
  %v3425 = vmax.bf16 %v3377, %v3383
  %v3426 = vmax.bf16 %v3425, %v3389
  %v3427 = vmax.bf16 %v3426, %v3395
  %v3428 = vmax.bf16 %v3378, %v3384
  %v3429 = vmax.bf16 %v3428, %v3390
  %v3430 = vmax.bf16 %v3429, %v3396
  %v3431 = vmax.bf16 %v3379, %v3385
  %v3432 = vmax.bf16 %v3431, %v3391
  %v3433 = vmax.bf16 %v3432, %v3397
  %v3434 = vunpack.c.l.bf16 %v3400
  %v3435 = vunpack.c.h.bf16 %v3400
  %v3436 = vunpack.c.l.bf16 %v3403
  %v3437 = vunpack.c.h.bf16 %v3403
  %v3438 = vunpack.c.l.bf16 %v3406
  %v3439 = vunpack.c.h.bf16 %v3406
  %v3440 = vunpack.c.l.bf16 %v3409
  %v3441 = vunpack.c.h.bf16 %v3409
  %v3442 = vunpack.c.l.bf16 %v3412
  %v3443 = vunpack.c.h.bf16 %v3412
  %v3444 = vunpack.c.l.bf16 %v3415
  %v3445 = vunpack.c.h.bf16 %v3415
  %v3446 = vunpack.c.l.bf16 %v3418
  %v3447 = vunpack.c.h.bf16 %v3418
  %v3448 = vunpack.c.l.bf16 %v3421
  %v3449 = vunpack.c.h.bf16 %v3421
  %v3450 = vunpack.c.l.bf16 %v3424
  %v3451 = vunpack.c.h.bf16 %v3424
  %v3452 = vunpack.c.l.bf16 %v3427
  %v3453 = vunpack.c.h.bf16 %v3427
  %v3454 = vunpack.c.l.bf16 %v3430
  %v3455 = vunpack.c.h.bf16 %v3430
  %v3456 = vunpack.c.l.bf16 %v3433
  %v3457 = vunpack.c.h.bf16 %v3433
  %v3482 = vrot.slane %v3434, 1
  %v3483 = vrot.slane %v3440, 1
  %v3484 = vsel %vm228, %v3482, %v3483
  %v3485 = vrot.slane %v3435, 1
  %v3486 = vrot.slane %v3441, 1
  %v3487 = vsel %vm228, %v3485, %v3486
  %v3488 = vrot.slane %v3436, 1
  %v3489 = vrot.slane %v3442, 1
  %v3490 = vsel %vm228, %v3488, %v3489
  %v3491 = vrot.slane %v3437, 1
  %v3492 = vrot.slane %v3443, 1
  %v3493 = vsel %vm228, %v3491, %v3492
  %v3494 = vrot.slane %v3438, 1
  %v3495 = vrot.slane %v3444, 1
  %v3496 = vsel %vm228, %v3494, %v3495
  %v3497 = vrot.slane %v3439, 1
  %v3498 = vrot.slane %v3445, 1
  %v3499 = vsel %vm228, %v3497, %v3498
  %v3500 = vrot.slane %v3446, 1
  %v3501 = vrot.slane %v3452, 1
  %v3502 = vsel %vm228, %v3500, %v3501
  %v3503 = vrot.slane %v3447, 1
  %v3504 = vrot.slane %v3453, 1
  %v3505 = vsel %vm228, %v3503, %v3504
  %v3506 = vrot.slane %v3448, 1
  %v3507 = vrot.slane %v3454, 1
  %v3508 = vsel %vm228, %v3506, %v3507
  %v3509 = vrot.slane %v3449, 1
  %v3510 = vrot.slane %v3455, 1
  %v3511 = vsel %vm228, %v3509, %v3510
  %v3512 = vrot.slane %v3450, 1
  %v3513 = vrot.slane %v3456, 1
  %v3514 = vsel %vm228, %v3512, %v3513
  %v3515 = vrot.slane %v3451, 1
  %v3516 = vrot.slane %v3457, 1
  %v3517 = vsel %vm228, %v3515, %v3516
  %v3542 = vmax.f32 %v3434, %v3484
  %v3543 = vmax.f32 %v3435, %v3487
  %v3544 = vmax.f32 %v3436, %v3490
  %v3545 = vmax.f32 %v3437, %v3493
  %v3546 = vmax.f32 %v3438, %v3496
  %v3547 = vmax.f32 %v3439, %v3499
  %v3548 = vmax.f32 %v3440, %v3483
  %v3549 = vmax.f32 %v3441, %v3486
  %v3550 = vmax.f32 %v3442, %v3489
  %v3551 = vmax.f32 %v3443, %v3492
  %v3552 = vmax.f32 %v3444, %v3495
  %v3553 = vmax.f32 %v3445, %v3498
  %v3554 = vmax.f32 %v3446, %v3502
  %v3555 = vmax.f32 %v3447, %v3505
  %v3556 = vmax.f32 %v3448, %v3508
  %v3557 = vmax.f32 %v3449, %v3511
  %v3558 = vmax.f32 %v3450, %v3514
  %v3559 = vmax.f32 %v3451, %v3517
  %v3560 = vmax.f32 %v3452, %v3501
  %v3561 = vmax.f32 %v3453, %v3504
  %v3562 = vmax.f32 %v3454, %v3507
  %v3563 = vmax.f32 %v3455, %v3510
  %v3564 = vmax.f32 %v3456, %v3513
  %v3565 = vmax.f32 %v3457, %v3516
  %v3590 = vrot.slane %v3542, 2
  %v3591 = vrot.slane %v3548, 2
  %v3592 = vsel %vm337, %v3590, %v3591
  %v3593 = vrot.slane %v3543, 2
  %v3594 = vrot.slane %v3549, 2
  %v3595 = vsel %vm337, %v3593, %v3594
  %v3596 = vrot.slane %v3544, 2
  %v3597 = vrot.slane %v3550, 2
  %v3598 = vsel %vm337, %v3596, %v3597
  %v3599 = vrot.slane %v3545, 2
  %v3600 = vrot.slane %v3551, 2
  %v3601 = vsel %vm337, %v3599, %v3600
  %v3602 = vrot.slane %v3546, 2
  %v3603 = vrot.slane %v3552, 2
  %v3604 = vsel %vm337, %v3602, %v3603
  %v3605 = vrot.slane %v3547, 2
  %v3606 = vrot.slane %v3553, 2
  %v3607 = vsel %vm337, %v3605, %v3606
  %v3608 = vrot.slane %v3554, 2
  %v3609 = vrot.slane %v3560, 2
  %v3610 = vsel %vm337, %v3608, %v3609
  %v3611 = vrot.slane %v3555, 2
  %v3612 = vrot.slane %v3561, 2
  %v3613 = vsel %vm337, %v3611, %v3612
  %v3614 = vrot.slane %v3556, 2
  %v3615 = vrot.slane %v3562, 2
  %v3616 = vsel %vm337, %v3614, %v3615
  %v3617 = vrot.slane %v3557, 2
  %v3618 = vrot.slane %v3563, 2
  %v3619 = vsel %vm337, %v3617, %v3618
  %v3620 = vrot.slane %v3558, 2
  %v3621 = vrot.slane %v3564, 2
  %v3622 = vsel %vm337, %v3620, %v3621
  %v3623 = vrot.slane %v3559, 2
  %v3624 = vrot.slane %v3565, 2
  %v3625 = vsel %vm337, %v3623, %v3624
  %v3650 = vmax.f32 %v3542, %v3592
  %v3651 = vmax.f32 %v3543, %v3595
  %v3652 = vmax.f32 %v3544, %v3598
  %v3653 = vmax.f32 %v3545, %v3601
  %v3654 = vmax.f32 %v3546, %v3604
  %v3655 = vmax.f32 %v3547, %v3607
  %v3656 = vmax.f32 %v3548, %v3591
  %v3657 = vmax.f32 %v3549, %v3594
  %v3658 = vmax.f32 %v3550, %v3597
  %v3659 = vmax.f32 %v3551, %v3600
  %v3660 = vmax.f32 %v3552, %v3603
  %v3661 = vmax.f32 %v3553, %v3606
  %v3662 = vmax.f32 %v3554, %v3610
  %v3663 = vmax.f32 %v3555, %v3613
  %v3664 = vmax.f32 %v3556, %v3616
  %v3665 = vmax.f32 %v3557, %v3619
  %v3666 = vmax.f32 %v3558, %v3622
  %v3667 = vmax.f32 %v3559, %v3625
  %v3668 = vmax.f32 %v3560, %v3609
  %v3669 = vmax.f32 %v3561, %v3612
  %v3670 = vmax.f32 %v3562, %v3615
  %v3671 = vmax.f32 %v3563, %v3618
  %v3672 = vmax.f32 %v3564, %v3621
  %v3673 = vmax.f32 %v3565, %v3624
  %v3674 = vmul.f32 %v3650, %v47
  %v3675 = vmul.f32 %v3651, %v48
  %v3676 = vmul.f32 %v3652, %v49
  %v3677 = vmul.f32 %v3653, %v50
  %v3678 = vmul.f32 %v3654, %v51
  %v3679 = vmul.f32 %v3655, %v52
  %v3680 = vmul.f32 %v3662, %v47
  %v3681 = vmul.f32 %v3663, %v48
  %v3682 = vmul.f32 %v3664, %v49
  %v3683 = vmul.f32 %v3665, %v50
  %v3684 = vmul.f32 %v3666, %v51
  %v3685 = vmul.f32 %v3667, %v52
  %v3686 = vsel %vm337, %v3674, 0.0
  %v3687 = vrot.slane %v3686, 4
  %v3688 = vadd.f32 %v3686, %v3687
  %v3689 = vrot.slane %v3688, 2
  %v3690 = vadd.f32 %v3688, %v3689
  %v3691 = vrot.slane %v3690, 1
  %v3692 = vadd.f32 %v3690, %v3691
  %v3693 = vsel %vm337, %v3675, 0.0
  %v3694 = vrot.slane %v3693, 4
  %v3695 = vadd.f32 %v3693, %v3694
  %v3696 = vrot.slane %v3695, 2
  %v3697 = vadd.f32 %v3695, %v3696
  %v3698 = vrot.slane %v3697, 1
  %v3699 = vadd.f32 %v3697, %v3698
  %v3700 = vsel %vm337, %v3676, 0.0
  %v3701 = vrot.slane %v3700, 4
  %v3702 = vadd.f32 %v3700, %v3701
  %v3703 = vrot.slane %v3702, 2
  %v3704 = vadd.f32 %v3702, %v3703
  %v3705 = vrot.slane %v3704, 1
  %v3706 = vadd.f32 %v3704, %v3705
  %v3707 = vsel %vm337, %v3677, 0.0
  %v3708 = vrot.slane %v3707, 4
  %v3709 = vadd.f32 %v3707, %v3708
  %v3710 = vrot.slane %v3709, 2
  %v3711 = vadd.f32 %v3709, %v3710
  %v3712 = vrot.slane %v3711, 1
  %v3713 = vadd.f32 %v3711, %v3712
  %v3714 = vsel %vm337, %v3678, 0.0
  %v3715 = vrot.slane %v3714, 4
  %v3716 = vadd.f32 %v3714, %v3715
  %v3717 = vrot.slane %v3716, 2
  %v3718 = vadd.f32 %v3716, %v3717
  %v3719 = vrot.slane %v3718, 1
  %v3720 = vadd.f32 %v3718, %v3719
  %v3721 = vsel %vm337, %v3679, 0.0
  %v3722 = vrot.slane %v3721, 4
  %v3723 = vadd.f32 %v3721, %v3722
  %v3724 = vrot.slane %v3723, 2
  %v3725 = vadd.f32 %v3723, %v3724
  %v3726 = vrot.slane %v3725, 1
  %v3727 = vadd.f32 %v3725, %v3726
  %v3728 = vsel %vm337, %v3680, 0.0
  %v3729 = vrot.slane %v3728, 4
  %v3730 = vadd.f32 %v3728, %v3729
  %v3731 = vrot.slane %v3730, 2
  %v3732 = vadd.f32 %v3730, %v3731
  %v3733 = vrot.slane %v3732, 1
  %v3734 = vadd.f32 %v3732, %v3733
  %v3735 = vsel %vm337, %v3681, 0.0
  %v3736 = vrot.slane %v3735, 4
  %v3737 = vadd.f32 %v3735, %v3736
  %v3738 = vrot.slane %v3737, 2
  %v3739 = vadd.f32 %v3737, %v3738
  %v3740 = vrot.slane %v3739, 1
  %v3741 = vadd.f32 %v3739, %v3740
  %v3742 = vsel %vm337, %v3682, 0.0
  %v3743 = vrot.slane %v3742, 4
  %v3744 = vadd.f32 %v3742, %v3743
  %v3745 = vrot.slane %v3744, 2
  %v3746 = vadd.f32 %v3744, %v3745
  %v3747 = vrot.slane %v3746, 1
  %v3748 = vadd.f32 %v3746, %v3747
  %v3749 = vsel %vm337, %v3683, 0.0
  %v3750 = vrot.slane %v3749, 4
  %v3751 = vadd.f32 %v3749, %v3750
  %v3752 = vrot.slane %v3751, 2
  %v3753 = vadd.f32 %v3751, %v3752
  %v3754 = vrot.slane %v3753, 1
  %v3755 = vadd.f32 %v3753, %v3754
  %v3756 = vsel %vm337, %v3684, 0.0
  %v3757 = vrot.slane %v3756, 4
  %v3758 = vadd.f32 %v3756, %v3757
  %v3759 = vrot.slane %v3758, 2
  %v3760 = vadd.f32 %v3758, %v3759
  %v3761 = vrot.slane %v3760, 1
  %v3762 = vadd.f32 %v3760, %v3761
  %v3763 = vsel %vm337, %v3685, 0.0
  %v3764 = vrot.slane %v3763, 4
  %v3765 = vadd.f32 %v3763, %v3764
  %v3766 = vrot.slane %v3765, 2
  %v3767 = vadd.f32 %v3765, %v3766
  %v3768 = vrot.slane %v3767, 1
  %v3769 = vadd.f32 %v3767, %v3768
  %v3770 = vadd.f32 %v3692, 0.0
  %v3771 = vadd.f32 %v3699, 0.0
  %v3772 = vadd.f32 %v3706, 0.0
  %v3773 = vadd.f32 %v3713, 0.0
  %v3774 = vadd.f32 %v3720, 0.0
  %v3775 = vadd.f32 %v3727, 0.0
  %v3776 = vadd.f32 %v3734, 0.0
  %v3777 = vadd.f32 %v3741, 0.0
  %v3778 = vadd.f32 %v3748, 0.0
  %v3779 = vadd.f32 %v3755, 0.0
  %v3780 = vadd.f32 %v3762, 0.0
  %v3781 = vadd.f32 %v3769, 0.0
  %v3782 = vmul.f32 %v3650, %v536
  %v3783 = vmul.f32 %v3651, %v537
  %v3784 = vmul.f32 %v3652, %v538
  %v3785 = vmul.f32 %v3653, %v539
  %v3786 = vmul.f32 %v3654, %v540
  %v3787 = vmul.f32 %v3655, %v541
  %v3788 = vmul.f32 %v3656, %v536
  %v3789 = vmul.f32 %v3657, %v537
  %v3790 = vmul.f32 %v3658, %v538
  %v3791 = vmul.f32 %v3659, %v539
  %v3792 = vmul.f32 %v3660, %v540
  %v3793 = vmul.f32 %v3661, %v541
  %v3794 = vmul.f32 %v3662, %v536
  %v3795 = vmul.f32 %v3663, %v537
  %v3796 = vmul.f32 %v3664, %v538
  %v3797 = vmul.f32 %v3665, %v539
  %v3798 = vmul.f32 %v3666, %v540
  %v3799 = vmul.f32 %v3667, %v541
  %v3800 = vmul.f32 %v3668, %v536
  %v3801 = vmul.f32 %v3669, %v537
  %v3802 = vmul.f32 %v3670, %v538
  %v3803 = vmul.f32 %v3671, %v539
  %v3804 = vmul.f32 %v3672, %v540
  %v3805 = vmul.f32 %v3673, %v541
  %v3830 = vrot.slane %v3782, 7
  %v3831 = vrot.slane %v3788, 7
  %v3832 = vsel %vm596, %v3830, %v3831
  %v3833 = vrot.slane %v3783, 7
  %v3834 = vrot.slane %v3789, 7
  %v3835 = vsel %vm596, %v3833, %v3834
  %v3836 = vrot.slane %v3784, 7
  %v3837 = vrot.slane %v3790, 7
  %v3838 = vsel %vm596, %v3836, %v3837
  %v3839 = vrot.slane %v3785, 7
  %v3840 = vrot.slane %v3791, 7
  %v3841 = vsel %vm596, %v3839, %v3840
  %v3842 = vrot.slane %v3786, 7
  %v3843 = vrot.slane %v3792, 7
  %v3844 = vsel %vm596, %v3842, %v3843
  %v3845 = vrot.slane %v3787, 7
  %v3846 = vrot.slane %v3793, 7
  %v3847 = vsel %vm596, %v3845, %v3846
  %v3848 = vrot.slane %v3794, 7
  %v3849 = vrot.slane %v3800, 7
  %v3850 = vsel %vm596, %v3848, %v3849
  %v3851 = vrot.slane %v3795, 7
  %v3852 = vrot.slane %v3801, 7
  %v3853 = vsel %vm596, %v3851, %v3852
  %v3854 = vrot.slane %v3796, 7
  %v3855 = vrot.slane %v3802, 7
  %v3856 = vsel %vm596, %v3854, %v3855
  %v3857 = vrot.slane %v3797, 7
  %v3858 = vrot.slane %v3803, 7
  %v3859 = vsel %vm596, %v3857, %v3858
  %v3860 = vrot.slane %v3798, 7
  %v3861 = vrot.slane %v3804, 7
  %v3862 = vsel %vm596, %v3860, %v3861
  %v3863 = vrot.slane %v3799, 7
  %v3864 = vrot.slane %v3805, 7
  %v3865 = vsel %vm596, %v3863, %v3864
  %v3878 = vsel %vm337, %v3832, 0.0
  %v3879 = vrot.slane %v3878, 4
  %v3880 = vadd.f32 %v3878, %v3879
  %v3881 = vrot.slane %v3880, 2
  %v3882 = vadd.f32 %v3880, %v3881
  %v3883 = vrot.slane %v3882, 1
  %v3884 = vadd.f32 %v3882, %v3883
  %v3885 = vsel %vm337, %v3835, 0.0
  %v3886 = vrot.slane %v3885, 4
  %v3887 = vadd.f32 %v3885, %v3886
  %v3888 = vrot.slane %v3887, 2
  %v3889 = vadd.f32 %v3887, %v3888
  %v3890 = vrot.slane %v3889, 1
  %v3891 = vadd.f32 %v3889, %v3890
  %v3892 = vsel %vm337, %v3838, 0.0
  %v3893 = vrot.slane %v3892, 4
  %v3894 = vadd.f32 %v3892, %v3893
  %v3895 = vrot.slane %v3894, 2
  %v3896 = vadd.f32 %v3894, %v3895
  %v3897 = vrot.slane %v3896, 1
  %v3898 = vadd.f32 %v3896, %v3897
  %v3899 = vsel %vm337, %v3841, 0.0
  %v3900 = vrot.slane %v3899, 4
  %v3901 = vadd.f32 %v3899, %v3900
  %v3902 = vrot.slane %v3901, 2
  %v3903 = vadd.f32 %v3901, %v3902
  %v3904 = vrot.slane %v3903, 1
  %v3905 = vadd.f32 %v3903, %v3904
  %v3906 = vsel %vm337, %v3844, 0.0
  %v3907 = vrot.slane %v3906, 4
  %v3908 = vadd.f32 %v3906, %v3907
  %v3909 = vrot.slane %v3908, 2
  %v3910 = vadd.f32 %v3908, %v3909
  %v3911 = vrot.slane %v3910, 1
  %v3912 = vadd.f32 %v3910, %v3911
  %v3913 = vsel %vm337, %v3847, 0.0
  %v3914 = vrot.slane %v3913, 4
  %v3915 = vadd.f32 %v3913, %v3914
  %v3916 = vrot.slane %v3915, 2
  %v3917 = vadd.f32 %v3915, %v3916
  %v3918 = vrot.slane %v3917, 1
  %v3919 = vadd.f32 %v3917, %v3918
  %v3920 = vsel %vm337, %v3850, 0.0
  %v3921 = vrot.slane %v3920, 4
  %v3922 = vadd.f32 %v3920, %v3921
  %v3923 = vrot.slane %v3922, 2
  %v3924 = vadd.f32 %v3922, %v3923
  %v3925 = vrot.slane %v3924, 1
  %v3926 = vadd.f32 %v3924, %v3925
  %v3927 = vsel %vm337, %v3853, 0.0
  %v3928 = vrot.slane %v3927, 4
  %v3929 = vadd.f32 %v3927, %v3928
  %v3930 = vrot.slane %v3929, 2
  %v3931 = vadd.f32 %v3929, %v3930
  %v3932 = vrot.slane %v3931, 1
  %v3933 = vadd.f32 %v3931, %v3932
  %v3934 = vsel %vm337, %v3856, 0.0
  %v3935 = vrot.slane %v3934, 4
  %v3936 = vadd.f32 %v3934, %v3935
  %v3937 = vrot.slane %v3936, 2
  %v3938 = vadd.f32 %v3936, %v3937
  %v3939 = vrot.slane %v3938, 1
  %v3940 = vadd.f32 %v3938, %v3939
  %v3941 = vsel %vm337, %v3859, 0.0
  %v3942 = vrot.slane %v3941, 4
  %v3943 = vadd.f32 %v3941, %v3942
  %v3944 = vrot.slane %v3943, 2
  %v3945 = vadd.f32 %v3943, %v3944
  %v3946 = vrot.slane %v3945, 1
  %v3947 = vadd.f32 %v3945, %v3946
  %v3948 = vsel %vm337, %v3862, 0.0
  %v3949 = vrot.slane %v3948, 4
  %v3950 = vadd.f32 %v3948, %v3949
  %v3951 = vrot.slane %v3950, 2
  %v3952 = vadd.f32 %v3950, %v3951
  %v3953 = vrot.slane %v3952, 1
  %v3954 = vadd.f32 %v3952, %v3953
  %v3955 = vsel %vm337, %v3865, 0.0
  %v3956 = vrot.slane %v3955, 4
  %v3957 = vadd.f32 %v3955, %v3956
  %v3958 = vrot.slane %v3957, 2
  %v3959 = vadd.f32 %v3957, %v3958
  %v3960 = vrot.slane %v3959, 1
  %v3961 = vadd.f32 %v3959, %v3960
  %v3962 = vadd.f32 %v3884, 0.0
  %v3963 = vadd.f32 %v3891, 0.0
  %v3964 = vadd.f32 %v3898, 0.0
  %v3965 = vadd.f32 %v3905, 0.0
  %v3966 = vadd.f32 %v3912, 0.0
  %v3967 = vadd.f32 %v3919, 0.0
  %v3968 = vadd.f32 %v3926, 0.0
  %v3969 = vadd.f32 %v3933, 0.0
  %v3970 = vadd.f32 %v3940, 0.0
  %v3971 = vadd.f32 %v3947, 0.0
  %v3972 = vadd.f32 %v3954, 0.0
  %v3973 = vadd.f32 %v3961, 0.0
  %s3974 = scalar_lea.vmem %s0, 432
  %v3975 = vld [vmem:[%s3974] sm:$0xff]
  %v3976 = vld [vmem:[%s3974 + $0x8] sm:$0xff]
  %v3977 = vld [vmem:[%s3974 + $0x10] sm:$0xff]
  %v3978 = vld [vmem:[%s3974 + $0x18] sm:$0xff]
  %v3979 = vld [vmem:[%s3974 + $0x20] sm:$0xff]
  %v3980 = vld [vmem:[%s3974 + $0x28] sm:$0xff]
  %v3981 = vld [vmem:[%s3974 + $0x30] sm:$0xff]
  %v3982 = vld [vmem:[%s3974 + $0x38] sm:$0xff]
  %v3983 = vld [vmem:[%s3974 + $0x40] sm:$0xff]
  %v3984 = vld [vmem:[%s3974 + $0x48] sm:$0xff]
  %v3985 = vld [vmem:[%s3974 + $0x50] sm:$0xff]
  %v3986 = vld [vmem:[%s3974 + $0x58] sm:$0xff]
  %v3987 = vld [vmem:[%s3974 + $0x60] sm:$0xff]
  %v3988 = vld [vmem:[%s3974 + $0x68] sm:$0xff]
  %v3989 = vld [vmem:[%s3974 + $0x70] sm:$0xff]
  %v3990 = vld [vmem:[%s3974 + $0x78] sm:$0xff]
  %v3991 = vld [vmem:[%s3974 + $0x80] sm:$0xff]
  %v3992 = vld [vmem:[%s3974 + $0x88] sm:$0xff]
  %v3993 = vld [vmem:[%s3974 + $0x90] sm:$0xff]
  %v3994 = vld [vmem:[%s3974 + $0x98] sm:$0xff]
  %v3995 = vld [vmem:[%s3974 + $0xa0] sm:$0xff]
  %v3996 = vld [vmem:[%s3974 + $0xa8] sm:$0xff]
  %v3997 = vld [vmem:[%s3974 + $0xb0] sm:$0xff]
  %v3998 = vld [vmem:[%s3974 + $0xb8] sm:$0xff]
  %v3999 = vld [vmem:[%s3974 + $0x300] sm:$0xff]
  %v4000 = vld [vmem:[%s3974 + $0x308] sm:$0xff]
  %v4001 = vld [vmem:[%s3974 + $0x310] sm:$0xff]
  %v4002 = vld [vmem:[%s3974 + $0x318] sm:$0xff]
  %v4003 = vld [vmem:[%s3974 + $0x320] sm:$0xff]
  %v4004 = vld [vmem:[%s3974 + $0x328] sm:$0xff]
  %v4005 = vld [vmem:[%s3974 + $0x330] sm:$0xff]
  %v4006 = vld [vmem:[%s3974 + $0x338] sm:$0xff]
  %v4007 = vld [vmem:[%s3974 + $0x340] sm:$0xff]
  %v4008 = vld [vmem:[%s3974 + $0x348] sm:$0xff]
  %v4009 = vld [vmem:[%s3974 + $0x350] sm:$0xff]
  %v4010 = vld [vmem:[%s3974 + $0x358] sm:$0xff]
  %v4011 = vld [vmem:[%s3974 + $0x360] sm:$0xff]
  %v4012 = vld [vmem:[%s3974 + $0x368] sm:$0xff]
  %v4013 = vld [vmem:[%s3974 + $0x370] sm:$0xff]
  %v4014 = vld [vmem:[%s3974 + $0x378] sm:$0xff]
  %v4015 = vld [vmem:[%s3974 + $0x380] sm:$0xff]
  %v4016 = vld [vmem:[%s3974 + $0x388] sm:$0xff]
  %v4017 = vld [vmem:[%s3974 + $0x390] sm:$0xff]
  %v4018 = vld [vmem:[%s3974 + $0x398] sm:$0xff]
  %v4019 = vld [vmem:[%s3974 + $0x3a0] sm:$0xff]
  %v4020 = vld [vmem:[%s3974 + $0x3a8] sm:$0xff]
  %v4021 = vld [vmem:[%s3974 + $0x3b0] sm:$0xff]
  %v4022 = vld [vmem:[%s3974 + $0x3b8] sm:$0xff]
  %v4023 = vmax.bf16 %v3975, %v3981
  %v4024 = vmax.bf16 %v4023, %v3987
  %v4025 = vmax.bf16 %v4024, %v3993
  %v4026 = vmax.bf16 %v3976, %v3982
  %v4027 = vmax.bf16 %v4026, %v3988
  %v4028 = vmax.bf16 %v4027, %v3994
  %v4029 = vmax.bf16 %v3977, %v3983
  %v4030 = vmax.bf16 %v4029, %v3989
  %v4031 = vmax.bf16 %v4030, %v3995
  %v4032 = vmax.bf16 %v3978, %v3984
  %v4033 = vmax.bf16 %v4032, %v3990
  %v4034 = vmax.bf16 %v4033, %v3996
  %v4035 = vmax.bf16 %v3979, %v3985
  %v4036 = vmax.bf16 %v4035, %v3991
  %v4037 = vmax.bf16 %v4036, %v3997
  %v4038 = vmax.bf16 %v3980, %v3986
  %v4039 = vmax.bf16 %v4038, %v3992
  %v4040 = vmax.bf16 %v4039, %v3998
  %v4041 = vmax.bf16 %v3999, %v4005
  %v4042 = vmax.bf16 %v4041, %v4011
  %v4043 = vmax.bf16 %v4042, %v4017
  %v4044 = vmax.bf16 %v4000, %v4006
  %v4045 = vmax.bf16 %v4044, %v4012
  %v4046 = vmax.bf16 %v4045, %v4018
  %v4047 = vmax.bf16 %v4001, %v4007
  %v4048 = vmax.bf16 %v4047, %v4013
  %v4049 = vmax.bf16 %v4048, %v4019
  %v4050 = vmax.bf16 %v4002, %v4008
  %v4051 = vmax.bf16 %v4050, %v4014
  %v4052 = vmax.bf16 %v4051, %v4020
  %v4053 = vmax.bf16 %v4003, %v4009
  %v4054 = vmax.bf16 %v4053, %v4015
  %v4055 = vmax.bf16 %v4054, %v4021
  %v4056 = vmax.bf16 %v4004, %v4010
  %v4057 = vmax.bf16 %v4056, %v4016
  %v4058 = vmax.bf16 %v4057, %v4022
  %v4059 = vunpack.c.l.bf16 %v4025
  %v4060 = vunpack.c.h.bf16 %v4025
  %v4061 = vunpack.c.l.bf16 %v4028
  %v4062 = vunpack.c.h.bf16 %v4028
  %v4063 = vunpack.c.l.bf16 %v4031
  %v4064 = vunpack.c.h.bf16 %v4031
  %v4065 = vunpack.c.l.bf16 %v4034
  %v4066 = vunpack.c.h.bf16 %v4034
  %v4067 = vunpack.c.l.bf16 %v4037
  %v4068 = vunpack.c.h.bf16 %v4037
  %v4069 = vunpack.c.l.bf16 %v4040
  %v4070 = vunpack.c.h.bf16 %v4040
  %v4071 = vunpack.c.l.bf16 %v4043
  %v4072 = vunpack.c.h.bf16 %v4043
  %v4073 = vunpack.c.l.bf16 %v4046
  %v4074 = vunpack.c.h.bf16 %v4046
  %v4075 = vunpack.c.l.bf16 %v4049
  %v4076 = vunpack.c.h.bf16 %v4049
  %v4077 = vunpack.c.l.bf16 %v4052
  %v4078 = vunpack.c.h.bf16 %v4052
  %v4079 = vunpack.c.l.bf16 %v4055
  %v4080 = vunpack.c.h.bf16 %v4055
  %v4081 = vunpack.c.l.bf16 %v4058
  %v4082 = vunpack.c.h.bf16 %v4058
  %v4107 = vrot.slane %v4059, 1
  %v4108 = vrot.slane %v4065, 1
  %v4109 = vsel %vm228, %v4107, %v4108
  %v4110 = vrot.slane %v4060, 1
  %v4111 = vrot.slane %v4066, 1
  %v4112 = vsel %vm228, %v4110, %v4111
  %v4113 = vrot.slane %v4061, 1
  %v4114 = vrot.slane %v4067, 1
  %v4115 = vsel %vm228, %v4113, %v4114
  %v4116 = vrot.slane %v4062, 1
  %v4117 = vrot.slane %v4068, 1
  %v4118 = vsel %vm228, %v4116, %v4117
  %v4119 = vrot.slane %v4063, 1
  %v4120 = vrot.slane %v4069, 1
  %v4121 = vsel %vm228, %v4119, %v4120
  %v4122 = vrot.slane %v4064, 1
  %v4123 = vrot.slane %v4070, 1
  %v4124 = vsel %vm228, %v4122, %v4123
  %v4125 = vrot.slane %v4071, 1
  %v4126 = vrot.slane %v4077, 1
  %v4127 = vsel %vm228, %v4125, %v4126
  %v4128 = vrot.slane %v4072, 1
  %v4129 = vrot.slane %v4078, 1
  %v4130 = vsel %vm228, %v4128, %v4129
  %v4131 = vrot.slane %v4073, 1
  %v4132 = vrot.slane %v4079, 1
  %v4133 = vsel %vm228, %v4131, %v4132
  %v4134 = vrot.slane %v4074, 1
  %v4135 = vrot.slane %v4080, 1
  %v4136 = vsel %vm228, %v4134, %v4135
  %v4137 = vrot.slane %v4075, 1
  %v4138 = vrot.slane %v4081, 1
  %v4139 = vsel %vm228, %v4137, %v4138
  %v4140 = vrot.slane %v4076, 1
  %v4141 = vrot.slane %v4082, 1
  %v4142 = vsel %vm228, %v4140, %v4141
  %v4167 = vmax.f32 %v4059, %v4109
  %v4168 = vmax.f32 %v4060, %v4112
  %v4169 = vmax.f32 %v4061, %v4115
  %v4170 = vmax.f32 %v4062, %v4118
  %v4171 = vmax.f32 %v4063, %v4121
  %v4172 = vmax.f32 %v4064, %v4124
  %v4173 = vmax.f32 %v4065, %v4108
  %v4174 = vmax.f32 %v4066, %v4111
  %v4175 = vmax.f32 %v4067, %v4114
  %v4176 = vmax.f32 %v4068, %v4117
  %v4177 = vmax.f32 %v4069, %v4120
  %v4178 = vmax.f32 %v4070, %v4123
  %v4179 = vmax.f32 %v4071, %v4127
  %v4180 = vmax.f32 %v4072, %v4130
  %v4181 = vmax.f32 %v4073, %v4133
  %v4182 = vmax.f32 %v4074, %v4136
  %v4183 = vmax.f32 %v4075, %v4139
  %v4184 = vmax.f32 %v4076, %v4142
  %v4185 = vmax.f32 %v4077, %v4126
  %v4186 = vmax.f32 %v4078, %v4129
  %v4187 = vmax.f32 %v4079, %v4132
  %v4188 = vmax.f32 %v4080, %v4135
  %v4189 = vmax.f32 %v4081, %v4138
  %v4190 = vmax.f32 %v4082, %v4141
  %v4215 = vrot.slane %v4167, 2
  %v4216 = vrot.slane %v4173, 2
  %v4217 = vsel %vm337, %v4215, %v4216
  %v4218 = vrot.slane %v4168, 2
  %v4219 = vrot.slane %v4174, 2
  %v4220 = vsel %vm337, %v4218, %v4219
  %v4221 = vrot.slane %v4169, 2
  %v4222 = vrot.slane %v4175, 2
  %v4223 = vsel %vm337, %v4221, %v4222
  %v4224 = vrot.slane %v4170, 2
  %v4225 = vrot.slane %v4176, 2
  %v4226 = vsel %vm337, %v4224, %v4225
  %v4227 = vrot.slane %v4171, 2
  %v4228 = vrot.slane %v4177, 2
  %v4229 = vsel %vm337, %v4227, %v4228
  %v4230 = vrot.slane %v4172, 2
  %v4231 = vrot.slane %v4178, 2
  %v4232 = vsel %vm337, %v4230, %v4231
  %v4233 = vrot.slane %v4179, 2
  %v4234 = vrot.slane %v4185, 2
  %v4235 = vsel %vm337, %v4233, %v4234
  %v4236 = vrot.slane %v4180, 2
  %v4237 = vrot.slane %v4186, 2
  %v4238 = vsel %vm337, %v4236, %v4237
  %v4239 = vrot.slane %v4181, 2
  %v4240 = vrot.slane %v4187, 2
  %v4241 = vsel %vm337, %v4239, %v4240
  %v4242 = vrot.slane %v4182, 2
  %v4243 = vrot.slane %v4188, 2
  %v4244 = vsel %vm337, %v4242, %v4243
  %v4245 = vrot.slane %v4183, 2
  %v4246 = vrot.slane %v4189, 2
  %v4247 = vsel %vm337, %v4245, %v4246
  %v4248 = vrot.slane %v4184, 2
  %v4249 = vrot.slane %v4190, 2
  %v4250 = vsel %vm337, %v4248, %v4249
  %v4275 = vmax.f32 %v4167, %v4217
  %v4276 = vmax.f32 %v4168, %v4220
  %v4277 = vmax.f32 %v4169, %v4223
  %v4278 = vmax.f32 %v4170, %v4226
  %v4279 = vmax.f32 %v4171, %v4229
  %v4280 = vmax.f32 %v4172, %v4232
  %v4281 = vmax.f32 %v4173, %v4216
  %v4282 = vmax.f32 %v4174, %v4219
  %v4283 = vmax.f32 %v4175, %v4222
  %v4284 = vmax.f32 %v4176, %v4225
  %v4285 = vmax.f32 %v4177, %v4228
  %v4286 = vmax.f32 %v4178, %v4231
  %v4287 = vmax.f32 %v4179, %v4235
  %v4288 = vmax.f32 %v4180, %v4238
  %v4289 = vmax.f32 %v4181, %v4241
  %v4290 = vmax.f32 %v4182, %v4244
  %v4291 = vmax.f32 %v4183, %v4247
  %v4292 = vmax.f32 %v4184, %v4250
  %v4293 = vmax.f32 %v4185, %v4234
  %v4294 = vmax.f32 %v4186, %v4237
  %v4295 = vmax.f32 %v4187, %v4240
  %v4296 = vmax.f32 %v4188, %v4243
  %v4297 = vmax.f32 %v4189, %v4246
  %v4298 = vmax.f32 %v4190, %v4249
  %v4299 = vmul.f32 %v4275, %v53
  %v4300 = vmul.f32 %v4276, %v54
  %v4301 = vmul.f32 %v4277, %v55
  %v4302 = vmul.f32 %v4278, %v56
  %v4303 = vmul.f32 %v4279, %v57
  %v4304 = vmul.f32 %v4280, %v58
  %v4305 = vmul.f32 %v4287, %v53
  %v4306 = vmul.f32 %v4288, %v54
  %v4307 = vmul.f32 %v4289, %v55
  %v4308 = vmul.f32 %v4290, %v56
  %v4309 = vmul.f32 %v4291, %v57
  %v4310 = vmul.f32 %v4292, %v58
  %v4311 = vsel %vm337, %v4299, 0.0
  %v4312 = vrot.slane %v4311, 4
  %v4313 = vadd.f32 %v4311, %v4312
  %v4314 = vrot.slane %v4313, 2
  %v4315 = vadd.f32 %v4313, %v4314
  %v4316 = vrot.slane %v4315, 1
  %v4317 = vadd.f32 %v4315, %v4316
  %v4318 = vsel %vm337, %v4300, 0.0
  %v4319 = vrot.slane %v4318, 4
  %v4320 = vadd.f32 %v4318, %v4319
  %v4321 = vrot.slane %v4320, 2
  %v4322 = vadd.f32 %v4320, %v4321
  %v4323 = vrot.slane %v4322, 1
  %v4324 = vadd.f32 %v4322, %v4323
  %v4325 = vsel %vm337, %v4301, 0.0
  %v4326 = vrot.slane %v4325, 4
  %v4327 = vadd.f32 %v4325, %v4326
  %v4328 = vrot.slane %v4327, 2
  %v4329 = vadd.f32 %v4327, %v4328
  %v4330 = vrot.slane %v4329, 1
  %v4331 = vadd.f32 %v4329, %v4330
  %v4332 = vsel %vm337, %v4302, 0.0
  %v4333 = vrot.slane %v4332, 4
  %v4334 = vadd.f32 %v4332, %v4333
  %v4335 = vrot.slane %v4334, 2
  %v4336 = vadd.f32 %v4334, %v4335
  %v4337 = vrot.slane %v4336, 1
  %v4338 = vadd.f32 %v4336, %v4337
  %v4339 = vsel %vm337, %v4303, 0.0
  %v4340 = vrot.slane %v4339, 4
  %v4341 = vadd.f32 %v4339, %v4340
  %v4342 = vrot.slane %v4341, 2
  %v4343 = vadd.f32 %v4341, %v4342
  %v4344 = vrot.slane %v4343, 1
  %v4345 = vadd.f32 %v4343, %v4344
  %v4346 = vsel %vm337, %v4304, 0.0
  %v4347 = vrot.slane %v4346, 4
  %v4348 = vadd.f32 %v4346, %v4347
  %v4349 = vrot.slane %v4348, 2
  %v4350 = vadd.f32 %v4348, %v4349
  %v4351 = vrot.slane %v4350, 1
  %v4352 = vadd.f32 %v4350, %v4351
  %v4353 = vsel %vm337, %v4305, 0.0
  %v4354 = vrot.slane %v4353, 4
  %v4355 = vadd.f32 %v4353, %v4354
  %v4356 = vrot.slane %v4355, 2
  %v4357 = vadd.f32 %v4355, %v4356
  %v4358 = vrot.slane %v4357, 1
  %v4359 = vadd.f32 %v4357, %v4358
  %v4360 = vsel %vm337, %v4306, 0.0
  %v4361 = vrot.slane %v4360, 4
  %v4362 = vadd.f32 %v4360, %v4361
  %v4363 = vrot.slane %v4362, 2
  %v4364 = vadd.f32 %v4362, %v4363
  %v4365 = vrot.slane %v4364, 1
  %v4366 = vadd.f32 %v4364, %v4365
  %v4367 = vsel %vm337, %v4307, 0.0
  %v4368 = vrot.slane %v4367, 4
  %v4369 = vadd.f32 %v4367, %v4368
  %v4370 = vrot.slane %v4369, 2
  %v4371 = vadd.f32 %v4369, %v4370
  %v4372 = vrot.slane %v4371, 1
  %v4373 = vadd.f32 %v4371, %v4372
  %v4374 = vsel %vm337, %v4308, 0.0
  %v4375 = vrot.slane %v4374, 4
  %v4376 = vadd.f32 %v4374, %v4375
  %v4377 = vrot.slane %v4376, 2
  %v4378 = vadd.f32 %v4376, %v4377
  %v4379 = vrot.slane %v4378, 1
  %v4380 = vadd.f32 %v4378, %v4379
  %v4381 = vsel %vm337, %v4309, 0.0
  %v4382 = vrot.slane %v4381, 4
  %v4383 = vadd.f32 %v4381, %v4382
  %v4384 = vrot.slane %v4383, 2
  %v4385 = vadd.f32 %v4383, %v4384
  %v4386 = vrot.slane %v4385, 1
  %v4387 = vadd.f32 %v4385, %v4386
  %v4388 = vsel %vm337, %v4310, 0.0
  %v4389 = vrot.slane %v4388, 4
  %v4390 = vadd.f32 %v4388, %v4389
  %v4391 = vrot.slane %v4390, 2
  %v4392 = vadd.f32 %v4390, %v4391
  %v4393 = vrot.slane %v4392, 1
  %v4394 = vadd.f32 %v4392, %v4393
  %v4395 = vadd.f32 %v3770, %v4317
  %v4396 = vadd.f32 %v3771, %v4324
  %v4397 = vadd.f32 %v3772, %v4331
  %v4398 = vadd.f32 %v3773, %v4338
  %v4399 = vadd.f32 %v3774, %v4345
  %v4400 = vadd.f32 %v3775, %v4352
  %v4401 = vadd.f32 %v3776, %v4359
  %v4402 = vadd.f32 %v3777, %v4366
  %v4403 = vadd.f32 %v3778, %v4373
  %v4404 = vadd.f32 %v3779, %v4380
  %v4405 = vadd.f32 %v3780, %v4387
  %v4406 = vadd.f32 %v3781, %v4394
  %v4407 = vmul.f32 %v4275, %v1180
  %v4408 = vmul.f32 %v4276, %v1181
  %v4409 = vmul.f32 %v4277, %v1182
  %v4410 = vmul.f32 %v4278, %v1183
  %v4411 = vmul.f32 %v4279, %v1184
  %v4412 = vmul.f32 %v4280, %v1185
  %v4413 = vmul.f32 %v4281, %v1180
  %v4414 = vmul.f32 %v4282, %v1181
  %v4415 = vmul.f32 %v4283, %v1182
  %v4416 = vmul.f32 %v4284, %v1183
  %v4417 = vmul.f32 %v4285, %v1184
  %v4418 = vmul.f32 %v4286, %v1185
  %v4419 = vmul.f32 %v4287, %v1180
  %v4420 = vmul.f32 %v4288, %v1181
  %v4421 = vmul.f32 %v4289, %v1182
  %v4422 = vmul.f32 %v4290, %v1183
  %v4423 = vmul.f32 %v4291, %v1184
  %v4424 = vmul.f32 %v4292, %v1185
  %v4425 = vmul.f32 %v4293, %v1180
  %v4426 = vmul.f32 %v4294, %v1181
  %v4427 = vmul.f32 %v4295, %v1182
  %v4428 = vmul.f32 %v4296, %v1183
  %v4429 = vmul.f32 %v4297, %v1184
  %v4430 = vmul.f32 %v4298, %v1185
  %v4455 = vrot.slane %v4407, 7
  %v4456 = vrot.slane %v4413, 7
  %v4457 = vsel %vm596, %v4455, %v4456
  %v4458 = vrot.slane %v4408, 7
  %v4459 = vrot.slane %v4414, 7
  %v4460 = vsel %vm596, %v4458, %v4459
  %v4461 = vrot.slane %v4409, 7
  %v4462 = vrot.slane %v4415, 7
  %v4463 = vsel %vm596, %v4461, %v4462
  %v4464 = vrot.slane %v4410, 7
  %v4465 = vrot.slane %v4416, 7
  %v4466 = vsel %vm596, %v4464, %v4465
  %v4467 = vrot.slane %v4411, 7
  %v4468 = vrot.slane %v4417, 7
  %v4469 = vsel %vm596, %v4467, %v4468
  %v4470 = vrot.slane %v4412, 7
  %v4471 = vrot.slane %v4418, 7
  %v4472 = vsel %vm596, %v4470, %v4471
  %v4473 = vrot.slane %v4419, 7
  %v4474 = vrot.slane %v4425, 7
  %v4475 = vsel %vm596, %v4473, %v4474
  %v4476 = vrot.slane %v4420, 7
  %v4477 = vrot.slane %v4426, 7
  %v4478 = vsel %vm596, %v4476, %v4477
  %v4479 = vrot.slane %v4421, 7
  %v4480 = vrot.slane %v4427, 7
  %v4481 = vsel %vm596, %v4479, %v4480
  %v4482 = vrot.slane %v4422, 7
  %v4483 = vrot.slane %v4428, 7
  %v4484 = vsel %vm596, %v4482, %v4483
  %v4485 = vrot.slane %v4423, 7
  %v4486 = vrot.slane %v4429, 7
  %v4487 = vsel %vm596, %v4485, %v4486
  %v4488 = vrot.slane %v4424, 7
  %v4489 = vrot.slane %v4430, 7
  %v4490 = vsel %vm596, %v4488, %v4489
  %v4503 = vsel %vm337, %v4457, 0.0
  %v4504 = vrot.slane %v4503, 4
  %v4505 = vadd.f32 %v4503, %v4504
  %v4506 = vrot.slane %v4505, 2
  %v4507 = vadd.f32 %v4505, %v4506
  %v4508 = vrot.slane %v4507, 1
  %v4509 = vadd.f32 %v4507, %v4508
  %v4510 = vsel %vm337, %v4460, 0.0
  %v4511 = vrot.slane %v4510, 4
  %v4512 = vadd.f32 %v4510, %v4511
  %v4513 = vrot.slane %v4512, 2
  %v4514 = vadd.f32 %v4512, %v4513
  %v4515 = vrot.slane %v4514, 1
  %v4516 = vadd.f32 %v4514, %v4515
  %v4517 = vsel %vm337, %v4463, 0.0
  %v4518 = vrot.slane %v4517, 4
  %v4519 = vadd.f32 %v4517, %v4518
  %v4520 = vrot.slane %v4519, 2
  %v4521 = vadd.f32 %v4519, %v4520
  %v4522 = vrot.slane %v4521, 1
  %v4523 = vadd.f32 %v4521, %v4522
  %v4524 = vsel %vm337, %v4466, 0.0
  %v4525 = vrot.slane %v4524, 4
  %v4526 = vadd.f32 %v4524, %v4525
  %v4527 = vrot.slane %v4526, 2
  %v4528 = vadd.f32 %v4526, %v4527
  %v4529 = vrot.slane %v4528, 1
  %v4530 = vadd.f32 %v4528, %v4529
  %v4531 = vsel %vm337, %v4469, 0.0
  %v4532 = vrot.slane %v4531, 4
  %v4533 = vadd.f32 %v4531, %v4532
  %v4534 = vrot.slane %v4533, 2
  %v4535 = vadd.f32 %v4533, %v4534
  %v4536 = vrot.slane %v4535, 1
  %v4537 = vadd.f32 %v4535, %v4536
  %v4538 = vsel %vm337, %v4472, 0.0
  %v4539 = vrot.slane %v4538, 4
  %v4540 = vadd.f32 %v4538, %v4539
  %v4541 = vrot.slane %v4540, 2
  %v4542 = vadd.f32 %v4540, %v4541
  %v4543 = vrot.slane %v4542, 1
  %v4544 = vadd.f32 %v4542, %v4543
  %v4545 = vsel %vm337, %v4475, 0.0
  %v4546 = vrot.slane %v4545, 4
  %v4547 = vadd.f32 %v4545, %v4546
  %v4548 = vrot.slane %v4547, 2
  %v4549 = vadd.f32 %v4547, %v4548
  %v4550 = vrot.slane %v4549, 1
  %v4551 = vadd.f32 %v4549, %v4550
  %v4552 = vsel %vm337, %v4478, 0.0
  %v4553 = vrot.slane %v4552, 4
  %v4554 = vadd.f32 %v4552, %v4553
  %v4555 = vrot.slane %v4554, 2
  %v4556 = vadd.f32 %v4554, %v4555
  %v4557 = vrot.slane %v4556, 1
  %v4558 = vadd.f32 %v4556, %v4557
  %v4559 = vsel %vm337, %v4481, 0.0
  %v4560 = vrot.slane %v4559, 4
  %v4561 = vadd.f32 %v4559, %v4560
  %v4562 = vrot.slane %v4561, 2
  %v4563 = vadd.f32 %v4561, %v4562
  %v4564 = vrot.slane %v4563, 1
  %v4565 = vadd.f32 %v4563, %v4564
  %v4566 = vsel %vm337, %v4484, 0.0
  %v4567 = vrot.slane %v4566, 4
  %v4568 = vadd.f32 %v4566, %v4567
  %v4569 = vrot.slane %v4568, 2
  %v4570 = vadd.f32 %v4568, %v4569
  %v4571 = vrot.slane %v4570, 1
  %v4572 = vadd.f32 %v4570, %v4571
  %v4573 = vsel %vm337, %v4487, 0.0
  %v4574 = vrot.slane %v4573, 4
  %v4575 = vadd.f32 %v4573, %v4574
  %v4576 = vrot.slane %v4575, 2
  %v4577 = vadd.f32 %v4575, %v4576
  %v4578 = vrot.slane %v4577, 1
  %v4579 = vadd.f32 %v4577, %v4578
  %v4580 = vsel %vm337, %v4490, 0.0
  %v4581 = vrot.slane %v4580, 4
  %v4582 = vadd.f32 %v4580, %v4581
  %v4583 = vrot.slane %v4582, 2
  %v4584 = vadd.f32 %v4582, %v4583
  %v4585 = vrot.slane %v4584, 1
  %v4586 = vadd.f32 %v4584, %v4585
  %v4587 = vadd.f32 %v3962, %v4509
  %v4588 = vadd.f32 %v3963, %v4516
  %v4589 = vadd.f32 %v3964, %v4523
  %v4590 = vadd.f32 %v3965, %v4530
  %v4591 = vadd.f32 %v3966, %v4537
  %v4592 = vadd.f32 %v3967, %v4544
  %v4593 = vadd.f32 %v3968, %v4551
  %v4594 = vadd.f32 %v3969, %v4558
  %v4595 = vadd.f32 %v3970, %v4565
  %v4596 = vadd.f32 %v3971, %v4572
  %v4597 = vadd.f32 %v3972, %v4579
  %v4598 = vadd.f32 %v3973, %v4586
  %s4599 = scalar_lea.vmem %s0, 480
  %v4600 = vld [vmem:[%s4599] sm:$0xff]
  %v4601 = vld [vmem:[%s4599 + $0x8] sm:$0xff]
  %v4602 = vld [vmem:[%s4599 + $0x10] sm:$0xff]
  %v4603 = vld [vmem:[%s4599 + $0x18] sm:$0xff]
  %v4604 = vld [vmem:[%s4599 + $0x20] sm:$0xff]
  %v4605 = vld [vmem:[%s4599 + $0x28] sm:$0xff]
  %v4606 = vld [vmem:[%s4599 + $0x30] sm:$0xff]
  %v4607 = vld [vmem:[%s4599 + $0x38] sm:$0xff]
  %v4608 = vld [vmem:[%s4599 + $0x40] sm:$0xff]
  %v4609 = vld [vmem:[%s4599 + $0x48] sm:$0xff]
  %v4610 = vld [vmem:[%s4599 + $0x50] sm:$0xff]
  %v4611 = vld [vmem:[%s4599 + $0x58] sm:$0xff]
  %v4612 = vld [vmem:[%s4599 + $0x60] sm:$0xff]
  %v4613 = vld [vmem:[%s4599 + $0x68] sm:$0xff]
  %v4614 = vld [vmem:[%s4599 + $0x70] sm:$0xff]
  %v4615 = vld [vmem:[%s4599 + $0x78] sm:$0xff]
  %v4616 = vld [vmem:[%s4599 + $0x80] sm:$0xff]
  %v4617 = vld [vmem:[%s4599 + $0x88] sm:$0xff]
  %v4618 = vld [vmem:[%s4599 + $0x90] sm:$0xff]
  %v4619 = vld [vmem:[%s4599 + $0x98] sm:$0xff]
  %v4620 = vld [vmem:[%s4599 + $0xa0] sm:$0xff]
  %v4621 = vld [vmem:[%s4599 + $0xa8] sm:$0xff]
  %v4622 = vld [vmem:[%s4599 + $0xb0] sm:$0xff]
  %v4623 = vld [vmem:[%s4599 + $0xb8] sm:$0xff]
  %v4624 = vld [vmem:[%s4599 + $0x300] sm:$0xff]
  %v4625 = vld [vmem:[%s4599 + $0x308] sm:$0xff]
  %v4626 = vld [vmem:[%s4599 + $0x310] sm:$0xff]
  %v4627 = vld [vmem:[%s4599 + $0x318] sm:$0xff]
  %v4628 = vld [vmem:[%s4599 + $0x320] sm:$0xff]
  %v4629 = vld [vmem:[%s4599 + $0x328] sm:$0xff]
  %v4630 = vld [vmem:[%s4599 + $0x330] sm:$0xff]
  %v4631 = vld [vmem:[%s4599 + $0x338] sm:$0xff]
  %v4632 = vld [vmem:[%s4599 + $0x340] sm:$0xff]
  %v4633 = vld [vmem:[%s4599 + $0x348] sm:$0xff]
  %v4634 = vld [vmem:[%s4599 + $0x350] sm:$0xff]
  %v4635 = vld [vmem:[%s4599 + $0x358] sm:$0xff]
  %v4636 = vld [vmem:[%s4599 + $0x360] sm:$0xff]
  %v4637 = vld [vmem:[%s4599 + $0x368] sm:$0xff]
  %v4638 = vld [vmem:[%s4599 + $0x370] sm:$0xff]
  %v4639 = vld [vmem:[%s4599 + $0x378] sm:$0xff]
  %v4640 = vld [vmem:[%s4599 + $0x380] sm:$0xff]
  %v4641 = vld [vmem:[%s4599 + $0x388] sm:$0xff]
  %v4642 = vld [vmem:[%s4599 + $0x390] sm:$0xff]
  %v4643 = vld [vmem:[%s4599 + $0x398] sm:$0xff]
  %v4644 = vld [vmem:[%s4599 + $0x3a0] sm:$0xff]
  %v4645 = vld [vmem:[%s4599 + $0x3a8] sm:$0xff]
  %v4646 = vld [vmem:[%s4599 + $0x3b0] sm:$0xff]
  %v4647 = vld [vmem:[%s4599 + $0x3b8] sm:$0xff]
  %v4648 = vmax.bf16 %v4600, %v4606
  %v4649 = vmax.bf16 %v4648, %v4612
  %v4650 = vmax.bf16 %v4649, %v4618
  %v4651 = vmax.bf16 %v4601, %v4607
  %v4652 = vmax.bf16 %v4651, %v4613
  %v4653 = vmax.bf16 %v4652, %v4619
  %v4654 = vmax.bf16 %v4602, %v4608
  %v4655 = vmax.bf16 %v4654, %v4614
  %v4656 = vmax.bf16 %v4655, %v4620
  %v4657 = vmax.bf16 %v4603, %v4609
  %v4658 = vmax.bf16 %v4657, %v4615
  %v4659 = vmax.bf16 %v4658, %v4621
  %v4660 = vmax.bf16 %v4604, %v4610
  %v4661 = vmax.bf16 %v4660, %v4616
  %v4662 = vmax.bf16 %v4661, %v4622
  %v4663 = vmax.bf16 %v4605, %v4611
  %v4664 = vmax.bf16 %v4663, %v4617
  %v4665 = vmax.bf16 %v4664, %v4623
  %v4666 = vmax.bf16 %v4624, %v4630
  %v4667 = vmax.bf16 %v4666, %v4636
  %v4668 = vmax.bf16 %v4667, %v4642
  %v4669 = vmax.bf16 %v4625, %v4631
  %v4670 = vmax.bf16 %v4669, %v4637
  %v4671 = vmax.bf16 %v4670, %v4643
  %v4672 = vmax.bf16 %v4626, %v4632
  %v4673 = vmax.bf16 %v4672, %v4638
  %v4674 = vmax.bf16 %v4673, %v4644
  %v4675 = vmax.bf16 %v4627, %v4633
  %v4676 = vmax.bf16 %v4675, %v4639
  %v4677 = vmax.bf16 %v4676, %v4645
  %v4678 = vmax.bf16 %v4628, %v4634
  %v4679 = vmax.bf16 %v4678, %v4640
  %v4680 = vmax.bf16 %v4679, %v4646
  %v4681 = vmax.bf16 %v4629, %v4635
  %v4682 = vmax.bf16 %v4681, %v4641
  %v4683 = vmax.bf16 %v4682, %v4647
  %v4684 = vunpack.c.l.bf16 %v4650
  %v4685 = vunpack.c.h.bf16 %v4650
  %v4686 = vunpack.c.l.bf16 %v4653
  %v4687 = vunpack.c.h.bf16 %v4653
  %v4688 = vunpack.c.l.bf16 %v4656
  %v4689 = vunpack.c.h.bf16 %v4656
  %v4690 = vunpack.c.l.bf16 %v4659
  %v4691 = vunpack.c.h.bf16 %v4659
  %v4692 = vunpack.c.l.bf16 %v4662
  %v4693 = vunpack.c.h.bf16 %v4662
  %v4694 = vunpack.c.l.bf16 %v4665
  %v4695 = vunpack.c.h.bf16 %v4665
  %v4696 = vunpack.c.l.bf16 %v4668
  %v4697 = vunpack.c.h.bf16 %v4668
  %v4698 = vunpack.c.l.bf16 %v4671
  %v4699 = vunpack.c.h.bf16 %v4671
  %v4700 = vunpack.c.l.bf16 %v4674
  %v4701 = vunpack.c.h.bf16 %v4674
  %v4702 = vunpack.c.l.bf16 %v4677
  %v4703 = vunpack.c.h.bf16 %v4677
  %v4704 = vunpack.c.l.bf16 %v4680
  %v4705 = vunpack.c.h.bf16 %v4680
  %v4706 = vunpack.c.l.bf16 %v4683
  %v4707 = vunpack.c.h.bf16 %v4683
  %v4732 = vrot.slane %v4684, 1
  %v4733 = vrot.slane %v4690, 1
  %v4734 = vsel %vm228, %v4732, %v4733
  %v4735 = vrot.slane %v4685, 1
  %v4736 = vrot.slane %v4691, 1
  %v4737 = vsel %vm228, %v4735, %v4736
  %v4738 = vrot.slane %v4686, 1
  %v4739 = vrot.slane %v4692, 1
  %v4740 = vsel %vm228, %v4738, %v4739
  %v4741 = vrot.slane %v4687, 1
  %v4742 = vrot.slane %v4693, 1
  %v4743 = vsel %vm228, %v4741, %v4742
  %v4744 = vrot.slane %v4688, 1
  %v4745 = vrot.slane %v4694, 1
  %v4746 = vsel %vm228, %v4744, %v4745
  %v4747 = vrot.slane %v4689, 1
  %v4748 = vrot.slane %v4695, 1
  %v4749 = vsel %vm228, %v4747, %v4748
  %v4750 = vrot.slane %v4696, 1
  %v4751 = vrot.slane %v4702, 1
  %v4752 = vsel %vm228, %v4750, %v4751
  %v4753 = vrot.slane %v4697, 1
  %v4754 = vrot.slane %v4703, 1
  %v4755 = vsel %vm228, %v4753, %v4754
  %v4756 = vrot.slane %v4698, 1
  %v4757 = vrot.slane %v4704, 1
  %v4758 = vsel %vm228, %v4756, %v4757
  %v4759 = vrot.slane %v4699, 1
  %v4760 = vrot.slane %v4705, 1
  %v4761 = vsel %vm228, %v4759, %v4760
  %v4762 = vrot.slane %v4700, 1
  %v4763 = vrot.slane %v4706, 1
  %v4764 = vsel %vm228, %v4762, %v4763
  %v4765 = vrot.slane %v4701, 1
  %v4766 = vrot.slane %v4707, 1
  %v4767 = vsel %vm228, %v4765, %v4766
  %v4792 = vmax.f32 %v4684, %v4734
  %v4793 = vmax.f32 %v4685, %v4737
  %v4794 = vmax.f32 %v4686, %v4740
  %v4795 = vmax.f32 %v4687, %v4743
  %v4796 = vmax.f32 %v4688, %v4746
  %v4797 = vmax.f32 %v4689, %v4749
  %v4798 = vmax.f32 %v4690, %v4733
  %v4799 = vmax.f32 %v4691, %v4736
  %v4800 = vmax.f32 %v4692, %v4739
  %v4801 = vmax.f32 %v4693, %v4742
  %v4802 = vmax.f32 %v4694, %v4745
  %v4803 = vmax.f32 %v4695, %v4748
  %v4804 = vmax.f32 %v4696, %v4752
  %v4805 = vmax.f32 %v4697, %v4755
  %v4806 = vmax.f32 %v4698, %v4758
  %v4807 = vmax.f32 %v4699, %v4761
  %v4808 = vmax.f32 %v4700, %v4764
  %v4809 = vmax.f32 %v4701, %v4767
  %v4810 = vmax.f32 %v4702, %v4751
  %v4811 = vmax.f32 %v4703, %v4754
  %v4812 = vmax.f32 %v4704, %v4757
  %v4813 = vmax.f32 %v4705, %v4760
  %v4814 = vmax.f32 %v4706, %v4763
  %v4815 = vmax.f32 %v4707, %v4766
  %v4840 = vrot.slane %v4792, 2
  %v4841 = vrot.slane %v4798, 2
  %v4842 = vsel %vm337, %v4840, %v4841
  %v4843 = vrot.slane %v4793, 2
  %v4844 = vrot.slane %v4799, 2
  %v4845 = vsel %vm337, %v4843, %v4844
  %v4846 = vrot.slane %v4794, 2
  %v4847 = vrot.slane %v4800, 2
  %v4848 = vsel %vm337, %v4846, %v4847
  %v4849 = vrot.slane %v4795, 2
  %v4850 = vrot.slane %v4801, 2
  %v4851 = vsel %vm337, %v4849, %v4850
  %v4852 = vrot.slane %v4796, 2
  %v4853 = vrot.slane %v4802, 2
  %v4854 = vsel %vm337, %v4852, %v4853
  %v4855 = vrot.slane %v4797, 2
  %v4856 = vrot.slane %v4803, 2
  %v4857 = vsel %vm337, %v4855, %v4856
  %v4858 = vrot.slane %v4804, 2
  %v4859 = vrot.slane %v4810, 2
  %v4860 = vsel %vm337, %v4858, %v4859
  %v4861 = vrot.slane %v4805, 2
  %v4862 = vrot.slane %v4811, 2
  %v4863 = vsel %vm337, %v4861, %v4862
  %v4864 = vrot.slane %v4806, 2
  %v4865 = vrot.slane %v4812, 2
  %v4866 = vsel %vm337, %v4864, %v4865
  %v4867 = vrot.slane %v4807, 2
  %v4868 = vrot.slane %v4813, 2
  %v4869 = vsel %vm337, %v4867, %v4868
  %v4870 = vrot.slane %v4808, 2
  %v4871 = vrot.slane %v4814, 2
  %v4872 = vsel %vm337, %v4870, %v4871
  %v4873 = vrot.slane %v4809, 2
  %v4874 = vrot.slane %v4815, 2
  %v4875 = vsel %vm337, %v4873, %v4874
  %v4900 = vmax.f32 %v4792, %v4842
  %v4901 = vmax.f32 %v4793, %v4845
  %v4902 = vmax.f32 %v4794, %v4848
  %v4903 = vmax.f32 %v4795, %v4851
  %v4904 = vmax.f32 %v4796, %v4854
  %v4905 = vmax.f32 %v4797, %v4857
  %v4906 = vmax.f32 %v4798, %v4841
  %v4907 = vmax.f32 %v4799, %v4844
  %v4908 = vmax.f32 %v4800, %v4847
  %v4909 = vmax.f32 %v4801, %v4850
  %v4910 = vmax.f32 %v4802, %v4853
  %v4911 = vmax.f32 %v4803, %v4856
  %v4912 = vmax.f32 %v4804, %v4860
  %v4913 = vmax.f32 %v4805, %v4863
  %v4914 = vmax.f32 %v4806, %v4866
  %v4915 = vmax.f32 %v4807, %v4869
  %v4916 = vmax.f32 %v4808, %v4872
  %v4917 = vmax.f32 %v4809, %v4875
  %v4918 = vmax.f32 %v4810, %v4859
  %v4919 = vmax.f32 %v4811, %v4862
  %v4920 = vmax.f32 %v4812, %v4865
  %v4921 = vmax.f32 %v4813, %v4868
  %v4922 = vmax.f32 %v4814, %v4871
  %v4923 = vmax.f32 %v4815, %v4874
  %v4924 = vmul.f32 %v4900, %v59
  %v4925 = vmul.f32 %v4901, %v60
  %v4926 = vmul.f32 %v4902, %v61
  %v4927 = vmul.f32 %v4903, %v62
  %v4928 = vmul.f32 %v4904, %v63
  %v4929 = vmul.f32 %v4905, %v64
  %v4930 = vmul.f32 %v4912, %v59
  %v4931 = vmul.f32 %v4913, %v60
  %v4932 = vmul.f32 %v4914, %v61
  %v4933 = vmul.f32 %v4915, %v62
  %v4934 = vmul.f32 %v4916, %v63
  %v4935 = vmul.f32 %v4917, %v64
  %v4936 = vsel %vm337, %v4924, 0.0
  %v4937 = vrot.slane %v4936, 4
  %v4938 = vadd.f32 %v4936, %v4937
  %v4939 = vrot.slane %v4938, 2
  %v4940 = vadd.f32 %v4938, %v4939
  %v4941 = vrot.slane %v4940, 1
  %v4942 = vadd.f32 %v4940, %v4941
  %v4943 = vsel %vm337, %v4925, 0.0
  %v4944 = vrot.slane %v4943, 4
  %v4945 = vadd.f32 %v4943, %v4944
  %v4946 = vrot.slane %v4945, 2
  %v4947 = vadd.f32 %v4945, %v4946
  %v4948 = vrot.slane %v4947, 1
  %v4949 = vadd.f32 %v4947, %v4948
  %v4950 = vsel %vm337, %v4926, 0.0
  %v4951 = vrot.slane %v4950, 4
  %v4952 = vadd.f32 %v4950, %v4951
  %v4953 = vrot.slane %v4952, 2
  %v4954 = vadd.f32 %v4952, %v4953
  %v4955 = vrot.slane %v4954, 1
  %v4956 = vadd.f32 %v4954, %v4955
  %v4957 = vsel %vm337, %v4927, 0.0
  %v4958 = vrot.slane %v4957, 4
  %v4959 = vadd.f32 %v4957, %v4958
  %v4960 = vrot.slane %v4959, 2
  %v4961 = vadd.f32 %v4959, %v4960
  %v4962 = vrot.slane %v4961, 1
  %v4963 = vadd.f32 %v4961, %v4962
  %v4964 = vsel %vm337, %v4928, 0.0
  %v4965 = vrot.slane %v4964, 4
  %v4966 = vadd.f32 %v4964, %v4965
  %v4967 = vrot.slane %v4966, 2
  %v4968 = vadd.f32 %v4966, %v4967
  %v4969 = vrot.slane %v4968, 1
  %v4970 = vadd.f32 %v4968, %v4969
  %v4971 = vsel %vm337, %v4929, 0.0
  %v4972 = vrot.slane %v4971, 4
  %v4973 = vadd.f32 %v4971, %v4972
  %v4974 = vrot.slane %v4973, 2
  %v4975 = vadd.f32 %v4973, %v4974
  %v4976 = vrot.slane %v4975, 1
  %v4977 = vadd.f32 %v4975, %v4976
  %v4978 = vsel %vm337, %v4930, 0.0
  %v4979 = vrot.slane %v4978, 4
  %v4980 = vadd.f32 %v4978, %v4979
  %v4981 = vrot.slane %v4980, 2
  %v4982 = vadd.f32 %v4980, %v4981
  %v4983 = vrot.slane %v4982, 1
  %v4984 = vadd.f32 %v4982, %v4983
  %v4985 = vsel %vm337, %v4931, 0.0
  %v4986 = vrot.slane %v4985, 4
  %v4987 = vadd.f32 %v4985, %v4986
  %v4988 = vrot.slane %v4987, 2
  %v4989 = vadd.f32 %v4987, %v4988
  %v4990 = vrot.slane %v4989, 1
  %v4991 = vadd.f32 %v4989, %v4990
  %v4992 = vsel %vm337, %v4932, 0.0
  %v4993 = vrot.slane %v4992, 4
  %v4994 = vadd.f32 %v4992, %v4993
  %v4995 = vrot.slane %v4994, 2
  %v4996 = vadd.f32 %v4994, %v4995
  %v4997 = vrot.slane %v4996, 1
  %v4998 = vadd.f32 %v4996, %v4997
  %v4999 = vsel %vm337, %v4933, 0.0
  %v5000 = vrot.slane %v4999, 4
  %v5001 = vadd.f32 %v4999, %v5000
  %v5002 = vrot.slane %v5001, 2
  %v5003 = vadd.f32 %v5001, %v5002
  %v5004 = vrot.slane %v5003, 1
  %v5005 = vadd.f32 %v5003, %v5004
  %v5006 = vsel %vm337, %v4934, 0.0
  %v5007 = vrot.slane %v5006, 4
  %v5008 = vadd.f32 %v5006, %v5007
  %v5009 = vrot.slane %v5008, 2
  %v5010 = vadd.f32 %v5008, %v5009
  %v5011 = vrot.slane %v5010, 1
  %v5012 = vadd.f32 %v5010, %v5011
  %v5013 = vsel %vm337, %v4935, 0.0
  %v5014 = vrot.slane %v5013, 4
  %v5015 = vadd.f32 %v5013, %v5014
  %v5016 = vrot.slane %v5015, 2
  %v5017 = vadd.f32 %v5015, %v5016
  %v5018 = vrot.slane %v5017, 1
  %v5019 = vadd.f32 %v5017, %v5018
  %v5020 = vadd.f32 %v4395, %v4942
  %v5021 = vadd.f32 %v4396, %v4949
  %v5022 = vadd.f32 %v4397, %v4956
  %v5023 = vadd.f32 %v4398, %v4963
  %v5024 = vadd.f32 %v4399, %v4970
  %v5025 = vadd.f32 %v4400, %v4977
  %v5026 = vadd.f32 %v4401, %v4984
  %v5027 = vadd.f32 %v4402, %v4991
  %v5028 = vadd.f32 %v4403, %v4998
  %v5029 = vadd.f32 %v4404, %v5005
  %v5030 = vadd.f32 %v4405, %v5012
  %v5031 = vadd.f32 %v4406, %v5019
  %v5032 = vmul.f32 %v4900, %v1823
  %v5033 = vmul.f32 %v4901, %v1824
  %v5034 = vmul.f32 %v4902, %v1825
  %v5035 = vmul.f32 %v4903, %v1826
  %v5036 = vmul.f32 %v4904, %v1827
  %v5037 = vmul.f32 %v4905, %v1828
  %v5038 = vmul.f32 %v4906, %v1823
  %v5039 = vmul.f32 %v4907, %v1824
  %v5040 = vmul.f32 %v4908, %v1825
  %v5041 = vmul.f32 %v4909, %v1826
  %v5042 = vmul.f32 %v4910, %v1827
  %v5043 = vmul.f32 %v4911, %v1828
  %v5044 = vmul.f32 %v4912, %v1823
  %v5045 = vmul.f32 %v4913, %v1824
  %v5046 = vmul.f32 %v4914, %v1825
  %v5047 = vmul.f32 %v4915, %v1826
  %v5048 = vmul.f32 %v4916, %v1827
  %v5049 = vmul.f32 %v4917, %v1828
  %v5050 = vmul.f32 %v4918, %v1823
  %v5051 = vmul.f32 %v4919, %v1824
  %v5052 = vmul.f32 %v4920, %v1825
  %v5053 = vmul.f32 %v4921, %v1826
  %v5054 = vmul.f32 %v4922, %v1827
  %v5055 = vmul.f32 %v4923, %v1828
  %v5080 = vrot.slane %v5032, 7
  %v5081 = vrot.slane %v5038, 7
  %v5082 = vsel %vm596, %v5080, %v5081
  %v5083 = vrot.slane %v5033, 7
  %v5084 = vrot.slane %v5039, 7
  %v5085 = vsel %vm596, %v5083, %v5084
  %v5086 = vrot.slane %v5034, 7
  %v5087 = vrot.slane %v5040, 7
  %v5088 = vsel %vm596, %v5086, %v5087
  %v5089 = vrot.slane %v5035, 7
  %v5090 = vrot.slane %v5041, 7
  %v5091 = vsel %vm596, %v5089, %v5090
  %v5092 = vrot.slane %v5036, 7
  %v5093 = vrot.slane %v5042, 7
  %v5094 = vsel %vm596, %v5092, %v5093
  %v5095 = vrot.slane %v5037, 7
  %v5096 = vrot.slane %v5043, 7
  %v5097 = vsel %vm596, %v5095, %v5096
  %v5098 = vrot.slane %v5044, 7
  %v5099 = vrot.slane %v5050, 7
  %v5100 = vsel %vm596, %v5098, %v5099
  %v5101 = vrot.slane %v5045, 7
  %v5102 = vrot.slane %v5051, 7
  %v5103 = vsel %vm596, %v5101, %v5102
  %v5104 = vrot.slane %v5046, 7
  %v5105 = vrot.slane %v5052, 7
  %v5106 = vsel %vm596, %v5104, %v5105
  %v5107 = vrot.slane %v5047, 7
  %v5108 = vrot.slane %v5053, 7
  %v5109 = vsel %vm596, %v5107, %v5108
  %v5110 = vrot.slane %v5048, 7
  %v5111 = vrot.slane %v5054, 7
  %v5112 = vsel %vm596, %v5110, %v5111
  %v5113 = vrot.slane %v5049, 7
  %v5114 = vrot.slane %v5055, 7
  %v5115 = vsel %vm596, %v5113, %v5114
  %v5128 = vsel %vm337, %v5082, 0.0
  %v5129 = vrot.slane %v5128, 4
  %v5130 = vadd.f32 %v5128, %v5129
  %v5131 = vrot.slane %v5130, 2
  %v5132 = vadd.f32 %v5130, %v5131
  %v5133 = vrot.slane %v5132, 1
  %v5134 = vadd.f32 %v5132, %v5133
  %v5135 = vsel %vm337, %v5085, 0.0
  %v5136 = vrot.slane %v5135, 4
  %v5137 = vadd.f32 %v5135, %v5136
  %v5138 = vrot.slane %v5137, 2
  %v5139 = vadd.f32 %v5137, %v5138
  %v5140 = vrot.slane %v5139, 1
  %v5141 = vadd.f32 %v5139, %v5140
  %v5142 = vsel %vm337, %v5088, 0.0
  %v5143 = vrot.slane %v5142, 4
  %v5144 = vadd.f32 %v5142, %v5143
  %v5145 = vrot.slane %v5144, 2
  %v5146 = vadd.f32 %v5144, %v5145
  %v5147 = vrot.slane %v5146, 1
  %v5148 = vadd.f32 %v5146, %v5147
  %v5149 = vsel %vm337, %v5091, 0.0
  %v5150 = vrot.slane %v5149, 4
  %v5151 = vadd.f32 %v5149, %v5150
  %v5152 = vrot.slane %v5151, 2
  %v5153 = vadd.f32 %v5151, %v5152
  %v5154 = vrot.slane %v5153, 1
  %v5155 = vadd.f32 %v5153, %v5154
  %v5156 = vsel %vm337, %v5094, 0.0
  %v5157 = vrot.slane %v5156, 4
  %v5158 = vadd.f32 %v5156, %v5157
  %v5159 = vrot.slane %v5158, 2
  %v5160 = vadd.f32 %v5158, %v5159
  %v5161 = vrot.slane %v5160, 1
  %v5162 = vadd.f32 %v5160, %v5161
  %v5163 = vsel %vm337, %v5097, 0.0
  %v5164 = vrot.slane %v5163, 4
  %v5165 = vadd.f32 %v5163, %v5164
  %v5166 = vrot.slane %v5165, 2
  %v5167 = vadd.f32 %v5165, %v5166
  %v5168 = vrot.slane %v5167, 1
  %v5169 = vadd.f32 %v5167, %v5168
  %v5170 = vsel %vm337, %v5100, 0.0
  %v5171 = vrot.slane %v5170, 4
  %v5172 = vadd.f32 %v5170, %v5171
  %v5173 = vrot.slane %v5172, 2
  %v5174 = vadd.f32 %v5172, %v5173
  %v5175 = vrot.slane %v5174, 1
  %v5176 = vadd.f32 %v5174, %v5175
  %v5177 = vsel %vm337, %v5103, 0.0
  %v5178 = vrot.slane %v5177, 4
  %v5179 = vadd.f32 %v5177, %v5178
  %v5180 = vrot.slane %v5179, 2
  %v5181 = vadd.f32 %v5179, %v5180
  %v5182 = vrot.slane %v5181, 1
  %v5183 = vadd.f32 %v5181, %v5182
  %v5184 = vsel %vm337, %v5106, 0.0
  %v5185 = vrot.slane %v5184, 4
  %v5186 = vadd.f32 %v5184, %v5185
  %v5187 = vrot.slane %v5186, 2
  %v5188 = vadd.f32 %v5186, %v5187
  %v5189 = vrot.slane %v5188, 1
  %v5190 = vadd.f32 %v5188, %v5189
  %v5191 = vsel %vm337, %v5109, 0.0
  %v5192 = vrot.slane %v5191, 4
  %v5193 = vadd.f32 %v5191, %v5192
  %v5194 = vrot.slane %v5193, 2
  %v5195 = vadd.f32 %v5193, %v5194
  %v5196 = vrot.slane %v5195, 1
  %v5197 = vadd.f32 %v5195, %v5196
  %v5198 = vsel %vm337, %v5112, 0.0
  %v5199 = vrot.slane %v5198, 4
  %v5200 = vadd.f32 %v5198, %v5199
  %v5201 = vrot.slane %v5200, 2
  %v5202 = vadd.f32 %v5200, %v5201
  %v5203 = vrot.slane %v5202, 1
  %v5204 = vadd.f32 %v5202, %v5203
  %v5205 = vsel %vm337, %v5115, 0.0
  %v5206 = vrot.slane %v5205, 4
  %v5207 = vadd.f32 %v5205, %v5206
  %v5208 = vrot.slane %v5207, 2
  %v5209 = vadd.f32 %v5207, %v5208
  %v5210 = vrot.slane %v5209, 1
  %v5211 = vadd.f32 %v5209, %v5210
  %v5212 = vadd.f32 %v4587, %v5134
  %v5213 = vadd.f32 %v4588, %v5141
  %v5214 = vadd.f32 %v4589, %v5148
  %v5215 = vadd.f32 %v4590, %v5155
  %v5216 = vadd.f32 %v4591, %v5162
  %v5217 = vadd.f32 %v4592, %v5169
  %v5218 = vadd.f32 %v4593, %v5176
  %v5219 = vadd.f32 %v4594, %v5183
  %v5220 = vadd.f32 %v4595, %v5190
  %v5221 = vadd.f32 %v4596, %v5197
  %v5222 = vadd.f32 %v4597, %v5204
  %v5223 = vadd.f32 %v4598, %v5211
  %s5224 = scalar_lea.vmem %s0, 576
  %v5225 = vld [vmem:[%s5224] sm:$0xff]
  %v5226 = vld [vmem:[%s5224 + $0x8] sm:$0xff]
  %v5227 = vld [vmem:[%s5224 + $0x10] sm:$0xff]
  %v5228 = vld [vmem:[%s5224 + $0x18] sm:$0xff]
  %v5229 = vld [vmem:[%s5224 + $0x20] sm:$0xff]
  %v5230 = vld [vmem:[%s5224 + $0x28] sm:$0xff]
  %v5231 = vld [vmem:[%s5224 + $0x30] sm:$0xff]
  %v5232 = vld [vmem:[%s5224 + $0x38] sm:$0xff]
  %v5233 = vld [vmem:[%s5224 + $0x40] sm:$0xff]
  %v5234 = vld [vmem:[%s5224 + $0x48] sm:$0xff]
  %v5235 = vld [vmem:[%s5224 + $0x50] sm:$0xff]
  %v5236 = vld [vmem:[%s5224 + $0x58] sm:$0xff]
  %v5237 = vld [vmem:[%s5224 + $0x60] sm:$0xff]
  %v5238 = vld [vmem:[%s5224 + $0x68] sm:$0xff]
  %v5239 = vld [vmem:[%s5224 + $0x70] sm:$0xff]
  %v5240 = vld [vmem:[%s5224 + $0x78] sm:$0xff]
  %v5241 = vld [vmem:[%s5224 + $0x80] sm:$0xff]
  %v5242 = vld [vmem:[%s5224 + $0x88] sm:$0xff]
  %v5243 = vld [vmem:[%s5224 + $0x90] sm:$0xff]
  %v5244 = vld [vmem:[%s5224 + $0x98] sm:$0xff]
  %v5245 = vld [vmem:[%s5224 + $0xa0] sm:$0xff]
  %v5246 = vld [vmem:[%s5224 + $0xa8] sm:$0xff]
  %v5247 = vld [vmem:[%s5224 + $0xb0] sm:$0xff]
  %v5248 = vld [vmem:[%s5224 + $0xb8] sm:$0xff]
  %v5249 = vld [vmem:[%s5224 + $0x300] sm:$0xff]
  %v5250 = vld [vmem:[%s5224 + $0x308] sm:$0xff]
  %v5251 = vld [vmem:[%s5224 + $0x310] sm:$0xff]
  %v5252 = vld [vmem:[%s5224 + $0x318] sm:$0xff]
  %v5253 = vld [vmem:[%s5224 + $0x320] sm:$0xff]
  %v5254 = vld [vmem:[%s5224 + $0x328] sm:$0xff]
  %v5255 = vld [vmem:[%s5224 + $0x330] sm:$0xff]
  %v5256 = vld [vmem:[%s5224 + $0x338] sm:$0xff]
  %v5257 = vld [vmem:[%s5224 + $0x340] sm:$0xff]
  %v5258 = vld [vmem:[%s5224 + $0x348] sm:$0xff]
  %v5259 = vld [vmem:[%s5224 + $0x350] sm:$0xff]
  %v5260 = vld [vmem:[%s5224 + $0x358] sm:$0xff]
  %v5261 = vld [vmem:[%s5224 + $0x360] sm:$0xff]
  %v5262 = vld [vmem:[%s5224 + $0x368] sm:$0xff]
  %v5263 = vld [vmem:[%s5224 + $0x370] sm:$0xff]
  %v5264 = vld [vmem:[%s5224 + $0x378] sm:$0xff]
  %v5265 = vld [vmem:[%s5224 + $0x380] sm:$0xff]
  %v5266 = vld [vmem:[%s5224 + $0x388] sm:$0xff]
  %v5267 = vld [vmem:[%s5224 + $0x390] sm:$0xff]
  %v5268 = vld [vmem:[%s5224 + $0x398] sm:$0xff]
  %v5269 = vld [vmem:[%s5224 + $0x3a0] sm:$0xff]
  %v5270 = vld [vmem:[%s5224 + $0x3a8] sm:$0xff]
  %v5271 = vld [vmem:[%s5224 + $0x3b0] sm:$0xff]
  %v5272 = vld [vmem:[%s5224 + $0x3b8] sm:$0xff]
  %v5273 = vmax.bf16 %v5225, %v5231
  %v5274 = vmax.bf16 %v5273, %v5237
  %v5275 = vmax.bf16 %v5274, %v5243
  %v5276 = vmax.bf16 %v5226, %v5232
  %v5277 = vmax.bf16 %v5276, %v5238
  %v5278 = vmax.bf16 %v5277, %v5244
  %v5279 = vmax.bf16 %v5227, %v5233
  %v5280 = vmax.bf16 %v5279, %v5239
  %v5281 = vmax.bf16 %v5280, %v5245
  %v5282 = vmax.bf16 %v5228, %v5234
  %v5283 = vmax.bf16 %v5282, %v5240
  %v5284 = vmax.bf16 %v5283, %v5246
  %v5285 = vmax.bf16 %v5229, %v5235
  %v5286 = vmax.bf16 %v5285, %v5241
  %v5287 = vmax.bf16 %v5286, %v5247
  %v5288 = vmax.bf16 %v5230, %v5236
  %v5289 = vmax.bf16 %v5288, %v5242
  %v5290 = vmax.bf16 %v5289, %v5248
  %v5291 = vmax.bf16 %v5249, %v5255
  %v5292 = vmax.bf16 %v5291, %v5261
  %v5293 = vmax.bf16 %v5292, %v5267
  %v5294 = vmax.bf16 %v5250, %v5256
  %v5295 = vmax.bf16 %v5294, %v5262
  %v5296 = vmax.bf16 %v5295, %v5268
  %v5297 = vmax.bf16 %v5251, %v5257
  %v5298 = vmax.bf16 %v5297, %v5263
  %v5299 = vmax.bf16 %v5298, %v5269
  %v5300 = vmax.bf16 %v5252, %v5258
  %v5301 = vmax.bf16 %v5300, %v5264
  %v5302 = vmax.bf16 %v5301, %v5270
  %v5303 = vmax.bf16 %v5253, %v5259
  %v5304 = vmax.bf16 %v5303, %v5265
  %v5305 = vmax.bf16 %v5304, %v5271
  %v5306 = vmax.bf16 %v5254, %v5260
  %v5307 = vmax.bf16 %v5306, %v5266
  %v5308 = vmax.bf16 %v5307, %v5272
  %v5309 = vunpack.c.l.bf16 %v5275
  %v5310 = vunpack.c.h.bf16 %v5275
  %v5311 = vunpack.c.l.bf16 %v5278
  %v5312 = vunpack.c.h.bf16 %v5278
  %v5313 = vunpack.c.l.bf16 %v5281
  %v5314 = vunpack.c.h.bf16 %v5281
  %v5315 = vunpack.c.l.bf16 %v5284
  %v5316 = vunpack.c.h.bf16 %v5284
  %v5317 = vunpack.c.l.bf16 %v5287
  %v5318 = vunpack.c.h.bf16 %v5287
  %v5319 = vunpack.c.l.bf16 %v5290
  %v5320 = vunpack.c.h.bf16 %v5290
  %v5321 = vunpack.c.l.bf16 %v5293
  %v5322 = vunpack.c.h.bf16 %v5293
  %v5323 = vunpack.c.l.bf16 %v5296
  %v5324 = vunpack.c.h.bf16 %v5296
  %v5325 = vunpack.c.l.bf16 %v5299
  %v5326 = vunpack.c.h.bf16 %v5299
  %v5327 = vunpack.c.l.bf16 %v5302
  %v5328 = vunpack.c.h.bf16 %v5302
  %v5329 = vunpack.c.l.bf16 %v5305
  %v5330 = vunpack.c.h.bf16 %v5305
  %v5331 = vunpack.c.l.bf16 %v5308
  %v5332 = vunpack.c.h.bf16 %v5308
  %v5357 = vrot.slane %v5309, 1
  %v5358 = vrot.slane %v5315, 1
  %v5359 = vsel %vm228, %v5357, %v5358
  %v5360 = vrot.slane %v5310, 1
  %v5361 = vrot.slane %v5316, 1
  %v5362 = vsel %vm228, %v5360, %v5361
  %v5363 = vrot.slane %v5311, 1
  %v5364 = vrot.slane %v5317, 1
  %v5365 = vsel %vm228, %v5363, %v5364
  %v5366 = vrot.slane %v5312, 1
  %v5367 = vrot.slane %v5318, 1
  %v5368 = vsel %vm228, %v5366, %v5367
  %v5369 = vrot.slane %v5313, 1
  %v5370 = vrot.slane %v5319, 1
  %v5371 = vsel %vm228, %v5369, %v5370
  %v5372 = vrot.slane %v5314, 1
  %v5373 = vrot.slane %v5320, 1
  %v5374 = vsel %vm228, %v5372, %v5373
  %v5375 = vrot.slane %v5321, 1
  %v5376 = vrot.slane %v5327, 1
  %v5377 = vsel %vm228, %v5375, %v5376
  %v5378 = vrot.slane %v5322, 1
  %v5379 = vrot.slane %v5328, 1
  %v5380 = vsel %vm228, %v5378, %v5379
  %v5381 = vrot.slane %v5323, 1
  %v5382 = vrot.slane %v5329, 1
  %v5383 = vsel %vm228, %v5381, %v5382
  %v5384 = vrot.slane %v5324, 1
  %v5385 = vrot.slane %v5330, 1
  %v5386 = vsel %vm228, %v5384, %v5385
  %v5387 = vrot.slane %v5325, 1
  %v5388 = vrot.slane %v5331, 1
  %v5389 = vsel %vm228, %v5387, %v5388
  %v5390 = vrot.slane %v5326, 1
  %v5391 = vrot.slane %v5332, 1
  %v5392 = vsel %vm228, %v5390, %v5391
  %v5417 = vmax.f32 %v5309, %v5359
  %v5418 = vmax.f32 %v5310, %v5362
  %v5419 = vmax.f32 %v5311, %v5365
  %v5420 = vmax.f32 %v5312, %v5368
  %v5421 = vmax.f32 %v5313, %v5371
  %v5422 = vmax.f32 %v5314, %v5374
  %v5423 = vmax.f32 %v5315, %v5358
  %v5424 = vmax.f32 %v5316, %v5361
  %v5425 = vmax.f32 %v5317, %v5364
  %v5426 = vmax.f32 %v5318, %v5367
  %v5427 = vmax.f32 %v5319, %v5370
  %v5428 = vmax.f32 %v5320, %v5373
  %v5429 = vmax.f32 %v5321, %v5377
  %v5430 = vmax.f32 %v5322, %v5380
  %v5431 = vmax.f32 %v5323, %v5383
  %v5432 = vmax.f32 %v5324, %v5386
  %v5433 = vmax.f32 %v5325, %v5389
  %v5434 = vmax.f32 %v5326, %v5392
  %v5435 = vmax.f32 %v5327, %v5376
  %v5436 = vmax.f32 %v5328, %v5379
  %v5437 = vmax.f32 %v5329, %v5382
  %v5438 = vmax.f32 %v5330, %v5385
  %v5439 = vmax.f32 %v5331, %v5388
  %v5440 = vmax.f32 %v5332, %v5391
  %v5465 = vrot.slane %v5417, 2
  %v5466 = vrot.slane %v5423, 2
  %v5467 = vsel %vm337, %v5465, %v5466
  %v5468 = vrot.slane %v5418, 2
  %v5469 = vrot.slane %v5424, 2
  %v5470 = vsel %vm337, %v5468, %v5469
  %v5471 = vrot.slane %v5419, 2
  %v5472 = vrot.slane %v5425, 2
  %v5473 = vsel %vm337, %v5471, %v5472
  %v5474 = vrot.slane %v5420, 2
  %v5475 = vrot.slane %v5426, 2
  %v5476 = vsel %vm337, %v5474, %v5475
  %v5477 = vrot.slane %v5421, 2
  %v5478 = vrot.slane %v5427, 2
  %v5479 = vsel %vm337, %v5477, %v5478
  %v5480 = vrot.slane %v5422, 2
  %v5481 = vrot.slane %v5428, 2
  %v5482 = vsel %vm337, %v5480, %v5481
  %v5483 = vrot.slane %v5429, 2
  %v5484 = vrot.slane %v5435, 2
  %v5485 = vsel %vm337, %v5483, %v5484
  %v5486 = vrot.slane %v5430, 2
  %v5487 = vrot.slane %v5436, 2
  %v5488 = vsel %vm337, %v5486, %v5487
  %v5489 = vrot.slane %v5431, 2
  %v5490 = vrot.slane %v5437, 2
  %v5491 = vsel %vm337, %v5489, %v5490
  %v5492 = vrot.slane %v5432, 2
  %v5493 = vrot.slane %v5438, 2
  %v5494 = vsel %vm337, %v5492, %v5493
  %v5495 = vrot.slane %v5433, 2
  %v5496 = vrot.slane %v5439, 2
  %v5497 = vsel %vm337, %v5495, %v5496
  %v5498 = vrot.slane %v5434, 2
  %v5499 = vrot.slane %v5440, 2
  %v5500 = vsel %vm337, %v5498, %v5499
  %v5525 = vmax.f32 %v5417, %v5467
  %v5526 = vmax.f32 %v5418, %v5470
  %v5527 = vmax.f32 %v5419, %v5473
  %v5528 = vmax.f32 %v5420, %v5476
  %v5529 = vmax.f32 %v5421, %v5479
  %v5530 = vmax.f32 %v5422, %v5482
  %v5531 = vmax.f32 %v5423, %v5466
  %v5532 = vmax.f32 %v5424, %v5469
  %v5533 = vmax.f32 %v5425, %v5472
  %v5534 = vmax.f32 %v5426, %v5475
  %v5535 = vmax.f32 %v5427, %v5478
  %v5536 = vmax.f32 %v5428, %v5481
  %v5537 = vmax.f32 %v5429, %v5485
  %v5538 = vmax.f32 %v5430, %v5488
  %v5539 = vmax.f32 %v5431, %v5491
  %v5540 = vmax.f32 %v5432, %v5494
  %v5541 = vmax.f32 %v5433, %v5497
  %v5542 = vmax.f32 %v5434, %v5500
  %v5543 = vmax.f32 %v5435, %v5484
  %v5544 = vmax.f32 %v5436, %v5487
  %v5545 = vmax.f32 %v5437, %v5490
  %v5546 = vmax.f32 %v5438, %v5493
  %v5547 = vmax.f32 %v5439, %v5496
  %v5548 = vmax.f32 %v5440, %v5499
  %v5549 = vmul.f32 %v5525, %v65
  %v5550 = vmul.f32 %v5526, %v66
  %v5551 = vmul.f32 %v5527, %v67
  %v5552 = vmul.f32 %v5528, %v68
  %v5553 = vmul.f32 %v5529, %v69
  %v5554 = vmul.f32 %v5530, %v70
  %v5555 = vmul.f32 %v5537, %v65
  %v5556 = vmul.f32 %v5538, %v66
  %v5557 = vmul.f32 %v5539, %v67
  %v5558 = vmul.f32 %v5540, %v68
  %v5559 = vmul.f32 %v5541, %v69
  %v5560 = vmul.f32 %v5542, %v70
  %v5561 = vsel %vm337, %v5549, 0.0
  %v5562 = vrot.slane %v5561, 4
  %v5563 = vadd.f32 %v5561, %v5562
  %v5564 = vrot.slane %v5563, 2
  %v5565 = vadd.f32 %v5563, %v5564
  %v5566 = vrot.slane %v5565, 1
  %v5567 = vadd.f32 %v5565, %v5566
  %v5568 = vsel %vm337, %v5550, 0.0
  %v5569 = vrot.slane %v5568, 4
  %v5570 = vadd.f32 %v5568, %v5569
  %v5571 = vrot.slane %v5570, 2
  %v5572 = vadd.f32 %v5570, %v5571
  %v5573 = vrot.slane %v5572, 1
  %v5574 = vadd.f32 %v5572, %v5573
  %v5575 = vsel %vm337, %v5551, 0.0
  %v5576 = vrot.slane %v5575, 4
  %v5577 = vadd.f32 %v5575, %v5576
  %v5578 = vrot.slane %v5577, 2
  %v5579 = vadd.f32 %v5577, %v5578
  %v5580 = vrot.slane %v5579, 1
  %v5581 = vadd.f32 %v5579, %v5580
  %v5582 = vsel %vm337, %v5552, 0.0
  %v5583 = vrot.slane %v5582, 4
  %v5584 = vadd.f32 %v5582, %v5583
  %v5585 = vrot.slane %v5584, 2
  %v5586 = vadd.f32 %v5584, %v5585
  %v5587 = vrot.slane %v5586, 1
  %v5588 = vadd.f32 %v5586, %v5587
  %v5589 = vsel %vm337, %v5553, 0.0
  %v5590 = vrot.slane %v5589, 4
  %v5591 = vadd.f32 %v5589, %v5590
  %v5592 = vrot.slane %v5591, 2
  %v5593 = vadd.f32 %v5591, %v5592
  %v5594 = vrot.slane %v5593, 1
  %v5595 = vadd.f32 %v5593, %v5594
  %v5596 = vsel %vm337, %v5554, 0.0
  %v5597 = vrot.slane %v5596, 4
  %v5598 = vadd.f32 %v5596, %v5597
  %v5599 = vrot.slane %v5598, 2
  %v5600 = vadd.f32 %v5598, %v5599
  %v5601 = vrot.slane %v5600, 1
  %v5602 = vadd.f32 %v5600, %v5601
  %v5603 = vsel %vm337, %v5555, 0.0
  %v5604 = vrot.slane %v5603, 4
  %v5605 = vadd.f32 %v5603, %v5604
  %v5606 = vrot.slane %v5605, 2
  %v5607 = vadd.f32 %v5605, %v5606
  %v5608 = vrot.slane %v5607, 1
  %v5609 = vadd.f32 %v5607, %v5608
  %v5610 = vsel %vm337, %v5556, 0.0
  %v5611 = vrot.slane %v5610, 4
  %v5612 = vadd.f32 %v5610, %v5611
  %v5613 = vrot.slane %v5612, 2
  %v5614 = vadd.f32 %v5612, %v5613
  %v5615 = vrot.slane %v5614, 1
  %v5616 = vadd.f32 %v5614, %v5615
  %v5617 = vsel %vm337, %v5557, 0.0
  %v5618 = vrot.slane %v5617, 4
  %v5619 = vadd.f32 %v5617, %v5618
  %v5620 = vrot.slane %v5619, 2
  %v5621 = vadd.f32 %v5619, %v5620
  %v5622 = vrot.slane %v5621, 1
  %v5623 = vadd.f32 %v5621, %v5622
  %v5624 = vsel %vm337, %v5558, 0.0
  %v5625 = vrot.slane %v5624, 4
  %v5626 = vadd.f32 %v5624, %v5625
  %v5627 = vrot.slane %v5626, 2
  %v5628 = vadd.f32 %v5626, %v5627
  %v5629 = vrot.slane %v5628, 1
  %v5630 = vadd.f32 %v5628, %v5629
  %v5631 = vsel %vm337, %v5559, 0.0
  %v5632 = vrot.slane %v5631, 4
  %v5633 = vadd.f32 %v5631, %v5632
  %v5634 = vrot.slane %v5633, 2
  %v5635 = vadd.f32 %v5633, %v5634
  %v5636 = vrot.slane %v5635, 1
  %v5637 = vadd.f32 %v5635, %v5636
  %v5638 = vsel %vm337, %v5560, 0.0
  %v5639 = vrot.slane %v5638, 4
  %v5640 = vadd.f32 %v5638, %v5639
  %v5641 = vrot.slane %v5640, 2
  %v5642 = vadd.f32 %v5640, %v5641
  %v5643 = vrot.slane %v5642, 1
  %v5644 = vadd.f32 %v5642, %v5643
  %v5645 = vadd.f32 %v5020, %v5567
  %v5646 = vadd.f32 %v5021, %v5574
  %v5647 = vadd.f32 %v5022, %v5581
  %v5648 = vadd.f32 %v5023, %v5588
  %v5649 = vadd.f32 %v5024, %v5595
  %v5650 = vadd.f32 %v5025, %v5602
  %v5651 = vadd.f32 %v5026, %v5609
  %v5652 = vadd.f32 %v5027, %v5616
  %v5653 = vadd.f32 %v5028, %v5623
  %v5654 = vadd.f32 %v5029, %v5630
  %v5655 = vadd.f32 %v5030, %v5637
  %v5656 = vadd.f32 %v5031, %v5644
  %v5657 = vmul.f32 %v5525, %v2466
  %v5658 = vmul.f32 %v5526, %v2467
  %v5659 = vmul.f32 %v5527, %v2468
  %v5660 = vmul.f32 %v5528, %v2469
  %v5661 = vmul.f32 %v5529, %v2470
  %v5662 = vmul.f32 %v5530, %v2471
  %v5663 = vmul.f32 %v5531, %v2466
  %v5664 = vmul.f32 %v5532, %v2467
  %v5665 = vmul.f32 %v5533, %v2468
  %v5666 = vmul.f32 %v5534, %v2469
  %v5667 = vmul.f32 %v5535, %v2470
  %v5668 = vmul.f32 %v5536, %v2471
  %v5669 = vmul.f32 %v5537, %v2466
  %v5670 = vmul.f32 %v5538, %v2467
  %v5671 = vmul.f32 %v5539, %v2468
  %v5672 = vmul.f32 %v5540, %v2469
  %v5673 = vmul.f32 %v5541, %v2470
  %v5674 = vmul.f32 %v5542, %v2471
  %v5675 = vmul.f32 %v5543, %v2466
  %v5676 = vmul.f32 %v5544, %v2467
  %v5677 = vmul.f32 %v5545, %v2468
  %v5678 = vmul.f32 %v5546, %v2469
  %v5679 = vmul.f32 %v5547, %v2470
  %v5680 = vmul.f32 %v5548, %v2471
  %v5705 = vrot.slane %v5657, 7
  %v5706 = vrot.slane %v5663, 7
  %v5707 = vsel %vm596, %v5705, %v5706
  %v5708 = vrot.slane %v5658, 7
  %v5709 = vrot.slane %v5664, 7
  %v5710 = vsel %vm596, %v5708, %v5709
  %v5711 = vrot.slane %v5659, 7
  %v5712 = vrot.slane %v5665, 7
  %v5713 = vsel %vm596, %v5711, %v5712
  %v5714 = vrot.slane %v5660, 7
  %v5715 = vrot.slane %v5666, 7
  %v5716 = vsel %vm596, %v5714, %v5715
  %v5717 = vrot.slane %v5661, 7
  %v5718 = vrot.slane %v5667, 7
  %v5719 = vsel %vm596, %v5717, %v5718
  %v5720 = vrot.slane %v5662, 7
  %v5721 = vrot.slane %v5668, 7
  %v5722 = vsel %vm596, %v5720, %v5721
  %v5723 = vrot.slane %v5669, 7
  %v5724 = vrot.slane %v5675, 7
  %v5725 = vsel %vm596, %v5723, %v5724
  %v5726 = vrot.slane %v5670, 7
  %v5727 = vrot.slane %v5676, 7
  %v5728 = vsel %vm596, %v5726, %v5727
  %v5729 = vrot.slane %v5671, 7
  %v5730 = vrot.slane %v5677, 7
  %v5731 = vsel %vm596, %v5729, %v5730
  %v5732 = vrot.slane %v5672, 7
  %v5733 = vrot.slane %v5678, 7
  %v5734 = vsel %vm596, %v5732, %v5733
  %v5735 = vrot.slane %v5673, 7
  %v5736 = vrot.slane %v5679, 7
  %v5737 = vsel %vm596, %v5735, %v5736
  %v5738 = vrot.slane %v5674, 7
  %v5739 = vrot.slane %v5680, 7
  %v5740 = vsel %vm596, %v5738, %v5739
  %v5753 = vsel %vm337, %v5707, 0.0
  %v5754 = vrot.slane %v5753, 4
  %v5755 = vadd.f32 %v5753, %v5754
  %v5756 = vrot.slane %v5755, 2
  %v5757 = vadd.f32 %v5755, %v5756
  %v5758 = vrot.slane %v5757, 1
  %v5759 = vadd.f32 %v5757, %v5758
  %v5760 = vsel %vm337, %v5710, 0.0
  %v5761 = vrot.slane %v5760, 4
  %v5762 = vadd.f32 %v5760, %v5761
  %v5763 = vrot.slane %v5762, 2
  %v5764 = vadd.f32 %v5762, %v5763
  %v5765 = vrot.slane %v5764, 1
  %v5766 = vadd.f32 %v5764, %v5765
  %v5767 = vsel %vm337, %v5713, 0.0
  %v5768 = vrot.slane %v5767, 4
  %v5769 = vadd.f32 %v5767, %v5768
  %v5770 = vrot.slane %v5769, 2
  %v5771 = vadd.f32 %v5769, %v5770
  %v5772 = vrot.slane %v5771, 1
  %v5773 = vadd.f32 %v5771, %v5772
  %v5774 = vsel %vm337, %v5716, 0.0
  %v5775 = vrot.slane %v5774, 4
  %v5776 = vadd.f32 %v5774, %v5775
  %v5777 = vrot.slane %v5776, 2
  %v5778 = vadd.f32 %v5776, %v5777
  %v5779 = vrot.slane %v5778, 1
  %v5780 = vadd.f32 %v5778, %v5779
  %v5781 = vsel %vm337, %v5719, 0.0
  %v5782 = vrot.slane %v5781, 4
  %v5783 = vadd.f32 %v5781, %v5782
  %v5784 = vrot.slane %v5783, 2
  %v5785 = vadd.f32 %v5783, %v5784
  %v5786 = vrot.slane %v5785, 1
  %v5787 = vadd.f32 %v5785, %v5786
  %v5788 = vsel %vm337, %v5722, 0.0
  %v5789 = vrot.slane %v5788, 4
  %v5790 = vadd.f32 %v5788, %v5789
  %v5791 = vrot.slane %v5790, 2
  %v5792 = vadd.f32 %v5790, %v5791
  %v5793 = vrot.slane %v5792, 1
  %v5794 = vadd.f32 %v5792, %v5793
  %v5795 = vsel %vm337, %v5725, 0.0
  %v5796 = vrot.slane %v5795, 4
  %v5797 = vadd.f32 %v5795, %v5796
  %v5798 = vrot.slane %v5797, 2
  %v5799 = vadd.f32 %v5797, %v5798
  %v5800 = vrot.slane %v5799, 1
  %v5801 = vadd.f32 %v5799, %v5800
  %v5802 = vsel %vm337, %v5728, 0.0
  %v5803 = vrot.slane %v5802, 4
  %v5804 = vadd.f32 %v5802, %v5803
  %v5805 = vrot.slane %v5804, 2
  %v5806 = vadd.f32 %v5804, %v5805
  %v5807 = vrot.slane %v5806, 1
  %v5808 = vadd.f32 %v5806, %v5807
  %v5809 = vsel %vm337, %v5731, 0.0
  %v5810 = vrot.slane %v5809, 4
  %v5811 = vadd.f32 %v5809, %v5810
  %v5812 = vrot.slane %v5811, 2
  %v5813 = vadd.f32 %v5811, %v5812
  %v5814 = vrot.slane %v5813, 1
  %v5815 = vadd.f32 %v5813, %v5814
  %v5816 = vsel %vm337, %v5734, 0.0
  %v5817 = vrot.slane %v5816, 4
  %v5818 = vadd.f32 %v5816, %v5817
  %v5819 = vrot.slane %v5818, 2
  %v5820 = vadd.f32 %v5818, %v5819
  %v5821 = vrot.slane %v5820, 1
  %v5822 = vadd.f32 %v5820, %v5821
  %v5823 = vsel %vm337, %v5737, 0.0
  %v5824 = vrot.slane %v5823, 4
  %v5825 = vadd.f32 %v5823, %v5824
  %v5826 = vrot.slane %v5825, 2
  %v5827 = vadd.f32 %v5825, %v5826
  %v5828 = vrot.slane %v5827, 1
  %v5829 = vadd.f32 %v5827, %v5828
  %v5830 = vsel %vm337, %v5740, 0.0
  %v5831 = vrot.slane %v5830, 4
  %v5832 = vadd.f32 %v5830, %v5831
  %v5833 = vrot.slane %v5832, 2
  %v5834 = vadd.f32 %v5832, %v5833
  %v5835 = vrot.slane %v5834, 1
  %v5836 = vadd.f32 %v5834, %v5835
  %v5837 = vadd.f32 %v5212, %v5759
  %v5838 = vadd.f32 %v5213, %v5766
  %v5839 = vadd.f32 %v5214, %v5773
  %v5840 = vadd.f32 %v5215, %v5780
  %v5841 = vadd.f32 %v5216, %v5787
  %v5842 = vadd.f32 %v5217, %v5794
  %v5843 = vadd.f32 %v5218, %v5801
  %v5844 = vadd.f32 %v5219, %v5808
  %v5845 = vadd.f32 %v5220, %v5815
  %v5846 = vadd.f32 %v5221, %v5822
  %v5847 = vadd.f32 %v5222, %v5829
  %v5848 = vadd.f32 %v5223, %v5836
  %v5849 = vadd.f32 %v5645, %v2674
  %v5850 = vadd.f32 %v5646, %v2678
  %v5851 = vadd.f32 %v5647, %v2682
  %v5852 = vadd.f32 %v5648, %v2686
  %v5853 = vadd.f32 %v5649, %v2690
  %v5854 = vadd.f32 %v5650, %v2694
  %v5855 = vadd.f32 %v5651, %v2674
  %v5856 = vadd.f32 %v5652, %v2678
  %v5857 = vadd.f32 %v5653, %v2682
  %v5858 = vadd.f32 %v5654, %v2686
  %v5859 = vadd.f32 %v5655, %v2690
  %v5860 = vadd.f32 %v5656, %v2694
  %v5861 = vmul.f32 %v5849, 0.5
  %v5862 = vmul.f32 %v5850, 0.5
  %v5863 = vmul.f32 %v5851, 0.5
  %v5864 = vmul.f32 %v5852, 0.5
  %v5865 = vmul.f32 %v5853, 0.5
  %v5866 = vmul.f32 %v5854, 0.5
  %v5867 = vmul.f32 %v5855, 0.5
  %v5868 = vmul.f32 %v5856, 0.5
  %v5869 = vmul.f32 %v5857, 0.5
  %v5870 = vmul.f32 %v5858, 0.5
  %v5871 = vmul.f32 %v5859, 0.5
  %v5872 = vmul.f32 %v5860, 0.5
  %v5873 = vmul.f32 %v5849, 0.70710677
  %v5874 = vmul.f32 %v5850, 0.70710677
  %v5875 = vmul.f32 %v5851, 0.70710677
  %v5876 = vmul.f32 %v5852, 0.70710677
  %v5877 = vmul.f32 %v5853, 0.70710677
  %v5878 = vmul.f32 %v5854, 0.70710677
  %v5879 = vmul.f32 %v5855, 0.70710677
  %v5880 = vmul.f32 %v5856, 0.70710677
  %v5881 = vmul.f32 %v5857, 0.70710677
  %v5882 = vmul.f32 %v5858, 0.70710677
  %v5883 = vmul.f32 %v5859, 0.70710677
  %v5884 = vmul.f32 %v5860, 0.70710677
  %v5885 = vand.u32 2147483647, %v5873
  %v5886 = vand.u32 2147483647, %v5874
  %v5887 = vand.u32 2147483647, %v5875
  %v5888 = vand.u32 2147483647, %v5876
  %v5889 = vand.u32 2147483647, %v5877
  %v5890 = vand.u32 2147483647, %v5878
  %v5891 = vand.u32 2147483647, %v5879
  %v5892 = vand.u32 2147483647, %v5880
  %v5893 = vand.u32 2147483647, %v5881
  %v5894 = vand.u32 2147483647, %v5882
  %v5895 = vand.u32 2147483647, %v5883
  %v5896 = vand.u32 2147483647, %v5884
  %v5897 = vmul.f32 %v5885, 0.3275911
  %v5898 = vmul.f32 %v5886, 0.3275911
  %v5899 = vmul.f32 %v5887, 0.3275911
  %v5900 = vmul.f32 %v5888, 0.3275911
  %v5901 = vmul.f32 %v5889, 0.3275911
  %v5902 = vmul.f32 %v5890, 0.3275911
  %v5903 = vmul.f32 %v5891, 0.3275911
  %v5904 = vmul.f32 %v5892, 0.3275911
  %v5905 = vmul.f32 %v5893, 0.3275911
  %v5906 = vmul.f32 %v5894, 0.3275911
  %v5907 = vmul.f32 %v5895, 0.3275911
  %v5908 = vmul.f32 %v5896, 0.3275911
  %v5909 = vadd.f32 %v5897, 1.0
  %v5910 = vadd.f32 %v5898, 1.0
  %v5911 = vadd.f32 %v5899, 1.0
  %v5912 = vadd.f32 %v5900, 1.0
  %v5913 = vadd.f32 %v5901, 1.0
  %v5914 = vadd.f32 %v5902, 1.0
  %v5915 = vadd.f32 %v5903, 1.0
  %v5916 = vadd.f32 %v5904, 1.0
  %v5917 = vadd.f32 %v5905, 1.0
  %v5918 = vadd.f32 %v5906, 1.0
  %v5919 = vadd.f32 %v5907, 1.0
  %v5920 = vadd.f32 %v5908, 1.0
  %v5921 = vrcp.pop %v5909
  %v5922 = vrcp.pop %v5910
  %v5923 = vrcp.pop %v5911
  %v5924 = vrcp.pop %v5912
  %v5925 = vrcp.pop %v5913
  %v5926 = vrcp.pop %v5914
  %v5927 = vrcp.pop %v5915
  %v5928 = vrcp.pop %v5916
  %v5929 = vrcp.pop %v5917
  %v5930 = vrcp.pop %v5918
  %v5931 = vrcp.pop %v5919
  %v5932 = vrcp.pop %v5920
  %v5933 = vmul.f32 %v5921, 1.0614054
  %v5934 = vmul.f32 %v5922, 1.0614054
  %v5935 = vmul.f32 %v5923, 1.0614054
  %v5936 = vmul.f32 %v5924, 1.0614054
  %v5937 = vmul.f32 %v5925, 1.0614054
  %v5938 = vmul.f32 %v5926, 1.0614054
  %v5939 = vmul.f32 %v5927, 1.0614054
  %v5940 = vmul.f32 %v5928, 1.0614054
  %v5941 = vmul.f32 %v5929, 1.0614054
  %v5942 = vmul.f32 %v5930, 1.0614054
  %v5943 = vmul.f32 %v5931, 1.0614054
  %v5944 = vmul.f32 %v5932, 1.0614054
  %v5945 = vadd.f32 %v5933, -1.4531521
  %v5946 = vadd.f32 %v5934, -1.4531521
  %v5947 = vadd.f32 %v5935, -1.4531521
  %v5948 = vadd.f32 %v5936, -1.4531521
  %v5949 = vadd.f32 %v5937, -1.4531521
  %v5950 = vadd.f32 %v5938, -1.4531521
  %v5951 = vadd.f32 %v5939, -1.4531521
  %v5952 = vadd.f32 %v5940, -1.4531521
  %v5953 = vadd.f32 %v5941, -1.4531521
  %v5954 = vadd.f32 %v5942, -1.4531521
  %v5955 = vadd.f32 %v5943, -1.4531521
  %v5956 = vadd.f32 %v5944, -1.4531521
  %v5957 = vmul.f32 %v5921, %v5945
  %v5958 = vmul.f32 %v5922, %v5946
  %v5959 = vmul.f32 %v5923, %v5947
  %v5960 = vmul.f32 %v5924, %v5948
  %v5961 = vmul.f32 %v5925, %v5949
  %v5962 = vmul.f32 %v5926, %v5950
  %v5963 = vmul.f32 %v5927, %v5951
  %v5964 = vmul.f32 %v5928, %v5952
  %v5965 = vmul.f32 %v5929, %v5953
  %v5966 = vmul.f32 %v5930, %v5954
  %v5967 = vmul.f32 %v5931, %v5955
  %v5968 = vmul.f32 %v5932, %v5956
  %v5969 = vadd.f32 %v5957, 1.4214138
  %v5970 = vadd.f32 %v5958, 1.4214138
  %v5971 = vadd.f32 %v5959, 1.4214138
  %v5972 = vadd.f32 %v5960, 1.4214138
  %v5973 = vadd.f32 %v5961, 1.4214138
  %v5974 = vadd.f32 %v5962, 1.4214138
  %v5975 = vadd.f32 %v5963, 1.4214138
  %v5976 = vadd.f32 %v5964, 1.4214138
  %v5977 = vadd.f32 %v5965, 1.4214138
  %v5978 = vadd.f32 %v5966, 1.4214138
  %v5979 = vadd.f32 %v5967, 1.4214138
  %v5980 = vadd.f32 %v5968, 1.4214138
  %v5981 = vmul.f32 %v5921, %v5969
  %v5982 = vmul.f32 %v5922, %v5970
  %v5983 = vmul.f32 %v5923, %v5971
  %v5984 = vmul.f32 %v5924, %v5972
  %v5985 = vmul.f32 %v5925, %v5973
  %v5986 = vmul.f32 %v5926, %v5974
  %v5987 = vmul.f32 %v5927, %v5975
  %v5988 = vmul.f32 %v5928, %v5976
  %v5989 = vmul.f32 %v5929, %v5977
  %v5990 = vmul.f32 %v5930, %v5978
  %v5991 = vmul.f32 %v5931, %v5979
  %v5992 = vmul.f32 %v5932, %v5980
  %v5993 = vadd.f32 %v5981, -0.28449672
  %v5994 = vadd.f32 %v5982, -0.28449672
  %v5995 = vadd.f32 %v5983, -0.28449672
  %v5996 = vadd.f32 %v5984, -0.28449672
  %v5997 = vadd.f32 %v5985, -0.28449672
  %v5998 = vadd.f32 %v5986, -0.28449672
  %v5999 = vadd.f32 %v5987, -0.28449672
  %v6000 = vadd.f32 %v5988, -0.28449672
  %v6001 = vadd.f32 %v5989, -0.28449672
  %v6002 = vadd.f32 %v5990, -0.28449672
  %v6003 = vadd.f32 %v5991, -0.28449672
  %v6004 = vadd.f32 %v5992, -0.28449672
  %v6005 = vmul.f32 %v5921, %v5993
  %v6006 = vmul.f32 %v5922, %v5994
  %v6007 = vmul.f32 %v5923, %v5995
  %v6008 = vmul.f32 %v5924, %v5996
  %v6009 = vmul.f32 %v5925, %v5997
  %v6010 = vmul.f32 %v5926, %v5998
  %v6011 = vmul.f32 %v5927, %v5999
  %v6012 = vmul.f32 %v5928, %v6000
  %v6013 = vmul.f32 %v5929, %v6001
  %v6014 = vmul.f32 %v5930, %v6002
  %v6015 = vmul.f32 %v5931, %v6003
  %v6016 = vmul.f32 %v5932, %v6004
  %v6017 = vadd.f32 %v6005, 0.2548296
  %v6018 = vadd.f32 %v6006, 0.2548296
  %v6019 = vadd.f32 %v6007, 0.2548296
  %v6020 = vadd.f32 %v6008, 0.2548296
  %v6021 = vadd.f32 %v6009, 0.2548296
  %v6022 = vadd.f32 %v6010, 0.2548296
  %v6023 = vadd.f32 %v6011, 0.2548296
  %v6024 = vadd.f32 %v6012, 0.2548296
  %v6025 = vadd.f32 %v6013, 0.2548296
  %v6026 = vadd.f32 %v6014, 0.2548296
  %v6027 = vadd.f32 %v6015, 0.2548296
  %v6028 = vadd.f32 %v6016, 0.2548296
  %v6029 = vmul.f32 %v5921, %v6017
  %v6030 = vmul.f32 %v5922, %v6018
  %v6031 = vmul.f32 %v5923, %v6019
  %v6032 = vmul.f32 %v5924, %v6020
  %v6033 = vmul.f32 %v5925, %v6021
  %v6034 = vmul.f32 %v5926, %v6022
  %v6035 = vmul.f32 %v5927, %v6023
  %v6036 = vmul.f32 %v5928, %v6024
  %v6037 = vmul.f32 %v5929, %v6025
  %v6038 = vmul.f32 %v5930, %v6026
  %v6039 = vmul.f32 %v5931, %v6027
  %v6040 = vmul.f32 %v5932, %v6028
  %v6041 = vsub.f32 0.0, %v5885
  %v6042 = vsub.f32 0.0, %v5886
  %v6043 = vsub.f32 0.0, %v5887
  %v6044 = vsub.f32 0.0, %v5888
  %v6045 = vsub.f32 0.0, %v5889
  %v6046 = vsub.f32 0.0, %v5890
  %v6047 = vsub.f32 0.0, %v5891
  %v6048 = vsub.f32 0.0, %v5892
  %v6049 = vsub.f32 0.0, %v5893
  %v6050 = vsub.f32 0.0, %v5894
  %v6051 = vsub.f32 0.0, %v5895
  %v6052 = vsub.f32 0.0, %v5896
  %v6053 = vmul.f32 %v6041, %v5885
  %v6054 = vmul.f32 %v6042, %v5886
  %v6055 = vmul.f32 %v6043, %v5887
  %v6056 = vmul.f32 %v6044, %v5888
  %v6057 = vmul.f32 %v6045, %v5889
  %v6058 = vmul.f32 %v6046, %v5890
  %v6059 = vmul.f32 %v6047, %v5891
  %v6060 = vmul.f32 %v6048, %v5892
  %v6061 = vmul.f32 %v6049, %v5893
  %v6062 = vmul.f32 %v6050, %v5894
  %v6063 = vmul.f32 %v6051, %v5895
  %v6064 = vmul.f32 %v6052, %v5896
  %v6065 = vmul.f32 %v6053, 1.442695
  %v6066 = vpow.pop %v6065
  %v6067 = vmul.f32 %v6054, 1.442695
  %v6068 = vpow.pop %v6067
  %v6069 = vmul.f32 %v6055, 1.442695
  %v6070 = vpow.pop %v6069
  %v6071 = vmul.f32 %v6056, 1.442695
  %v6072 = vpow.pop %v6071
  %v6073 = vmul.f32 %v6057, 1.442695
  %v6074 = vpow.pop %v6073
  %v6075 = vmul.f32 %v6058, 1.442695
  %v6076 = vpow.pop %v6075
  %v6077 = vmul.f32 %v6059, 1.442695
  %v6078 = vpow.pop %v6077
  %v6079 = vmul.f32 %v6060, 1.442695
  %v6080 = vpow.pop %v6079
  %v6081 = vmul.f32 %v6061, 1.442695
  %v6082 = vpow.pop %v6081
  %v6083 = vmul.f32 %v6062, 1.442695
  %v6084 = vpow.pop %v6083
  %v6085 = vmul.f32 %v6063, 1.442695
  %v6086 = vpow.pop %v6085
  %v6087 = vmul.f32 %v6064, 1.442695
  %v6088 = vpow.pop %v6087
  %v6089 = vmul.f32 %v6029, %v6066
  %v6090 = vmul.f32 %v6030, %v6068
  %v6091 = vmul.f32 %v6031, %v6070
  %v6092 = vmul.f32 %v6032, %v6072
  %v6093 = vmul.f32 %v6033, %v6074
  %v6094 = vmul.f32 %v6034, %v6076
  %v6095 = vmul.f32 %v6035, %v6078
  %v6096 = vmul.f32 %v6036, %v6080
  %v6097 = vmul.f32 %v6037, %v6082
  %v6098 = vmul.f32 %v6038, %v6084
  %v6099 = vmul.f32 %v6039, %v6086
  %v6100 = vmul.f32 %v6040, %v6088
  %v6101 = vsub.f32 1.0, %v6089
  %v6102 = vsub.f32 1.0, %v6090
  %v6103 = vsub.f32 1.0, %v6091
  %v6104 = vsub.f32 1.0, %v6092
  %v6105 = vsub.f32 1.0, %v6093
  %v6106 = vsub.f32 1.0, %v6094
  %v6107 = vsub.f32 1.0, %v6095
  %v6108 = vsub.f32 1.0, %v6096
  %v6109 = vsub.f32 1.0, %v6097
  %v6110 = vsub.f32 1.0, %v6098
  %v6111 = vsub.f32 1.0, %v6099
  %v6112 = vsub.f32 1.0, %v6100
  %vm6113 = vcmp.ge.f32.partialorder %v5873, 0.0
  %vm6114 = vcmp.ge.f32.partialorder %v5874, 0.0
  %vm6115 = vcmp.ge.f32.partialorder %v5875, 0.0
  %vm6116 = vcmp.ge.f32.partialorder %v5876, 0.0
  %vm6117 = vcmp.ge.f32.partialorder %v5877, 0.0
  %vm6118 = vcmp.ge.f32.partialorder %v5878, 0.0
  %vm6119 = vcmp.ge.f32.partialorder %v5879, 0.0
  %vm6120 = vcmp.ge.f32.partialorder %v5880, 0.0
  %vm6121 = vcmp.ge.f32.partialorder %v5881, 0.0
  %vm6122 = vcmp.ge.f32.partialorder %v5882, 0.0
  %vm6123 = vcmp.ge.f32.partialorder %v5883, 0.0
  %vm6124 = vcmp.ge.f32.partialorder %v5884, 0.0
  %v6125 = vsub.f32 0.0, %v6101
  %v6126 = vsub.f32 0.0, %v6102
  %v6127 = vsub.f32 0.0, %v6103
  %v6128 = vsub.f32 0.0, %v6104
  %v6129 = vsub.f32 0.0, %v6105
  %v6130 = vsub.f32 0.0, %v6106
  %v6131 = vsub.f32 0.0, %v6107
  %v6132 = vsub.f32 0.0, %v6108
  %v6133 = vsub.f32 0.0, %v6109
  %v6134 = vsub.f32 0.0, %v6110
  %v6135 = vsub.f32 0.0, %v6111
  %v6136 = vsub.f32 0.0, %v6112
  %v6137 = vsel %vm6113, %v6101, %v6125
  %v6138 = vsel %vm6114, %v6102, %v6126
  %v6139 = vsel %vm6115, %v6103, %v6127
  %v6140 = vsel %vm6116, %v6104, %v6128
  %v6141 = vsel %vm6117, %v6105, %v6129
  %v6142 = vsel %vm6118, %v6106, %v6130
  %v6143 = vsel %vm6119, %v6107, %v6131
  %v6144 = vsel %vm6120, %v6108, %v6132
  %v6145 = vsel %vm6121, %v6109, %v6133
  %v6146 = vsel %vm6122, %v6110, %v6134
  %v6147 = vsel %vm6123, %v6111, %v6135
  %v6148 = vsel %vm6124, %v6112, %v6136
  %v6149 = vadd.f32 %v6137, 1.0
  %v6150 = vadd.f32 %v6138, 1.0
  %v6151 = vadd.f32 %v6139, 1.0
  %v6152 = vadd.f32 %v6140, 1.0
  %v6153 = vadd.f32 %v6141, 1.0
  %v6154 = vadd.f32 %v6142, 1.0
  %v6155 = vadd.f32 %v6143, 1.0
  %v6156 = vadd.f32 %v6144, 1.0
  %v6157 = vadd.f32 %v6145, 1.0
  %v6158 = vadd.f32 %v6146, 1.0
  %v6159 = vadd.f32 %v6147, 1.0
  %v6160 = vadd.f32 %v6148, 1.0
  %v6161 = vmul.f32 %v5861, %v6149
  %v6162 = vmul.f32 %v5862, %v6150
  %v6163 = vmul.f32 %v5863, %v6151
  %v6164 = vmul.f32 %v5864, %v6152
  %v6165 = vmul.f32 %v5865, %v6153
  %v6166 = vmul.f32 %v5866, %v6154
  %v6167 = vmul.f32 %v5867, %v6155
  %v6168 = vmul.f32 %v5868, %v6156
  %v6169 = vmul.f32 %v5869, %v6157
  %v6170 = vmul.f32 %v5870, %v6158
  %v6171 = vmul.f32 %v5871, %v6159
  %v6172 = vmul.f32 %v5872, %v6160
  %v6173 = vadd.f32 %v5837, %v2674
  %v6174 = vadd.f32 %v5838, %v2678
  %v6175 = vadd.f32 %v5839, %v2682
  %v6176 = vadd.f32 %v5840, %v2686
  %v6177 = vadd.f32 %v5841, %v2690
  %v6178 = vadd.f32 %v5842, %v2694
  %v6179 = vadd.f32 %v5843, %v2674
  %v6180 = vadd.f32 %v5844, %v2678
  %v6181 = vadd.f32 %v5845, %v2682
  %v6182 = vadd.f32 %v5846, %v2686
  %v6183 = vadd.f32 %v5847, %v2690
  %v6184 = vadd.f32 %v5848, %v2694
  %v6185 = vmul.f32 %v6173, 0.5
  %v6186 = vmul.f32 %v6174, 0.5
  %v6187 = vmul.f32 %v6175, 0.5
  %v6188 = vmul.f32 %v6176, 0.5
  %v6189 = vmul.f32 %v6177, 0.5
  %v6190 = vmul.f32 %v6178, 0.5
  %v6191 = vmul.f32 %v6179, 0.5
  %v6192 = vmul.f32 %v6180, 0.5
  %v6193 = vmul.f32 %v6181, 0.5
  %v6194 = vmul.f32 %v6182, 0.5
  %v6195 = vmul.f32 %v6183, 0.5
  %v6196 = vmul.f32 %v6184, 0.5
  %v6197 = vmul.f32 %v6173, 0.70710677
  %v6198 = vmul.f32 %v6174, 0.70710677
  %v6199 = vmul.f32 %v6175, 0.70710677
  %v6200 = vmul.f32 %v6176, 0.70710677
  %v6201 = vmul.f32 %v6177, 0.70710677
  %v6202 = vmul.f32 %v6178, 0.70710677
  %v6203 = vmul.f32 %v6179, 0.70710677
  %v6204 = vmul.f32 %v6180, 0.70710677
  %v6205 = vmul.f32 %v6181, 0.70710677
  %v6206 = vmul.f32 %v6182, 0.70710677
  %v6207 = vmul.f32 %v6183, 0.70710677
  %v6208 = vmul.f32 %v6184, 0.70710677
  %v6209 = vand.u32 2147483647, %v6197
  %v6210 = vand.u32 2147483647, %v6198
  %v6211 = vand.u32 2147483647, %v6199
  %v6212 = vand.u32 2147483647, %v6200
  %v6213 = vand.u32 2147483647, %v6201
  %v6214 = vand.u32 2147483647, %v6202
  %v6215 = vand.u32 2147483647, %v6203
  %v6216 = vand.u32 2147483647, %v6204
  %v6217 = vand.u32 2147483647, %v6205
  %v6218 = vand.u32 2147483647, %v6206
  %v6219 = vand.u32 2147483647, %v6207
  %v6220 = vand.u32 2147483647, %v6208
  %v6221 = vmul.f32 %v6209, 0.3275911
  %v6222 = vmul.f32 %v6210, 0.3275911
  %v6223 = vmul.f32 %v6211, 0.3275911
  %v6224 = vmul.f32 %v6212, 0.3275911
  %v6225 = vmul.f32 %v6213, 0.3275911
  %v6226 = vmul.f32 %v6214, 0.3275911
  %v6227 = vmul.f32 %v6215, 0.3275911
  %v6228 = vmul.f32 %v6216, 0.3275911
  %v6229 = vmul.f32 %v6217, 0.3275911
  %v6230 = vmul.f32 %v6218, 0.3275911
  %v6231 = vmul.f32 %v6219, 0.3275911
  %v6232 = vmul.f32 %v6220, 0.3275911
  %v6233 = vadd.f32 %v6221, 1.0
  %v6234 = vadd.f32 %v6222, 1.0
  %v6235 = vadd.f32 %v6223, 1.0
  %v6236 = vadd.f32 %v6224, 1.0
  %v6237 = vadd.f32 %v6225, 1.0
  %v6238 = vadd.f32 %v6226, 1.0
  %v6239 = vadd.f32 %v6227, 1.0
  %v6240 = vadd.f32 %v6228, 1.0
  %v6241 = vadd.f32 %v6229, 1.0
  %v6242 = vadd.f32 %v6230, 1.0
  %v6243 = vadd.f32 %v6231, 1.0
  %v6244 = vadd.f32 %v6232, 1.0
  %v6245 = vrcp.pop %v6233
  %v6246 = vrcp.pop %v6234
  %v6247 = vrcp.pop %v6235
  %v6248 = vrcp.pop %v6236
  %v6249 = vrcp.pop %v6237
  %v6250 = vrcp.pop %v6238
  %v6251 = vrcp.pop %v6239
  %v6252 = vrcp.pop %v6240
  %v6253 = vrcp.pop %v6241
  %v6254 = vrcp.pop %v6242
  %v6255 = vrcp.pop %v6243
  %v6256 = vrcp.pop %v6244
  %v6257 = vmul.f32 %v6245, 1.0614054
  %v6258 = vmul.f32 %v6246, 1.0614054
  %v6259 = vmul.f32 %v6247, 1.0614054
  %v6260 = vmul.f32 %v6248, 1.0614054
  %v6261 = vmul.f32 %v6249, 1.0614054
  %v6262 = vmul.f32 %v6250, 1.0614054
  %v6263 = vmul.f32 %v6251, 1.0614054
  %v6264 = vmul.f32 %v6252, 1.0614054
  %v6265 = vmul.f32 %v6253, 1.0614054
  %v6266 = vmul.f32 %v6254, 1.0614054
  %v6267 = vmul.f32 %v6255, 1.0614054
  %v6268 = vmul.f32 %v6256, 1.0614054
  %v6269 = vadd.f32 %v6257, -1.4531521
  %v6270 = vadd.f32 %v6258, -1.4531521
  %v6271 = vadd.f32 %v6259, -1.4531521
  %v6272 = vadd.f32 %v6260, -1.4531521
  %v6273 = vadd.f32 %v6261, -1.4531521
  %v6274 = vadd.f32 %v6262, -1.4531521
  %v6275 = vadd.f32 %v6263, -1.4531521
  %v6276 = vadd.f32 %v6264, -1.4531521
  %v6277 = vadd.f32 %v6265, -1.4531521
  %v6278 = vadd.f32 %v6266, -1.4531521
  %v6279 = vadd.f32 %v6267, -1.4531521
  %v6280 = vadd.f32 %v6268, -1.4531521
  %v6281 = vmul.f32 %v6245, %v6269
  %v6282 = vmul.f32 %v6246, %v6270
  %v6283 = vmul.f32 %v6247, %v6271
  %v6284 = vmul.f32 %v6248, %v6272
  %v6285 = vmul.f32 %v6249, %v6273
  %v6286 = vmul.f32 %v6250, %v6274
  %v6287 = vmul.f32 %v6251, %v6275
  %v6288 = vmul.f32 %v6252, %v6276
  %v6289 = vmul.f32 %v6253, %v6277
  %v6290 = vmul.f32 %v6254, %v6278
  %v6291 = vmul.f32 %v6255, %v6279
  %v6292 = vmul.f32 %v6256, %v6280
  %v6293 = vadd.f32 %v6281, 1.4214138
  %v6294 = vadd.f32 %v6282, 1.4214138
  %v6295 = vadd.f32 %v6283, 1.4214138
  %v6296 = vadd.f32 %v6284, 1.4214138
  %v6297 = vadd.f32 %v6285, 1.4214138
  %v6298 = vadd.f32 %v6286, 1.4214138
  %v6299 = vadd.f32 %v6287, 1.4214138
  %v6300 = vadd.f32 %v6288, 1.4214138
  %v6301 = vadd.f32 %v6289, 1.4214138
  %v6302 = vadd.f32 %v6290, 1.4214138
  %v6303 = vadd.f32 %v6291, 1.4214138
  %v6304 = vadd.f32 %v6292, 1.4214138
  %v6305 = vmul.f32 %v6245, %v6293
  %v6306 = vmul.f32 %v6246, %v6294
  %v6307 = vmul.f32 %v6247, %v6295
  %v6308 = vmul.f32 %v6248, %v6296
  %v6309 = vmul.f32 %v6249, %v6297
  %v6310 = vmul.f32 %v6250, %v6298
  %v6311 = vmul.f32 %v6251, %v6299
  %v6312 = vmul.f32 %v6252, %v6300
  %v6313 = vmul.f32 %v6253, %v6301
  %v6314 = vmul.f32 %v6254, %v6302
  %v6315 = vmul.f32 %v6255, %v6303
  %v6316 = vmul.f32 %v6256, %v6304
  %v6317 = vadd.f32 %v6305, -0.28449672
  %v6318 = vadd.f32 %v6306, -0.28449672
  %v6319 = vadd.f32 %v6307, -0.28449672
  %v6320 = vadd.f32 %v6308, -0.28449672
  %v6321 = vadd.f32 %v6309, -0.28449672
  %v6322 = vadd.f32 %v6310, -0.28449672
  %v6323 = vadd.f32 %v6311, -0.28449672
  %v6324 = vadd.f32 %v6312, -0.28449672
  %v6325 = vadd.f32 %v6313, -0.28449672
  %v6326 = vadd.f32 %v6314, -0.28449672
  %v6327 = vadd.f32 %v6315, -0.28449672
  %v6328 = vadd.f32 %v6316, -0.28449672
  %v6329 = vmul.f32 %v6245, %v6317
  %v6330 = vmul.f32 %v6246, %v6318
  %v6331 = vmul.f32 %v6247, %v6319
  %v6332 = vmul.f32 %v6248, %v6320
  %v6333 = vmul.f32 %v6249, %v6321
  %v6334 = vmul.f32 %v6250, %v6322
  %v6335 = vmul.f32 %v6251, %v6323
  %v6336 = vmul.f32 %v6252, %v6324
  %v6337 = vmul.f32 %v6253, %v6325
  %v6338 = vmul.f32 %v6254, %v6326
  %v6339 = vmul.f32 %v6255, %v6327
  %v6340 = vmul.f32 %v6256, %v6328
  %v6341 = vadd.f32 %v6329, 0.2548296
  %v6342 = vadd.f32 %v6330, 0.2548296
  %v6343 = vadd.f32 %v6331, 0.2548296
  %v6344 = vadd.f32 %v6332, 0.2548296
  %v6345 = vadd.f32 %v6333, 0.2548296
  %v6346 = vadd.f32 %v6334, 0.2548296
  %v6347 = vadd.f32 %v6335, 0.2548296
  %v6348 = vadd.f32 %v6336, 0.2548296
  %v6349 = vadd.f32 %v6337, 0.2548296
  %v6350 = vadd.f32 %v6338, 0.2548296
  %v6351 = vadd.f32 %v6339, 0.2548296
  %v6352 = vadd.f32 %v6340, 0.2548296
  %v6353 = vmul.f32 %v6245, %v6341
  %v6354 = vmul.f32 %v6246, %v6342
  %v6355 = vmul.f32 %v6247, %v6343
  %v6356 = vmul.f32 %v6248, %v6344
  %v6357 = vmul.f32 %v6249, %v6345
  %v6358 = vmul.f32 %v6250, %v6346
  %v6359 = vmul.f32 %v6251, %v6347
  %v6360 = vmul.f32 %v6252, %v6348
  %v6361 = vmul.f32 %v6253, %v6349
  %v6362 = vmul.f32 %v6254, %v6350
  %v6363 = vmul.f32 %v6255, %v6351
  %v6364 = vmul.f32 %v6256, %v6352
  %v6365 = vsub.f32 0.0, %v6209
  %v6366 = vsub.f32 0.0, %v6210
  %v6367 = vsub.f32 0.0, %v6211
  %v6368 = vsub.f32 0.0, %v6212
  %v6369 = vsub.f32 0.0, %v6213
  %v6370 = vsub.f32 0.0, %v6214
  %v6371 = vsub.f32 0.0, %v6215
  %v6372 = vsub.f32 0.0, %v6216
  %v6373 = vsub.f32 0.0, %v6217
  %v6374 = vsub.f32 0.0, %v6218
  %v6375 = vsub.f32 0.0, %v6219
  %v6376 = vsub.f32 0.0, %v6220
  %v6377 = vmul.f32 %v6365, %v6209
  %v6378 = vmul.f32 %v6366, %v6210
  %v6379 = vmul.f32 %v6367, %v6211
  %v6380 = vmul.f32 %v6368, %v6212
  %v6381 = vmul.f32 %v6369, %v6213
  %v6382 = vmul.f32 %v6370, %v6214
  %v6383 = vmul.f32 %v6371, %v6215
  %v6384 = vmul.f32 %v6372, %v6216
  %v6385 = vmul.f32 %v6373, %v6217
  %v6386 = vmul.f32 %v6374, %v6218
  %v6387 = vmul.f32 %v6375, %v6219
  %v6388 = vmul.f32 %v6376, %v6220
  %v6389 = vmul.f32 %v6377, 1.442695
  %v6390 = vpow.pop %v6389
  %v6391 = vmul.f32 %v6378, 1.442695
  %v6392 = vpow.pop %v6391
  %v6393 = vmul.f32 %v6379, 1.442695
  %v6394 = vpow.pop %v6393
  %v6395 = vmul.f32 %v6380, 1.442695
  %v6396 = vpow.pop %v6395
  %v6397 = vmul.f32 %v6381, 1.442695
  %v6398 = vpow.pop %v6397
  %v6399 = vmul.f32 %v6382, 1.442695
  %v6400 = vpow.pop %v6399
  %v6401 = vmul.f32 %v6383, 1.442695
  %v6402 = vpow.pop %v6401
  %v6403 = vmul.f32 %v6384, 1.442695
  %v6404 = vpow.pop %v6403
  %v6405 = vmul.f32 %v6385, 1.442695
  %v6406 = vpow.pop %v6405
  %v6407 = vmul.f32 %v6386, 1.442695
  %v6408 = vpow.pop %v6407
  %v6409 = vmul.f32 %v6387, 1.442695
  %v6410 = vpow.pop %v6409
  %v6411 = vmul.f32 %v6388, 1.442695
  %v6412 = vpow.pop %v6411
  %v6413 = vmul.f32 %v6353, %v6390
  %v6414 = vmul.f32 %v6354, %v6392
  %v6415 = vmul.f32 %v6355, %v6394
  %v6416 = vmul.f32 %v6356, %v6396
  %v6417 = vmul.f32 %v6357, %v6398
  %v6418 = vmul.f32 %v6358, %v6400
  %v6419 = vmul.f32 %v6359, %v6402
  %v6420 = vmul.f32 %v6360, %v6404
  %v6421 = vmul.f32 %v6361, %v6406
  %v6422 = vmul.f32 %v6362, %v6408
  %v6423 = vmul.f32 %v6363, %v6410
  %v6424 = vmul.f32 %v6364, %v6412
  %v6425 = vsub.f32 1.0, %v6413
  %v6426 = vsub.f32 1.0, %v6414
  %v6427 = vsub.f32 1.0, %v6415
  %v6428 = vsub.f32 1.0, %v6416
  %v6429 = vsub.f32 1.0, %v6417
  %v6430 = vsub.f32 1.0, %v6418
  %v6431 = vsub.f32 1.0, %v6419
  %v6432 = vsub.f32 1.0, %v6420
  %v6433 = vsub.f32 1.0, %v6421
  %v6434 = vsub.f32 1.0, %v6422
  %v6435 = vsub.f32 1.0, %v6423
  %v6436 = vsub.f32 1.0, %v6424
  %vm6437 = vcmp.ge.f32.partialorder %v6197, 0.0
  %vm6438 = vcmp.ge.f32.partialorder %v6198, 0.0
  %vm6439 = vcmp.ge.f32.partialorder %v6199, 0.0
  %vm6440 = vcmp.ge.f32.partialorder %v6200, 0.0
  %vm6441 = vcmp.ge.f32.partialorder %v6201, 0.0
  %vm6442 = vcmp.ge.f32.partialorder %v6202, 0.0
  %vm6443 = vcmp.ge.f32.partialorder %v6203, 0.0
  %vm6444 = vcmp.ge.f32.partialorder %v6204, 0.0
  %vm6445 = vcmp.ge.f32.partialorder %v6205, 0.0
  %vm6446 = vcmp.ge.f32.partialorder %v6206, 0.0
  %vm6447 = vcmp.ge.f32.partialorder %v6207, 0.0
  %vm6448 = vcmp.ge.f32.partialorder %v6208, 0.0
  %v6449 = vsub.f32 0.0, %v6425
  %v6450 = vsub.f32 0.0, %v6426
  %v6451 = vsub.f32 0.0, %v6427
  %v6452 = vsub.f32 0.0, %v6428
  %v6453 = vsub.f32 0.0, %v6429
  %v6454 = vsub.f32 0.0, %v6430
  %v6455 = vsub.f32 0.0, %v6431
  %v6456 = vsub.f32 0.0, %v6432
  %v6457 = vsub.f32 0.0, %v6433
  %v6458 = vsub.f32 0.0, %v6434
  %v6459 = vsub.f32 0.0, %v6435
  %v6460 = vsub.f32 0.0, %v6436
  %v6461 = vsel %vm6437, %v6425, %v6449
  %v6462 = vsel %vm6438, %v6426, %v6450
  %v6463 = vsel %vm6439, %v6427, %v6451
  %v6464 = vsel %vm6440, %v6428, %v6452
  %v6465 = vsel %vm6441, %v6429, %v6453
  %v6466 = vsel %vm6442, %v6430, %v6454
  %v6467 = vsel %vm6443, %v6431, %v6455
  %v6468 = vsel %vm6444, %v6432, %v6456
  %v6469 = vsel %vm6445, %v6433, %v6457
  %v6470 = vsel %vm6446, %v6434, %v6458
  %v6471 = vsel %vm6447, %v6435, %v6459
  %v6472 = vsel %vm6448, %v6436, %v6460
  %v6473 = vadd.f32 %v6461, 1.0
  %v6474 = vadd.f32 %v6462, 1.0
  %v6475 = vadd.f32 %v6463, 1.0
  %v6476 = vadd.f32 %v6464, 1.0
  %v6477 = vadd.f32 %v6465, 1.0
  %v6478 = vadd.f32 %v6466, 1.0
  %v6479 = vadd.f32 %v6467, 1.0
  %v6480 = vadd.f32 %v6468, 1.0
  %v6481 = vadd.f32 %v6469, 1.0
  %v6482 = vadd.f32 %v6470, 1.0
  %v6483 = vadd.f32 %v6471, 1.0
  %v6484 = vadd.f32 %v6472, 1.0
  %v6485 = vmul.f32 %v6185, %v6473
  %v6486 = vmul.f32 %v6186, %v6474
  %v6487 = vmul.f32 %v6187, %v6475
  %v6488 = vmul.f32 %v6188, %v6476
  %v6489 = vmul.f32 %v6189, %v6477
  %v6490 = vmul.f32 %v6190, %v6478
  %v6491 = vmul.f32 %v6191, %v6479
  %v6492 = vmul.f32 %v6192, %v6480
  %v6493 = vmul.f32 %v6193, %v6481
  %v6494 = vmul.f32 %v6194, %v6482
  %v6495 = vmul.f32 %v6195, %v6483
  %v6496 = vmul.f32 %v6196, %v6484
  %v6497 = vmax.f32 %v3013, %v3337
  %v6498 = vmax.f32 %v3014, %v3338
  %v6499 = vmax.f32 %v3015, %v3339
  %v6500 = vmax.f32 %v3016, %v3340
  %v6501 = vmax.f32 %v3017, %v3341
  %v6502 = vmax.f32 %v3018, %v3342
  %v6503 = vmax.f32 %v3019, %v3343
  %v6504 = vmax.f32 %v3020, %v3344
  %v6505 = vmax.f32 %v3021, %v3345
  %v6506 = vmax.f32 %v3022, %v3346
  %v6507 = vmax.f32 %v3023, %v3347
  %v6508 = vmax.f32 %v3024, %v3348
  %v6509 = vmax.f32 %v6161, %v6485
  %v6510 = vmax.f32 %v6162, %v6486
  %v6511 = vmax.f32 %v6163, %v6487
  %v6512 = vmax.f32 %v6164, %v6488
  %v6513 = vmax.f32 %v6165, %v6489
  %v6514 = vmax.f32 %v6166, %v6490
  %v6515 = vmax.f32 %v6167, %v6491
  %v6516 = vmax.f32 %v6168, %v6492
  %v6517 = vmax.f32 %v6169, %v6493
  %v6518 = vmax.f32 %v6170, %v6494
  %v6519 = vmax.f32 %v6171, %v6495
  %v6520 = vmax.f32 %v6172, %v6496
  %v6521 = vmax.f32 %v6497, %v6509
  %v6522 = vmax.f32 %v6498, %v6510
  %v6523 = vmax.f32 %v6499, %v6511
  %v6524 = vmax.f32 %v6500, %v6512
  %v6525 = vmax.f32 %v6501, %v6513
  %v6526 = vmax.f32 %v6502, %v6514
  %v6527 = vmax.f32 %v6503, %v6515
  %v6528 = vmax.f32 %v6504, %v6516
  %v6529 = vmax.f32 %v6505, %v6517
  %v6530 = vmax.f32 %v6506, %v6518
  %v6531 = vmax.f32 %v6507, %v6519
  %v6532 = vmax.f32 %v6508, %v6520
  %v6533 = vld [vmem:[%s1] sm:$0x1]
  %v6534 = vld [vmem:[%s1 + $0x1] sm:$0x1]
  %v6535 = vpack.c.bf16 %v6521, %v6521
  %v6536 = vpack.c.bf16 %v6522, %v6522
  %v6537 = vpack.c.bf16 %v6523, %v6523
  %v6538 = vpack.c.bf16 %v6524, %v6524
  %v6539 = vpack.c.bf16 %v6525, %v6525
  %v6540 = vpack.c.bf16 %v6526, %v6526
  %v6541 = vpack.c.bf16 %v6527, %v6527
  %v6542 = vpack.c.bf16 %v6528, %v6528
  %v6543 = vpack.c.bf16 %v6529, %v6529
  %v6544 = vpack.c.bf16 %v6530, %v6530
  %v6545 = vpack.c.bf16 %v6531, %v6531
  %v6546 = vpack.c.bf16 %v6532, %v6532
  %v6547 = vld [vmem:[%s4] sm:$0xff]
  %v6548 = vld [vmem:[%s4 + $0x8] sm:$0xff]
  %v6549 = vld [vmem:[%s4 + $0x10] sm:$0xff]
  %v6550 = vld [vmem:[%s4 + $0x18] sm:$0xf]
  %v6551 = vld [vmem:[%s4 + $0x1c] sm:$0xff]
  %v6552 = vld [vmem:[%s4 + $0x24] sm:$0xff]
  %v6553 = vld [vmem:[%s4 + $0x2c] sm:$0xff]
  %v6554 = vld [vmem:[%s4 + $0x34] sm:$0xf]
  %v6555 = vld [vmem:[%s4 + $0x38] sm:$0xff]
  %v6556 = vld [vmem:[%s4 + $0x40] sm:$0xff]
  %v6557 = vld [vmem:[%s4 + $0x48] sm:$0xff]
  %v6558 = vld [vmem:[%s4 + $0x50] sm:$0xf]
  %v6559 = vld [vmem:[%s4 + $0x54] sm:$0xff]
  %v6560 = vld [vmem:[%s4 + $0x5c] sm:$0xff]
  %v6561 = vld [vmem:[%s4 + $0x64] sm:$0xff]
  %v6562 = vld [vmem:[%s4 + $0x6c] sm:$0xf]
  %v6563 = vld [vmem:[%s4 + $0x70] sm:$0xff]
  %v6564 = vld [vmem:[%s4 + $0x78] sm:$0xff]
  %v6565 = vld [vmem:[%s4 + $0x80] sm:$0xff]
  %v6566 = vld [vmem:[%s4 + $0x88] sm:$0xf]
  %v6567 = vld [vmem:[%s4 + $0x8c] sm:$0xff]
  %v6568 = vld [vmem:[%s4 + $0x94] sm:$0xff]
  %v6569 = vld [vmem:[%s4 + $0x9c] sm:$0xff]
  %v6570 = vld [vmem:[%s4 + $0xa4] sm:$0xf]
  %v6571 = vld [vmem:[%s4 + $0xa8] sm:$0xff]
  %v6572 = vld [vmem:[%s4 + $0xb0] sm:$0xff]
  %v6573 = vld [vmem:[%s4 + $0xb8] sm:$0xff]
  %v6574 = vld [vmem:[%s4 + $0xc0] sm:$0xf]
  %v6575 = vld [vmem:[%s4 + $0xc4] sm:$0xff]
  %v6576 = vld [vmem:[%s4 + $0xcc] sm:$0xff]
  %v6577 = vld [vmem:[%s4 + $0xd4] sm:$0xff]
  %v6578 = vld [vmem:[%s4 + $0xdc] sm:$0xf]
  %v6579 = vld [vmem:[%s4 + $0xe0] sm:$0xff]
  %v6580 = vld [vmem:[%s4 + $0xe8] sm:$0xff]
  %v6581 = vld [vmem:[%s4 + $0xf0] sm:$0xff]
  %v6582 = vld [vmem:[%s4 + $0xf8] sm:$0xf]
  %v6583 = vld [vmem:[%s4 + $0xfc] sm:$0xff]
  %v6584 = vld [vmem:[%s4 + $0x104] sm:$0xff]
  %v6585 = vld [vmem:[%s4 + $0x10c] sm:$0xff]
  %v6586 = vld [vmem:[%s4 + $0x114] sm:$0xf]
  %v6587 = vld [vmem:[%s4 + $0x118] sm:$0xff]
  %v6588 = vld [vmem:[%s4 + $0x120] sm:$0xff]
  %v6589 = vld [vmem:[%s4 + $0x128] sm:$0xff]
  %v6590 = vld [vmem:[%s4 + $0x130] sm:$0xf]
  %v6591 = vld [vmem:[%s4 + $0x134] sm:$0xff]
  %v6592 = vld [vmem:[%s4 + $0x13c] sm:$0xff]
  %v6593 = vld [vmem:[%s4 + $0x144] sm:$0xff]
  %v6594 = vld [vmem:[%s4 + $0x14c] sm:$0xf]
  %v6595 = vld [vmem:[%s4 + $0x150] sm:$0xff]
  %v6596 = vld [vmem:[%s4 + $0x158] sm:$0xff]
  %v6597 = vld [vmem:[%s4 + $0x160] sm:$0xff]
  %v6598 = vld [vmem:[%s4 + $0x168] sm:$0xf]
  %v6599 = vld [vmem:[%s4 + $0x16c] sm:$0xff]
  %v6600 = vld [vmem:[%s4 + $0x174] sm:$0xff]
  %v6601 = vld [vmem:[%s4 + $0x17c] sm:$0xff]
  %v6602 = vld [vmem:[%s4 + $0x184] sm:$0xf]
  %v6603 = vld [vmem:[%s4 + $0x188] sm:$0xff]
  %v6604 = vld [vmem:[%s4 + $0x190] sm:$0xff]
  %v6605 = vld [vmem:[%s4 + $0x198] sm:$0xff]
  %v6606 = vld [vmem:[%s4 + $0x1a0] sm:$0xf]
  %v6607 = vld [vmem:[%s4 + $0x1a4] sm:$0xff]
  %v6608 = vld [vmem:[%s4 + $0x1ac] sm:$0xff]
  %v6609 = vld [vmem:[%s4 + $0x1b4] sm:$0xff]
  %v6610 = vld [vmem:[%s4 + $0x1bc] sm:$0xf]
  %v6611 = vld [vmem:[%s4 + $0x1c0] sm:$0xff]
  %v6612 = vld [vmem:[%s4 + $0x1c8] sm:$0xff]
  %v6613 = vld [vmem:[%s4 + $0x1d0] sm:$0xff]
  %v6614 = vld [vmem:[%s4 + $0x1d8] sm:$0xf]
  %v6615 = vld [vmem:[%s4 + $0x1dc] sm:$0xff]
  %v6616 = vld [vmem:[%s4 + $0x1e4] sm:$0xff]
  %v6617 = vld [vmem:[%s4 + $0x1ec] sm:$0xff]
  %v6618 = vld [vmem:[%s4 + $0x1f4] sm:$0xf]
  %v6619 = vld [vmem:[%s4 + $0x1f8] sm:$0xff]
  %v6620 = vld [vmem:[%s4 + $0x200] sm:$0xff]
  %v6621 = vld [vmem:[%s4 + $0x208] sm:$0xff]
  %v6622 = vld [vmem:[%s4 + $0x210] sm:$0xf]
  %v6623 = vld [vmem:[%s4 + $0x214] sm:$0xff]
  %v6624 = vld [vmem:[%s4 + $0x21c] sm:$0xff]
  %v6625 = vld [vmem:[%s4 + $0x224] sm:$0xff]
  %v6626 = vld [vmem:[%s4 + $0x22c] sm:$0xf]
  %v6627 = vld [vmem:[%s4 + $0x230] sm:$0xff]
  %v6628 = vld [vmem:[%s4 + $0x238] sm:$0xff]
  %v6629 = vld [vmem:[%s4 + $0x240] sm:$0xff]
  %v6630 = vld [vmem:[%s4 + $0x248] sm:$0xf]
  %v6631 = vld [vmem:[%s4 + $0x24c] sm:$0xff]
  %v6632 = vld [vmem:[%s4 + $0x254] sm:$0xff]
  %v6633 = vld [vmem:[%s4 + $0x25c] sm:$0xff]
  %v6634 = vld [vmem:[%s4 + $0x264] sm:$0xf]
  %v6635 = vld [vmem:[%s4 + $0x268] sm:$0xff]
  %v6636 = vld [vmem:[%s4 + $0x270] sm:$0xff]
  %v6637 = vld [vmem:[%s4 + $0x278] sm:$0xff]
  %v6638 = vld [vmem:[%s4 + $0x280] sm:$0xf]
  %v6639 = vld [vmem:[%s4 + $0x284] sm:$0xff]
  %v6640 = vld [vmem:[%s4 + $0x28c] sm:$0xff]
  %v6641 = vld [vmem:[%s4 + $0x294] sm:$0xff]
  %v6642 = vld [vmem:[%s4 + $0x29c] sm:$0xf]
  %v6643 = vld [vmem:[%s4 + $0x2a0] sm:$0xff]
  %v6644 = vld [vmem:[%s4 + $0x2a8] sm:$0xff]
  %v6645 = vld [vmem:[%s4 + $0x2b0] sm:$0xff]
  %v6646 = vld [vmem:[%s4 + $0x2b8] sm:$0xf]
  %v6647 = vld [vmem:[%s4 + $0x2bc] sm:$0xff]
  %v6648 = vld [vmem:[%s4 + $0x2c4] sm:$0xff]
  %v6649 = vld [vmem:[%s4 + $0x2cc] sm:$0xff]
  %v6650 = vld [vmem:[%s4 + $0x2d4] sm:$0xf]
  %v6651 = vld [vmem:[%s4 + $0x2d8] sm:$0xff]
  %v6652 = vld [vmem:[%s4 + $0x2e0] sm:$0xff]
  %v6653 = vld [vmem:[%s4 + $0x2e8] sm:$0xff]
  %v6654 = vld [vmem:[%s4 + $0x2f0] sm:$0xf]
  %v6655 = vld [vmem:[%s4 + $0x2f4] sm:$0xff]
  %v6656 = vld [vmem:[%s4 + $0x2fc] sm:$0xff]
  %v6657 = vld [vmem:[%s4 + $0x304] sm:$0xff]
  %v6658 = vld [vmem:[%s4 + $0x30c] sm:$0xf]
  %v6659 = vld [vmem:[%s4 + $0x310] sm:$0xff]
  %v6660 = vld [vmem:[%s4 + $0x318] sm:$0xff]
  %v6661 = vld [vmem:[%s4 + $0x320] sm:$0xff]
  %v6662 = vld [vmem:[%s4 + $0x328] sm:$0xf]
  %v6663 = vld [vmem:[%s4 + $0x32c] sm:$0xff]
  %v6664 = vld [vmem:[%s4 + $0x334] sm:$0xff]
  %v6665 = vld [vmem:[%s4 + $0x33c] sm:$0xff]
  %v6666 = vld [vmem:[%s4 + $0x344] sm:$0xf]
  %v6667 = vld [vmem:[%s4 + $0x348] sm:$0xff]
  %v6668 = vld [vmem:[%s4 + $0x350] sm:$0xff]
  %v6669 = vld [vmem:[%s4 + $0x358] sm:$0xff]
  %v6670 = vld [vmem:[%s4 + $0x360] sm:$0xf]
  %v6671 = vld [vmem:[%s4 + $0x364] sm:$0xff]
  %v6672 = vld [vmem:[%s4 + $0x36c] sm:$0xff]
  %v6673 = vld [vmem:[%s4 + $0x374] sm:$0xff]
  %v6674 = vld [vmem:[%s4 + $0x37c] sm:$0xf]
  %v6675 = vld [vmem:[%s4 + $0x380] sm:$0xff]
  %v6676 = vld [vmem:[%s4 + $0x388] sm:$0xff]
  %v6677 = vld [vmem:[%s4 + $0x390] sm:$0xff]
  %v6678 = vld [vmem:[%s4 + $0x398] sm:$0xf]
  %v6679 = vld [vmem:[%s4 + $0x39c] sm:$0xff]
  %v6680 = vld [vmem:[%s4 + $0x3a4] sm:$0xff]
  %v6681 = vld [vmem:[%s4 + $0x3ac] sm:$0xff]
  %v6682 = vld [vmem:[%s4 + $0x3b4] sm:$0xf]
  %v6683 = vld [vmem:[%s4 + $0x3b8] sm:$0xff]
  %v6684 = vld [vmem:[%s4 + $0x3c0] sm:$0xff]
  %v6685 = vld [vmem:[%s4 + $0x3c8] sm:$0xff]
  %v6686 = vld [vmem:[%s4 + $0x3d0] sm:$0xf]
  %v6687 = vld [vmem:[%s4 + $0x3d4] sm:$0xff]
  %v6688 = vld [vmem:[%s4 + $0x3dc] sm:$0xff]
  %v6689 = vld [vmem:[%s4 + $0x3e4] sm:$0xff]
  %v6690 = vld [vmem:[%s4 + $0x3ec] sm:$0xf]
  %v6691 = vld [vmem:[%s4 + $0x3f0] sm:$0xff]
  %v6692 = vld [vmem:[%s4 + $0x3f8] sm:$0xff]
  %v6693 = vld [vmem:[%s4 + $0x400] sm:$0xff]
  %v6694 = vld [vmem:[%s4 + $0x408] sm:$0xf]
  %v6695 = vld [vmem:[%s4 + $0x40c] sm:$0xff]
  %v6696 = vld [vmem:[%s4 + $0x414] sm:$0xff]
  %v6697 = vld [vmem:[%s4 + $0x41c] sm:$0xff]
  %v6698 = vld [vmem:[%s4 + $0x424] sm:$0xf]
  %v6699 = vld [vmem:[%s4 + $0x428] sm:$0xff]
  %v6700 = vld [vmem:[%s4 + $0x430] sm:$0xff]
  %v6701 = vld [vmem:[%s4 + $0x438] sm:$0xff]
  %v6702 = vld [vmem:[%s4 + $0x440] sm:$0xf]
  %v6703 = vld [vmem:[%s4 + $0x444] sm:$0xff]
  %v6704 = vld [vmem:[%s4 + $0x44c] sm:$0xff]
  %v6705 = vld [vmem:[%s4 + $0x454] sm:$0xff]
  %v6706 = vld [vmem:[%s4 + $0x45c] sm:$0xf]
  %v6707 = vld [vmem:[%s4 + $0x460] sm:$0xff]
  %v6708 = vld [vmem:[%s4 + $0x468] sm:$0xff]
  %v6709 = vld [vmem:[%s4 + $0x470] sm:$0xff]
  %v6710 = vld [vmem:[%s4 + $0x478] sm:$0xf]
  %v6711 = vld [vmem:[%s4 + $0x47c] sm:$0xff]
  %v6712 = vld [vmem:[%s4 + $0x484] sm:$0xff]
  %v6713 = vld [vmem:[%s4 + $0x48c] sm:$0xff]
  %v6714 = vld [vmem:[%s4 + $0x494] sm:$0xf]
  %v6715 = vld [vmem:[%s4 + $0x498] sm:$0xff]
  %v6716 = vld [vmem:[%s4 + $0x4a0] sm:$0xff]
  %v6717 = vld [vmem:[%s4 + $0x4a8] sm:$0xff]
  %v6718 = vld [vmem:[%s4 + $0x4b0] sm:$0xf]
  %v6719 = vld [vmem:[%s4 + $0x4b4] sm:$0xff]
  %v6720 = vld [vmem:[%s4 + $0x4bc] sm:$0xff]
  %v6721 = vld [vmem:[%s4 + $0x4c4] sm:$0xff]
  %v6722 = vld [vmem:[%s4 + $0x4cc] sm:$0xf]
  %v6723 = vld [vmem:[%s4 + $0x4d0] sm:$0xff]
  %v6724 = vld [vmem:[%s4 + $0x4d8] sm:$0xff]
  %v6725 = vld [vmem:[%s4 + $0x4e0] sm:$0xff]
  %v6726 = vld [vmem:[%s4 + $0x4e8] sm:$0xf]
  %v6727 = vld [vmem:[%s4 + $0x4ec] sm:$0xff]
  %v6728 = vld [vmem:[%s4 + $0x4f4] sm:$0xff]
  %v6729 = vld [vmem:[%s4 + $0x4fc] sm:$0xff]
  %v6730 = vld [vmem:[%s4 + $0x504] sm:$0xf]
  %v6731 = vld [vmem:[%s4 + $0x508] sm:$0xff]
  %v6732 = vld [vmem:[%s4 + $0x510] sm:$0xff]
  %v6733 = vld [vmem:[%s4 + $0x518] sm:$0xff]
  %v6734 = vld [vmem:[%s4 + $0x520] sm:$0xf]
  %v6735 = vld [vmem:[%s4 + $0x524] sm:$0xff]
  %v6736 = vld [vmem:[%s4 + $0x52c] sm:$0xff]
  %v6737 = vld [vmem:[%s4 + $0x534] sm:$0xff]
  %v6738 = vld [vmem:[%s4 + $0x53c] sm:$0xf]
  %v6739 = vld [vmem:[%s4 + $0x540] sm:$0xff]
  %v6740 = vld [vmem:[%s4 + $0x548] sm:$0xff]
  %v6741 = vld [vmem:[%s4 + $0x550] sm:$0xff]
  %v6742 = vld [vmem:[%s4 + $0x558] sm:$0xf]
  %v6743 = vld [vmem:[%s4 + $0x55c] sm:$0xff]
  %v6744 = vld [vmem:[%s4 + $0x564] sm:$0xff]
  %v6745 = vld [vmem:[%s4 + $0x56c] sm:$0xff]
  %v6746 = vld [vmem:[%s4 + $0x574] sm:$0xf]
  %v6747 = vld [vmem:[%s4 + $0x578] sm:$0xff]
  %v6748 = vld [vmem:[%s4 + $0x580] sm:$0xff]
  %v6749 = vld [vmem:[%s4 + $0x588] sm:$0xff]
  %v6750 = vld [vmem:[%s4 + $0x590] sm:$0xf]
  %v6751 = vld [vmem:[%s4 + $0x594] sm:$0xff]
  %v6752 = vld [vmem:[%s4 + $0x59c] sm:$0xff]
  %v6753 = vld [vmem:[%s4 + $0x5a4] sm:$0xff]
  %v6754 = vld [vmem:[%s4 + $0x5ac] sm:$0xf]
  %v6755 = vld [vmem:[%s4 + $0x5b0] sm:$0xff]
  %v6756 = vld [vmem:[%s4 + $0x5b8] sm:$0xff]
  %v6757 = vld [vmem:[%s4 + $0x5c0] sm:$0xff]
  %v6758 = vld [vmem:[%s4 + $0x5c8] sm:$0xf]
  %v6759 = vld [vmem:[%s4 + $0x5cc] sm:$0xff]
  %v6760 = vld [vmem:[%s4 + $0x5d4] sm:$0xff]
  %v6761 = vld [vmem:[%s4 + $0x5dc] sm:$0xff]
  %v6762 = vld [vmem:[%s4 + $0x5e4] sm:$0xf]
  %v6763 = vld [vmem:[%s4 + $0x5e8] sm:$0xff]
  %v6764 = vld [vmem:[%s4 + $0x5f0] sm:$0xff]
  %v6765 = vld [vmem:[%s4 + $0x5f8] sm:$0xff]
  %v6766 = vld [vmem:[%s4 + $0x600] sm:$0xf]
  %v6767 = vld [vmem:[%s4 + $0x604] sm:$0xff]
  %v6768 = vld [vmem:[%s4 + $0x60c] sm:$0xff]
  %v6769 = vld [vmem:[%s4 + $0x614] sm:$0xff]
  %v6770 = vld [vmem:[%s4 + $0x61c] sm:$0xf]
  %v6771 = vld [vmem:[%s4 + $0x620] sm:$0xff]
  %v6772 = vld [vmem:[%s4 + $0x628] sm:$0xff]
  %v6773 = vld [vmem:[%s4 + $0x630] sm:$0xff]
  %v6774 = vld [vmem:[%s4 + $0x638] sm:$0xf]
  %v6775 = vld [vmem:[%s4 + $0x63c] sm:$0xff]
  %v6776 = vld [vmem:[%s4 + $0x644] sm:$0xff]
  %v6777 = vld [vmem:[%s4 + $0x64c] sm:$0xff]
  %v6778 = vld [vmem:[%s4 + $0x654] sm:$0xf]
  %v6779 = vld [vmem:[%s4 + $0x658] sm:$0xff]
  %v6780 = vld [vmem:[%s4 + $0x660] sm:$0xff]
  %v6781 = vld [vmem:[%s4 + $0x668] sm:$0xff]
  %v6782 = vld [vmem:[%s4 + $0x670] sm:$0xf]
  %v6783 = vld [vmem:[%s4 + $0x674] sm:$0xff]
  %v6784 = vld [vmem:[%s4 + $0x67c] sm:$0xff]
  %v6785 = vld [vmem:[%s4 + $0x684] sm:$0xff]
  %v6786 = vld [vmem:[%s4 + $0x68c] sm:$0xf]
  %v6787 = vld [vmem:[%s4 + $0x690] sm:$0xff]
  %v6788 = vld [vmem:[%s4 + $0x698] sm:$0xff]
  %v6789 = vld [vmem:[%s4 + $0x6a0] sm:$0xff]
  %v6790 = vld [vmem:[%s4 + $0x6a8] sm:$0xf]
  %v6791 = vld [vmem:[%s4 + $0x6ac] sm:$0xff]
  %v6792 = vld [vmem:[%s4 + $0x6b4] sm:$0xff]
  %v6793 = vld [vmem:[%s4 + $0x6bc] sm:$0xff]
  %v6794 = vld [vmem:[%s4 + $0x6c4] sm:$0xf]
  %v6795 = vld [vmem:[%s4 + $0x6c8] sm:$0xff]
  %v6796 = vld [vmem:[%s4 + $0x6d0] sm:$0xff]
  %v6797 = vld [vmem:[%s4 + $0x6d8] sm:$0xff]
  %v6798 = vld [vmem:[%s4 + $0x6e0] sm:$0xf]
  %v6799 = vld [vmem:[%s4 + $0x6e4] sm:$0xff]
  %v6800 = vld [vmem:[%s4 + $0x6ec] sm:$0xff]
  %v6801 = vld [vmem:[%s4 + $0x6f4] sm:$0xff]
  %v6802 = vld [vmem:[%s4 + $0x6fc] sm:$0xf]
  %v6803 = vld [vmem:[%s4 + $0x700] sm:$0xff]
  %v6804 = vld [vmem:[%s4 + $0x708] sm:$0xff]
  %v6805 = vld [vmem:[%s4 + $0x710] sm:$0xff]
  %v6806 = vld [vmem:[%s4 + $0x718] sm:$0xf]
  %v6807 = vld [vmem:[%s4 + $0x71c] sm:$0xff]
  %v6808 = vld [vmem:[%s4 + $0x724] sm:$0xff]
  %v6809 = vld [vmem:[%s4 + $0x72c] sm:$0xff]
  %v6810 = vld [vmem:[%s4 + $0x734] sm:$0xf]
  %v6811 = vld [vmem:[%s4 + $0x738] sm:$0xff]
  %v6812 = vld [vmem:[%s4 + $0x740] sm:$0xff]
  %v6813 = vld [vmem:[%s4 + $0x748] sm:$0xff]
  %v6814 = vld [vmem:[%s4 + $0x750] sm:$0xf]
  %v6815 = vld [vmem:[%s4 + $0x754] sm:$0xff]
  %v6816 = vld [vmem:[%s4 + $0x75c] sm:$0xff]
  %v6817 = vld [vmem:[%s4 + $0x764] sm:$0xff]
  %v6818 = vld [vmem:[%s4 + $0x76c] sm:$0xf]
  %v6819 = vld [vmem:[%s4 + $0x770] sm:$0xff]
  %v6820 = vld [vmem:[%s4 + $0x778] sm:$0xff]
  %v6821 = vld [vmem:[%s4 + $0x780] sm:$0xff]
  %v6822 = vld [vmem:[%s4 + $0x788] sm:$0xf]
  %v6823 = vld [vmem:[%s4 + $0x78c] sm:$0xff]
  %v6824 = vld [vmem:[%s4 + $0x794] sm:$0xff]
  %v6825 = vld [vmem:[%s4 + $0x79c] sm:$0xff]
  %v6826 = vld [vmem:[%s4 + $0x7a4] sm:$0xf]
  %v6827 = vld [vmem:[%s4 + $0x7a8] sm:$0xff]
  %v6828 = vld [vmem:[%s4 + $0x7b0] sm:$0xff]
  %v6829 = vld [vmem:[%s4 + $0x7b8] sm:$0xff]
  %v6830 = vld [vmem:[%s4 + $0x7c0] sm:$0xf]
  %v6831 = vld [vmem:[%s4 + $0x7c4] sm:$0xff]
  %v6832 = vld [vmem:[%s4 + $0x7cc] sm:$0xff]
  %v6833 = vld [vmem:[%s4 + $0x7d4] sm:$0xff]
  %v6834 = vld [vmem:[%s4 + $0x7dc] sm:$0xf]
  %v6835 = vld [vmem:[%s4 + $0x7e0] sm:$0xff]
  %v6836 = vld [vmem:[%s4 + $0x7e8] sm:$0xff]
  %v6837 = vld [vmem:[%s4 + $0x7f0] sm:$0xff]
  %v6838 = vld [vmem:[%s4 + $0x7f8] sm:$0xf]
  %v6839 = vld [vmem:[%s4 + $0x7fc] sm:$0xff]
  %v6840 = vld [vmem:[%s4 + $0x804] sm:$0xff]
  %v6841 = vld [vmem:[%s4 + $0x80c] sm:$0xff]
  %v6842 = vld [vmem:[%s4 + $0x814] sm:$0xf]
  %v6843 = vld [vmem:[%s4 + $0x818] sm:$0xff]
  %v6844 = vld [vmem:[%s4 + $0x820] sm:$0xff]
  %v6845 = vld [vmem:[%s4 + $0x828] sm:$0xff]
  %v6846 = vld [vmem:[%s4 + $0x830] sm:$0xf]
  %v6847 = vld [vmem:[%s4 + $0x834] sm:$0xff]
  %v6848 = vld [vmem:[%s4 + $0x83c] sm:$0xff]
  %v6849 = vld [vmem:[%s4 + $0x844] sm:$0xff]
  %v6850 = vld [vmem:[%s4 + $0x84c] sm:$0xf]
  %v6851 = vld [vmem:[%s4 + $0x850] sm:$0xff]
  %v6852 = vld [vmem:[%s4 + $0x858] sm:$0xff]
  %v6853 = vld [vmem:[%s4 + $0x860] sm:$0xff]
  %v6854 = vld [vmem:[%s4 + $0x868] sm:$0xf]
  %v6855 = vld [vmem:[%s4 + $0x86c] sm:$0xff]
  %v6856 = vld [vmem:[%s4 + $0x874] sm:$0xff]
  %v6857 = vld [vmem:[%s4 + $0x87c] sm:$0xff]
  %v6858 = vld [vmem:[%s4 + $0x884] sm:$0xf]
  %v6859 = vld [vmem:[%s4 + $0x888] sm:$0xff]
  %v6860 = vld [vmem:[%s4 + $0x890] sm:$0xff]
  %v6861 = vld [vmem:[%s4 + $0x898] sm:$0xff]
  %v6862 = vld [vmem:[%s4 + $0x8a0] sm:$0xf]
  %v6863 = vld [vmem:[%s4 + $0x8a4] sm:$0xff]
  %v6864 = vld [vmem:[%s4 + $0x8ac] sm:$0xff]
  %v6865 = vld [vmem:[%s4 + $0x8b4] sm:$0xff]
  %v6866 = vld [vmem:[%s4 + $0x8bc] sm:$0xf]
  %v6867 = vld [vmem:[%s4 + $0x8c0] sm:$0xff]
  %v6868 = vld [vmem:[%s4 + $0x8c8] sm:$0xff]
  %v6869 = vld [vmem:[%s4 + $0x8d0] sm:$0xff]
  %v6870 = vld [vmem:[%s4 + $0x8d8] sm:$0xf]
  %v6871 = vld [vmem:[%s4 + $0x8dc] sm:$0xff]
  %v6872 = vld [vmem:[%s4 + $0x8e4] sm:$0xff]
  %v6873 = vld [vmem:[%s4 + $0x8ec] sm:$0xff]
  %v6874 = vld [vmem:[%s4 + $0x8f4] sm:$0xf]
  %v6875 = vld [vmem:[%s4 + $0x8f8] sm:$0xff]
  %v6876 = vld [vmem:[%s4 + $0x900] sm:$0xff]
  %v6877 = vld [vmem:[%s4 + $0x908] sm:$0xff]
  %v6878 = vld [vmem:[%s4 + $0x910] sm:$0xf]
  %v6879 = vld [vmem:[%s4 + $0x914] sm:$0xff]
  %v6880 = vld [vmem:[%s4 + $0x91c] sm:$0xff]
  %v6881 = vld [vmem:[%s4 + $0x924] sm:$0xff]
  %v6882 = vld [vmem:[%s4 + $0x92c] sm:$0xf]
  %v6883 = vld [vmem:[%s4 + $0x930] sm:$0xff]
  %v6884 = vld [vmem:[%s4 + $0x938] sm:$0xff]
  %v6885 = vld [vmem:[%s4 + $0x940] sm:$0xff]
  %v6886 = vld [vmem:[%s4 + $0x948] sm:$0xf]
  %v6887 = vld [vmem:[%s4 + $0x94c] sm:$0xff]
  %v6888 = vld [vmem:[%s4 + $0x954] sm:$0xff]
  %v6889 = vld [vmem:[%s4 + $0x95c] sm:$0xff]
  %v6890 = vld [vmem:[%s4 + $0x964] sm:$0xf]
  %v6891 = vld [vmem:[%s4 + $0x968] sm:$0xff]
  %v6892 = vld [vmem:[%s4 + $0x970] sm:$0xff]
  %v6893 = vld [vmem:[%s4 + $0x978] sm:$0xff]
  %v6894 = vld [vmem:[%s4 + $0x980] sm:$0xf]
  %v6895 = vld [vmem:[%s4 + $0x984] sm:$0xff]
  %v6896 = vld [vmem:[%s4 + $0x98c] sm:$0xff]
  %v6897 = vld [vmem:[%s4 + $0x994] sm:$0xff]
  %v6898 = vld [vmem:[%s4 + $0x99c] sm:$0xf]
  %v6899 = vld [vmem:[%s4 + $0x9a0] sm:$0xff]
  %v6900 = vld [vmem:[%s4 + $0x9a8] sm:$0xff]
  %v6901 = vld [vmem:[%s4 + $0x9b0] sm:$0xff]
  %v6902 = vld [vmem:[%s4 + $0x9b8] sm:$0xf]
  %v6903 = vld [vmem:[%s4 + $0x9bc] sm:$0xff]
  %v6904 = vld [vmem:[%s4 + $0x9c4] sm:$0xff]
  %v6905 = vld [vmem:[%s4 + $0x9cc] sm:$0xff]
  %v6906 = vld [vmem:[%s4 + $0x9d4] sm:$0xf]
  %v6907 = vld [vmem:[%s4 + $0x9d8] sm:$0xff]
  %v6908 = vld [vmem:[%s4 + $0x9e0] sm:$0xff]
  %v6909 = vld [vmem:[%s4 + $0x9e8] sm:$0xff]
  %v6910 = vld [vmem:[%s4 + $0x9f0] sm:$0xf]
  %v6911 = vld [vmem:[%s4 + $0x9f4] sm:$0xff]
  %v6912 = vld [vmem:[%s4 + $0x9fc] sm:$0xff]
  %v6913 = vld [vmem:[%s4 + $0xa04] sm:$0xff]
  %v6914 = vld [vmem:[%s4 + $0xa0c] sm:$0xf]
  %v6915 = vld [vmem:[%s4 + $0xa10] sm:$0xff]
  %v6916 = vld [vmem:[%s4 + $0xa18] sm:$0xff]
  %v6917 = vld [vmem:[%s4 + $0xa20] sm:$0xff]
  %v6918 = vld [vmem:[%s4 + $0xa28] sm:$0xf]
  %v6919 = vld [vmem:[%s4 + $0xa2c] sm:$0xff]
  %v6920 = vld [vmem:[%s4 + $0xa34] sm:$0xff]
  %v6921 = vld [vmem:[%s4 + $0xa3c] sm:$0xff]
  %v6922 = vld [vmem:[%s4 + $0xa44] sm:$0xf]
  %v6923 = vld [vmem:[%s4 + $0xa48] sm:$0xff]
  %v6924 = vld [vmem:[%s4 + $0xa50] sm:$0xff]
  %v6925 = vld [vmem:[%s4 + $0xa58] sm:$0xff]
  %v6926 = vld [vmem:[%s4 + $0xa60] sm:$0xf]
  %v6927 = vld [vmem:[%s4 + $0xa64] sm:$0xff]
  %v6928 = vld [vmem:[%s4 + $0xa6c] sm:$0xff]
  %v6929 = vld [vmem:[%s4 + $0xa74] sm:$0xff]
  %v6930 = vld [vmem:[%s4 + $0xa7c] sm:$0xf]
  %v6931 = vld [vmem:[%s5] sm:$0x7f]
  %6933 = vset.pattern.permute.xlu0 0
  %6934 = vperm.xlu0 %6933, %v6533
  %v6935 = vpop.permute.xlu0 %6934
  %v6937 = vlaneseq
  %v6938 = vshrl.u32 %v6937, 7
  %v6939 = vsub.s32 0, %v6938
  %v6940 = vrot.slane %v6935, %v6939
  %6942 = vset.pattern.permute.xlu0 0
  %6943 = vperm.xlu0 %6942, %v6534
  %v6944 = vpop.permute.xlu0 %6943
  %v6946 = vlaneseq
  %v6947 = vshrl.u32 %v6946, 7
  %v6948 = vsub.s32 0, %v6947
  %v6949 = vrot.slane %v6944, %v6948
  %v6951 = vlaneseq
  %v6952 = vshrl.u32 %v6951, 7
  %v6953 = vsub.s32 0, %v6952
  %v6954 = vrot.slane %v6931, %v6953
  %v6955 = vlaneseq
  %v6956 = vshrl.u32 %v6955, 7
  %v6957 = vsub.s32 1, %v6956
  %v6958 = vrot.slane %v6931, %v6957
  %v6959 = vlaneseq
  %v6960 = vshrl.u32 %v6959, 7
  %v6961 = vsub.s32 2, %v6960
  %v6962 = vrot.slane %v6931, %v6961
  %v6963 = vlaneseq
  %v6964 = vshrl.u32 %v6963, 7
  %v6965 = vsub.s32 3, %v6964
  %v6966 = vrot.slane %v6931, %v6965
  %v6967 = vlaneseq
  %v6968 = vshrl.u32 %v6967, 7
  %v6969 = vsub.s32 4, %v6968
  %v6970 = vrot.slane %v6931, %v6969
  %v6971 = vlaneseq
  %v6972 = vshrl.u32 %v6971, 7
  %v6973 = vsub.s32 5, %v6972
  %v6974 = vrot.slane %v6931, %v6973
  %v6975 = vlaneseq
  %v6976 = vshrl.u32 %v6975, 7
  %v6977 = vsub.s32 6, %v6976
  %v6978 = vrot.slane %v6931, %v6977
  %v6979 = vcombine.low %v6954, %v6958
  %v6980 = vcombine.low %v6962, %v6966
  %v6981 = vcombine.low %v6970, %v6974
  %v6983 = vunpack.c.l.s4 1966171168
  %v6984 = vunpack.c.0.s8 %v6983
  %v6985 = vlaneseq
  %v6986 = vshrl.u32 %v6985, 7
  %v6987 = vsub.s32 %v6984, %v6986
  %v6988 = vrot.slane %v6979, %v6987
  %v6990 = vunpack.c.l.s4 1966171168
  %v6991 = vunpack.c.0.s8 %v6990
  %v6992 = vlaneseq
  %v6993 = vshrl.u32 %v6992, 7
  %v6994 = vsub.s32 %v6991, %v6993
  %v6995 = vrot.slane %v6980, %v6994
  %v6997 = vunpack.c.l.s4 1966171168
  %v6998 = vunpack.c.0.s8 %v6997
  %v6999 = vlaneseq
  %v7000 = vshrl.u32 %v6999, 7
  %v7001 = vsub.s32 %v6998, %v7000
  %v7002 = vrot.slane %v6981, %v7001
  %v7004 = vunpack.c.l.s4 1966171168
  %v7005 = vunpack.c.0.s8 %v7004
  %v7006 = vlaneseq
  %v7007 = vshrl.u32 %v7006, 7
  %v7008 = vsub.s32 %v7005, %v7007
  %v7009 = vrot.slane %v6978, %v7008
  %v7010 = vcombine.low %v6988, %v6995
  %v7011 = vcombine.high %v6988, %v6995
  %v7012 = vcombine.low %v7002, %v7009
  %v7013 = vcombine.high %v7002, %v7009
  %v7015 = vunpack.c.l.s4 1966171168
  %v7016 = vunpack.c.0.s8 %v7015
  %v7017 = vlaneseq
  %v7018 = vshrl.u32 %v7017, 7
  %v7019 = vsub.s32 %v7016, %v7018
  %v7020 = vrot.slane %v7010, %v7019
  %v7022 = vunpack.c.l.s4 1966171168
  %v7023 = vunpack.c.0.s8 %v7022
  %v7024 = vlaneseq
  %v7025 = vshrl.u32 %v7024, 7
  %v7026 = vsub.s32 %v7023, %v7025
  %v7027 = vrot.slane %v7011, %v7026
  %v7029 = vunpack.c.l.s4 1966171168
  %v7030 = vunpack.c.0.s8 %v7029
  %v7031 = vlaneseq
  %v7032 = vshrl.u32 %v7031, 7
  %v7033 = vsub.s32 %v7030, %v7032
  %v7034 = vrot.slane %v7012, %v7033
  %v7036 = vunpack.c.l.s4 1966171168
  %v7037 = vunpack.c.0.s8 %v7036
  %v7038 = vlaneseq
  %v7039 = vshrl.u32 %v7038, 7
  %v7040 = vsub.s32 %v7037, %v7039
  %v7041 = vrot.slane %v7013, %v7040
  %v7042 = vcombine.low %v7020, %v7034
  %v7043 = vcombine.low %v7027, %v7041
  %v7046 = vmul.f32 %v6940, %v7042
  %v7047 = vmul.f32 %v6949, %v7043
  %v7060 = vunpack.c.l.b16 %v6535
  %v7061 = vunpack.c.l.b16 %v6536
  %v7062 = vunpack.c.l.b16 %v6537
  %v7063 = vunpack.c.l.b16 %v6538
  %v7064 = vunpack.c.l.b16 %v6539
  %v7065 = vunpack.c.l.b16 %v6540
  %v7066 = vunpack.c.l.b16 %v6541
  %v7067 = vunpack.c.l.b16 %v6542
  %v7068 = vunpack.c.l.b16 %v6543
  %v7069 = vunpack.c.l.b16 %v6544
  %v7070 = vunpack.c.l.b16 %v6545
  %v7071 = vunpack.c.l.b16 %v6546
  %v7072 = vrot.slane %v7066, 7
  %vm7073 = vcmask 1041409
  %v7074 = vsel %vm7073, %v7072, %v7060
  %v7075 = vrot.slane %v7067, 7
  %v7076 = vsel %vm7073, %v7075, %v7061
  %v7077 = vrot.slane %v7068, 7
  %v7078 = vsel %vm7073, %v7077, %v7062
  %v7079 = vrot.slane %v7069, 7
  %v7080 = vsel %vm7073, %v7079, %v7063
  %v7081 = vrot.slane %v7070, 7
  %v7082 = vsel %vm7073, %v7081, %v7064
  %v7083 = vrot.slane %v7071, 7
  %v7084 = vsel %vm7073, %v7083, %v7065
  %v7085 = vpack.c.b16 %v7074, %v7074
  %v7086 = vpack.c.b16 %v7076, %v7076
  %v7087 = vpack.c.b16 %v7078, %v7078
  %v7088 = vpack.c.b16 %v7080, %v7080
  %v7089 = vpack.c.b16 %v7082, %v7082
  %v7090 = vpack.c.b16 %v7084, %v7084
  %v7481 = vunpack.c.l.b16 %v6547
  %v7482 = vunpack.c.h.b16 %v6547
  %v7483 = vunpack.c.l.b16 %v6548
  %v7484 = vunpack.c.h.b16 %v6548
  %v7485 = vunpack.c.l.b16 %v6549
  %v7486 = vunpack.c.h.b16 %v6549
  %v7487 = vunpack.c.l.b16 %v6550
  %v7488 = vunpack.c.l.b16 %v6551
  %v7489 = vunpack.c.h.b16 %v6551
  %v7490 = vunpack.c.l.b16 %v6552
  %v7491 = vunpack.c.h.b16 %v6552
  %v7492 = vunpack.c.l.b16 %v6553
  %v7493 = vunpack.c.h.b16 %v6553
  %v7494 = vunpack.c.l.b16 %v6554
  %v7495 = vunpack.c.l.b16 %v6555
  %v7496 = vunpack.c.h.b16 %v6555
  %v7497 = vunpack.c.l.b16 %v6556
  %v7498 = vunpack.c.h.b16 %v6556
  %v7499 = vunpack.c.l.b16 %v6557
  %v7500 = vunpack.c.h.b16 %v6557
  %v7501 = vunpack.c.l.b16 %v6558
  %v7502 = vunpack.c.l.b16 %v6559
  %v7503 = vunpack.c.h.b16 %v6559
  %v7504 = vunpack.c.l.b16 %v6560
  %v7505 = vunpack.c.h.b16 %v6560
  %v7506 = vunpack.c.l.b16 %v6561
  %v7507 = vunpack.c.h.b16 %v6561
  %v7508 = vunpack.c.l.b16 %v6562
  %v7509 = vunpack.c.l.b16 %v6563
  %v7510 = vunpack.c.h.b16 %v6563
  %v7511 = vunpack.c.l.b16 %v6564
  %v7512 = vunpack.c.h.b16 %v6564
  %v7513 = vunpack.c.l.b16 %v6565
  %v7514 = vunpack.c.h.b16 %v6565
  %v7515 = vunpack.c.l.b16 %v6566
  %v7516 = vunpack.c.l.b16 %v6567
  %v7517 = vunpack.c.h.b16 %v6567
  %v7518 = vunpack.c.l.b16 %v6568
  %v7519 = vunpack.c.h.b16 %v6568
  %v7520 = vunpack.c.l.b16 %v6569
  %v7521 = vunpack.c.h.b16 %v6569
  %v7522 = vunpack.c.l.b16 %v6570
  %v7523 = vunpack.c.l.b16 %v6571
  %v7524 = vunpack.c.h.b16 %v6571
  %v7525 = vunpack.c.l.b16 %v6572
  %v7526 = vunpack.c.h.b16 %v6572
  %v7527 = vunpack.c.l.b16 %v6573
  %v7528 = vunpack.c.h.b16 %v6573
  %v7529 = vunpack.c.l.b16 %v6574
  %v7530 = vunpack.c.l.b16 %v6575
  %v7531 = vunpack.c.h.b16 %v6575
  %v7532 = vunpack.c.l.b16 %v6576
  %v7533 = vunpack.c.h.b16 %v6576
  %v7534 = vunpack.c.l.b16 %v6577
  %v7535 = vunpack.c.h.b16 %v6577
  %v7536 = vunpack.c.l.b16 %v6578
  %v7537 = vunpack.c.l.b16 %v6579
  %v7538 = vunpack.c.h.b16 %v6579
  %v7539 = vunpack.c.l.b16 %v6580
  %v7540 = vunpack.c.h.b16 %v6580
  %v7541 = vunpack.c.l.b16 %v6581
  %v7542 = vunpack.c.h.b16 %v6581
  %v7543 = vunpack.c.l.b16 %v6582
  %v7544 = vunpack.c.l.b16 %v6583
  %v7545 = vunpack.c.h.b16 %v6583
  %v7546 = vunpack.c.l.b16 %v6584
  %v7547 = vunpack.c.h.b16 %v6584
  %v7548 = vunpack.c.l.b16 %v6585
  %v7549 = vunpack.c.h.b16 %v6585
  %v7550 = vunpack.c.l.b16 %v6586
  %v7551 = vunpack.c.l.b16 %v6587
  %v7552 = vunpack.c.h.b16 %v6587
  %v7553 = vunpack.c.l.b16 %v6588
  %v7554 = vunpack.c.h.b16 %v6588
  %v7555 = vunpack.c.l.b16 %v6589
  %v7556 = vunpack.c.h.b16 %v6589
  %v7557 = vunpack.c.l.b16 %v6590
  %v7558 = vunpack.c.l.b16 %v6591
  %v7559 = vunpack.c.h.b16 %v6591
  %v7560 = vunpack.c.l.b16 %v6592
  %v7561 = vunpack.c.h.b16 %v6592
  %v7562 = vunpack.c.l.b16 %v6593
  %v7563 = vunpack.c.h.b16 %v6593
  %v7564 = vunpack.c.l.b16 %v6594
  %v7565 = vunpack.c.l.b16 %v6595
  %v7566 = vunpack.c.h.b16 %v6595
  %v7567 = vunpack.c.l.b16 %v6596
  %v7568 = vunpack.c.h.b16 %v6596
  %v7569 = vunpack.c.l.b16 %v6597
  %v7570 = vunpack.c.h.b16 %v6597
  %v7571 = vunpack.c.l.b16 %v6598
  %v7572 = vunpack.c.l.b16 %v6599
  %v7573 = vunpack.c.h.b16 %v6599
  %v7574 = vunpack.c.l.b16 %v6600
  %v7575 = vunpack.c.h.b16 %v6600
  %v7576 = vunpack.c.l.b16 %v6601
  %v7577 = vunpack.c.h.b16 %v6601
  %v7578 = vunpack.c.l.b16 %v6602
  %v7579 = vunpack.c.l.b16 %v6603
  %v7580 = vunpack.c.h.b16 %v6603
  %v7581 = vunpack.c.l.b16 %v6604
  %v7582 = vunpack.c.h.b16 %v6604
  %v7583 = vunpack.c.l.b16 %v6605
  %v7584 = vunpack.c.h.b16 %v6605
  %v7585 = vunpack.c.l.b16 %v6606
  %v7586 = vunpack.c.l.b16 %v6607
  %v7587 = vunpack.c.h.b16 %v6607
  %v7588 = vunpack.c.l.b16 %v6608
  %v7589 = vunpack.c.h.b16 %v6608
  %v7590 = vunpack.c.l.b16 %v6609
  %v7591 = vunpack.c.h.b16 %v6609
  %v7592 = vunpack.c.l.b16 %v6610
  %v7593 = vunpack.c.l.b16 %v6611
  %v7594 = vunpack.c.h.b16 %v6611
  %v7595 = vunpack.c.l.b16 %v6612
  %v7596 = vunpack.c.h.b16 %v6612
  %v7597 = vunpack.c.l.b16 %v6613
  %v7598 = vunpack.c.h.b16 %v6613
  %v7599 = vunpack.c.l.b16 %v6614
  %v7600 = vunpack.c.l.b16 %v6615
  %v7601 = vunpack.c.h.b16 %v6615
  %v7602 = vunpack.c.l.b16 %v6616
  %v7603 = vunpack.c.h.b16 %v6616
  %v7604 = vunpack.c.l.b16 %v6617
  %v7605 = vunpack.c.h.b16 %v6617
  %v7606 = vunpack.c.l.b16 %v6618
  %v7607 = vunpack.c.l.b16 %v6619
  %v7608 = vunpack.c.h.b16 %v6619
  %v7609 = vunpack.c.l.b16 %v6620
  %v7610 = vunpack.c.h.b16 %v6620
  %v7611 = vunpack.c.l.b16 %v6621
  %v7612 = vunpack.c.h.b16 %v6621
  %v7613 = vunpack.c.l.b16 %v6622
  %v7614 = vunpack.c.l.b16 %v6623
  %v7615 = vunpack.c.h.b16 %v6623
  %v7616 = vunpack.c.l.b16 %v6624
  %v7617 = vunpack.c.h.b16 %v6624
  %v7618 = vunpack.c.l.b16 %v6625
  %v7619 = vunpack.c.h.b16 %v6625
  %v7620 = vunpack.c.l.b16 %v6626
  %v7621 = vunpack.c.l.b16 %v6627
  %v7622 = vunpack.c.h.b16 %v6627
  %v7623 = vunpack.c.l.b16 %v6628
  %v7624 = vunpack.c.h.b16 %v6628
  %v7625 = vunpack.c.l.b16 %v6629
  %v7626 = vunpack.c.h.b16 %v6629
  %v7627 = vunpack.c.l.b16 %v6630
  %v7628 = vunpack.c.l.b16 %v6631
  %v7629 = vunpack.c.h.b16 %v6631
  %v7630 = vunpack.c.l.b16 %v6632
  %v7631 = vunpack.c.h.b16 %v6632
  %v7632 = vunpack.c.l.b16 %v6633
  %v7633 = vunpack.c.h.b16 %v6633
  %v7634 = vunpack.c.l.b16 %v6634
  %v7635 = vunpack.c.l.b16 %v6635
  %v7636 = vunpack.c.h.b16 %v6635
  %v7637 = vunpack.c.l.b16 %v6636
  %v7638 = vunpack.c.h.b16 %v6636
  %v7639 = vunpack.c.l.b16 %v6637
  %v7640 = vunpack.c.h.b16 %v6637
  %v7641 = vunpack.c.l.b16 %v6638
  %v7642 = vunpack.c.l.b16 %v6639
  %v7643 = vunpack.c.h.b16 %v6639
  %v7644 = vunpack.c.l.b16 %v6640
  %v7645 = vunpack.c.h.b16 %v6640
  %v7646 = vunpack.c.l.b16 %v6641
  %v7647 = vunpack.c.h.b16 %v6641
  %v7648 = vunpack.c.l.b16 %v6642
  %v7649 = vunpack.c.l.b16 %v6643
  %v7650 = vunpack.c.h.b16 %v6643
  %v7651 = vunpack.c.l.b16 %v6644
  %v7652 = vunpack.c.h.b16 %v6644
  %v7653 = vunpack.c.l.b16 %v6645
  %v7654 = vunpack.c.h.b16 %v6645
  %v7655 = vunpack.c.l.b16 %v6646
  %v7656 = vunpack.c.l.b16 %v6647
  %v7657 = vunpack.c.h.b16 %v6647
  %v7658 = vunpack.c.l.b16 %v6648
  %v7659 = vunpack.c.h.b16 %v6648
  %v7660 = vunpack.c.l.b16 %v6649
  %v7661 = vunpack.c.h.b16 %v6649
  %v7662 = vunpack.c.l.b16 %v6650
  %v7663 = vunpack.c.l.b16 %v6651
  %v7664 = vunpack.c.h.b16 %v6651
  %v7665 = vunpack.c.l.b16 %v6652
  %v7666 = vunpack.c.h.b16 %v6652
  %v7667 = vunpack.c.l.b16 %v6653
  %v7668 = vunpack.c.h.b16 %v6653
  %v7669 = vunpack.c.l.b16 %v6654
  %v7670 = vunpack.c.l.b16 %v6655
  %v7671 = vunpack.c.h.b16 %v6655
  %v7672 = vunpack.c.l.b16 %v6656
  %v7673 = vunpack.c.h.b16 %v6656
  %v7674 = vunpack.c.l.b16 %v6657
  %v7675 = vunpack.c.h.b16 %v6657
  %v7676 = vunpack.c.l.b16 %v6658
  %v7677 = vunpack.c.l.b16 %v6659
  %v7678 = vunpack.c.h.b16 %v6659
  %v7679 = vunpack.c.l.b16 %v6660
  %v7680 = vunpack.c.h.b16 %v6660
  %v7681 = vunpack.c.l.b16 %v6661
  %v7682 = vunpack.c.h.b16 %v6661
  %v7683 = vunpack.c.l.b16 %v6662
  %v7684 = vunpack.c.l.b16 %v6663
  %v7685 = vunpack.c.h.b16 %v6663
  %v7686 = vunpack.c.l.b16 %v6664
  %v7687 = vunpack.c.h.b16 %v6664
  %v7688 = vunpack.c.l.b16 %v6665
  %v7689 = vunpack.c.h.b16 %v6665
  %v7690 = vunpack.c.l.b16 %v6666
  %v7691 = vunpack.c.l.b16 %v6667
  %v7692 = vunpack.c.h.b16 %v6667
  %v7693 = vunpack.c.l.b16 %v6668
  %v7694 = vunpack.c.h.b16 %v6668
  %v7695 = vunpack.c.l.b16 %v6669
  %v7696 = vunpack.c.h.b16 %v6669
  %v7697 = vunpack.c.l.b16 %v6670
  %v7698 = vunpack.c.l.b16 %v6671
  %v7699 = vunpack.c.h.b16 %v6671
  %v7700 = vunpack.c.l.b16 %v6672
  %v7701 = vunpack.c.h.b16 %v6672
  %v7702 = vunpack.c.l.b16 %v6673
  %v7703 = vunpack.c.h.b16 %v6673
  %v7704 = vunpack.c.l.b16 %v6674
  %v7705 = vunpack.c.l.b16 %v6675
  %v7706 = vunpack.c.h.b16 %v6675
  %v7707 = vunpack.c.l.b16 %v6676
  %v7708 = vunpack.c.h.b16 %v6676
  %v7709 = vunpack.c.l.b16 %v6677
  %v7710 = vunpack.c.h.b16 %v6677
  %v7711 = vunpack.c.l.b16 %v6678
  %v7712 = vunpack.c.l.b16 %v6679
  %v7713 = vunpack.c.h.b16 %v6679
  %v7714 = vunpack.c.l.b16 %v6680
  %v7715 = vunpack.c.h.b16 %v6680
  %v7716 = vunpack.c.l.b16 %v6681
  %v7717 = vunpack.c.h.b16 %v6681
  %v7718 = vunpack.c.l.b16 %v6682
  %v7719 = vunpack.c.l.b16 %v6683
  %v7720 = vunpack.c.h.b16 %v6683
  %v7721 = vunpack.c.l.b16 %v6684
  %v7722 = vunpack.c.h.b16 %v6684
  %v7723 = vunpack.c.l.b16 %v6685
  %v7724 = vunpack.c.h.b16 %v6685
  %v7725 = vunpack.c.l.b16 %v6686
  %v7726 = vunpack.c.l.b16 %v6687
  %v7727 = vunpack.c.h.b16 %v6687
  %v7728 = vunpack.c.l.b16 %v6688
  %v7729 = vunpack.c.h.b16 %v6688
  %v7730 = vunpack.c.l.b16 %v6689
  %v7731 = vunpack.c.h.b16 %v6689
  %v7732 = vunpack.c.l.b16 %v6690
  %v7733 = vunpack.c.l.b16 %v6691
  %v7734 = vunpack.c.h.b16 %v6691
  %v7735 = vunpack.c.l.b16 %v6692
  %v7736 = vunpack.c.h.b16 %v6692
  %v7737 = vunpack.c.l.b16 %v6693
  %v7738 = vunpack.c.h.b16 %v6693
  %v7739 = vunpack.c.l.b16 %v6694
  %v7740 = vunpack.c.l.b16 %v6695
  %v7741 = vunpack.c.h.b16 %v6695
  %v7742 = vunpack.c.l.b16 %v6696
  %v7743 = vunpack.c.h.b16 %v6696
  %v7744 = vunpack.c.l.b16 %v6697
  %v7745 = vunpack.c.h.b16 %v6697
  %v7746 = vunpack.c.l.b16 %v6698
  %v7747 = vunpack.c.l.b16 %v6699
  %v7748 = vunpack.c.h.b16 %v6699
  %v7749 = vunpack.c.l.b16 %v6700
  %v7750 = vunpack.c.h.b16 %v6700
  %v7751 = vunpack.c.l.b16 %v6701
  %v7752 = vunpack.c.h.b16 %v6701
  %v7753 = vunpack.c.l.b16 %v6702
  %v7754 = vunpack.c.l.b16 %v6703
  %v7755 = vunpack.c.h.b16 %v6703
  %v7756 = vunpack.c.l.b16 %v6704
  %v7757 = vunpack.c.h.b16 %v6704
  %v7758 = vunpack.c.l.b16 %v6705
  %v7759 = vunpack.c.h.b16 %v6705
  %v7760 = vunpack.c.l.b16 %v6706
  %v7761 = vunpack.c.l.b16 %v6707
  %v7762 = vunpack.c.h.b16 %v6707
  %v7763 = vunpack.c.l.b16 %v6708
  %v7764 = vunpack.c.h.b16 %v6708
  %v7765 = vunpack.c.l.b16 %v6709
  %v7766 = vunpack.c.h.b16 %v6709
  %v7767 = vunpack.c.l.b16 %v6710
  %v7768 = vunpack.c.l.b16 %v6711
  %v7769 = vunpack.c.h.b16 %v6711
  %v7770 = vunpack.c.l.b16 %v6712
  %v7771 = vunpack.c.h.b16 %v6712
  %v7772 = vunpack.c.l.b16 %v6713
  %v7773 = vunpack.c.h.b16 %v6713
  %v7774 = vunpack.c.l.b16 %v6714
  %v7775 = vunpack.c.l.b16 %v6715
  %v7776 = vunpack.c.h.b16 %v6715
  %v7777 = vunpack.c.l.b16 %v6716
  %v7778 = vunpack.c.h.b16 %v6716
  %v7779 = vunpack.c.l.b16 %v6717
  %v7780 = vunpack.c.h.b16 %v6717
  %v7781 = vunpack.c.l.b16 %v6718
  %v7782 = vunpack.c.l.b16 %v6719
  %v7783 = vunpack.c.h.b16 %v6719
  %v7784 = vunpack.c.l.b16 %v6720
  %v7785 = vunpack.c.h.b16 %v6720
  %v7786 = vunpack.c.l.b16 %v6721
  %v7787 = vunpack.c.h.b16 %v6721
  %v7788 = vunpack.c.l.b16 %v6722
  %v7789 = vunpack.c.l.b16 %v6723
  %v7790 = vunpack.c.h.b16 %v6723
  %v7791 = vunpack.c.l.b16 %v6724
  %v7792 = vunpack.c.h.b16 %v6724
  %v7793 = vunpack.c.l.b16 %v6725
  %v7794 = vunpack.c.h.b16 %v6725
  %v7795 = vunpack.c.l.b16 %v6726
  %v7796 = vunpack.c.l.b16 %v6727
  %v7797 = vunpack.c.h.b16 %v6727
  %v7798 = vunpack.c.l.b16 %v6728
  %v7799 = vunpack.c.h.b16 %v6728
  %v7800 = vunpack.c.l.b16 %v6729
  %v7801 = vunpack.c.h.b16 %v6729
  %v7802 = vunpack.c.l.b16 %v6730
  %v7803 = vunpack.c.l.b16 %v6731
  %v7804 = vunpack.c.h.b16 %v6731
  %v7805 = vunpack.c.l.b16 %v6732
  %v7806 = vunpack.c.h.b16 %v6732
  %v7807 = vunpack.c.l.b16 %v6733
  %v7808 = vunpack.c.h.b16 %v6733
  %v7809 = vunpack.c.l.b16 %v6734
  %v7810 = vunpack.c.l.b16 %v6735
  %v7811 = vunpack.c.h.b16 %v6735
  %v7812 = vunpack.c.l.b16 %v6736
  %v7813 = vunpack.c.h.b16 %v6736
  %v7814 = vunpack.c.l.b16 %v6737
  %v7815 = vunpack.c.h.b16 %v6737
  %v7816 = vunpack.c.l.b16 %v6738
  %v7817 = vunpack.c.l.b16 %v6739
  %v7818 = vunpack.c.h.b16 %v6739
  %v7819 = vunpack.c.l.b16 %v6740
  %v7820 = vunpack.c.h.b16 %v6740
  %v7821 = vunpack.c.l.b16 %v6741
  %v7822 = vunpack.c.h.b16 %v6741
  %v7823 = vunpack.c.l.b16 %v6742
  %v7824 = vunpack.c.l.b16 %v6743
  %v7825 = vunpack.c.h.b16 %v6743
  %v7826 = vunpack.c.l.b16 %v6744
  %v7827 = vunpack.c.h.b16 %v6744
  %v7828 = vunpack.c.l.b16 %v6745
  %v7829 = vunpack.c.h.b16 %v6745
  %v7830 = vunpack.c.l.b16 %v6746
  %v7831 = vunpack.c.l.b16 %v6747
  %v7832 = vunpack.c.h.b16 %v6747
  %v7833 = vunpack.c.l.b16 %v6748
  %v7834 = vunpack.c.h.b16 %v6748
  %v7835 = vunpack.c.l.b16 %v6749
  %v7836 = vunpack.c.h.b16 %v6749
  %v7837 = vunpack.c.l.b16 %v6750
  %v7838 = vunpack.c.l.b16 %v6751
  %v7839 = vunpack.c.h.b16 %v6751
  %v7840 = vunpack.c.l.b16 %v6752
  %v7841 = vunpack.c.h.b16 %v6752
  %v7842 = vunpack.c.l.b16 %v6753
  %v7843 = vunpack.c.h.b16 %v6753
  %v7844 = vunpack.c.l.b16 %v6754
  %v7845 = vunpack.c.l.b16 %v6755
  %v7846 = vunpack.c.h.b16 %v6755
  %v7847 = vunpack.c.l.b16 %v6756
  %v7848 = vunpack.c.h.b16 %v6756
  %v7849 = vunpack.c.l.b16 %v6757
  %v7850 = vunpack.c.h.b16 %v6757
  %v7851 = vunpack.c.l.b16 %v6758
  %v7852 = vunpack.c.l.b16 %v6759
  %v7853 = vunpack.c.h.b16 %v6759
  %v7854 = vunpack.c.l.b16 %v6760
  %v7855 = vunpack.c.h.b16 %v6760
  %v7856 = vunpack.c.l.b16 %v6761
  %v7857 = vunpack.c.h.b16 %v6761
  %v7858 = vunpack.c.l.b16 %v6762
  %v7859 = vunpack.c.l.b16 %v6763
  %v7860 = vunpack.c.h.b16 %v6763
  %v7861 = vunpack.c.l.b16 %v6764
  %v7862 = vunpack.c.h.b16 %v6764
  %v7863 = vunpack.c.l.b16 %v6765
  %v7864 = vunpack.c.h.b16 %v6765
  %v7865 = vunpack.c.l.b16 %v6766
  %v7866 = vunpack.c.l.b16 %v6767
  %v7867 = vunpack.c.h.b16 %v6767
  %v7868 = vunpack.c.l.b16 %v6768
  %v7869 = vunpack.c.h.b16 %v6768
  %v7870 = vunpack.c.l.b16 %v6769
  %v7871 = vunpack.c.h.b16 %v6769
  %v7872 = vunpack.c.l.b16 %v6770
  %v7873 = vunpack.c.l.b16 %v6771
  %v7874 = vunpack.c.h.b16 %v6771
  %v7875 = vunpack.c.l.b16 %v6772
  %v7876 = vunpack.c.h.b16 %v6772
  %v7877 = vunpack.c.l.b16 %v6773
  %v7878 = vunpack.c.h.b16 %v6773
  %v7879 = vunpack.c.l.b16 %v6774
  %v7880 = vunpack.c.l.b16 %v6775
  %v7881 = vunpack.c.h.b16 %v6775
  %v7882 = vunpack.c.l.b16 %v6776
  %v7883 = vunpack.c.h.b16 %v6776
  %v7884 = vunpack.c.l.b16 %v6777
  %v7885 = vunpack.c.h.b16 %v6777
  %v7886 = vunpack.c.l.b16 %v6778
  %v7887 = vunpack.c.l.b16 %v6779
  %v7888 = vunpack.c.h.b16 %v6779
  %v7889 = vunpack.c.l.b16 %v6780
  %v7890 = vunpack.c.h.b16 %v6780
  %v7891 = vunpack.c.l.b16 %v6781
  %v7892 = vunpack.c.h.b16 %v6781
  %v7893 = vunpack.c.l.b16 %v6782
  %v7894 = vunpack.c.l.b16 %v6783
  %v7895 = vunpack.c.h.b16 %v6783
  %v7896 = vunpack.c.l.b16 %v6784
  %v7897 = vunpack.c.h.b16 %v6784
  %v7898 = vunpack.c.l.b16 %v6785
  %v7899 = vunpack.c.h.b16 %v6785
  %v7900 = vunpack.c.l.b16 %v6786
  %v7901 = vunpack.c.l.b16 %v6787
  %v7902 = vunpack.c.h.b16 %v6787
  %v7903 = vunpack.c.l.b16 %v6788
  %v7904 = vunpack.c.h.b16 %v6788
  %v7905 = vunpack.c.l.b16 %v6789
  %v7906 = vunpack.c.h.b16 %v6789
  %v7907 = vunpack.c.l.b16 %v6790
  %v7908 = vunpack.c.l.b16 %v6791
  %v7909 = vunpack.c.h.b16 %v6791
  %v7910 = vunpack.c.l.b16 %v6792
  %v7911 = vunpack.c.h.b16 %v6792
  %v7912 = vunpack.c.l.b16 %v6793
  %v7913 = vunpack.c.h.b16 %v6793
  %v7914 = vunpack.c.l.b16 %v6794
  %v7915 = vunpack.c.l.b16 %v6795
  %v7916 = vunpack.c.h.b16 %v6795
  %v7917 = vunpack.c.l.b16 %v6796
  %v7918 = vunpack.c.h.b16 %v6796
  %v7919 = vunpack.c.l.b16 %v6797
  %v7920 = vunpack.c.h.b16 %v6797
  %v7921 = vunpack.c.l.b16 %v6798
  %v7922 = vunpack.c.l.b16 %v6799
  %v7923 = vunpack.c.h.b16 %v6799
  %v7924 = vunpack.c.l.b16 %v6800
  %v7925 = vunpack.c.h.b16 %v6800
  %v7926 = vunpack.c.l.b16 %v6801
  %v7927 = vunpack.c.h.b16 %v6801
  %v7928 = vunpack.c.l.b16 %v6802
  %v7929 = vunpack.c.l.b16 %v6803
  %v7930 = vunpack.c.h.b16 %v6803
  %v7931 = vunpack.c.l.b16 %v6804
  %v7932 = vunpack.c.h.b16 %v6804
  %v7933 = vunpack.c.l.b16 %v6805
  %v7934 = vunpack.c.h.b16 %v6805
  %v7935 = vunpack.c.l.b16 %v6806
  %v7936 = vunpack.c.l.b16 %v6807
  %v7937 = vunpack.c.h.b16 %v6807
  %v7938 = vunpack.c.l.b16 %v6808
  %v7939 = vunpack.c.h.b16 %v6808
  %v7940 = vunpack.c.l.b16 %v6809
  %v7941 = vunpack.c.h.b16 %v6809
  %v7942 = vunpack.c.l.b16 %v6810
  %v7943 = vunpack.c.l.b16 %v6811
  %v7944 = vunpack.c.h.b16 %v6811
  %v7945 = vunpack.c.l.b16 %v6812
  %v7946 = vunpack.c.h.b16 %v6812
  %v7947 = vunpack.c.l.b16 %v6813
  %v7948 = vunpack.c.h.b16 %v6813
  %v7949 = vunpack.c.l.b16 %v6814
  %v7950 = vunpack.c.l.b16 %v6815
  %v7951 = vunpack.c.h.b16 %v6815
  %v7952 = vunpack.c.l.b16 %v6816
  %v7953 = vunpack.c.h.b16 %v6816
  %v7954 = vunpack.c.l.b16 %v6817
  %v7955 = vunpack.c.h.b16 %v6817
  %v7956 = vunpack.c.l.b16 %v6818
  %v7957 = vunpack.c.l.b16 %v6819
  %v7958 = vunpack.c.h.b16 %v6819
  %v7959 = vunpack.c.l.b16 %v6820
  %v7960 = vunpack.c.h.b16 %v6820
  %v7961 = vunpack.c.l.b16 %v6821
  %v7962 = vunpack.c.h.b16 %v6821
  %v7963 = vunpack.c.l.b16 %v6822
  %v7964 = vunpack.c.l.b16 %v6823
  %v7965 = vunpack.c.h.b16 %v6823
  %v7966 = vunpack.c.l.b16 %v6824
  %v7967 = vunpack.c.h.b16 %v6824
  %v7968 = vunpack.c.l.b16 %v6825
  %v7969 = vunpack.c.h.b16 %v6825
  %v7970 = vunpack.c.l.b16 %v6826
  %v7971 = vunpack.c.l.b16 %v6827
  %v7972 = vunpack.c.h.b16 %v6827
  %v7973 = vunpack.c.l.b16 %v6828
  %v7974 = vunpack.c.h.b16 %v6828
  %v7975 = vunpack.c.l.b16 %v6829
  %v7976 = vunpack.c.h.b16 %v6829
  %v7977 = vunpack.c.l.b16 %v6830
  %v7978 = vunpack.c.l.b16 %v6831
  %v7979 = vunpack.c.h.b16 %v6831
  %v7980 = vunpack.c.l.b16 %v6832
  %v7981 = vunpack.c.h.b16 %v6832
  %v7982 = vunpack.c.l.b16 %v6833
  %v7983 = vunpack.c.h.b16 %v6833
  %v7984 = vunpack.c.l.b16 %v6834
  %v7985 = vunpack.c.l.b16 %v6835
  %v7986 = vunpack.c.h.b16 %v6835
  %v7987 = vunpack.c.l.b16 %v6836
  %v7988 = vunpack.c.h.b16 %v6836
  %v7989 = vunpack.c.l.b16 %v6837
  %v7990 = vunpack.c.h.b16 %v6837
  %v7991 = vunpack.c.l.b16 %v6838
  %v7992 = vunpack.c.l.b16 %v6839
  %v7993 = vunpack.c.h.b16 %v6839
  %v7994 = vunpack.c.l.b16 %v6840
  %v7995 = vunpack.c.h.b16 %v6840
  %v7996 = vunpack.c.l.b16 %v6841
  %v7997 = vunpack.c.h.b16 %v6841
  %v7998 = vunpack.c.l.b16 %v6842
  %v7999 = vunpack.c.l.b16 %v6843
  %v8000 = vunpack.c.h.b16 %v6843
  %v8001 = vunpack.c.l.b16 %v6844
  %v8002 = vunpack.c.h.b16 %v6844
  %v8003 = vunpack.c.l.b16 %v6845
  %v8004 = vunpack.c.h.b16 %v6845
  %v8005 = vunpack.c.l.b16 %v6846
  %v8006 = vunpack.c.l.b16 %v6847
  %v8007 = vunpack.c.h.b16 %v6847
  %v8008 = vunpack.c.l.b16 %v6848
  %v8009 = vunpack.c.h.b16 %v6848
  %v8010 = vunpack.c.l.b16 %v6849
  %v8011 = vunpack.c.h.b16 %v6849
  %v8012 = vunpack.c.l.b16 %v6850
  %v8013 = vunpack.c.l.b16 %v6851
  %v8014 = vunpack.c.h.b16 %v6851
  %v8015 = vunpack.c.l.b16 %v6852
  %v8016 = vunpack.c.h.b16 %v6852
  %v8017 = vunpack.c.l.b16 %v6853
  %v8018 = vunpack.c.h.b16 %v6853
  %v8019 = vunpack.c.l.b16 %v6854
  %v8020 = vunpack.c.l.b16 %v6855
  %v8021 = vunpack.c.h.b16 %v6855
  %v8022 = vunpack.c.l.b16 %v6856
  %v8023 = vunpack.c.h.b16 %v6856
  %v8024 = vunpack.c.l.b16 %v6857
  %v8025 = vunpack.c.h.b16 %v6857
  %v8026 = vunpack.c.l.b16 %v6858
  %v8027 = vunpack.c.l.b16 %v6859
  %v8028 = vunpack.c.h.b16 %v6859
  %v8029 = vunpack.c.l.b16 %v6860
  %v8030 = vunpack.c.h.b16 %v6860
  %v8031 = vunpack.c.l.b16 %v6861
  %v8032 = vunpack.c.h.b16 %v6861
  %v8033 = vunpack.c.l.b16 %v6862
  %v8034 = vunpack.c.l.b16 %v6863
  %v8035 = vunpack.c.h.b16 %v6863
  %v8036 = vunpack.c.l.b16 %v6864
  %v8037 = vunpack.c.h.b16 %v6864
  %v8038 = vunpack.c.l.b16 %v6865
  %v8039 = vunpack.c.h.b16 %v6865
  %v8040 = vunpack.c.l.b16 %v6866
  %v8041 = vunpack.c.l.b16 %v6867
  %v8042 = vunpack.c.h.b16 %v6867
  %v8043 = vunpack.c.l.b16 %v6868
  %v8044 = vunpack.c.h.b16 %v6868
  %v8045 = vunpack.c.l.b16 %v6869
  %v8046 = vunpack.c.h.b16 %v6869
  %v8047 = vunpack.c.l.b16 %v6870
  %v8048 = vunpack.c.l.b16 %v6871
  %v8049 = vunpack.c.h.b16 %v6871
  %v8050 = vunpack.c.l.b16 %v6872
  %v8051 = vunpack.c.h.b16 %v6872
  %v8052 = vunpack.c.l.b16 %v6873
  %v8053 = vunpack.c.h.b16 %v6873
  %v8054 = vunpack.c.l.b16 %v6874
  %v8055 = vunpack.c.l.b16 %v6875
  %v8056 = vunpack.c.h.b16 %v6875
  %v8057 = vunpack.c.l.b16 %v6876
  %v8058 = vunpack.c.h.b16 %v6876
  %v8059 = vunpack.c.l.b16 %v6877
  %v8060 = vunpack.c.h.b16 %v6877
  %v8061 = vunpack.c.l.b16 %v6878
  %v8062 = vunpack.c.l.b16 %v6879
  %v8063 = vunpack.c.h.b16 %v6879
  %v8064 = vunpack.c.l.b16 %v6880
  %v8065 = vunpack.c.h.b16 %v6880
  %v8066 = vunpack.c.l.b16 %v6881
  %v8067 = vunpack.c.h.b16 %v6881
  %v8068 = vunpack.c.l.b16 %v6882
  %v8069 = vunpack.c.l.b16 %v6883
  %v8070 = vunpack.c.h.b16 %v6883
  %v8071 = vunpack.c.l.b16 %v6884
  %v8072 = vunpack.c.h.b16 %v6884
  %v8073 = vunpack.c.l.b16 %v6885
  %v8074 = vunpack.c.h.b16 %v6885
  %v8075 = vunpack.c.l.b16 %v6886
  %v8076 = vunpack.c.l.b16 %v6887
  %v8077 = vunpack.c.h.b16 %v6887
  %v8078 = vunpack.c.l.b16 %v6888
  %v8079 = vunpack.c.h.b16 %v6888
  %v8080 = vunpack.c.l.b16 %v6889
  %v8081 = vunpack.c.h.b16 %v6889
  %v8082 = vunpack.c.l.b16 %v6890
  %v8083 = vunpack.c.l.b16 %v6891
  %v8084 = vunpack.c.h.b16 %v6891
  %v8085 = vunpack.c.l.b16 %v6892
  %v8086 = vunpack.c.h.b16 %v6892
  %v8087 = vunpack.c.l.b16 %v6893
  %v8088 = vunpack.c.h.b16 %v6893
  %v8089 = vunpack.c.l.b16 %v6894
  %v8090 = vunpack.c.l.b16 %v6895
  %v8091 = vunpack.c.h.b16 %v6895
  %v8092 = vunpack.c.l.b16 %v6896
  %v8093 = vunpack.c.h.b16 %v6896
  %v8094 = vunpack.c.l.b16 %v6897
  %v8095 = vunpack.c.h.b16 %v6897
  %v8096 = vunpack.c.l.b16 %v6898
  %v8097 = vunpack.c.l.b16 %v6899
  %v8098 = vunpack.c.h.b16 %v6899
  %v8099 = vunpack.c.l.b16 %v6900
  %v8100 = vunpack.c.h.b16 %v6900
  %v8101 = vunpack.c.l.b16 %v6901
  %v8102 = vunpack.c.h.b16 %v6901
  %v8103 = vunpack.c.l.b16 %v6902
  %v8104 = vunpack.c.l.b16 %v6903
  %v8105 = vunpack.c.h.b16 %v6903
  %v8106 = vunpack.c.l.b16 %v6904
  %v8107 = vunpack.c.h.b16 %v6904
  %v8108 = vunpack.c.l.b16 %v6905
  %v8109 = vunpack.c.h.b16 %v6905
  %v8110 = vunpack.c.l.b16 %v6906
  %v8111 = vunpack.c.l.b16 %v6907
  %v8112 = vunpack.c.h.b16 %v6907
  %v8113 = vunpack.c.l.b16 %v6908
  %v8114 = vunpack.c.h.b16 %v6908
  %v8115 = vunpack.c.l.b16 %v6909
  %v8116 = vunpack.c.h.b16 %v6909
  %v8117 = vunpack.c.l.b16 %v6910
  %v8118 = vunpack.c.l.b16 %v6911
  %v8119 = vunpack.c.h.b16 %v6911
  %v8120 = vunpack.c.l.b16 %v6912
  %v8121 = vunpack.c.h.b16 %v6912
  %v8122 = vunpack.c.l.b16 %v6913
  %v8123 = vunpack.c.h.b16 %v6913
  %v8124 = vunpack.c.l.b16 %v6914
  %v8125 = vunpack.c.l.b16 %v6915
  %v8126 = vunpack.c.h.b16 %v6915
  %v8127 = vunpack.c.l.b16 %v6916
  %v8128 = vunpack.c.h.b16 %v6916
  %v8129 = vunpack.c.l.b16 %v6917
  %v8130 = vunpack.c.h.b16 %v6917
  %v8131 = vunpack.c.l.b16 %v6918
  %v8132 = vunpack.c.l.b16 %v6919
  %v8133 = vunpack.c.h.b16 %v6919
  %v8134 = vunpack.c.l.b16 %v6920
  %v8135 = vunpack.c.h.b16 %v6920
  %v8136 = vunpack.c.l.b16 %v6921
  %v8137 = vunpack.c.h.b16 %v6921
  %v8138 = vunpack.c.l.b16 %v6922
  %v8139 = vunpack.c.l.b16 %v6923
  %v8140 = vunpack.c.h.b16 %v6923
  %v8141 = vunpack.c.l.b16 %v6924
  %v8142 = vunpack.c.h.b16 %v6924
  %v8143 = vunpack.c.l.b16 %v6925
  %v8144 = vunpack.c.h.b16 %v6925
  %v8145 = vunpack.c.l.b16 %v6926
  %v8146 = vunpack.c.l.b16 %v6927
  %v8147 = vunpack.c.h.b16 %v6927
  %v8148 = vunpack.c.l.b16 %v6928
  %v8149 = vunpack.c.h.b16 %v6928
  %v8150 = vunpack.c.l.b16 %v6929
  %v8151 = vunpack.c.h.b16 %v6929
  %v8152 = vunpack.c.l.b16 %v6930
  %v8153 = vpack.c.b16 %v7488, %v7481
  %v8154 = vpack.c.b16 %v7489, %v7482
  %v8155 = vpack.c.b16 %v7490, %v7483
  %v8156 = vpack.c.b16 %v7491, %v7484
  %v8157 = vpack.c.b16 %v7492, %v7485
  %v8158 = vpack.c.b16 %v7493, %v7486
  %v8159 = vpack.c.b16 %v7494, %v7487
  %v8160 = vpack.c.b16 %v7502, %v7495
  %v8161 = vpack.c.b16 %v7503, %v7496
  %v8162 = vpack.c.b16 %v7504, %v7497
  %v8163 = vpack.c.b16 %v7505, %v7498
  %v8164 = vpack.c.b16 %v7506, %v7499
  %v8165 = vpack.c.b16 %v7507, %v7500
  %v8166 = vpack.c.b16 %v7508, %v7501
  %v8167 = vpack.c.b16 %v7516, %v7509
  %v8168 = vpack.c.b16 %v7517, %v7510
  %v8169 = vpack.c.b16 %v7518, %v7511
  %v8170 = vpack.c.b16 %v7519, %v7512
  %v8171 = vpack.c.b16 %v7520, %v7513
  %v8172 = vpack.c.b16 %v7521, %v7514
  %v8173 = vpack.c.b16 %v7522, %v7515
  %v8174 = vpack.c.b16 %v7530, %v7523
  %v8175 = vpack.c.b16 %v7531, %v7524
  %v8176 = vpack.c.b16 %v7532, %v7525
  %v8177 = vpack.c.b16 %v7533, %v7526
  %v8178 = vpack.c.b16 %v7534, %v7527
  %v8179 = vpack.c.b16 %v7535, %v7528
  %v8180 = vpack.c.b16 %v7536, %v7529
  %v8181 = vpack.c.b16 %v7544, %v7537
  %v8182 = vpack.c.b16 %v7545, %v7538
  %v8183 = vpack.c.b16 %v7546, %v7539
  %v8184 = vpack.c.b16 %v7547, %v7540
  %v8185 = vpack.c.b16 %v7548, %v7541
  %v8186 = vpack.c.b16 %v7549, %v7542
  %v8187 = vpack.c.b16 %v7550, %v7543
  %v8188 = vpack.c.b16 %v7558, %v7551
  %v8189 = vpack.c.b16 %v7559, %v7552
  %v8190 = vpack.c.b16 %v7560, %v7553
  %v8191 = vpack.c.b16 %v7561, %v7554
  %v8192 = vpack.c.b16 %v7562, %v7555
  %v8193 = vpack.c.b16 %v7563, %v7556
  %v8194 = vpack.c.b16 %v7564, %v7557
  %v8195 = vpack.c.b16 %v7572, %v7565
  %v8196 = vpack.c.b16 %v7573, %v7566
  %v8197 = vpack.c.b16 %v7574, %v7567
  %v8198 = vpack.c.b16 %v7575, %v7568
  %v8199 = vpack.c.b16 %v7576, %v7569
  %v8200 = vpack.c.b16 %v7577, %v7570
  %v8201 = vpack.c.b16 %v7578, %v7571
  %v8202 = vpack.c.b16 %v7586, %v7579
  %v8203 = vpack.c.b16 %v7587, %v7580
  %v8204 = vpack.c.b16 %v7588, %v7581
  %v8205 = vpack.c.b16 %v7589, %v7582
  %v8206 = vpack.c.b16 %v7590, %v7583
  %v8207 = vpack.c.b16 %v7591, %v7584
  %v8208 = vpack.c.b16 %v7592, %v7585
  %v8209 = vpack.c.b16 %v7600, %v7593
  %v8210 = vpack.c.b16 %v7601, %v7594
  %v8211 = vpack.c.b16 %v7602, %v7595
  %v8212 = vpack.c.b16 %v7603, %v7596
  %v8213 = vpack.c.b16 %v7604, %v7597
  %v8214 = vpack.c.b16 %v7605, %v7598
  %v8215 = vpack.c.b16 %v7606, %v7599
  %v8216 = vpack.c.b16 %v7614, %v7607
  %v8217 = vpack.c.b16 %v7615, %v7608
  %v8218 = vpack.c.b16 %v7616, %v7609
  %v8219 = vpack.c.b16 %v7617, %v7610
  %v8220 = vpack.c.b16 %v7618, %v7611
  %v8221 = vpack.c.b16 %v7619, %v7612
  %v8222 = vpack.c.b16 %v7620, %v7613
  %v8223 = vpack.c.b16 %v7628, %v7621
  %v8224 = vpack.c.b16 %v7629, %v7622
  %v8225 = vpack.c.b16 %v7630, %v7623
  %v8226 = vpack.c.b16 %v7631, %v7624
  %v8227 = vpack.c.b16 %v7632, %v7625
  %v8228 = vpack.c.b16 %v7633, %v7626
  %v8229 = vpack.c.b16 %v7634, %v7627
  %v8230 = vpack.c.b16 %v7642, %v7635
  %v8231 = vpack.c.b16 %v7643, %v7636
  %v8232 = vpack.c.b16 %v7644, %v7637
  %v8233 = vpack.c.b16 %v7645, %v7638
  %v8234 = vpack.c.b16 %v7646, %v7639
  %v8235 = vpack.c.b16 %v7647, %v7640
  %v8236 = vpack.c.b16 %v7648, %v7641
  %v8237 = vpack.c.b16 %v7656, %v7649
  %v8238 = vpack.c.b16 %v7657, %v7650
  %v8239 = vpack.c.b16 %v7658, %v7651
  %v8240 = vpack.c.b16 %v7659, %v7652
  %v8241 = vpack.c.b16 %v7660, %v7653
  %v8242 = vpack.c.b16 %v7661, %v7654
  %v8243 = vpack.c.b16 %v7662, %v7655
  %v8244 = vpack.c.b16 %v7670, %v7663
  %v8245 = vpack.c.b16 %v7671, %v7664
  %v8246 = vpack.c.b16 %v7672, %v7665
  %v8247 = vpack.c.b16 %v7673, %v7666
  %v8248 = vpack.c.b16 %v7674, %v7667
  %v8249 = vpack.c.b16 %v7675, %v7668
  %v8250 = vpack.c.b16 %v7676, %v7669
  %v8251 = vpack.c.b16 %v7684, %v7677
  %v8252 = vpack.c.b16 %v7685, %v7678
  %v8253 = vpack.c.b16 %v7686, %v7679
  %v8254 = vpack.c.b16 %v7687, %v7680
  %v8255 = vpack.c.b16 %v7688, %v7681
  %v8256 = vpack.c.b16 %v7689, %v7682
  %v8257 = vpack.c.b16 %v7690, %v7683
  %v8258 = vpack.c.b16 %v7698, %v7691
  %v8259 = vpack.c.b16 %v7699, %v7692
  %v8260 = vpack.c.b16 %v7700, %v7693
  %v8261 = vpack.c.b16 %v7701, %v7694
  %v8262 = vpack.c.b16 %v7702, %v7695
  %v8263 = vpack.c.b16 %v7703, %v7696
  %v8264 = vpack.c.b16 %v7704, %v7697
  %v8265 = vpack.c.b16 %v7712, %v7705
  %v8266 = vpack.c.b16 %v7713, %v7706
  %v8267 = vpack.c.b16 %v7714, %v7707
  %v8268 = vpack.c.b16 %v7715, %v7708
  %v8269 = vpack.c.b16 %v7716, %v7709
  %v8270 = vpack.c.b16 %v7717, %v7710
  %v8271 = vpack.c.b16 %v7718, %v7711
  %v8272 = vpack.c.b16 %v7726, %v7719
  %v8273 = vpack.c.b16 %v7727, %v7720
  %v8274 = vpack.c.b16 %v7728, %v7721
  %v8275 = vpack.c.b16 %v7729, %v7722
  %v8276 = vpack.c.b16 %v7730, %v7723
  %v8277 = vpack.c.b16 %v7731, %v7724
  %v8278 = vpack.c.b16 %v7732, %v7725
  %v8279 = vpack.c.b16 %v7740, %v7733
  %v8280 = vpack.c.b16 %v7741, %v7734
  %v8281 = vpack.c.b16 %v7742, %v7735
  %v8282 = vpack.c.b16 %v7743, %v7736
  %v8283 = vpack.c.b16 %v7744, %v7737
  %v8284 = vpack.c.b16 %v7745, %v7738
  %v8285 = vpack.c.b16 %v7746, %v7739
  %v8286 = vpack.c.b16 %v7754, %v7747
  %v8287 = vpack.c.b16 %v7755, %v7748
  %v8288 = vpack.c.b16 %v7756, %v7749
  %v8289 = vpack.c.b16 %v7757, %v7750
  %v8290 = vpack.c.b16 %v7758, %v7751
  %v8291 = vpack.c.b16 %v7759, %v7752
  %v8292 = vpack.c.b16 %v7760, %v7753
  %v8293 = vpack.c.b16 %v7768, %v7761
  %v8294 = vpack.c.b16 %v7769, %v7762
  %v8295 = vpack.c.b16 %v7770, %v7763
  %v8296 = vpack.c.b16 %v7771, %v7764
  %v8297 = vpack.c.b16 %v7772, %v7765
  %v8298 = vpack.c.b16 %v7773, %v7766
  %v8299 = vpack.c.b16 %v7774, %v7767
  %v8300 = vpack.c.b16 %v7782, %v7775
  %v8301 = vpack.c.b16 %v7783, %v7776
  %v8302 = vpack.c.b16 %v7784, %v7777
  %v8303 = vpack.c.b16 %v7785, %v7778
  %v8304 = vpack.c.b16 %v7786, %v7779
  %v8305 = vpack.c.b16 %v7787, %v7780
  %v8306 = vpack.c.b16 %v7788, %v7781
  %v8307 = vpack.c.b16 %v7796, %v7789
  %v8308 = vpack.c.b16 %v7797, %v7790
  %v8309 = vpack.c.b16 %v7798, %v7791
  %v8310 = vpack.c.b16 %v7799, %v7792
  %v8311 = vpack.c.b16 %v7800, %v7793
  %v8312 = vpack.c.b16 %v7801, %v7794
  %v8313 = vpack.c.b16 %v7802, %v7795
  %v8314 = vpack.c.b16 %v7810, %v7803
  %v8315 = vpack.c.b16 %v7811, %v7804
  %v8316 = vpack.c.b16 %v7812, %v7805
  %v8317 = vpack.c.b16 %v7813, %v7806
  %v8318 = vpack.c.b16 %v7814, %v7807
  %v8319 = vpack.c.b16 %v7815, %v7808
  %v8320 = vpack.c.b16 %v7816, %v7809
  %v8321 = vpack.c.b16 %v7824, %v7817
  %v8322 = vpack.c.b16 %v7825, %v7818
  %v8323 = vpack.c.b16 %v7826, %v7819
  %v8324 = vpack.c.b16 %v7827, %v7820
  %v8325 = vpack.c.b16 %v7828, %v7821
  %v8326 = vpack.c.b16 %v7829, %v7822
  %v8327 = vpack.c.b16 %v7830, %v7823
  %v8328 = vpack.c.b16 %v7838, %v7831
  %v8329 = vpack.c.b16 %v7839, %v7832
  %v8330 = vpack.c.b16 %v7840, %v7833
  %v8331 = vpack.c.b16 %v7841, %v7834
  %v8332 = vpack.c.b16 %v7842, %v7835
  %v8333 = vpack.c.b16 %v7843, %v7836
  %v8334 = vpack.c.b16 %v7844, %v7837
  %v8335 = vpack.c.b16 %v7852, %v7845
  %v8336 = vpack.c.b16 %v7853, %v7846
  %v8337 = vpack.c.b16 %v7854, %v7847
  %v8338 = vpack.c.b16 %v7855, %v7848
  %v8339 = vpack.c.b16 %v7856, %v7849
  %v8340 = vpack.c.b16 %v7857, %v7850
  %v8341 = vpack.c.b16 %v7858, %v7851
  %v8342 = vpack.c.b16 %v7866, %v7859
  %v8343 = vpack.c.b16 %v7867, %v7860
  %v8344 = vpack.c.b16 %v7868, %v7861
  %v8345 = vpack.c.b16 %v7869, %v7862
  %v8346 = vpack.c.b16 %v7870, %v7863
  %v8347 = vpack.c.b16 %v7871, %v7864
  %v8348 = vpack.c.b16 %v7872, %v7865
  %v8349 = vpack.c.b16 %v7880, %v7873
  %v8350 = vpack.c.b16 %v7881, %v7874
  %v8351 = vpack.c.b16 %v7882, %v7875
  %v8352 = vpack.c.b16 %v7883, %v7876
  %v8353 = vpack.c.b16 %v7884, %v7877
  %v8354 = vpack.c.b16 %v7885, %v7878
  %v8355 = vpack.c.b16 %v7886, %v7879
  %v8356 = vpack.c.b16 %v7894, %v7887
  %v8357 = vpack.c.b16 %v7895, %v7888
  %v8358 = vpack.c.b16 %v7896, %v7889
  %v8359 = vpack.c.b16 %v7897, %v7890
  %v8360 = vpack.c.b16 %v7898, %v7891
  %v8361 = vpack.c.b16 %v7899, %v7892
  %v8362 = vpack.c.b16 %v7900, %v7893
  %v8363 = vpack.c.b16 %v7908, %v7901
  %v8364 = vpack.c.b16 %v7909, %v7902
  %v8365 = vpack.c.b16 %v7910, %v7903
  %v8366 = vpack.c.b16 %v7911, %v7904
  %v8367 = vpack.c.b16 %v7912, %v7905
  %v8368 = vpack.c.b16 %v7913, %v7906
  %v8369 = vpack.c.b16 %v7914, %v7907
  %v8370 = vpack.c.b16 %v7922, %v7915
  %v8371 = vpack.c.b16 %v7923, %v7916
  %v8372 = vpack.c.b16 %v7924, %v7917
  %v8373 = vpack.c.b16 %v7925, %v7918
  %v8374 = vpack.c.b16 %v7926, %v7919
  %v8375 = vpack.c.b16 %v7927, %v7920
  %v8376 = vpack.c.b16 %v7928, %v7921
  %v8377 = vpack.c.b16 %v7936, %v7929
  %v8378 = vpack.c.b16 %v7937, %v7930
  %v8379 = vpack.c.b16 %v7938, %v7931
  %v8380 = vpack.c.b16 %v7939, %v7932
  %v8381 = vpack.c.b16 %v7940, %v7933
  %v8382 = vpack.c.b16 %v7941, %v7934
  %v8383 = vpack.c.b16 %v7942, %v7935
  %v8384 = vpack.c.b16 %v7950, %v7943
  %v8385 = vpack.c.b16 %v7951, %v7944
  %v8386 = vpack.c.b16 %v7952, %v7945
  %v8387 = vpack.c.b16 %v7953, %v7946
  %v8388 = vpack.c.b16 %v7954, %v7947
  %v8389 = vpack.c.b16 %v7955, %v7948
  %v8390 = vpack.c.b16 %v7956, %v7949
  %v8391 = vpack.c.b16 %v7964, %v7957
  %v8392 = vpack.c.b16 %v7965, %v7958
  %v8393 = vpack.c.b16 %v7966, %v7959
  %v8394 = vpack.c.b16 %v7967, %v7960
  %v8395 = vpack.c.b16 %v7968, %v7961
  %v8396 = vpack.c.b16 %v7969, %v7962
  %v8397 = vpack.c.b16 %v7970, %v7963
  %v8398 = vpack.c.b16 %v7978, %v7971
  %v8399 = vpack.c.b16 %v7979, %v7972
  %v8400 = vpack.c.b16 %v7980, %v7973
  %v8401 = vpack.c.b16 %v7981, %v7974
  %v8402 = vpack.c.b16 %v7982, %v7975
  %v8403 = vpack.c.b16 %v7983, %v7976
  %v8404 = vpack.c.b16 %v7984, %v7977
  %v8405 = vpack.c.b16 %v7992, %v7985
  %v8406 = vpack.c.b16 %v7993, %v7986
  %v8407 = vpack.c.b16 %v7994, %v7987
  %v8408 = vpack.c.b16 %v7995, %v7988
  %v8409 = vpack.c.b16 %v7996, %v7989
  %v8410 = vpack.c.b16 %v7997, %v7990
  %v8411 = vpack.c.b16 %v7998, %v7991
  %v8412 = vpack.c.b16 %v8006, %v7999
  %v8413 = vpack.c.b16 %v8007, %v8000
  %v8414 = vpack.c.b16 %v8008, %v8001
  %v8415 = vpack.c.b16 %v8009, %v8002
  %v8416 = vpack.c.b16 %v8010, %v8003
  %v8417 = vpack.c.b16 %v8011, %v8004
  %v8418 = vpack.c.b16 %v8012, %v8005
  %v8419 = vpack.c.b16 %v8020, %v8013
  %v8420 = vpack.c.b16 %v8021, %v8014
  %v8421 = vpack.c.b16 %v8022, %v8015
  %v8422 = vpack.c.b16 %v8023, %v8016
  %v8423 = vpack.c.b16 %v8024, %v8017
  %v8424 = vpack.c.b16 %v8025, %v8018
  %v8425 = vpack.c.b16 %v8026, %v8019
  %v8426 = vpack.c.b16 %v8034, %v8027
  %v8427 = vpack.c.b16 %v8035, %v8028
  %v8428 = vpack.c.b16 %v8036, %v8029
  %v8429 = vpack.c.b16 %v8037, %v8030
  %v8430 = vpack.c.b16 %v8038, %v8031
  %v8431 = vpack.c.b16 %v8039, %v8032
  %v8432 = vpack.c.b16 %v8040, %v8033
  %v8433 = vpack.c.b16 %v8048, %v8041
  %v8434 = vpack.c.b16 %v8049, %v8042
  %v8435 = vpack.c.b16 %v8050, %v8043
  %v8436 = vpack.c.b16 %v8051, %v8044
  %v8437 = vpack.c.b16 %v8052, %v8045
  %v8438 = vpack.c.b16 %v8053, %v8046
  %v8439 = vpack.c.b16 %v8054, %v8047
  %v8440 = vpack.c.b16 %v8062, %v8055
  %v8441 = vpack.c.b16 %v8063, %v8056
  %v8442 = vpack.c.b16 %v8064, %v8057
  %v8443 = vpack.c.b16 %v8065, %v8058
  %v8444 = vpack.c.b16 %v8066, %v8059
  %v8445 = vpack.c.b16 %v8067, %v8060
  %v8446 = vpack.c.b16 %v8068, %v8061
  %v8447 = vpack.c.b16 %v8076, %v8069
  %v8448 = vpack.c.b16 %v8077, %v8070
  %v8449 = vpack.c.b16 %v8078, %v8071
  %v8450 = vpack.c.b16 %v8079, %v8072
  %v8451 = vpack.c.b16 %v8080, %v8073
  %v8452 = vpack.c.b16 %v8081, %v8074
  %v8453 = vpack.c.b16 %v8082, %v8075
  %v8454 = vpack.c.b16 %v8090, %v8083
  %v8455 = vpack.c.b16 %v8091, %v8084
  %v8456 = vpack.c.b16 %v8092, %v8085
  %v8457 = vpack.c.b16 %v8093, %v8086
  %v8458 = vpack.c.b16 %v8094, %v8087
  %v8459 = vpack.c.b16 %v8095, %v8088
  %v8460 = vpack.c.b16 %v8096, %v8089
  %v8461 = vpack.c.b16 %v8104, %v8097
  %v8462 = vpack.c.b16 %v8105, %v8098
  %v8463 = vpack.c.b16 %v8106, %v8099
  %v8464 = vpack.c.b16 %v8107, %v8100
  %v8465 = vpack.c.b16 %v8108, %v8101
  %v8466 = vpack.c.b16 %v8109, %v8102
  %v8467 = vpack.c.b16 %v8110, %v8103
  %v8468 = vpack.c.b16 %v8118, %v8111
  %v8469 = vpack.c.b16 %v8119, %v8112
  %v8470 = vpack.c.b16 %v8120, %v8113
  %v8471 = vpack.c.b16 %v8121, %v8114
  %v8472 = vpack.c.b16 %v8122, %v8115
  %v8473 = vpack.c.b16 %v8123, %v8116
  %v8474 = vpack.c.b16 %v8124, %v8117
  %v8475 = vpack.c.b16 %v8132, %v8125
  %v8476 = vpack.c.b16 %v8133, %v8126
  %v8477 = vpack.c.b16 %v8134, %v8127
  %v8478 = vpack.c.b16 %v8135, %v8128
  %v8479 = vpack.c.b16 %v8136, %v8129
  %v8480 = vpack.c.b16 %v8137, %v8130
  %v8481 = vpack.c.b16 %v8138, %v8131
  %v8482 = vpack.c.b16 %v8146, %v8139
  %v8483 = vpack.c.b16 %v8147, %v8140
  %v8484 = vpack.c.b16 %v8148, %v8141
  %v8485 = vpack.c.b16 %v8149, %v8142
  %v8486 = vpack.c.b16 %v8150, %v8143
  %v8487 = vpack.c.b16 %v8151, %v8144
  %v8488 = vpack.c.b16 %v8152, %v8145
  %v8827 = vcombine.low %v7046, %v7047
  %v8828 = vcombine.high %v7046, %v7047
  %v8830 = vunpack.c.l.s4 1966171168
  %v8831 = vunpack.c.0.s8 %v8830
  %v8832 = vlaneseq
  %v8833 = vshrl.u32 %v8832, 7
  %v8834 = vsub.s32 %v8831, %v8833
  %v8835 = vrot.slane %v8827, %v8834
  %v8837 = vunpack.c.l.s4 1966171168
  %v8838 = vunpack.c.0.s8 %v8837
  %v8839 = vlaneseq
  %v8840 = vshrl.u32 %v8839, 7
  %v8841 = vsub.s32 %v8838, %v8840
  %v8842 = vrot.slane %v8828, %v8841
  %v8843 = vcombine.high %v8835, %v8835
  %v8844 = vcombine.high %v8842, %v8842
  %v8846 = vunpack.c.l.s4 1966171168
  %v8847 = vunpack.c.0.s8 %v8846
  %v8848 = vlaneseq
  %v8849 = vshrl.u32 %v8848, 7
  %v8850 = vsub.s32 %v8847, %v8849
  %v8851 = vrot.slane %v8835, %v8850
  %v8853 = vunpack.c.l.s4 1966171168
  %v8854 = vunpack.c.0.s8 %v8853
  %v8855 = vlaneseq
  %v8856 = vshrl.u32 %v8855, 7
  %v8857 = vsub.s32 %v8854, %v8856
  %v8858 = vrot.slane %v8842, %v8857
  %v8860 = vunpack.c.l.s4 1966171168
  %v8861 = vunpack.c.0.s8 %v8860
  %v8862 = vlaneseq
  %v8863 = vshrl.u32 %v8862, 7
  %v8864 = vsub.s32 %v8861, %v8863
  %v8865 = vrot.slane %v8843, %v8864
  %v8867 = vunpack.c.l.s4 1966171168
  %v8868 = vunpack.c.0.s8 %v8867
  %v8869 = vlaneseq
  %v8870 = vshrl.u32 %v8869, 7
  %v8871 = vsub.s32 %v8868, %v8870
  %v8872 = vrot.slane %v8844, %v8871
  %v8873 = vcombine.high %v8851, %v8851
  %v8874 = vcombine.high %v8858, %v8858
  %v8875 = vcombine.high %v8865, %v8865
  %8883 = vmatprep.subr.bf16.mxu0 %v8154
  %8884 = vmatpush1.bf16.msra.mxu0 %v8153
  %8885 = vmatprep.subr.bf16.mxu0 %v8161
  %8886 = vmatpush1.bf16.msra.mxu0 %v8160
  %8887 = vmatprep.subr.bf16.mxu0 %v8168
  %8888 = vmatpush1.bf16.msra.mxu0 %v8167
  %8889 = vmatprep.subr.bf16.mxu0 %v8175
  %8890 = vmatpush1.bf16.msra.mxu0 %v8174
  %8891 = vmatprep.subr.bf16.mxu0 %v8182
  %8892 = vmatpush1.bf16.msra.mxu0 %v8181
  %8893 = vmatprep.subr.bf16.mxu0 %v8189
  %8894 = vmatpush1.bf16.msra.mxu0 %v8188
  %8895 = vmatprep.subr.bf16.mxu0 %v8196
  %8896 = vmatpush1.bf16.msra.mxu0 %v8195
  %8897 = vmatprep.subr.bf16.mxu0 %v8203
  %8898 = vmatpush1.bf16.msra.mxu0 %v8202
  %8899 = vmatprep.subr.bf16.mxu0 %v8210
  %8900 = vmatpush1.bf16.msra.mxu0 %v8209
  %8901 = vmatprep.subr.bf16.mxu0 %v8217
  %8902 = vmatpush1.bf16.msra.mxu0 %v8216
  %8903 = vmatprep.subr.bf16.mxu0 %v8224
  %8904 = vmatpush1.bf16.msra.mxu0 %v8223
  %8905 = vmatprep.subr.bf16.mxu0 %v8231
  %8906 = vmatpush1.bf16.msra.mxu0 %v8230
  %8907 = vmatprep.subr.bf16.mxu0 %v8238
  %8908 = vmatpush1.bf16.msra.mxu0 %v8237
  %8909 = vmatprep.subr.bf16.mxu0 %v8245
  %8910 = vmatpush1.bf16.msra.mxu0 %v8244
  %8911 = vmatprep.subr.bf16.mxu0 %v8252
  %8912 = vmatpush1.bf16.msra.mxu0 %v8251
  %8913 = vmatprep.subr.bf16.mxu0 %v8259
  %8914 = vmatpush1.bf16.msra.mxu0 %v8258
  %8915 = vmatprep.mubr.bf16.mxu0 %v7086
  %8916 = vmatmul.mubr.bf16.gmra.mrb[0].mxu0 %v7085
  %v8917 = vpop.f32.mrb[0].mxu0
  %v8918 = vadd.f32 %v8851, %v8917
  %v8919 = vpop.f32.mrb[0].mxu0
  %v8920 = vadd.f32 %v8865, %v8919
  %v8921 = vpop.f32.mrb[0].mxu0
  %v8922 = vpop.f32.mrb[0].mxu0
  %8923 = vdwg.mxu0
  %8924 = vmatprep.subr.bf16.mxu0 %v8266
  %8925 = vmatpush1.bf16.msra.mxu0 %v8265
  %8926 = vmatprep.subr.bf16.mxu0 %v8273
  %8927 = vmatpush1.bf16.msra.mxu0 %v8272
  %8928 = vmatprep.subr.bf16.mxu0 %v8280
  %8929 = vmatpush1.bf16.msra.mxu0 %v8279
  %8930 = vmatprep.subr.bf16.mxu0 %v8287
  %8931 = vmatpush1.bf16.msra.mxu0 %v8286
  %8932 = vmatprep.subr.bf16.mxu0 %v8294
  %8933 = vmatpush1.bf16.msra.mxu0 %v8293
  %8934 = vmatprep.subr.bf16.mxu0 %v8301
  %8935 = vmatpush1.bf16.msra.mxu0 %v8300
  %8936 = vmatprep.subr.bf16.mxu0 %v8308
  %8937 = vmatpush1.bf16.msra.mxu0 %v8307
  %8938 = vmatprep.subr.bf16.mxu0 %v8315
  %8939 = vmatpush1.bf16.msra.mxu0 %v8314
  %8940 = vmatprep.subr.bf16.mxu0 %v8322
  %8941 = vmatpush1.bf16.msra.mxu0 %v8321
  %8942 = vmatprep.subr.bf16.mxu0 %v8329
  %8943 = vmatpush1.bf16.msra.mxu0 %v8328
  %8944 = vmatprep.subr.bf16.mxu0 %v8336
  %8945 = vmatpush1.bf16.msra.mxu0 %v8335
  %8946 = vmatprep.subr.bf16.mxu0 %v8343
  %8947 = vmatpush1.bf16.msra.mxu0 %v8342
  %8948 = vmatprep.subr.bf16.mxu0 %v8350
  %8949 = vmatpush1.bf16.msra.mxu0 %v8349
  %8950 = vmatprep.subr.bf16.mxu0 %v8357
  %8951 = vmatpush1.bf16.msra.mxu0 %v8356
  %8952 = vmatprep.subr.bf16.mxu0 %v8364
  %8953 = vmatpush1.bf16.msra.mxu0 %v8363
  %8954 = vmatprep.subr.bf16.mxu0 %v8371
  %8955 = vmatpush1.bf16.msra.mxu0 %v8370
  %8956 = vmatprep.mubr.bf16.mxu0 %v7088
  %8957 = vmatmul.mubr.bf16.gmra.mrb[0].mxu0 %v7087
  %v8958 = vpop.f32.mrb[0].mxu0
  %v8959 = vadd.f32 %v8918, %v8958
  %v8960 = vpop.f32.mrb[0].mxu0
  %v8961 = vadd.f32 %v8920, %v8960
  %v8962 = vpop.f32.mrb[0].mxu0
  %v8963 = vpop.f32.mrb[0].mxu0
  %8964 = vdwg.mxu0
  %8965 = vmatprep.subr.bf16.mxu0 %v8378
  %8966 = vmatpush1.bf16.msra.mxu0 %v8377
  %8967 = vmatprep.subr.bf16.mxu0 %v8385
  %8968 = vmatpush1.bf16.msra.mxu0 %v8384
  %8969 = vmatprep.subr.bf16.mxu0 %v8392
  %8970 = vmatpush1.bf16.msra.mxu0 %v8391
  %8971 = vmatprep.subr.bf16.mxu0 %v8399
  %8972 = vmatpush1.bf16.msra.mxu0 %v8398
  %8973 = vmatprep.subr.bf16.mxu0 %v8406
  %8974 = vmatpush1.bf16.msra.mxu0 %v8405
  %8975 = vmatprep.subr.bf16.mxu0 %v8413
  %8976 = vmatpush1.bf16.msra.mxu0 %v8412
  %8977 = vmatprep.subr.bf16.mxu0 %v8420
  %8978 = vmatpush1.bf16.msra.mxu0 %v8419
  %8979 = vmatprep.subr.bf16.mxu0 %v8427
  %8980 = vmatpush1.bf16.msra.mxu0 %v8426
  %8981 = vmatprep.subr.bf16.mxu0 %v8434
  %8982 = vmatpush1.bf16.msra.mxu0 %v8433
  %8983 = vmatprep.subr.bf16.mxu0 %v8441
  %8984 = vmatpush1.bf16.msra.mxu0 %v8440
  %8985 = vmatprep.subr.bf16.mxu0 %v8448
  %8986 = vmatpush1.bf16.msra.mxu0 %v8447
  %8987 = vmatprep.subr.bf16.mxu0 %v8455
  %8988 = vmatpush1.bf16.msra.mxu0 %v8454
  %8989 = vmatprep.subr.bf16.mxu0 %v8462
  %8990 = vmatpush1.bf16.msra.mxu0 %v8461
  %8991 = vmatprep.subr.bf16.mxu0 %v8469
  %8992 = vmatpush1.bf16.msra.mxu0 %v8468
  %8993 = vmatprep.subr.bf16.mxu0 %v8476
  %8994 = vmatpush1.bf16.msra.mxu0 %v8475
  %8995 = vmatprep.subr.bf16.mxu0 %v8483
  %8996 = vmatpush1.bf16.msra.mxu0 %v8482
  %8997 = vmatprep.mubr.bf16.mxu0 %v7090
  %8998 = vmatmul.mubr.bf16.gmra.mrb[0].mxu0 %v7089
  %v8999 = vpop.f32.mrb[0].mxu0
  %v9000 = vadd.f32 %v8959, %v8999
  %v9001 = vpop.f32.mrb[0].mxu0
  %v9002 = vadd.f32 %v8961, %v9001
  %v9003 = vpop.f32.mrb[0].mxu0
  %v9004 = vpop.f32.mrb[0].mxu0
  %9005 = vdwg.mxu0
  %9006 = vmatprep.subr.bf16.mxu0 %v8156
  %9007 = vmatpush1.bf16.msra.mxu0 %v8155
  %9008 = vmatprep.subr.bf16.mxu0 %v8163
  %9009 = vmatpush1.bf16.msra.mxu0 %v8162
  %9010 = vmatprep.subr.bf16.mxu0 %v8170
  %9011 = vmatpush1.bf16.msra.mxu0 %v8169
  %9012 = vmatprep.subr.bf16.mxu0 %v8177
  %9013 = vmatpush1.bf16.msra.mxu0 %v8176
  %9014 = vmatprep.subr.bf16.mxu0 %v8184
  %9015 = vmatpush1.bf16.msra.mxu0 %v8183
  %9016 = vmatprep.subr.bf16.mxu0 %v8191
  %9017 = vmatpush1.bf16.msra.mxu0 %v8190
  %9018 = vmatprep.subr.bf16.mxu0 %v8198
  %9019 = vmatpush1.bf16.msra.mxu0 %v8197
  %9020 = vmatprep.subr.bf16.mxu0 %v8205
  %9021 = vmatpush1.bf16.msra.mxu0 %v8204
  %9022 = vmatprep.subr.bf16.mxu0 %v8212
  %9023 = vmatpush1.bf16.msra.mxu0 %v8211
  %9024 = vmatprep.subr.bf16.mxu0 %v8219
  %9025 = vmatpush1.bf16.msra.mxu0 %v8218
  %9026 = vmatprep.subr.bf16.mxu0 %v8226
  %9027 = vmatpush1.bf16.msra.mxu0 %v8225
  %9028 = vmatprep.subr.bf16.mxu0 %v8233
  %9029 = vmatpush1.bf16.msra.mxu0 %v8232
  %9030 = vmatprep.subr.bf16.mxu0 %v8240
  %9031 = vmatpush1.bf16.msra.mxu0 %v8239
  %9032 = vmatprep.subr.bf16.mxu0 %v8247
  %9033 = vmatpush1.bf16.msra.mxu0 %v8246
  %9034 = vmatprep.subr.bf16.mxu0 %v8254
  %9035 = vmatpush1.bf16.msra.mxu0 %v8253
  %9036 = vmatprep.subr.bf16.mxu0 %v8261
  %9037 = vmatpush1.bf16.msra.mxu0 %v8260
  %9038 = vmatprep.mubr.bf16.mxu0 %v7086
  %9039 = vmatmul.mubr.bf16.gmra.mrb[0].mxu0 %v7085
  %v9040 = vpop.f32.mrb[0].mxu0
  %v9041 = vadd.f32 %v8873, %v9040
  %v9042 = vpop.f32.mrb[0].mxu0
  %v9043 = vadd.f32 %v8875, %v9042
  %v9044 = vpop.f32.mrb[0].mxu0
  %v9045 = vpop.f32.mrb[0].mxu0
  %9046 = vdwg.mxu0
  %9047 = vmatprep.subr.bf16.mxu0 %v8268
  %9048 = vmatpush1.bf16.msra.mxu0 %v8267
  %9049 = vmatprep.subr.bf16.mxu0 %v8275
  %9050 = vmatpush1.bf16.msra.mxu0 %v8274
  %9051 = vmatprep.subr.bf16.mxu0 %v8282
  %9052 = vmatpush1.bf16.msra.mxu0 %v8281
  %9053 = vmatprep.subr.bf16.mxu0 %v8289
  %9054 = vmatpush1.bf16.msra.mxu0 %v8288
  %9055 = vmatprep.subr.bf16.mxu0 %v8296
  %9056 = vmatpush1.bf16.msra.mxu0 %v8295
  %9057 = vmatprep.subr.bf16.mxu0 %v8303
  %9058 = vmatpush1.bf16.msra.mxu0 %v8302
  %9059 = vmatprep.subr.bf16.mxu0 %v8310
  %9060 = vmatpush1.bf16.msra.mxu0 %v8309
  %9061 = vmatprep.subr.bf16.mxu0 %v8317
  %9062 = vmatpush1.bf16.msra.mxu0 %v8316
  %9063 = vmatprep.subr.bf16.mxu0 %v8324
  %9064 = vmatpush1.bf16.msra.mxu0 %v8323
  %9065 = vmatprep.subr.bf16.mxu0 %v8331
  %9066 = vmatpush1.bf16.msra.mxu0 %v8330
  %9067 = vmatprep.subr.bf16.mxu0 %v8338
  %9068 = vmatpush1.bf16.msra.mxu0 %v8337
  %9069 = vmatprep.subr.bf16.mxu0 %v8345
  %9070 = vmatpush1.bf16.msra.mxu0 %v8344
  %9071 = vmatprep.subr.bf16.mxu0 %v8352
  %9072 = vmatpush1.bf16.msra.mxu0 %v8351
  %9073 = vmatprep.subr.bf16.mxu0 %v8359
  %9074 = vmatpush1.bf16.msra.mxu0 %v8358
  %9075 = vmatprep.subr.bf16.mxu0 %v8366
  %9076 = vmatpush1.bf16.msra.mxu0 %v8365
  %9077 = vmatprep.subr.bf16.mxu0 %v8373
  %9078 = vmatpush1.bf16.msra.mxu0 %v8372
  %9079 = vmatprep.mubr.bf16.mxu0 %v7088
  %9080 = vmatmul.mubr.bf16.gmra.mrb[0].mxu0 %v7087
  %v9081 = vpop.f32.mrb[0].mxu0
  %v9082 = vadd.f32 %v9041, %v9081
  %v9083 = vpop.f32.mrb[0].mxu0
  %v9084 = vadd.f32 %v9043, %v9083
  %v9085 = vpop.f32.mrb[0].mxu0
  %v9086 = vpop.f32.mrb[0].mxu0
  %9087 = vdwg.mxu0
  %9088 = vmatprep.subr.bf16.mxu0 %v8380
  %9089 = vmatpush1.bf16.msra.mxu0 %v8379
  %9090 = vmatprep.subr.bf16.mxu0 %v8387
  %9091 = vmatpush1.bf16.msra.mxu0 %v8386
  %9092 = vmatprep.subr.bf16.mxu0 %v8394
  %9093 = vmatpush1.bf16.msra.mxu0 %v8393
  %9094 = vmatprep.subr.bf16.mxu0 %v8401
  %9095 = vmatpush1.bf16.msra.mxu0 %v8400
  %9096 = vmatprep.subr.bf16.mxu0 %v8408
  %9097 = vmatpush1.bf16.msra.mxu0 %v8407
  %9098 = vmatprep.subr.bf16.mxu0 %v8415
  %9099 = vmatpush1.bf16.msra.mxu0 %v8414
  %9100 = vmatprep.subr.bf16.mxu0 %v8422
  %9101 = vmatpush1.bf16.msra.mxu0 %v8421
  %9102 = vmatprep.subr.bf16.mxu0 %v8429
  %9103 = vmatpush1.bf16.msra.mxu0 %v8428
  %9104 = vmatprep.subr.bf16.mxu0 %v8436
  %9105 = vmatpush1.bf16.msra.mxu0 %v8435
  %9106 = vmatprep.subr.bf16.mxu0 %v8443
  %9107 = vmatpush1.bf16.msra.mxu0 %v8442
  %9108 = vmatprep.subr.bf16.mxu0 %v8450
  %9109 = vmatpush1.bf16.msra.mxu0 %v8449
  %9110 = vmatprep.subr.bf16.mxu0 %v8457
  %9111 = vmatpush1.bf16.msra.mxu0 %v8456
  %9112 = vmatprep.subr.bf16.mxu0 %v8464
  %9113 = vmatpush1.bf16.msra.mxu0 %v8463
  %9114 = vmatprep.subr.bf16.mxu0 %v8471
  %9115 = vmatpush1.bf16.msra.mxu0 %v8470
  %9116 = vmatprep.subr.bf16.mxu0 %v8478
  %9117 = vmatpush1.bf16.msra.mxu0 %v8477
  %9118 = vmatprep.subr.bf16.mxu0 %v8485
  %9119 = vmatpush1.bf16.msra.mxu0 %v8484
  %9120 = vmatprep.mubr.bf16.mxu0 %v7090
  %9121 = vmatmul.mubr.bf16.gmra.mrb[0].mxu0 %v7089
  %v9122 = vpop.f32.mrb[0].mxu0
  %v9123 = vadd.f32 %v9082, %v9122
  %v9124 = vpop.f32.mrb[0].mxu0
  %v9125 = vadd.f32 %v9084, %v9124
  %v9126 = vpop.f32.mrb[0].mxu0
  %v9127 = vpop.f32.mrb[0].mxu0
  %9128 = vdwg.mxu0
  %9129 = vmatprep.subr.bf16.mxu0 %v8158
  %9130 = vmatpush1.bf16.msra.mxu0 %v8157
  %9131 = vmatprep.subr.bf16.mxu0 %v8165
  %9132 = vmatpush1.bf16.msra.mxu0 %v8164
  %9133 = vmatprep.subr.bf16.mxu0 %v8172
  %9134 = vmatpush1.bf16.msra.mxu0 %v8171
  %9135 = vmatprep.subr.bf16.mxu0 %v8179
  %9136 = vmatpush1.bf16.msra.mxu0 %v8178
  %9137 = vmatprep.subr.bf16.mxu0 %v8186
  %9138 = vmatpush1.bf16.msra.mxu0 %v8185
  %9139 = vmatprep.subr.bf16.mxu0 %v8193
  %9140 = vmatpush1.bf16.msra.mxu0 %v8192
  %9141 = vmatprep.subr.bf16.mxu0 %v8200
  %9142 = vmatpush1.bf16.msra.mxu0 %v8199
  %9143 = vmatprep.subr.bf16.mxu0 %v8207
  %9144 = vmatpush1.bf16.msra.mxu0 %v8206
  %9145 = vmatprep.subr.bf16.mxu0 %v8214
  %9146 = vmatpush1.bf16.msra.mxu0 %v8213
  %9147 = vmatprep.subr.bf16.mxu0 %v8221
  %9148 = vmatpush1.bf16.msra.mxu0 %v8220
  %9149 = vmatprep.subr.bf16.mxu0 %v8228
  %9150 = vmatpush1.bf16.msra.mxu0 %v8227
  %9151 = vmatprep.subr.bf16.mxu0 %v8235
  %9152 = vmatpush1.bf16.msra.mxu0 %v8234
  %9153 = vmatprep.subr.bf16.mxu0 %v8242
  %9154 = vmatpush1.bf16.msra.mxu0 %v8241
  %9155 = vmatprep.subr.bf16.mxu0 %v8249
  %9156 = vmatpush1.bf16.msra.mxu0 %v8248
  %9157 = vmatprep.subr.bf16.mxu0 %v8256
  %9158 = vmatpush1.bf16.msra.mxu0 %v8255
  %9159 = vmatprep.subr.bf16.mxu0 %v8263
  %9160 = vmatpush1.bf16.msra.mxu0 %v8262
  %9161 = vmatprep.mubr.bf16.mxu0 %v7086
  %9162 = vmatmul.mubr.bf16.gmra.mrb[0].mxu0 %v7085
  %v9163 = vpop.f32.mrb[0].mxu0
  %v9164 = vadd.f32 %v8858, %v9163
  %v9165 = vpop.f32.mrb[0].mxu0
  %v9166 = vadd.f32 %v8872, %v9165
  %v9167 = vpop.f32.mrb[0].mxu0
  %v9168 = vpop.f32.mrb[0].mxu0
  %9169 = vdwg.mxu0
  %9170 = vmatprep.subr.bf16.mxu0 %v8270
  %9171 = vmatpush1.bf16.msra.mxu0 %v8269
  %9172 = vmatprep.subr.bf16.mxu0 %v8277
  %9173 = vmatpush1.bf16.msra.mxu0 %v8276
  %9174 = vmatprep.subr.bf16.mxu0 %v8284
  %9175 = vmatpush1.bf16.msra.mxu0 %v8283
  %9176 = vmatprep.subr.bf16.mxu0 %v8291
  %9177 = vmatpush1.bf16.msra.mxu0 %v8290
  %9178 = vmatprep.subr.bf16.mxu0 %v8298
  %9179 = vmatpush1.bf16.msra.mxu0 %v8297
  %9180 = vmatprep.subr.bf16.mxu0 %v8305
  %9181 = vmatpush1.bf16.msra.mxu0 %v8304
  %9182 = vmatprep.subr.bf16.mxu0 %v8312
  %9183 = vmatpush1.bf16.msra.mxu0 %v8311
  %9184 = vmatprep.subr.bf16.mxu0 %v8319
  %9185 = vmatpush1.bf16.msra.mxu0 %v8318
  %9186 = vmatprep.subr.bf16.mxu0 %v8326
  %9187 = vmatpush1.bf16.msra.mxu0 %v8325
  %9188 = vmatprep.subr.bf16.mxu0 %v8333
  %9189 = vmatpush1.bf16.msra.mxu0 %v8332
  %9190 = vmatprep.subr.bf16.mxu0 %v8340
  %9191 = vmatpush1.bf16.msra.mxu0 %v8339
  %9192 = vmatprep.subr.bf16.mxu0 %v8347
  %9193 = vmatpush1.bf16.msra.mxu0 %v8346
  %9194 = vmatprep.subr.bf16.mxu0 %v8354
  %9195 = vmatpush1.bf16.msra.mxu0 %v8353
  %9196 = vmatprep.subr.bf16.mxu0 %v8361
  %9197 = vmatpush1.bf16.msra.mxu0 %v8360
  %9198 = vmatprep.subr.bf16.mxu0 %v8368
  %9199 = vmatpush1.bf16.msra.mxu0 %v8367
  %9200 = vmatprep.subr.bf16.mxu0 %v8375
  %9201 = vmatpush1.bf16.msra.mxu0 %v8374
  %9202 = vmatprep.mubr.bf16.mxu0 %v7088
  %9203 = vmatmul.mubr.bf16.gmra.mrb[0].mxu0 %v7087
  %v9204 = vpop.f32.mrb[0].mxu0
  %v9205 = vadd.f32 %v9164, %v9204
  %v9206 = vpop.f32.mrb[0].mxu0
  %v9207 = vadd.f32 %v9166, %v9206
  %v9208 = vpop.f32.mrb[0].mxu0
  %v9209 = vpop.f32.mrb[0].mxu0
  %9210 = vdwg.mxu0
  %9211 = vmatprep.subr.bf16.mxu0 %v8382
  %9212 = vmatpush1.bf16.msra.mxu0 %v8381
  %9213 = vmatprep.subr.bf16.mxu0 %v8389
  %9214 = vmatpush1.bf16.msra.mxu0 %v8388
  %9215 = vmatprep.subr.bf16.mxu0 %v8396
  %9216 = vmatpush1.bf16.msra.mxu0 %v8395
  %9217 = vmatprep.subr.bf16.mxu0 %v8403
  %9218 = vmatpush1.bf16.msra.mxu0 %v8402
  %9219 = vmatprep.subr.bf16.mxu0 %v8410
  %9220 = vmatpush1.bf16.msra.mxu0 %v8409
  %9221 = vmatprep.subr.bf16.mxu0 %v8417
  %9222 = vmatpush1.bf16.msra.mxu0 %v8416
  %9223 = vmatprep.subr.bf16.mxu0 %v8424
  %9224 = vmatpush1.bf16.msra.mxu0 %v8423
  %9225 = vmatprep.subr.bf16.mxu0 %v8431
  %9226 = vmatpush1.bf16.msra.mxu0 %v8430
  %9227 = vmatprep.subr.bf16.mxu0 %v8438
  %9228 = vmatpush1.bf16.msra.mxu0 %v8437
  %9229 = vmatprep.subr.bf16.mxu0 %v8445
  %9230 = vmatpush1.bf16.msra.mxu0 %v8444
  %9231 = vmatprep.subr.bf16.mxu0 %v8452
  %9232 = vmatpush1.bf16.msra.mxu0 %v8451
  %9233 = vmatprep.subr.bf16.mxu0 %v8459
  %9234 = vmatpush1.bf16.msra.mxu0 %v8458
  %9235 = vmatprep.subr.bf16.mxu0 %v8466
  %9236 = vmatpush1.bf16.msra.mxu0 %v8465
  %9237 = vmatprep.subr.bf16.mxu0 %v8473
  %9238 = vmatpush1.bf16.msra.mxu0 %v8472
  %9239 = vmatprep.subr.bf16.mxu0 %v8480
  %9240 = vmatpush1.bf16.msra.mxu0 %v8479
  %9241 = vmatprep.subr.bf16.mxu0 %v8487
  %9242 = vmatpush1.bf16.msra.mxu0 %v8486
  %9243 = vmatprep.mubr.bf16.mxu0 %v7090
  %9244 = vmatmul.mubr.bf16.gmra.mrb[0].mxu0 %v7089
  %v9245 = vpop.f32.mrb[0].mxu0
  %v9246 = vadd.f32 %v9205, %v9245
  %v9247 = vpop.f32.mrb[0].mxu0
  %v9248 = vadd.f32 %v9207, %v9247
  %v9249 = vpop.f32.mrb[0].mxu0
  %v9250 = vpop.f32.mrb[0].mxu0
  %9251 = vdwg.mxu0
  %9252 = vmatprep.subr.bf16.mxu0 0
  %9253 = vmatpush1.bf16.msra.mxu0 %v8159
  %9254 = vmatprep.subr.bf16.mxu0 0
  %9255 = vmatpush1.bf16.msra.mxu0 %v8166
  %9256 = vmatprep.subr.bf16.mxu0 0
  %9257 = vmatpush1.bf16.msra.mxu0 %v8173
  %9258 = vmatprep.subr.bf16.mxu0 0
  %9259 = vmatpush1.bf16.msra.mxu0 %v8180
  %9260 = vmatprep.subr.bf16.mxu0 0
  %9261 = vmatpush1.bf16.msra.mxu0 %v8187
  %9262 = vmatprep.subr.bf16.mxu0 0
  %9263 = vmatpush1.bf16.msra.mxu0 %v8194
  %9264 = vmatprep.subr.bf16.mxu0 0
  %9265 = vmatpush1.bf16.msra.mxu0 %v8201
  %9266 = vmatprep.subr.bf16.mxu0 0
  %9267 = vmatpush1.bf16.msra.mxu0 %v8208
  %9268 = vmatprep.subr.bf16.mxu0 0
  %9269 = vmatpush1.bf16.msra.mxu0 %v8215
  %9270 = vmatprep.subr.bf16.mxu0 0
  %9271 = vmatpush1.bf16.msra.mxu0 %v8222
  %9272 = vmatprep.subr.bf16.mxu0 0
  %9273 = vmatpush1.bf16.msra.mxu0 %v8229
  %9274 = vmatprep.subr.bf16.mxu0 0
  %9275 = vmatpush1.bf16.msra.mxu0 %v8236
  %9276 = vmatprep.subr.bf16.mxu0 0
  %9277 = vmatpush1.bf16.msra.mxu0 %v8243
  %9278 = vmatprep.subr.bf16.mxu0 0
  %9279 = vmatpush1.bf16.msra.mxu0 %v8250
  %9280 = vmatprep.subr.bf16.mxu0 0
  %9281 = vmatpush1.bf16.msra.mxu0 %v8257
  %9282 = vmatprep.subr.bf16.mxu0 0
  %9283 = vmatpush1.bf16.msra.mxu0 %v8264
  %9284 = vmatprep.mubr.bf16.mxu0 %v7086
  %9285 = vmatmul.mubr.bf16.gmra.mrb[0].mxu0 %v7085
  %v9286 = vpop.f32.mrb[0].mxu0
  %v9287 = vadd.f32 %v8874, %v9286
  %v9288 = vpop.f32.mrb[0].mxu0
  %v9289 = vpop.f32.mrb[0].mxu0
  %v9290 = vpop.f32.mrb[0].mxu0
  %9291 = vdwg.mxu0
  %9292 = vmatprep.subr.bf16.mxu0 0
  %9293 = vmatpush1.bf16.msra.mxu0 %v8271
  %9294 = vmatprep.subr.bf16.mxu0 0
  %9295 = vmatpush1.bf16.msra.mxu0 %v8278
  %9296 = vmatprep.subr.bf16.mxu0 0
  %9297 = vmatpush1.bf16.msra.mxu0 %v8285
  %9298 = vmatprep.subr.bf16.mxu0 0
  %9299 = vmatpush1.bf16.msra.mxu0 %v8292
  %9300 = vmatprep.subr.bf16.mxu0 0
  %9301 = vmatpush1.bf16.msra.mxu0 %v8299
  %9302 = vmatprep.subr.bf16.mxu0 0
  %9303 = vmatpush1.bf16.msra.mxu0 %v8306
  %9304 = vmatprep.subr.bf16.mxu0 0
  %9305 = vmatpush1.bf16.msra.mxu0 %v8313
  %9306 = vmatprep.subr.bf16.mxu0 0
  %9307 = vmatpush1.bf16.msra.mxu0 %v8320
  %9308 = vmatprep.subr.bf16.mxu0 0
  %9309 = vmatpush1.bf16.msra.mxu0 %v8327
  %9310 = vmatprep.subr.bf16.mxu0 0
  %9311 = vmatpush1.bf16.msra.mxu0 %v8334
  %9312 = vmatprep.subr.bf16.mxu0 0
  %9313 = vmatpush1.bf16.msra.mxu0 %v8341
  %9314 = vmatprep.subr.bf16.mxu0 0
  %9315 = vmatpush1.bf16.msra.mxu0 %v8348
  %9316 = vmatprep.subr.bf16.mxu0 0
  %9317 = vmatpush1.bf16.msra.mxu0 %v8355
  %9318 = vmatprep.subr.bf16.mxu0 0
  %9319 = vmatpush1.bf16.msra.mxu0 %v8362
  %9320 = vmatprep.subr.bf16.mxu0 0
  %9321 = vmatpush1.bf16.msra.mxu0 %v8369
  %9322 = vmatprep.subr.bf16.mxu0 0
  %9323 = vmatpush1.bf16.msra.mxu0 %v8376
  %9324 = vmatprep.mubr.bf16.mxu0 %v7088
  %9325 = vmatmul.mubr.bf16.gmra.mrb[0].mxu0 %v7087
  %v9326 = vpop.f32.mrb[0].mxu0
  %v9327 = vadd.f32 %v9287, %v9326
  %v9328 = vpop.f32.mrb[0].mxu0
  %v9329 = vpop.f32.mrb[0].mxu0
  %v9330 = vpop.f32.mrb[0].mxu0
  %9331 = vdwg.mxu0
  %9332 = vmatprep.subr.bf16.mxu0 0
  %9333 = vmatpush1.bf16.msra.mxu0 %v8383
  %9334 = vmatprep.subr.bf16.mxu0 0
  %9335 = vmatpush1.bf16.msra.mxu0 %v8390
  %9336 = vmatprep.subr.bf16.mxu0 0
  %9337 = vmatpush1.bf16.msra.mxu0 %v8397
  %9338 = vmatprep.subr.bf16.mxu0 0
  %9339 = vmatpush1.bf16.msra.mxu0 %v8404
  %9340 = vmatprep.subr.bf16.mxu0 0
  %9341 = vmatpush1.bf16.msra.mxu0 %v8411
  %9342 = vmatprep.subr.bf16.mxu0 0
  %9343 = vmatpush1.bf16.msra.mxu0 %v8418
  %9344 = vmatprep.subr.bf16.mxu0 0
  %9345 = vmatpush1.bf16.msra.mxu0 %v8425
  %9346 = vmatprep.subr.bf16.mxu0 0
  %9347 = vmatpush1.bf16.msra.mxu0 %v8432
  %9348 = vmatprep.subr.bf16.mxu0 0
  %9349 = vmatpush1.bf16.msra.mxu0 %v8439
  %9350 = vmatprep.subr.bf16.mxu0 0
  %9351 = vmatpush1.bf16.msra.mxu0 %v8446
  %9352 = vmatprep.subr.bf16.mxu0 0
  %9353 = vmatpush1.bf16.msra.mxu0 %v8453
  %9354 = vmatprep.subr.bf16.mxu0 0
  %9355 = vmatpush1.bf16.msra.mxu0 %v8460
  %9356 = vmatprep.subr.bf16.mxu0 0
  %9357 = vmatpush1.bf16.msra.mxu0 %v8467
  %9358 = vmatprep.subr.bf16.mxu0 0
  %9359 = vmatpush1.bf16.msra.mxu0 %v8474
  %9360 = vmatprep.subr.bf16.mxu0 0
  %9361 = vmatpush1.bf16.msra.mxu0 %v8481
  %9362 = vmatprep.subr.bf16.mxu0 0
  %9363 = vmatpush1.bf16.msra.mxu0 %v8488
  %9364 = vmatprep.mubr.bf16.mxu0 %v7090
  %9365 = vmatmul.mubr.bf16.gmra.mrb[0].mxu0 %v7089
  %v9366 = vpop.f32.mrb[0].mxu0
  %v9367 = vadd.f32 %v9327, %v9366
  %v9368 = vpop.f32.mrb[0].mxu0
  %v9369 = vpop.f32.mrb[0].mxu0
  %v9370 = vpop.f32.mrb[0].mxu0
  %9371 = vdwg.mxu0
  %v9372 = vld [vmem:[%s6] sm:$0x7f]
  %v9374 = vlaneseq
  %v9375 = vshrl.u32 %v9374, 7
  %v9376 = vsub.s32 0, %v9375
  %v9377 = vrot.slane %v9372, %v9376
  %v9378 = vlaneseq
  %v9379 = vshrl.u32 %v9378, 7
  %v9380 = vsub.s32 1, %v9379
  %v9381 = vrot.slane %v9372, %v9380
  %v9382 = vlaneseq
  %v9383 = vshrl.u32 %v9382, 7
  %v9384 = vsub.s32 2, %v9383
  %v9385 = vrot.slane %v9372, %v9384
  %v9386 = vlaneseq
  %v9387 = vshrl.u32 %v9386, 7
  %v9388 = vsub.s32 3, %v9387
  %v9389 = vrot.slane %v9372, %v9388
  %v9390 = vlaneseq
  %v9391 = vshrl.u32 %v9390, 7
  %v9392 = vsub.s32 4, %v9391
  %v9393 = vrot.slane %v9372, %v9392
  %v9394 = vlaneseq
  %v9395 = vshrl.u32 %v9394, 7
  %v9396 = vsub.s32 5, %v9395
  %v9397 = vrot.slane %v9372, %v9396
  %v9398 = vlaneseq
  %v9399 = vshrl.u32 %v9398, 7
  %v9400 = vsub.s32 6, %v9399
  %v9401 = vrot.slane %v9372, %v9400
  %v9409 = vadd.f32 %v9000, %v9377
  %v9410 = vadd.f32 %v9002, %v9381
  %v9411 = vadd.f32 %v9123, %v9385
  %v9412 = vadd.f32 %v9125, %v9389
  %v9413 = vadd.f32 %v9246, %v9393
  %v9414 = vadd.f32 %v9248, %v9397
  %v9415 = vadd.f32 %v9367, %v9401
  %v9416 = vmul.f32 %v9409, 0.5
  %v9417 = vmul.f32 %v9410, 0.5
  %v9418 = vmul.f32 %v9411, 0.5
  %v9419 = vmul.f32 %v9412, 0.5
  %v9420 = vmul.f32 %v9413, 0.5
  %v9421 = vmul.f32 %v9414, 0.5
  %v9422 = vmul.f32 %v9415, 0.5
  %v9423 = vmul.f32 %v9409, 0.70710677
  %v9424 = vmul.f32 %v9410, 0.70710677
  %v9425 = vmul.f32 %v9411, 0.70710677
  %v9426 = vmul.f32 %v9412, 0.70710677
  %v9427 = vmul.f32 %v9413, 0.70710677
  %v9428 = vmul.f32 %v9414, 0.70710677
  %v9429 = vmul.f32 %v9415, 0.70710677
  %v9430 = vand.u32 2147483647, %v9423
  %v9431 = vand.u32 2147483647, %v9424
  %v9432 = vand.u32 2147483647, %v9425
  %v9433 = vand.u32 2147483647, %v9426
  %v9434 = vand.u32 2147483647, %v9427
  %v9435 = vand.u32 2147483647, %v9428
  %v9436 = vand.u32 2147483647, %v9429
  %v9437 = vmul.f32 %v9430, 0.3275911
  %v9438 = vmul.f32 %v9431, 0.3275911
  %v9439 = vmul.f32 %v9432, 0.3275911
  %v9440 = vmul.f32 %v9433, 0.3275911
  %v9441 = vmul.f32 %v9434, 0.3275911
  %v9442 = vmul.f32 %v9435, 0.3275911
  %v9443 = vmul.f32 %v9436, 0.3275911
  %v9444 = vadd.f32 %v9437, 1.0
  %v9445 = vadd.f32 %v9438, 1.0
  %v9446 = vadd.f32 %v9439, 1.0
  %v9447 = vadd.f32 %v9440, 1.0
  %v9448 = vadd.f32 %v9441, 1.0
  %v9449 = vadd.f32 %v9442, 1.0
  %v9450 = vadd.f32 %v9443, 1.0
  %v9451 = vrcp.pop %v9444
  %v9452 = vrcp.pop %v9445
  %v9453 = vrcp.pop %v9446
  %v9454 = vrcp.pop %v9447
  %v9455 = vrcp.pop %v9448
  %v9456 = vrcp.pop %v9449
  %v9457 = vrcp.pop %v9450
  %v9458 = vmul.f32 %v9451, 1.0614054
  %v9459 = vmul.f32 %v9452, 1.0614054
  %v9460 = vmul.f32 %v9453, 1.0614054
  %v9461 = vmul.f32 %v9454, 1.0614054
  %v9462 = vmul.f32 %v9455, 1.0614054
  %v9463 = vmul.f32 %v9456, 1.0614054
  %v9464 = vmul.f32 %v9457, 1.0614054
  %v9465 = vadd.f32 %v9458, -1.4531521
  %v9466 = vadd.f32 %v9459, -1.4531521
  %v9467 = vadd.f32 %v9460, -1.4531521
  %v9468 = vadd.f32 %v9461, -1.4531521
  %v9469 = vadd.f32 %v9462, -1.4531521
  %v9470 = vadd.f32 %v9463, -1.4531521
  %v9471 = vadd.f32 %v9464, -1.4531521
  %v9472 = vmul.f32 %v9451, %v9465
  %v9473 = vmul.f32 %v9452, %v9466
  %v9474 = vmul.f32 %v9453, %v9467
  %v9475 = vmul.f32 %v9454, %v9468
  %v9476 = vmul.f32 %v9455, %v9469
  %v9477 = vmul.f32 %v9456, %v9470
  %v9478 = vmul.f32 %v9457, %v9471
  %v9479 = vadd.f32 %v9472, 1.4214138
  %v9480 = vadd.f32 %v9473, 1.4214138
  %v9481 = vadd.f32 %v9474, 1.4214138
  %v9482 = vadd.f32 %v9475, 1.4214138
  %v9483 = vadd.f32 %v9476, 1.4214138
  %v9484 = vadd.f32 %v9477, 1.4214138
  %v9485 = vadd.f32 %v9478, 1.4214138
  %v9486 = vmul.f32 %v9451, %v9479
  %v9487 = vmul.f32 %v9452, %v9480
  %v9488 = vmul.f32 %v9453, %v9481
  %v9489 = vmul.f32 %v9454, %v9482
  %v9490 = vmul.f32 %v9455, %v9483
  %v9491 = vmul.f32 %v9456, %v9484
  %v9492 = vmul.f32 %v9457, %v9485
  %v9493 = vadd.f32 %v9486, -0.28449672
  %v9494 = vadd.f32 %v9487, -0.28449672
  %v9495 = vadd.f32 %v9488, -0.28449672
  %v9496 = vadd.f32 %v9489, -0.28449672
  %v9497 = vadd.f32 %v9490, -0.28449672
  %v9498 = vadd.f32 %v9491, -0.28449672
  %v9499 = vadd.f32 %v9492, -0.28449672
  %v9500 = vmul.f32 %v9451, %v9493
  %v9501 = vmul.f32 %v9452, %v9494
  %v9502 = vmul.f32 %v9453, %v9495
  %v9503 = vmul.f32 %v9454, %v9496
  %v9504 = vmul.f32 %v9455, %v9497
  %v9505 = vmul.f32 %v9456, %v9498
  %v9506 = vmul.f32 %v9457, %v9499
  %v9507 = vadd.f32 %v9500, 0.2548296
  %v9508 = vadd.f32 %v9501, 0.2548296
  %v9509 = vadd.f32 %v9502, 0.2548296
  %v9510 = vadd.f32 %v9503, 0.2548296
  %v9511 = vadd.f32 %v9504, 0.2548296
  %v9512 = vadd.f32 %v9505, 0.2548296
  %v9513 = vadd.f32 %v9506, 0.2548296
  %v9514 = vmul.f32 %v9451, %v9507
  %v9515 = vmul.f32 %v9452, %v9508
  %v9516 = vmul.f32 %v9453, %v9509
  %v9517 = vmul.f32 %v9454, %v9510
  %v9518 = vmul.f32 %v9455, %v9511
  %v9519 = vmul.f32 %v9456, %v9512
  %v9520 = vmul.f32 %v9457, %v9513
  %v9521 = vsub.f32 0.0, %v9430
  %v9522 = vsub.f32 0.0, %v9431
  %v9523 = vsub.f32 0.0, %v9432
  %v9524 = vsub.f32 0.0, %v9433
  %v9525 = vsub.f32 0.0, %v9434
  %v9526 = vsub.f32 0.0, %v9435
  %v9527 = vsub.f32 0.0, %v9436
  %v9528 = vmul.f32 %v9521, %v9430
  %v9529 = vmul.f32 %v9522, %v9431
  %v9530 = vmul.f32 %v9523, %v9432
  %v9531 = vmul.f32 %v9524, %v9433
  %v9532 = vmul.f32 %v9525, %v9434
  %v9533 = vmul.f32 %v9526, %v9435
  %v9534 = vmul.f32 %v9527, %v9436
  %v9535 = vmul.f32 %v9528, 1.442695
  %v9536 = vpow.pop %v9535
  %v9537 = vmul.f32 %v9529, 1.442695
  %v9538 = vpow.pop %v9537
  %v9539 = vmul.f32 %v9530, 1.442695
  %v9540 = vpow.pop %v9539
  %v9541 = vmul.f32 %v9531, 1.442695
  %v9542 = vpow.pop %v9541
  %v9543 = vmul.f32 %v9532, 1.442695
  %v9544 = vpow.pop %v9543
  %v9545 = vmul.f32 %v9533, 1.442695
  %v9546 = vpow.pop %v9545
  %v9547 = vmul.f32 %v9534, 1.442695
  %v9548 = vpow.pop %v9547
  %v9549 = vmul.f32 %v9514, %v9536
  %v9550 = vmul.f32 %v9515, %v9538
  %v9551 = vmul.f32 %v9516, %v9540
  %v9552 = vmul.f32 %v9517, %v9542
  %v9553 = vmul.f32 %v9518, %v9544
  %v9554 = vmul.f32 %v9519, %v9546
  %v9555 = vmul.f32 %v9520, %v9548
  %v9556 = vsub.f32 1.0, %v9549
  %v9557 = vsub.f32 1.0, %v9550
  %v9558 = vsub.f32 1.0, %v9551
  %v9559 = vsub.f32 1.0, %v9552
  %v9560 = vsub.f32 1.0, %v9553
  %v9561 = vsub.f32 1.0, %v9554
  %v9562 = vsub.f32 1.0, %v9555
  %vm9563 = vcmp.ge.f32.partialorder %v9423, 0.0
  %vm9564 = vcmp.ge.f32.partialorder %v9424, 0.0
  %vm9565 = vcmp.ge.f32.partialorder %v9425, 0.0
  %vm9566 = vcmp.ge.f32.partialorder %v9426, 0.0
  %vm9567 = vcmp.ge.f32.partialorder %v9427, 0.0
  %vm9568 = vcmp.ge.f32.partialorder %v9428, 0.0
  %vm9569 = vcmp.ge.f32.partialorder %v9429, 0.0
  %v9570 = vsub.f32 0.0, %v9556
  %v9571 = vsub.f32 0.0, %v9557
  %v9572 = vsub.f32 0.0, %v9558
  %v9573 = vsub.f32 0.0, %v9559
  %v9574 = vsub.f32 0.0, %v9560
  %v9575 = vsub.f32 0.0, %v9561
  %v9576 = vsub.f32 0.0, %v9562
  %v9577 = vsel %vm9563, %v9556, %v9570
  %v9578 = vsel %vm9564, %v9557, %v9571
  %v9579 = vsel %vm9565, %v9558, %v9572
  %v9580 = vsel %vm9566, %v9559, %v9573
  %v9581 = vsel %vm9567, %v9560, %v9574
  %v9582 = vsel %vm9568, %v9561, %v9575
  %v9583 = vsel %vm9569, %v9562, %v9576
  %v9584 = vadd.f32 %v9577, 1.0
  %v9585 = vadd.f32 %v9578, 1.0
  %v9586 = vadd.f32 %v9579, 1.0
  %v9587 = vadd.f32 %v9580, 1.0
  %v9588 = vadd.f32 %v9581, 1.0
  %v9589 = vadd.f32 %v9582, 1.0
  %v9590 = vadd.f32 %v9583, 1.0
  %v9591 = vmul.f32 %v9416, %v9584
  %v9592 = vmul.f32 %v9417, %v9585
  %v9593 = vmul.f32 %v9418, %v9586
  %v9594 = vmul.f32 %v9419, %v9587
  %v9595 = vmul.f32 %v9420, %v9588
  %v9596 = vmul.f32 %v9421, %v9589
  %v9597 = vmul.f32 %v9422, %v9590
  %vm9598 = vcmask 1041408
  %v9599 = vsel %vm9598, %v9591, 0.0
  %v9600 = vsel %vm9598, %v9592, 0.0
  %v9601 = vadd.f32 %v9599, %v9600
  %v9602 = vsel %vm9598, %v9593, 0.0
  %v9603 = vadd.f32 %v9601, %v9602
  %v9604 = vsel %vm9598, %v9594, 0.0
  %v9605 = vadd.f32 %v9603, %v9604
  %v9606 = vsel %vm9598, %v9595, 0.0
  %v9607 = vadd.f32 %v9605, %v9606
  %v9608 = vsel %vm9598, %v9596, 0.0
  %v9609 = vadd.f32 %v9607, %v9608
  %vm9610 = vcmask 254976
  %v9611 = vsel %vm9610, %v9597, 0.0
  %v9612 = vadd.f32 %v9609, %v9611
  %9613 = vadd.xlane.f32.xlu0 %v9612
  %v9614 = vpop.xlane.xlu0 %9613
  %v9615 = vrcp.pop 800.0
  %v9616 = vmul.f32 %v9614, %v9615
  %v9617 = vsub.f32 %v9591, %v9616
  %v9618 = vsub.f32 %v9592, %v9616
  %v9619 = vsub.f32 %v9593, %v9616
  %v9620 = vsub.f32 %v9594, %v9616
  %v9621 = vsub.f32 %v9595, %v9616
  %v9622 = vsub.f32 %v9596, %v9616
  %v9623 = vsub.f32 %v9597, %v9616
  %v9624 = vmul.f32 %v9617, %v9617
  %v9625 = vmul.f32 %v9618, %v9618
  %v9626 = vmul.f32 %v9619, %v9619
  %v9627 = vmul.f32 %v9620, %v9620
  %v9628 = vmul.f32 %v9621, %v9621
  %v9629 = vmul.f32 %v9622, %v9622
  %v9630 = vmul.f32 %v9623, %v9623
  %v9631 = vsel %vm9598, %v9624, 0.0
  %v9632 = vsel %vm9598, %v9625, 0.0
  %v9633 = vadd.f32 %v9631, %v9632
  %v9634 = vsel %vm9598, %v9626, 0.0
  %v9635 = vadd.f32 %v9633, %v9634
  %v9636 = vsel %vm9598, %v9627, 0.0
  %v9637 = vadd.f32 %v9635, %v9636
  %v9638 = vsel %vm9598, %v9628, 0.0
  %v9639 = vadd.f32 %v9637, %v9638
  %v9640 = vsel %vm9598, %v9629, 0.0
  %v9641 = vadd.f32 %v9639, %v9640
  %v9642 = vsel %vm9610, %v9630, 0.0
  %v9643 = vadd.f32 %v9641, %v9642
  %9644 = vadd.xlane.f32.xlu0 %v9643
  %v9645 = vpop.xlane.xlu0 %9644
  %v9646 = vmul.f32 %v9645, %v9615
  %v9647 = vadd.f32 %v9646, 1e-05
  %v9648 = vrsqrt.pop %v9647
  %v9649 = vmul.f32 %v9617, %v9648
  %v9650 = vmul.f32 %v9618, %v9648
  %v9651 = vmul.f32 %v9619, %v9648
  %v9652 = vmul.f32 %v9620, %v9648
  %v9653 = vmul.f32 %v9621, %v9648
  %v9654 = vmul.f32 %v9622, %v9648
  %v9655 = vmul.f32 %v9623, %v9648
  %v9656 = vpack.c.bf16 %v9649, %v9649
  %v9657 = vpack.c.bf16 %v9650, %v9650
  %v9658 = vpack.c.bf16 %v9651, %v9651
  %v9659 = vpack.c.bf16 %v9652, %v9652
  %v9660 = vpack.c.bf16 %v9653, %v9653
  %v9661 = vpack.c.bf16 %v9654, %v9654
  %v9662 = vpack.c.bf16 %v9655, %v9655
  %v9663 = vld [vmem:[%s7] sm:$0xff]
  %v9664 = vld [vmem:[%s7 + $0x8] sm:$0xff]
  %v9665 = vld [vmem:[%s7 + $0x10] sm:$0xff]
  %v9666 = vld [vmem:[%s7 + $0x18] sm:$0xff]
  %v9667 = vld [vmem:[%s7 + $0x20] sm:$0xff]
  %v9668 = vld [vmem:[%s7 + $0x28] sm:$0xff]
  %v9669 = vld [vmem:[%s7 + $0x30] sm:$0xff]
  %v9670 = vld [vmem:[%s7 + $0x38] sm:$0xff]
  %v9671 = vld [vmem:[%s7 + $0x40] sm:$0xff]
  %v9672 = vld [vmem:[%s7 + $0x48] sm:$0xff]
  %v9673 = vld [vmem:[%s7 + $0x50] sm:$0xff]
  %v9674 = vld [vmem:[%s7 + $0x58] sm:$0xff]
  %v9675 = vld [vmem:[%s7 + $0x60] sm:$0xff]
  %v9676 = vld [vmem:[%s7 + $0x68] sm:$0xff]
  %v9677 = vld [vmem:[%s7 + $0x70] sm:$0xff]
  %v9678 = vld [vmem:[%s7 + $0x78] sm:$0xff]
  %v9679 = vld [vmem:[%s7 + $0x80] sm:$0xff]
  %v9680 = vld [vmem:[%s7 + $0x88] sm:$0xff]
  %v9681 = vld [vmem:[%s7 + $0x90] sm:$0xff]
  %v9682 = vld [vmem:[%s7 + $0x98] sm:$0xff]
  %v9683 = vld [vmem:[%s7 + $0xa0] sm:$0xff]
  %v9684 = vld [vmem:[%s7 + $0xa8] sm:$0xff]
  %v9685 = vld [vmem:[%s7 + $0xb0] sm:$0xff]
  %v9686 = vld [vmem:[%s7 + $0xb8] sm:$0xff]
  %v9687 = vld [vmem:[%s7 + $0xc0] sm:$0xff]
  %v9688 = vld [vmem:[%s7 + $0xc8] sm:$0xff]
  %v9689 = vld [vmem:[%s7 + $0xd0] sm:$0xff]
  %v9690 = vld [vmem:[%s7 + $0xd8] sm:$0xff]
  %v9691 = vld [vmem:[%s7 + $0xe0] sm:$0xff]
  %v9692 = vld [vmem:[%s7 + $0xe8] sm:$0xff]
  %v9693 = vld [vmem:[%s7 + $0xf0] sm:$0xff]
  %v9694 = vld [vmem:[%s7 + $0xf8] sm:$0xff]
  %v9695 = vld [vmem:[%s7 + $0x100] sm:$0xff]
  %v9696 = vld [vmem:[%s7 + $0x108] sm:$0xff]
  %v9697 = vld [vmem:[%s7 + $0x110] sm:$0xff]
  %v9698 = vld [vmem:[%s7 + $0x118] sm:$0xff]
  %v9699 = vld [vmem:[%s7 + $0x120] sm:$0xff]
  %v9700 = vld [vmem:[%s7 + $0x128] sm:$0xff]
  %v9701 = vld [vmem:[%s7 + $0x130] sm:$0xff]
  %v9702 = vld [vmem:[%s7 + $0x138] sm:$0xff]
  %v9703 = vld [vmem:[%s7 + $0x140] sm:$0xff]
  %v9704 = vld [vmem:[%s7 + $0x148] sm:$0xff]
  %v9705 = vld [vmem:[%s7 + $0x150] sm:$0xff]
  %v9706 = vld [vmem:[%s7 + $0x158] sm:$0xff]
  %v9707 = vld [vmem:[%s7 + $0x160] sm:$0xff]
  %v9708 = vld [vmem:[%s7 + $0x168] sm:$0xff]
  %v9709 = vld [vmem:[%s7 + $0x170] sm:$0xff]
  %v9710 = vld [vmem:[%s7 + $0x178] sm:$0xff]
  %v9711 = vld [vmem:[%s7 + $0x180] sm:$0xff]
  %v9712 = vld [vmem:[%s7 + $0x188] sm:$0xff]
  %v9713 = vld [vmem:[%s7 + $0x190] sm:$0xff]
  %v9714 = vld [vmem:[%s7 + $0x198] sm:$0xff]
  %v9715 = vld [vmem:[%s7 + $0x1a0] sm:$0xff]
  %v9716 = vld [vmem:[%s7 + $0x1a8] sm:$0xff]
  %v9717 = vld [vmem:[%s7 + $0x1b0] sm:$0xff]
  %v9718 = vld [vmem:[%s7 + $0x1b8] sm:$0xff]
  %v9719 = vld [vmem:[%s7 + $0x1c0] sm:$0xff]
  %v9720 = vld [vmem:[%s7 + $0x1c8] sm:$0xff]
  %v9721 = vld [vmem:[%s7 + $0x1d0] sm:$0xff]
  %v9722 = vld [vmem:[%s7 + $0x1d8] sm:$0xff]
  %v9723 = vld [vmem:[%s7 + $0x1e0] sm:$0xff]
  %v9724 = vld [vmem:[%s7 + $0x1e8] sm:$0xff]
  %v9725 = vld [vmem:[%s7 + $0x1f0] sm:$0xff]
  %v9726 = vld [vmem:[%s7 + $0x1f8] sm:$0xff]
  %v9727 = vld [vmem:[%s7 + $0x200] sm:$0xff]
  %v9728 = vld [vmem:[%s7 + $0x208] sm:$0xff]
  %v9729 = vld [vmem:[%s7 + $0x210] sm:$0xff]
  %v9730 = vld [vmem:[%s7 + $0x218] sm:$0xff]
  %v9731 = vld [vmem:[%s7 + $0x220] sm:$0xff]
  %v9732 = vld [vmem:[%s7 + $0x228] sm:$0xff]
  %v9733 = vld [vmem:[%s7 + $0x230] sm:$0xff]
  %v9734 = vld [vmem:[%s7 + $0x238] sm:$0xff]
  %v9735 = vld [vmem:[%s7 + $0x240] sm:$0xff]
  %v9736 = vld [vmem:[%s7 + $0x248] sm:$0xff]
  %v9737 = vld [vmem:[%s7 + $0x250] sm:$0xff]
  %v9738 = vld [vmem:[%s7 + $0x258] sm:$0xff]
  %v9739 = vld [vmem:[%s7 + $0x260] sm:$0xff]
  %v9740 = vld [vmem:[%s7 + $0x268] sm:$0xff]
  %v9741 = vld [vmem:[%s7 + $0x270] sm:$0xff]
  %v9742 = vld [vmem:[%s7 + $0x278] sm:$0xff]
  %v9743 = vld [vmem:[%s7 + $0x280] sm:$0xff]
  %v9744 = vld [vmem:[%s7 + $0x288] sm:$0xff]
  %v9745 = vld [vmem:[%s7 + $0x290] sm:$0xff]
  %v9746 = vld [vmem:[%s7 + $0x298] sm:$0xff]
  %v9747 = vld [vmem:[%s7 + $0x2a0] sm:$0xff]
  %v9748 = vld [vmem:[%s7 + $0x2a8] sm:$0xff]
  %v9749 = vld [vmem:[%s7 + $0x2b0] sm:$0xff]
  %v9750 = vld [vmem:[%s7 + $0x2b8] sm:$0xff]
  %v9751 = vld [vmem:[%s7 + $0x2c0] sm:$0xff]
  %v9752 = vld [vmem:[%s7 + $0x2c8] sm:$0xff]
  %v9753 = vld [vmem:[%s7 + $0x2d0] sm:$0xff]
  %v9754 = vld [vmem:[%s7 + $0x2d8] sm:$0xff]
  %v9755 = vld [vmem:[%s7 + $0x2e0] sm:$0xff]
  %v9756 = vld [vmem:[%s7 + $0x2e8] sm:$0xff]
  %v9757 = vld [vmem:[%s7 + $0x2f0] sm:$0xff]
  %v9758 = vld [vmem:[%s7 + $0x2f8] sm:$0xff]
  %v9759 = vld [vmem:[%s7 + $0x300] sm:$0xff]
  %v9760 = vld [vmem:[%s7 + $0x308] sm:$0xff]
  %v9761 = vld [vmem:[%s7 + $0x310] sm:$0xff]
  %v9762 = vld [vmem:[%s7 + $0x318] sm:$0xff]
  %v9763 = vld [vmem:[%s8] sm:$0x3]
  %v9765 = vlaneseq
  %v9766 = vshrl.u32 %v9765, 7
  %v9767 = vsub.s32 0, %v9766
  %v9768 = vrot.slane %v9763, %v9767
  %v9769 = vlaneseq
  %v9770 = vshrl.u32 %v9769, 7
  %v9771 = vsub.s32 1, %v9770
  %v9772 = vrot.slane %v9763, %v9771
  %v9875 = vunpack.c.l.b16 %v9663
  %v9876 = vunpack.c.h.b16 %v9663
  %v9877 = vunpack.c.l.b16 %v9664
  %v9878 = vunpack.c.h.b16 %v9664
  %v9879 = vunpack.c.l.b16 %v9665
  %v9880 = vunpack.c.h.b16 %v9665
  %v9881 = vunpack.c.l.b16 %v9666
  %v9882 = vunpack.c.h.b16 %v9666
  %v9883 = vunpack.c.l.b16 %v9667
  %v9884 = vunpack.c.h.b16 %v9667
  %v9885 = vunpack.c.l.b16 %v9668
  %v9886 = vunpack.c.h.b16 %v9668
  %v9887 = vunpack.c.l.b16 %v9669
  %v9888 = vunpack.c.h.b16 %v9669
  %v9889 = vunpack.c.l.b16 %v9670
  %v9890 = vunpack.c.h.b16 %v9670
  %v9891 = vunpack.c.l.b16 %v9671
  %v9892 = vunpack.c.h.b16 %v9671
  %v9893 = vunpack.c.l.b16 %v9672
  %v9894 = vunpack.c.h.b16 %v9672
  %v9895 = vunpack.c.l.b16 %v9673
  %v9896 = vunpack.c.h.b16 %v9673
  %v9897 = vunpack.c.l.b16 %v9674
  %v9898 = vunpack.c.h.b16 %v9674
  %v9899 = vunpack.c.l.b16 %v9675
  %v9900 = vunpack.c.h.b16 %v9675
  %v9901 = vunpack.c.l.b16 %v9676
  %v9902 = vunpack.c.h.b16 %v9676
  %v9903 = vunpack.c.l.b16 %v9677
  %v9904 = vunpack.c.h.b16 %v9677
  %v9905 = vunpack.c.l.b16 %v9678
  %v9906 = vunpack.c.h.b16 %v9678
  %v9907 = vunpack.c.l.b16 %v9679
  %v9908 = vunpack.c.h.b16 %v9679
  %v9909 = vunpack.c.l.b16 %v9680
  %v9910 = vunpack.c.h.b16 %v9680
  %v9911 = vunpack.c.l.b16 %v9681
  %v9912 = vunpack.c.h.b16 %v9681
  %v9913 = vunpack.c.l.b16 %v9682
  %v9914 = vunpack.c.h.b16 %v9682
  %v9915 = vunpack.c.l.b16 %v9683
  %v9916 = vunpack.c.h.b16 %v9683
  %v9917 = vunpack.c.l.b16 %v9684
  %v9918 = vunpack.c.h.b16 %v9684
  %v9919 = vunpack.c.l.b16 %v9685
  %v9920 = vunpack.c.h.b16 %v9685
  %v9921 = vunpack.c.l.b16 %v9686
  %v9922 = vunpack.c.h.b16 %v9686
  %v9923 = vunpack.c.l.b16 %v9687
  %v9924 = vunpack.c.h.b16 %v9687
  %v9925 = vunpack.c.l.b16 %v9688
  %v9926 = vunpack.c.h.b16 %v9688
  %v9927 = vunpack.c.l.b16 %v9689
  %v9928 = vunpack.c.h.b16 %v9689
  %v9929 = vunpack.c.l.b16 %v9690
  %v9930 = vunpack.c.h.b16 %v9690
  %v9931 = vunpack.c.l.b16 %v9691
  %v9932 = vunpack.c.h.b16 %v9691
  %v9933 = vunpack.c.l.b16 %v9692
  %v9934 = vunpack.c.h.b16 %v9692
  %v9935 = vunpack.c.l.b16 %v9693
  %v9936 = vunpack.c.h.b16 %v9693
  %v9937 = vunpack.c.l.b16 %v9694
  %v9938 = vunpack.c.h.b16 %v9694
  %v9939 = vunpack.c.l.b16 %v9695
  %v9940 = vunpack.c.h.b16 %v9695
  %v9941 = vunpack.c.l.b16 %v9696
  %v9942 = vunpack.c.h.b16 %v9696
  %v9943 = vunpack.c.l.b16 %v9697
  %v9944 = vunpack.c.h.b16 %v9697
  %v9945 = vunpack.c.l.b16 %v9698
  %v9946 = vunpack.c.h.b16 %v9698
  %v9947 = vunpack.c.l.b16 %v9699
  %v9948 = vunpack.c.h.b16 %v9699
  %v9949 = vunpack.c.l.b16 %v9700
  %v9950 = vunpack.c.h.b16 %v9700
  %v9951 = vunpack.c.l.b16 %v9701
  %v9952 = vunpack.c.h.b16 %v9701
  %v9953 = vunpack.c.l.b16 %v9702
  %v9954 = vunpack.c.h.b16 %v9702
  %v9955 = vunpack.c.l.b16 %v9703
  %v9956 = vunpack.c.h.b16 %v9703
  %v9957 = vunpack.c.l.b16 %v9704
  %v9958 = vunpack.c.h.b16 %v9704
  %v9959 = vunpack.c.l.b16 %v9705
  %v9960 = vunpack.c.h.b16 %v9705
  %v9961 = vunpack.c.l.b16 %v9706
  %v9962 = vunpack.c.h.b16 %v9706
  %v9963 = vunpack.c.l.b16 %v9707
  %v9964 = vunpack.c.h.b16 %v9707
  %v9965 = vunpack.c.l.b16 %v9708
  %v9966 = vunpack.c.h.b16 %v9708
  %v9967 = vunpack.c.l.b16 %v9709
  %v9968 = vunpack.c.h.b16 %v9709
  %v9969 = vunpack.c.l.b16 %v9710
  %v9970 = vunpack.c.h.b16 %v9710
  %v9971 = vunpack.c.l.b16 %v9711
  %v9972 = vunpack.c.h.b16 %v9711
  %v9973 = vunpack.c.l.b16 %v9712
  %v9974 = vunpack.c.h.b16 %v9712
  %v9975 = vunpack.c.l.b16 %v9713
  %v9976 = vunpack.c.h.b16 %v9713
  %v9977 = vunpack.c.l.b16 %v9714
  %v9978 = vunpack.c.h.b16 %v9714
  %v9979 = vunpack.c.l.b16 %v9715
  %v9980 = vunpack.c.h.b16 %v9715
  %v9981 = vunpack.c.l.b16 %v9716
  %v9982 = vunpack.c.h.b16 %v9716
  %v9983 = vunpack.c.l.b16 %v9717
  %v9984 = vunpack.c.h.b16 %v9717
  %v9985 = vunpack.c.l.b16 %v9718
  %v9986 = vunpack.c.h.b16 %v9718
  %v9987 = vunpack.c.l.b16 %v9719
  %v9988 = vunpack.c.h.b16 %v9719
  %v9989 = vunpack.c.l.b16 %v9720
  %v9990 = vunpack.c.h.b16 %v9720
  %v9991 = vunpack.c.l.b16 %v9721
  %v9992 = vunpack.c.h.b16 %v9721
  %v9993 = vunpack.c.l.b16 %v9722
  %v9994 = vunpack.c.h.b16 %v9722
  %v9995 = vunpack.c.l.b16 %v9723
  %v9996 = vunpack.c.h.b16 %v9723
  %v9997 = vunpack.c.l.b16 %v9724
  %v9998 = vunpack.c.h.b16 %v9724
  %v9999 = vunpack.c.l.b16 %v9725
  %v10000 = vunpack.c.h.b16 %v9725
  %v10001 = vunpack.c.l.b16 %v9726
  %v10002 = vunpack.c.h.b16 %v9726
  %v10003 = vunpack.c.l.b16 %v9727
  %v10004 = vunpack.c.h.b16 %v9727
  %v10005 = vunpack.c.l.b16 %v9728
  %v10006 = vunpack.c.h.b16 %v9728
  %v10007 = vunpack.c.l.b16 %v9729
  %v10008 = vunpack.c.h.b16 %v9729
  %v10009 = vunpack.c.l.b16 %v9730
  %v10010 = vunpack.c.h.b16 %v9730
  %v10011 = vunpack.c.l.b16 %v9731
  %v10012 = vunpack.c.h.b16 %v9731
  %v10013 = vunpack.c.l.b16 %v9732
  %v10014 = vunpack.c.h.b16 %v9732
  %v10015 = vunpack.c.l.b16 %v9733
  %v10016 = vunpack.c.h.b16 %v9733
  %v10017 = vunpack.c.l.b16 %v9734
  %v10018 = vunpack.c.h.b16 %v9734
  %v10019 = vunpack.c.l.b16 %v9735
  %v10020 = vunpack.c.h.b16 %v9735
  %v10021 = vunpack.c.l.b16 %v9736
  %v10022 = vunpack.c.h.b16 %v9736
  %v10023 = vunpack.c.l.b16 %v9737
  %v10024 = vunpack.c.h.b16 %v9737
  %v10025 = vunpack.c.l.b16 %v9738
  %v10026 = vunpack.c.h.b16 %v9738
  %v10027 = vunpack.c.l.b16 %v9739
  %v10028 = vunpack.c.h.b16 %v9739
  %v10029 = vunpack.c.l.b16 %v9740
  %v10030 = vunpack.c.h.b16 %v9740
  %v10031 = vunpack.c.l.b16 %v9741
  %v10032 = vunpack.c.h.b16 %v9741
  %v10033 = vunpack.c.l.b16 %v9742
  %v10034 = vunpack.c.h.b16 %v9742
  %v10035 = vunpack.c.l.b16 %v9743
  %v10036 = vunpack.c.h.b16 %v9743
  %v10037 = vunpack.c.l.b16 %v9744
  %v10038 = vunpack.c.h.b16 %v9744
  %v10039 = vunpack.c.l.b16 %v9745
  %v10040 = vunpack.c.h.b16 %v9745
  %v10041 = vunpack.c.l.b16 %v9746
  %v10042 = vunpack.c.h.b16 %v9746
  %v10043 = vunpack.c.l.b16 %v9747
  %v10044 = vunpack.c.h.b16 %v9747
  %v10045 = vunpack.c.l.b16 %v9748
  %v10046 = vunpack.c.h.b16 %v9748
  %v10047 = vunpack.c.l.b16 %v9749
  %v10048 = vunpack.c.h.b16 %v9749
  %v10049 = vunpack.c.l.b16 %v9750
  %v10050 = vunpack.c.h.b16 %v9750
  %v10051 = vunpack.c.l.b16 %v9751
  %v10052 = vunpack.c.h.b16 %v9751
  %v10053 = vunpack.c.l.b16 %v9752
  %v10054 = vunpack.c.h.b16 %v9752
  %v10055 = vunpack.c.l.b16 %v9753
  %v10056 = vunpack.c.h.b16 %v9753
  %v10057 = vunpack.c.l.b16 %v9754
  %v10058 = vunpack.c.h.b16 %v9754
  %v10059 = vunpack.c.l.b16 %v9755
  %v10060 = vunpack.c.h.b16 %v9755
  %v10061 = vunpack.c.l.b16 %v9756
  %v10062 = vunpack.c.h.b16 %v9756
  %v10063 = vunpack.c.l.b16 %v9757
  %v10064 = vunpack.c.h.b16 %v9757
  %v10065 = vunpack.c.l.b16 %v9758
  %v10066 = vunpack.c.h.b16 %v9758
  %v10067 = vunpack.c.l.b16 %v9759
  %v10068 = vunpack.c.h.b16 %v9759
  %v10069 = vunpack.c.l.b16 %v9760
  %v10070 = vunpack.c.h.b16 %v9760
  %v10071 = vunpack.c.l.b16 %v9761
  %v10072 = vunpack.c.h.b16 %v9761
  %v10073 = vunpack.c.l.b16 %v9762
  %v10074 = vunpack.c.h.b16 %v9762
  %v10075 = vpack.c.b16 %v9877, %v9875
  %v10076 = vpack.c.b16 %v9878, %v9876
  %v10077 = vpack.c.b16 %v9881, %v9879
  %v10078 = vpack.c.b16 %v9882, %v9880
  %v10079 = vpack.c.b16 %v9885, %v9883
  %v10080 = vpack.c.b16 %v9886, %v9884
  %v10081 = vpack.c.b16 %v9889, %v9887
  %v10082 = vpack.c.b16 %v9890, %v9888
  %v10083 = vpack.c.b16 %v9893, %v9891
  %v10084 = vpack.c.b16 %v9894, %v9892
  %v10085 = vpack.c.b16 %v9897, %v9895
  %v10086 = vpack.c.b16 %v9898, %v9896
  %v10087 = vpack.c.b16 %v9901, %v9899
  %v10088 = vpack.c.b16 %v9902, %v9900
  %v10089 = vpack.c.b16 %v9905, %v9903
  %v10090 = vpack.c.b16 %v9906, %v9904
  %v10091 = vpack.c.b16 %v9909, %v9907
  %v10092 = vpack.c.b16 %v9910, %v9908
  %v10093 = vpack.c.b16 %v9913, %v9911
  %v10094 = vpack.c.b16 %v9914, %v9912
  %v10095 = vpack.c.b16 %v9917, %v9915
  %v10096 = vpack.c.b16 %v9918, %v9916
  %v10097 = vpack.c.b16 %v9921, %v9919
  %v10098 = vpack.c.b16 %v9922, %v9920
  %v10099 = vpack.c.b16 %v9925, %v9923
  %v10100 = vpack.c.b16 %v9926, %v9924
  %v10101 = vpack.c.b16 %v9929, %v9927
  %v10102 = vpack.c.b16 %v9930, %v9928
  %v10103 = vpack.c.b16 %v9933, %v9931
  %v10104 = vpack.c.b16 %v9934, %v9932
  %v10105 = vpack.c.b16 %v9937, %v9935
  %v10106 = vpack.c.b16 %v9938, %v9936
  %v10107 = vpack.c.b16 %v9941, %v9939
  %v10108 = vpack.c.b16 %v9942, %v9940
  %v10109 = vpack.c.b16 %v9945, %v9943
  %v10110 = vpack.c.b16 %v9946, %v9944
  %v10111 = vpack.c.b16 %v9949, %v9947
  %v10112 = vpack.c.b16 %v9950, %v9948
  %v10113 = vpack.c.b16 %v9953, %v9951
  %v10114 = vpack.c.b16 %v9954, %v9952
  %v10115 = vpack.c.b16 %v9957, %v9955
  %v10116 = vpack.c.b16 %v9958, %v9956
  %v10117 = vpack.c.b16 %v9961, %v9959
  %v10118 = vpack.c.b16 %v9962, %v9960
  %v10119 = vpack.c.b16 %v9965, %v9963
  %v10120 = vpack.c.b16 %v9966, %v9964
  %v10121 = vpack.c.b16 %v9969, %v9967
  %v10122 = vpack.c.b16 %v9970, %v9968
  %v10123 = vpack.c.b16 %v9973, %v9971
  %v10124 = vpack.c.b16 %v9974, %v9972
  %v10125 = vpack.c.b16 %v9977, %v9975
  %v10126 = vpack.c.b16 %v9978, %v9976
  %v10127 = vpack.c.b16 %v9981, %v9979
  %v10128 = vpack.c.b16 %v9982, %v9980
  %v10129 = vpack.c.b16 %v9985, %v9983
  %v10130 = vpack.c.b16 %v9986, %v9984
  %v10131 = vpack.c.b16 %v9989, %v9987
  %v10132 = vpack.c.b16 %v9990, %v9988
  %v10133 = vpack.c.b16 %v9993, %v9991
  %v10134 = vpack.c.b16 %v9994, %v9992
  %v10135 = vpack.c.b16 %v9997, %v9995
  %v10136 = vpack.c.b16 %v9998, %v9996
  %v10137 = vpack.c.b16 %v10001, %v9999
  %v10138 = vpack.c.b16 %v10002, %v10000
  %v10139 = vpack.c.b16 %v10005, %v10003
  %v10140 = vpack.c.b16 %v10006, %v10004
  %v10141 = vpack.c.b16 %v10009, %v10007
  %v10142 = vpack.c.b16 %v10010, %v10008
  %v10143 = vpack.c.b16 %v10013, %v10011
  %v10144 = vpack.c.b16 %v10014, %v10012
  %v10145 = vpack.c.b16 %v10017, %v10015
  %v10146 = vpack.c.b16 %v10018, %v10016
  %v10147 = vpack.c.b16 %v10021, %v10019
  %v10148 = vpack.c.b16 %v10022, %v10020
  %v10149 = vpack.c.b16 %v10025, %v10023
  %v10150 = vpack.c.b16 %v10026, %v10024
  %v10151 = vpack.c.b16 %v10029, %v10027
  %v10152 = vpack.c.b16 %v10030, %v10028
  %v10153 = vpack.c.b16 %v10033, %v10031
  %v10154 = vpack.c.b16 %v10034, %v10032
  %v10155 = vpack.c.b16 %v10037, %v10035
  %v10156 = vpack.c.b16 %v10038, %v10036
  %v10157 = vpack.c.b16 %v10041, %v10039
  %v10158 = vpack.c.b16 %v10042, %v10040
  %v10159 = vpack.c.b16 %v10045, %v10043
  %v10160 = vpack.c.b16 %v10046, %v10044
  %v10161 = vpack.c.b16 %v10049, %v10047
  %v10162 = vpack.c.b16 %v10050, %v10048
  %v10163 = vpack.c.b16 %v10053, %v10051
  %v10164 = vpack.c.b16 %v10054, %v10052
  %v10165 = vpack.c.b16 %v10057, %v10055
  %v10166 = vpack.c.b16 %v10058, %v10056
  %v10167 = vpack.c.b16 %v10061, %v10059
  %v10168 = vpack.c.b16 %v10062, %v10060
  %v10169 = vpack.c.b16 %v10065, %v10063
  %v10170 = vpack.c.b16 %v10066, %v10064
  %v10171 = vpack.c.b16 %v10069, %v10067
  %v10172 = vpack.c.b16 %v10070, %v10068
  %v10173 = vpack.c.b16 %v10073, %v10071
  %v10174 = vpack.c.b16 %v10074, %v10072
  %vm10275 = vcmask 261120
  %v10277 = vsel %vm10275, %v9662, 0
  %10279 = vmatprep.subr.bf16.mxu0 %v10076
  %10280 = vmatpush1.bf16.msra.mxu0 %v10075
  %10281 = vmatprep.subr.bf16.mxu0 %v10078
  %10282 = vmatpush1.bf16.msra.mxu0 %v10077
  %10283 = vmatprep.subr.bf16.mxu0 %v10080
  %10284 = vmatpush1.bf16.msra.mxu0 %v10079
  %10285 = vmatprep.subr.bf16.mxu0 %v10082
  %10286 = vmatpush1.bf16.msra.mxu0 %v10081
  %10287 = vmatprep.subr.bf16.mxu0 %v10084
  %10288 = vmatpush1.bf16.msra.mxu0 %v10083
  %10289 = vmatprep.subr.bf16.mxu0 %v10086
  %10290 = vmatpush1.bf16.msra.mxu0 %v10085
  %10291 = vmatprep.subr.bf16.mxu0 %v10088
  %10292 = vmatpush1.bf16.msra.mxu0 %v10087
  %10293 = vmatprep.subr.bf16.mxu0 %v10090
  %10294 = vmatpush1.bf16.msra.mxu0 %v10089
  %10295 = vmatprep.subr.bf16.mxu0 %v10092
  %10296 = vmatpush1.bf16.msra.mxu0 %v10091
  %10297 = vmatprep.subr.bf16.mxu0 %v10094
  %10298 = vmatpush1.bf16.msra.mxu0 %v10093
  %10299 = vmatprep.subr.bf16.mxu0 %v10096
  %10300 = vmatpush1.bf16.msra.mxu0 %v10095
  %10301 = vmatprep.subr.bf16.mxu0 %v10098
  %10302 = vmatpush1.bf16.msra.mxu0 %v10097
  %10303 = vmatprep.subr.bf16.mxu0 %v10100
  %10304 = vmatpush1.bf16.msra.mxu0 %v10099
  %10305 = vmatprep.subr.bf16.mxu0 %v10102
  %10306 = vmatpush1.bf16.msra.mxu0 %v10101
  %10307 = vmatprep.subr.bf16.mxu0 %v10104
  %10308 = vmatpush1.bf16.msra.mxu0 %v10103
  %10309 = vmatprep.subr.bf16.mxu0 %v10106
  %10310 = vmatpush1.bf16.msra.mxu0 %v10105
  %10311 = vmatprep.mubr.bf16.mxu0 %v9657
  %10312 = vmatmul.mubr.bf16.gmra.mrb[0].mxu0 %v9656
  %v10313 = vpop.f32.mrb[0].mxu0
  %v10314 = vadd.f32 %v9768, %v10313
  %v10315 = vpop.f32.mrb[0].mxu0
  %v10316 = vadd.f32 %v9772, %v10315
  %v10317 = vpop.f32.mrb[0].mxu0
  %v10318 = vpop.f32.mrb[0].mxu0
  %10319 = vdwg.mxu0
  %10320 = vmatprep.subr.bf16.mxu0 %v10108
  %10321 = vmatpush1.bf16.msra.mxu0 %v10107
  %10322 = vmatprep.subr.bf16.mxu0 %v10110
  %10323 = vmatpush1.bf16.msra.mxu0 %v10109
  %10324 = vmatprep.subr.bf16.mxu0 %v10112
  %10325 = vmatpush1.bf16.msra.mxu0 %v10111
  %10326 = vmatprep.subr.bf16.mxu0 %v10114
  %10327 = vmatpush1.bf16.msra.mxu0 %v10113
  %10328 = vmatprep.subr.bf16.mxu0 %v10116
  %10329 = vmatpush1.bf16.msra.mxu0 %v10115
  %10330 = vmatprep.subr.bf16.mxu0 %v10118
  %10331 = vmatpush1.bf16.msra.mxu0 %v10117
  %10332 = vmatprep.subr.bf16.mxu0 %v10120
  %10333 = vmatpush1.bf16.msra.mxu0 %v10119
  %10334 = vmatprep.subr.bf16.mxu0 %v10122
  %10335 = vmatpush1.bf16.msra.mxu0 %v10121
  %10336 = vmatprep.subr.bf16.mxu0 %v10124
  %10337 = vmatpush1.bf16.msra.mxu0 %v10123
  %10338 = vmatprep.subr.bf16.mxu0 %v10126
  %10339 = vmatpush1.bf16.msra.mxu0 %v10125
  %10340 = vmatprep.subr.bf16.mxu0 %v10128
  %10341 = vmatpush1.bf16.msra.mxu0 %v10127
  %10342 = vmatprep.subr.bf16.mxu0 %v10130
  %10343 = vmatpush1.bf16.msra.mxu0 %v10129
  %10344 = vmatprep.subr.bf16.mxu0 %v10132
  %10345 = vmatpush1.bf16.msra.mxu0 %v10131
  %10346 = vmatprep.subr.bf16.mxu0 %v10134
  %10347 = vmatpush1.bf16.msra.mxu0 %v10133
  %10348 = vmatprep.subr.bf16.mxu0 %v10136
  %10349 = vmatpush1.bf16.msra.mxu0 %v10135
  %10350 = vmatprep.subr.bf16.mxu0 %v10138
  %10351 = vmatpush1.bf16.msra.mxu0 %v10137
  %10352 = vmatprep.mubr.bf16.mxu0 %v9659
  %10353 = vmatmul.mubr.bf16.gmra.mrb[0].mxu0 %v9658
  %v10354 = vpop.f32.mrb[0].mxu0
  %v10355 = vadd.f32 %v10314, %v10354
  %v10356 = vpop.f32.mrb[0].mxu0
  %v10357 = vadd.f32 %v10316, %v10356
  %v10358 = vpop.f32.mrb[0].mxu0
  %v10359 = vpop.f32.mrb[0].mxu0
  %10360 = vdwg.mxu0
  %10361 = vmatprep.subr.bf16.mxu0 %v10140
  %10362 = vmatpush1.bf16.msra.mxu0 %v10139
  %10363 = vmatprep.subr.bf16.mxu0 %v10142
  %10364 = vmatpush1.bf16.msra.mxu0 %v10141
  %10365 = vmatprep.subr.bf16.mxu0 %v10144
  %10366 = vmatpush1.bf16.msra.mxu0 %v10143
  %10367 = vmatprep.subr.bf16.mxu0 %v10146
  %10368 = vmatpush1.bf16.msra.mxu0 %v10145
  %10369 = vmatprep.subr.bf16.mxu0 %v10148
  %10370 = vmatpush1.bf16.msra.mxu0 %v10147
  %10371 = vmatprep.subr.bf16.mxu0 %v10150
  %10372 = vmatpush1.bf16.msra.mxu0 %v10149
  %10373 = vmatprep.subr.bf16.mxu0 %v10152
  %10374 = vmatpush1.bf16.msra.mxu0 %v10151
  %10375 = vmatprep.subr.bf16.mxu0 %v10154
  %10376 = vmatpush1.bf16.msra.mxu0 %v10153
  %10377 = vmatprep.subr.bf16.mxu0 %v10156
  %10378 = vmatpush1.bf16.msra.mxu0 %v10155
  %10379 = vmatprep.subr.bf16.mxu0 %v10158
  %10380 = vmatpush1.bf16.msra.mxu0 %v10157
  %10381 = vmatprep.subr.bf16.mxu0 %v10160
  %10382 = vmatpush1.bf16.msra.mxu0 %v10159
  %10383 = vmatprep.subr.bf16.mxu0 %v10162
  %10384 = vmatpush1.bf16.msra.mxu0 %v10161
  %10385 = vmatprep.subr.bf16.mxu0 %v10164
  %10386 = vmatpush1.bf16.msra.mxu0 %v10163
  %10387 = vmatprep.subr.bf16.mxu0 %v10166
  %10388 = vmatpush1.bf16.msra.mxu0 %v10165
  %10389 = vmatprep.subr.bf16.mxu0 %v10168
  %10390 = vmatpush1.bf16.msra.mxu0 %v10167
  %10391 = vmatprep.subr.bf16.mxu0 %v10170
  %10392 = vmatpush1.bf16.msra.mxu0 %v10169
  %10393 = vmatprep.mubr.bf16.mxu0 %v9661
  %10394 = vmatmul.mubr.bf16.gmra.mrb[0].mxu0 %v9660
  %v10395 = vpop.f32.mrb[0].mxu0
  %v10396 = vadd.f32 %v10355, %v10395
  %v10397 = vpop.f32.mrb[0].mxu0
  %v10398 = vadd.f32 %v10357, %v10397
  %v10399 = vpop.f32.mrb[0].mxu0
  %v10400 = vpop.f32.mrb[0].mxu0
  %10401 = vdwg.mxu0
  %10402 = vmatprep.subr.bf16.mxu0 %v10172
  %10403 = vmatpush1.bf16.msra.mxu0 %v10171
  %10404 = vmatprep.subr.bf16.mxu0 %v10174
  %10405 = vmatpush1.bf16.msra.mxu0 %v10173
  %10406 = vmatprep.subr.bf16.mxu0 0
  %10407 = vmatpush1.bf16.msra.mxu0 0
  %10408 = vmatprep.subr.bf16.mxu0 0
  %10409 = vmatpush1.bf16.msra.mxu0 0
  %10410 = vmatprep.subr.bf16.mxu0 0
  %10411 = vmatpush1.bf16.msra.mxu0 0
  %10412 = vmatprep.subr.bf16.mxu0 0
  %10413 = vmatpush1.bf16.msra.mxu0 0
  %10414 = vmatprep.subr.bf16.mxu0 0
  %10415 = vmatpush1.bf16.msra.mxu0 0
  %10416 = vmatprep.subr.bf16.mxu0 0
  %10417 = vmatpush1.bf16.msra.mxu0 0
  %10418 = vmatprep.subr.bf16.mxu0 0
  %10419 = vmatpush1.bf16.msra.mxu0 0
  %10420 = vmatprep.subr.bf16.mxu0 0
  %10421 = vmatpush1.bf16.msra.mxu0 0
  %10422 = vmatprep.subr.bf16.mxu0 0
  %10423 = vmatpush1.bf16.msra.mxu0 0
  %10424 = vmatprep.subr.bf16.mxu0 0
  %10425 = vmatpush1.bf16.msra.mxu0 0
  %10426 = vmatprep.subr.bf16.mxu0 0
  %10427 = vmatpush1.bf16.msra.mxu0 0
  %10428 = vmatprep.subr.bf16.mxu0 0
  %10429 = vmatpush1.bf16.msra.mxu0 0
  %10430 = vmatprep.subr.bf16.mxu0 0
  %10431 = vmatpush1.bf16.msra.mxu0 0
  %10432 = vmatprep.subr.bf16.mxu0 0
  %10433 = vmatpush1.bf16.msra.mxu0 0
  %10434 = vmatprep.mubr.bf16.mxu0 0
  %10435 = vmatmul.mubr.bf16.gmra.mrb[0].mxu0 %v10277
  %v10436 = vpop.f32.mrb[0].mxu0
  %v10437 = vadd.f32 %v10396, %v10436
  %v10438 = vpop.f32.mrb[0].mxu0
  %v10439 = vadd.f32 %v10398, %v10438
  %v10440 = vpop.f32.mrb[0].mxu0
  %v10441 = vpop.f32.mrb[0].mxu0
  %10442 = vdwg.mxu0
  %v10443 = vmul.f32 %v10437, 0.5
  %v10444 = vmul.f32 %v10439, 0.5
  %v10445 = vmul.f32 %v10437, 0.70710677
  %v10446 = vmul.f32 %v10439, 0.70710677
  %v10447 = vand.u32 2147483647, %v10445
  %v10448 = vand.u32 2147483647, %v10446
  %v10449 = vmul.f32 %v10447, 0.3275911
  %v10450 = vmul.f32 %v10448, 0.3275911
  %v10451 = vadd.f32 %v10449, 1.0
  %v10452 = vadd.f32 %v10450, 1.0
  %v10453 = vrcp.pop %v10451
  %v10454 = vrcp.pop %v10452
  %v10455 = vmul.f32 %v10453, 1.0614054
  %v10456 = vmul.f32 %v10454, 1.0614054
  %v10457 = vadd.f32 %v10455, -1.4531521
  %v10458 = vadd.f32 %v10456, -1.4531521
  %v10459 = vmul.f32 %v10453, %v10457
  %v10460 = vmul.f32 %v10454, %v10458
  %v10461 = vadd.f32 %v10459, 1.4214138
  %v10462 = vadd.f32 %v10460, 1.4214138
  %v10463 = vmul.f32 %v10453, %v10461
  %v10464 = vmul.f32 %v10454, %v10462
  %v10465 = vadd.f32 %v10463, -0.28449672
  %v10466 = vadd.f32 %v10464, -0.28449672
  %v10467 = vmul.f32 %v10453, %v10465
  %v10468 = vmul.f32 %v10454, %v10466
  %v10469 = vadd.f32 %v10467, 0.2548296
  %v10470 = vadd.f32 %v10468, 0.2548296
  %v10471 = vmul.f32 %v10453, %v10469
  %v10472 = vmul.f32 %v10454, %v10470
  %v10473 = vsub.f32 0.0, %v10447
  %v10474 = vsub.f32 0.0, %v10448
  %v10475 = vmul.f32 %v10473, %v10447
  %v10476 = vmul.f32 %v10474, %v10448
  %v10477 = vmul.f32 %v10475, 1.442695
  %v10478 = vpow.pop %v10477
  %v10479 = vmul.f32 %v10476, 1.442695
  %v10480 = vpow.pop %v10479
  %v10481 = vmul.f32 %v10471, %v10478
  %v10482 = vmul.f32 %v10472, %v10480
  %v10483 = vsub.f32 1.0, %v10481
  %v10484 = vsub.f32 1.0, %v10482
  %vm10485 = vcmp.ge.f32.partialorder %v10445, 0.0
  %vm10486 = vcmp.ge.f32.partialorder %v10446, 0.0
  %v10487 = vsub.f32 0.0, %v10483
  %v10488 = vsub.f32 0.0, %v10484
  %v10489 = vsel %vm10485, %v10483, %v10487
  %v10490 = vsel %vm10486, %v10484, %v10488
  %v10491 = vadd.f32 %v10489, 1.0
  %v10492 = vadd.f32 %v10490, 1.0
  %v10493 = vmul.f32 %v10443, %v10491
  %v10494 = vmul.f32 %v10444, %v10492
  %v10495 = vsel %vm9598, %v10493, 0.0
  %v10496 = vsel %vm9598, %v10494, 0.0
  %v10497 = vadd.f32 %v10495, %v10496
  %10498 = vadd.xlane.f32.xlu0 %v10497
  %v10499 = vpop.xlane.xlu0 %10498
  %v10500 = vrcp.pop 256.0
  %v10501 = vmul.f32 %v10499, %v10500
  %v10502 = vsub.f32 %v10493, %v10501
  %v10503 = vsub.f32 %v10494, %v10501
  %v10504 = vmul.f32 %v10502, %v10502
  %v10505 = vmul.f32 %v10503, %v10503
  %v10506 = vsel %vm9598, %v10504, 0.0
  %v10507 = vsel %vm9598, %v10505, 0.0
  %v10508 = vadd.f32 %v10506, %v10507
  %10509 = vadd.xlane.f32.xlu0 %v10508
  %v10510 = vpop.xlane.xlu0 %10509
  %v10511 = vmul.f32 %v10510, %v10500
  %v10512 = vadd.f32 %v10511, 1e-05
  %v10513 = vrsqrt.pop %v10512
  %v10514 = vmul.f32 %v10502, %v10513
  %v10515 = vmul.f32 %v10503, %v10513
  %v10516 = vpack.c.bf16 %v10514, %v10514
  %v10517 = vpack.c.bf16 %v10515, %v10515
  %v10518 = vld [vmem:[%s9] sm:$0xf]
  %v10519 = vld [vmem:[%s9 + $0x4] sm:$0xf]
  %v10520 = vld [vmem:[%s9 + $0x8] sm:$0xf]
  %v10521 = vld [vmem:[%s9 + $0xc] sm:$0xf]
  %v10522 = vld [vmem:[%s9 + $0x10] sm:$0xf]
  %v10523 = vld [vmem:[%s9 + $0x14] sm:$0xf]
  %v10524 = vld [vmem:[%s9 + $0x18] sm:$0xf]
  %v10525 = vld [vmem:[%s9 + $0x1c] sm:$0xf]
  %v10526 = vld [vmem:[%s9 + $0x20] sm:$0xf]
  %v10527 = vld [vmem:[%s9 + $0x24] sm:$0xf]
  %v10528 = vld [vmem:[%s9 + $0x28] sm:$0xf]
  %v10529 = vld [vmem:[%s9 + $0x2c] sm:$0xf]
  %v10530 = vld [vmem:[%s9 + $0x30] sm:$0xf]
  %v10531 = vld [vmem:[%s9 + $0x34] sm:$0xf]
  %v10532 = vld [vmem:[%s9 + $0x38] sm:$0xf]
  %v10533 = vld [vmem:[%s9 + $0x3c] sm:$0xf]
  %v10534 = vld [vmem:[%s9 + $0x40] sm:$0xf]
  %v10535 = vld [vmem:[%s9 + $0x44] sm:$0xf]
  %v10536 = vld [vmem:[%s9 + $0x48] sm:$0xf]
  %v10537 = vld [vmem:[%s9 + $0x4c] sm:$0xf]
  %v10538 = vld [vmem:[%s9 + $0x50] sm:$0xf]
  %v10539 = vld [vmem:[%s9 + $0x54] sm:$0xf]
  %v10540 = vld [vmem:[%s9 + $0x58] sm:$0xf]
  %v10541 = vld [vmem:[%s9 + $0x5c] sm:$0xf]
  %v10542 = vld [vmem:[%s9 + $0x60] sm:$0xf]
  %v10543 = vld [vmem:[%s9 + $0x64] sm:$0xf]
  %v10544 = vld [vmem:[%s9 + $0x68] sm:$0xf]
  %v10545 = vld [vmem:[%s9 + $0x6c] sm:$0xf]
  %v10546 = vld [vmem:[%s9 + $0x70] sm:$0xf]
  %v10547 = vld [vmem:[%s9 + $0x74] sm:$0xf]
  %v10548 = vld [vmem:[%s9 + $0x78] sm:$0xf]
  %v10549 = vld [vmem:[%s9 + $0x7c] sm:$0xf]
  %v10550 = vld [vmem:[%s10] sm:$0x1]
  %v10552 = vlaneseq
  %v10553 = vshrl.u32 %v10552, 7
  %v10554 = vsub.s32 0, %v10553
  %v10555 = vrot.slane %v10550, %v10554
  %v10589 = vunpack.c.l.b16 %v10518
  %v10590 = vunpack.c.l.b16 %v10519
  %v10591 = vunpack.c.l.b16 %v10520
  %v10592 = vunpack.c.l.b16 %v10521
  %v10593 = vunpack.c.l.b16 %v10522
  %v10594 = vunpack.c.l.b16 %v10523
  %v10595 = vunpack.c.l.b16 %v10524
  %v10596 = vunpack.c.l.b16 %v10525
  %v10597 = vunpack.c.l.b16 %v10526
  %v10598 = vunpack.c.l.b16 %v10527
  %v10599 = vunpack.c.l.b16 %v10528
  %v10600 = vunpack.c.l.b16 %v10529
  %v10601 = vunpack.c.l.b16 %v10530
  %v10602 = vunpack.c.l.b16 %v10531
  %v10603 = vunpack.c.l.b16 %v10532
  %v10604 = vunpack.c.l.b16 %v10533
  %v10605 = vunpack.c.l.b16 %v10534
  %v10606 = vunpack.c.l.b16 %v10535
  %v10607 = vunpack.c.l.b16 %v10536
  %v10608 = vunpack.c.l.b16 %v10537
  %v10609 = vunpack.c.l.b16 %v10538
  %v10610 = vunpack.c.l.b16 %v10539
  %v10611 = vunpack.c.l.b16 %v10540
  %v10612 = vunpack.c.l.b16 %v10541
  %v10613 = vunpack.c.l.b16 %v10542
  %v10614 = vunpack.c.l.b16 %v10543
  %v10615 = vunpack.c.l.b16 %v10544
  %v10616 = vunpack.c.l.b16 %v10545
  %v10617 = vunpack.c.l.b16 %v10546
  %v10618 = vunpack.c.l.b16 %v10547
  %v10619 = vunpack.c.l.b16 %v10548
  %v10620 = vunpack.c.l.b16 %v10549
  %v10621 = vpack.c.b16 %v10590, %v10589
  %v10622 = vpack.c.b16 %v10592, %v10591
  %v10623 = vpack.c.b16 %v10594, %v10593
  %v10624 = vpack.c.b16 %v10596, %v10595
  %v10625 = vpack.c.b16 %v10598, %v10597
  %v10626 = vpack.c.b16 %v10600, %v10599
  %v10627 = vpack.c.b16 %v10602, %v10601
  %v10628 = vpack.c.b16 %v10604, %v10603
  %v10629 = vpack.c.b16 %v10606, %v10605
  %v10630 = vpack.c.b16 %v10608, %v10607
  %v10631 = vpack.c.b16 %v10610, %v10609
  %v10632 = vpack.c.b16 %v10612, %v10611
  %v10633 = vpack.c.b16 %v10614, %v10613
  %v10634 = vpack.c.b16 %v10616, %v10615
  %v10635 = vpack.c.b16 %v10618, %v10617
  %v10636 = vpack.c.b16 %v10620, %v10619
  %10653 = vmatprep.subr.bf16.mxu0 0
  %10654 = vmatpush1.bf16.msra.mxu0 %v10621
  %10655 = vmatprep.subr.bf16.mxu0 0
  %10656 = vmatpush1.bf16.msra.mxu0 %v10622
  %10657 = vmatprep.subr.bf16.mxu0 0
  %10658 = vmatpush1.bf16.msra.mxu0 %v10623
  %10659 = vmatprep.subr.bf16.mxu0 0
  %10660 = vmatpush1.bf16.msra.mxu0 %v10624
  %10661 = vmatprep.subr.bf16.mxu0 0
  %10662 = vmatpush1.bf16.msra.mxu0 %v10625
  %10663 = vmatprep.subr.bf16.mxu0 0
  %10664 = vmatpush1.bf16.msra.mxu0 %v10626
  %10665 = vmatprep.subr.bf16.mxu0 0
  %10666 = vmatpush1.bf16.msra.mxu0 %v10627
  %10667 = vmatprep.subr.bf16.mxu0 0
  %10668 = vmatpush1.bf16.msra.mxu0 %v10628
  %10669 = vmatprep.subr.bf16.mxu0 0
  %10670 = vmatpush1.bf16.msra.mxu0 %v10629
  %10671 = vmatprep.subr.bf16.mxu0 0
  %10672 = vmatpush1.bf16.msra.mxu0 %v10630
  %10673 = vmatprep.subr.bf16.mxu0 0
  %10674 = vmatpush1.bf16.msra.mxu0 %v10631
  %10675 = vmatprep.subr.bf16.mxu0 0
  %10676 = vmatpush1.bf16.msra.mxu0 %v10632
  %10677 = vmatprep.subr.bf16.mxu0 0
  %10678 = vmatpush1.bf16.msra.mxu0 %v10633
  %10679 = vmatprep.subr.bf16.mxu0 0
  %10680 = vmatpush1.bf16.msra.mxu0 %v10634
  %10681 = vmatprep.subr.bf16.mxu0 0
  %10682 = vmatpush1.bf16.msra.mxu0 %v10635
  %10683 = vmatprep.subr.bf16.mxu0 0
  %10684 = vmatpush1.bf16.msra.mxu0 %v10636
  %10685 = vmatprep.mubr.bf16.mxu0 %v10517
  %10686 = vmatmul.mubr.bf16.gmra.mrb[0].mxu0 %v10516
  %v10687 = vpop.f32.mrb[0].mxu0
  %v10688 = vadd.f32 %v10555, %v10687
  %v10689 = vpop.f32.mrb[0].mxu0
  %v10690 = vpop.f32.mrb[0].mxu0
  %v10691 = vpop.f32.mrb[0].mxu0
  %10692 = vdwg.mxu0
  %v10693 = vmul.f32 %v10688, 0.5
  %v10694 = vmul.f32 %v10688, 0.70710677
  %v10695 = vand.u32 2147483647, %v10694
  %v10696 = vmul.f32 %v10695, 0.3275911
  %v10697 = vadd.f32 %v10696, 1.0
  %v10698 = vrcp.pop %v10697
  %v10699 = vmul.f32 %v10698, 1.0614054
  %v10700 = vadd.f32 %v10699, -1.4531521
  %v10701 = vmul.f32 %v10698, %v10700
  %v10702 = vadd.f32 %v10701, 1.4214138
  %v10703 = vmul.f32 %v10698, %v10702
  %v10704 = vadd.f32 %v10703, -0.28449672
  %v10705 = vmul.f32 %v10698, %v10704
  %v10706 = vadd.f32 %v10705, 0.2548296
  %v10707 = vmul.f32 %v10698, %v10706
  %v10708 = vsub.f32 0.0, %v10695
  %v10709 = vmul.f32 %v10708, %v10695
  %v10710 = vmul.f32 %v10709, 1.442695
  %v10711 = vpow.pop %v10710
  %v10712 = vmul.f32 %v10707, %v10711
  %v10713 = vsub.f32 1.0, %v10712
  %vm10714 = vcmp.ge.f32.partialorder %v10694, 0.0
  %v10715 = vsub.f32 0.0, %v10713
  %v10716 = vsel %vm10714, %v10713, %v10715
  %v10717 = vadd.f32 %v10716, 1.0
  %v10718 = vmul.f32 %v10693, %v10717
  %v10719 = vsel %vm9610, %v10718, 0.0
  %10720 = vadd.xlane.f32.xlu0 %v10719
  %v10721 = vpop.xlane.xlu0 %10720
  %v10722 = vrcp.pop 32.0
  %v10723 = vmul.f32 %v10721, %v10722
  %v10724 = vsub.f32 %v10718, %v10723
  %v10725 = vmul.f32 %v10724, %v10724
  %v10726 = vsel %vm9610, %v10725, 0.0
  %10727 = vadd.xlane.f32.xlu0 %v10726
  %v10728 = vpop.xlane.xlu0 %10727
  %v10729 = vmul.f32 %v10728, %v10722
  %v10730 = vadd.f32 %v10729, 1e-05
  %v10731 = vrsqrt.pop %v10730
  %v10732 = vmul.f32 %v10724, %v10731
  %v10733 = vld [vmem:[%s11] sm:$0x1]
  %v10735 = vlaneseq
  %v10736 = vshrl.u32 %v10735, 7
  %v10737 = vsub.s32 0, %v10736
  %v10738 = vrot.slane %v10733, %v10737
  %v10740 = vmul.f32 %v10732, %v10738
  %v10741 = vsel %vm9610, %v10740, 0.0
  %10742 = vadd.xlane.f32.xlu0 %v10741
  %v10743 = vpop.xlane.xlu0 %10742
  %v10744 = vld [vmem:[#allocation2] sm:$0x1]
  %v10746 = vlaneseq
  %v10747 = vshrl.u32 %v10746, 7
  %v10748 = vsub.s32 0, %v10747
  %v10749 = vrot.slane %v10744, %v10748
  %v10751 = vadd.f32 %v10743, %v10749
  %v10754 = vunpack.c.l.s4 1966171168
  %v10755 = vunpack.c.0.s8 %v10754
  %v10756 = vlaneseq
  %v10757 = vshrl.u32 %v10756, 7
  %v10758 = vsub.s32 %v10755, %v10757
  %v10759 = vrot.slane %v10751, %v10758
  %v10760 = vcombine.high %v10759, %v10759
  %v10762 = vunpack.c.l.s4 1966171168
  %v10763 = vunpack.c.0.s8 %v10762
  %v10764 = vlaneseq
  %v10765 = vshrl.u32 %v10764, 7
  %v10766 = vsub.s32 %v10763, %v10765
  %v10767 = vrot.slane %v10759, %v10766
  %v10769 = vunpack.c.l.s4 1966171168
  %v10770 = vunpack.c.0.s8 %v10769
  %v10771 = vlaneseq
  %v10772 = vshrl.u32 %v10771, 7
  %v10773 = vsub.s32 %v10770, %v10772
  %v10774 = vrot.slane %v10760, %v10773
  %vm10777 = vcmask 0
  %10778 = vst.msk [vmem:[%s13] sm:$0x1] %vm10777, %v10767
  %10779 = vst.msk [vmem:[%s13 + $0x1] sm:$0x1] %vm10777, %v10774
  // Predicated region
  $region54: #{bar_model_forward.1} parent=0 // pred_check
    _
  $region55: #{bar_model_forward.1} parent=0 // pred_check_branch
    %10781 = sbr.rel (0) target = $region57
  $region56: #{bar_model_forward.1} parent=0 // pred_region
    _
  $region57: #{bar_model_forward.1} parent=0 // pred_fallthru
    _
  // Predicated region
  $region58: #{bar_model_forward.1} parent=0 // pred_check
    _
  $region59: #{bar_model_forward.1} parent=0 // pred_check_branch
    %10783 = sbr.rel (0) target = $region61
  $region60: #{bar_model_forward.1} parent=0 // pred_region
    _
  $region61: #{bar_model_forward.1} parent=0 // pred_fallthru
    _

</llo_original>
